<compile_context>
chip_gen: v5e
topology: v5e:2x2
jax: 0.10.0
libtpu: 0.0.40
codegen_flags: <defaults>
</compile_context>

<pallas_src>
import functools

import numpy as np
import jax
import jax.numpy as jnp
from jax.experimental import pallas as pl
from jax.experimental.pallas import tpu as pltpu

BN_EPS = 1e-5


# ------------------------------ Pallas kernel ------------------------------

def _tree_max(parts):
    while len(parts) > 1:
        nxt = [jnp.maximum(parts[i], parts[i + 1])
               for i in range(0, len(parts) - 1, 2)]
        if len(parts) % 2:
            nxt.append(parts[-1])
        parts = nxt
    return parts[0]


def _tree_sum(parts):
    while len(parts) > 1:
        nxt = [parts[i] + parts[i + 1] for i in range(0, len(parts) - 1, 2)]
        if len(parts) % 2:
            nxt.append(parts[-1])
        parts = nxt
    return parts[0]


def _cnn_early_kernel(x_ref, m1_ref, b1e_ref, m2_ref, b2e_ref,
                      w1r_ref, bf1_ref, w2g_ref, bf2_ref, out_ref):
    """Whole CNN_Early forward for B_TILE batch elements, everything in VMEM.

    Rows are ordered (h2', b): flat row index = h2' * B_TILE + b.

    x_ref   : (1, M, 18*W)   M = H2*B_TILE; each row already holds its 18-row
                             circular window (halo built by the wrapper).
    m1_ref  : (18*W, 8*4*C1*(W/2))     folded BN1+conv1+pool1 matrix (bf16)
    b1e_ref : (1, 4*C1*(W/2))          conv1 bias in the a1 layout (f32)
    m2_ref  : (6*C1*(W/2), 8*C2*(W/4)) folded BN2+conv2+pool2 matrix (bf16)
    b2e_ref : (1, C2*(W/4))
    w1r_ref : (H2, C2*(W/4), 128)      fc1 weights, flatten order pre-permuted
    bf1_ref : (1, 128)
    w2g_ref : (128, n_pad)             fc2 weights, classes padded to n_pad
    bf2_ref : (1, n_pad)
    out_ref : (B_TILE, n_pad)
    """
    b_tile = out_ref.shape[0]
    H2 = w1r_ref.shape[0]
    M = x_ref.shape[1]                                    # = H2 * b_tile

    # ---- stage 1: BN1 + conv1(3x3 circular) + ReLU + MaxPool(4,2) ----------
    xin = x_ref[0].astype(jnp.bfloat16)                   # (M, 18*W)
    y1 = jnp.dot(xin, m1_ref[...],
                 preferred_element_type=jnp.float32)      # (M, 8*G1)
    G1 = m1_ref.shape[1] // 8                             # 4*C1*Wp1 (= 3*128)
    a1 = _tree_max([y1[:, t * G1:(t + 1) * G1] for t in range(8)])
    a1 = jnp.maximum(a1 + b1e_ref[...], 0.0)              # (M, G1)

    # ---- stage 2: BN2 + conv2(3x3 circular) + ReLU + MaxPool(4,2) ----------
    # With (h2', b) row ordering a flat +-b_tile sublane shift is exactly the
    # per-element circular row shift (b_tile=8 -> vreg-aligned row moves).
    Gq = G1 // 4                                          # C1 * Wp1
    prev = jnp.concatenate([a1[M - b_tile:], a1[:M - b_tile]], axis=0)
    nxt = jnp.concatenate([a1[b_tile:], a1[:b_tile]], axis=0)
    patches2 = jnp.concatenate([prev[:, 3 * Gq:], a1, nxt[:, :Gq]], axis=1)
    y2 = jnp.dot(patches2.astype(jnp.bfloat16), m2_ref[...],
                 preferred_element_type=jnp.float32)      # (M, 8*G2)
    G2 = m2_ref.shape[1] // 8                             # C2 * Wp2
    a2 = _tree_max([y2[:, t * G2:(t + 1) * G2] for t in range(8)])
    a2 = jnp.maximum(a2 + b2e_ref[...], 0.0)              # (M, G2)

    # ---- head: flatten folded into w1r; fc1 + ReLU + fc2 -------------------
    # H2 INDEPENDENT (b_tile, G2)@(G2, 128) matmuls on vreg-aligned row
    # slices, tree-summed (no serial accumulation chain through the MXU).
    parts = [jnp.dot(a2[r * b_tile:(r + 1) * b_tile, :], w1r_ref[r],
                     preferred_element_type=jnp.float32) for r in range(H2)]
    h = jnp.maximum(_tree_sum(parts) + bf1_ref[...], 0.0)  # (b_tile, 128)
    out_ref[...] = (jnp.dot(h, w2g_ref[...],
                            preferred_element_type=jnp.float32)
                    + bf2_ref[...])


# ------------------------------ parameter prep ------------------------------

def fold_bn_into_conv(w, b, gamma, beta, mean, var):
    """Fold eval-mode BatchNorm (applied to the conv INPUT) into conv params."""
    s = gamma / jnp.sqrt(var + BN_EPS)            # (Cin,)
    t = beta - mean * s                           # (Cin,)
    w_f = w * s[None, :, None, None]
    b_f = b + jnp.sum(w * t[None, :, None, None], axis=(1, 2, 3))
    return w_f, b_f


@functools.lru_cache(maxsize=None)
def _conv_pool_mat_indices(W, Cin, Cout, n_q):
    """Scatter indices for the folded conv(3x3 circular)+MaxPool(4,2) matrix.

    Matrix M of shape (K, N) with
      K = (4*n_q + 2) * Cin * W           contraction index (o, cin, j)
      N = 8 * n_q * Cout * (W // 2)       output index (t, q, co, w')
    so that (patches @ M) enumerates, per pooled output position, the 8
    pool-window candidates contiguously in the lane axis.
    """
    assert W >= 3, "circular 3x3 conv fold needs width >= 3 (no dup taps)"
    Wp = W // 2
    K = (4 * n_q + 2) * Cin * W
    N = 8 * n_q * Cout * Wp
    rows, cols, widx = [], [], []
    for r in range(4):
        for s in range(2):
            t = r * 2 + s
            for q in range(n_q):
                for co in range(Cout):
                    for wp in range(Wp):
                        col = ((t * n_q + q) * Cout + co) * Wp + wp
                        for cin in range(Cin):
                            for di in range(3):
                                o = 4 * q + r + di
                                for dj in range(3):
                                    j = (2 * wp + s + dj - 1) % W
                                    rows.append((o * Cin + cin) * W + j)
                                    cols.append(col)
                                    widx.append(((co * Cin + cin) * 3 + di) * 3 + dj)
    assert len(set(zip(rows, cols))) == len(rows), "duplicate scatter targets"
    return (np.asarray(rows, np.int32), np.asarray(cols, np.int32),
            np.asarray(widx, np.int32), K, N)


def _conv_pool_matrix(w_folded, W, n_q):
    Cout, Cin = int(w_folded.shape[0]), int(w_folded.shape[1])
    rows, cols, widx, K, N = _conv_pool_mat_indices(W, Cin, Cout, n_q)
    vals = w_folded.reshape(-1)[widx]
    return jnp.zeros((K, N), jnp.float32).at[rows, cols].set(vals)


def prepare_params(params, window_size, num_channel):
    """One-time (outside the hot path) folding of all layers into kernel inputs."""
    H, W = window_size, num_channel
    assert H % 16 == 0 and W % 4 == 0, "two MaxPool((4,2)) stages need H%16==0, W%4==0"
    assert W >= 6, "need W/2 >= 3 for the stage-2 circular conv fold"
    H2, Wp1, Wp2 = H // 16, W // 2, W // 4
    C1 = int(params["conv1_w"].shape[0])          # 16
    C2 = int(params["conv2_w"].shape[0])          # 8
    n_hidden = int(params["fc1_w"].shape[0])      # 128
    n_cls = int(params["fc2_w"].shape[0])         # 49
    assert params["fc1_w"].shape[1] == C2 * H2 * Wp2, "Linear(600,.) shape mismatch"

    w1f, b1f = fold_bn_into_conv(params["conv1_w"], params["conv1_b"],
                                 params["bn1_g"], params["bn1_b"],
                                 params["bn1_m"], params["bn1_v"])
    w2f, b2f = fold_bn_into_conv(params["conv2_w"], params["conv2_b"],
                                 params["bn2_g"], params["bn2_b"],
                                 params["bn2_m"], params["bn2_v"])

    # bf16 operands for the two large matmuls (accumulation stays f32).
    m1 = _conv_pool_matrix(w1f, W, n_q=4).astype(jnp.bfloat16)   # (18*W, 8*4*C1*Wp1)
    m2 = _conv_pool_matrix(w2f, Wp1, n_q=1).astype(jnp.bfloat16)  # (6*C1*Wp1, 8*C2*Wp2)
    b1e = jnp.tile(jnp.repeat(b1f, Wp1), 4)[None, :]              # (1, 4*C1*Wp1)
    b2e = jnp.repeat(b2f, Wp2)[None, :]                           # (1, C2*Wp2)

    # fc1 weights permuted so the in-kernel (h2', c2*Wp2 + w2') layout matches
    # PyTorch's NCHW flatten (c2*H2*Wp2 + h2'*Wp2 + w2') -> no flatten transpose.
    w1r = params["fc1_w"].reshape(n_hidden, C2, H2, Wp2)
    w1r = jnp.transpose(w1r, (2, 1, 3, 0)).reshape(H2, C2 * Wp2, n_hidden)

    # fc2 classes padded to a lane-dense 128 so the final store is a full vst.
    n_pad = max(128, ((n_cls + 127) // 128) * 128)
    w2g = jnp.zeros((n_hidden, n_pad), jnp.float32).at[:, :n_cls].set(params["fc2_w"].T)
    bf2 = jnp.zeros((1, n_pad), jnp.float32).at[:, :n_cls].set(params["fc2_b"][None, :])

    return dict(m1=m1, b1e=b1e, m2=m2, b2e=b2e,
                w1r=w1r, bf1=params["fc1_b"][None, :],
                w2g=w2g, bf2=bf2)


# ------------------------------ forward (Pallas) ------------------------------

def cnn_early_forward(x, prepped, *, n_cls, b_tile=8):
    """x: (B, window_size, num_channel) float32 -> (B, n_cls) logits."""
    B, H, W = x.shape
    H2 = H // 16
    m1, b1e = prepped["m1"], prepped["b1e"]
    m2, b2e = prepped["m2"], prepped["b2e"]
    w1r, bf1 = prepped["w1r"], prepped["bf1"]
    w2g, bf2 = prepped["w2g"], prepped["bf2"]
    n_pad = w2g.shape[1]
    assert m1.shape[0] == 18 * W and w1r.shape[0] == H2

    # Pad batch to a multiple of b_tile (padded elements are sliced off below).
    Bp = ((B + b_tile - 1) // b_tile) * b_tile
    if Bp != B:
        x = jnp.concatenate([x, jnp.zeros((Bp - B, H, W), x.dtype)], axis=0)
    nblk = Bp // b_tile
    M = H2 * b_tile

    # Wrapper-side layout plumbing (no arithmetic): each packed row carries its
    # full 18-row circular window, and rows are interleaved (h2', b) so the
    # kernel's stage matmuls see M = H2*b_tile independent rows and stage-2's
    # circular halo is a flat +-b_tile row shift.
    xr = x.reshape(Bp, H2, 16, W)
    prev = jnp.roll(xr[:, :, 15, :], 1, axis=1)[:, :, None, :]   # row above group
    nxt = jnp.roll(xr[:, :, 0, :], -1, axis=1)[:, :, None, :]    # row below group
    x18 = jnp.concatenate([prev, xr, nxt], axis=2)               # (Bp, H2, 18, W)
    x18 = x18.reshape(nblk, b_tile, H2, 18 * W)
    x18 = jnp.transpose(x18, (0, 2, 1, 3)).reshape(nblk, M, 18 * W)

    out = pl.pallas_call(
        _cnn_early_kernel,
        out_shape=jax.ShapeDtypeStruct((Bp, n_pad), jnp.float32),
        grid=(nblk,),
        in_specs=[
            pl.BlockSpec((1, M, 18 * W), lambda g: (g, 0, 0)),
            pl.BlockSpec(m1.shape, lambda g: (0, 0)),
            pl.BlockSpec(b1e.shape, lambda g: (0, 0)),
            pl.BlockSpec(m2.shape, lambda g: (0, 0)),
            pl.BlockSpec(b2e.shape, lambda g: (0, 0)),
            pl.BlockSpec(w1r.shape, lambda g: (0, 0, 0)),
            pl.BlockSpec(bf1.shape, lambda g: (0, 0)),
            pl.BlockSpec(w2g.shape, lambda g: (0, 0)),
            pl.BlockSpec(bf2.shape, lambda g: (0, 0)),
        ],
        out_specs=pl.BlockSpec((b_tile, n_pad), lambda g: (g, 0)),
        compiler_params=pltpu.CompilerParams(
            dimension_semantics=("parallel",),
            vmem_limit_bytes=32 * 1024 * 1024,
        ),
    )(x18, m1, b1e, m2, b2e, w1r, bf1, w2g, bf2)
    return out[:B, :n_cls]


# ------------------------------ pure-JAX reference ------------------------------

def reference_forward(x, params):
    B = x.shape[0]
    x = x[:, None, :, :].astype(jnp.float32)      # NCHW (B,1,H,W)

    def bn(h, g, b, m, v):
        sh = (1, -1, 1, 1)
        return (h - m.reshape(sh)) / jnp.sqrt(v.reshape(sh) + BN_EPS) \
            * g.reshape(sh) + b.reshape(sh)

    def circ_conv(h, w, b):
        H, W = h.shape[2], h.shape[3]
        hp = jnp.pad(h, ((0, 0), (0, 0), (1, 1), (1, 1)), mode="wrap")
        out = jnp.zeros((h.shape[0], w.shape[0], H, W), jnp.float32)
        for di in range(3):
            for dj in range(3):
                out = out + jnp.einsum("bihw,oi->bohw",
                                       hp[:, :, di:di + H, dj:dj + W],
                                       w[:, :, di, dj], precision="highest")
        return out + b[None, :, None, None]

    def maxpool(h, ph, pw):
        b_, c_, hh, ww = h.shape
        return h.reshape(b_, c_, hh // ph, ph, ww // pw, pw).max(axis=(3, 5))

    h = bn(x, params["bn1_g"], params["bn1_b"], params["bn1_m"], params["bn1_v"])
    h = jax.nn.relu(circ_conv(h, params["conv1_w"], params["conv1_b"]))
    h = maxpool(h, 4, 2)
    h = bn(h, params["bn2_g"], params["bn2_b"], params["bn2_m"], params["bn2_v"])
    h = jax.nn.relu(circ_conv(h, params["conv2_w"], params["conv2_b"]))
    h = maxpool(h, 4, 2)
    h = h.reshape(B, -1)
    h = jax.nn.relu(jnp.matmul(h, params["fc1_w"].T, precision="highest")
                    + params["fc1_b"])
    return jnp.matmul(h, params["fc2_w"].T, precision="highest") + params["fc2_b"]


# ------------------------------ parameter init ------------------------------

def init_params(key, n_cls=49):
    ks = jax.random.split(key, 16)
    p = {
        "bn1_g": 1.0 + 0.1 * jax.random.normal(ks[0], (1,)),
        "bn1_b": 0.1 * jax.random.normal(ks[1], (1,)),
        "bn1_m": 0.1 * jax.random.normal(ks[2], (1,)),
        "bn1_v": jax.random.uniform(ks[3], (1,), minval=0.5, maxval=1.5),
        "conv1_w": jax.random.normal(ks[4], (16, 1, 3, 3)) / 3.0,
        "conv1_b": 0.1 * jax.random.normal(ks[5], (16,)),
        "bn2_g": 1.0 + 0.1 * jax.random.normal(ks[6], (16,)),
        "bn2_b": 0.1 * jax.random.normal(ks[7], (16,)),
        "bn2_m": 0.1 * jax.random.normal(ks[8], (16,)),
        "bn2_v": jax.random.uniform(ks[9], (16,), minval=0.5, maxval=1.5),
        "conv2_w": jax.random.normal(ks[10], (8, 16, 3, 3)) / 12.0,
        "conv2_b": 0.1 * jax.random.normal(ks[11], (8,)),
        "fc1_w": jax.random.normal(ks[12], (128, 600)) / np.sqrt(600.0),
        "fc1_b": 0.1 * jax.random.normal(ks[13], (128,)),
        "fc2_w": jax.random.normal(ks[14], (49, 128)) / np.sqrt(128.0),
        "fc2_b": 0.1 * jax.random.normal(ks[15], (49,)),
    }
    return {k: v.astype(jnp.float32) for k, v in p.items()}


# ------------------------------ main ------------------------------

if __name__ == "__main__":
    key = jax.random.PRNGKey(0)
    pkey, xkey = jax.random.split(key)
    params = init_params(pkey, n_cls=49)

    # Linear(600, 128) forces 8 * (window/16) * (channels/4) == 600,
    # e.g. window_size = 400, num_channel = 12 (typical EMG window).
    B, Wd, Ch = 12, 400, 12
    x = jax.random.normal(xkey, (B, Wd, Ch), jnp.float32)

    prepped = prepare_params(params, Wd, Ch)      # one-time, outside hot path
    fwd = jax.jit(functools.partial(cnn_early_forward, n_cls=49, b_tile=8))
    out = jax.block_until_ready(fwd(x, prepped))
    assert out.shape == (B, 49), out.shape

    ref = reference_forward(x, params)
    np.testing.assert_allclose(np.asarray(out), np.asarray(ref),
                               rtol=5e-2, atol=5e-2)
    print("KERNEL_OK")
</pallas_src>

<mosaic_0001>
module attributes {stable_mosaic.version = 11 : i64} {
  func.func @_cnn_early_kernel(%arg0: i32, %arg1: memref<1x200x216xf32, #tpu.memory_space<vmem>>, %arg2: memref<216x3072xbf16, #tpu.memory_space<vmem>>, %arg3: memref<1x384xf32, #tpu.memory_space<vmem>>, %arg4: memref<576x192xbf16, #tpu.memory_space<vmem>>, %arg5: memref<1x24xf32, #tpu.memory_space<vmem>>, %arg6: memref<25x24x128xf32, #tpu.memory_space<vmem>>, %arg7: memref<1x128xf32, #tpu.memory_space<vmem>>, %arg8: memref<128x128xf32, #tpu.memory_space<vmem>>, %arg9: memref<1x128xf32, #tpu.memory_space<vmem>>, %arg10: memref<8x128xf32, #tpu.memory_space<vmem>>) attributes {dimension_semantics = [#tpu.dimension_semantics<parallel>], iteration_bounds = array<i64: 2>, scalar_prefetch = 0 : i64, scratch_operands = 0 : i64, tpu.core_type = #tpu.core_type<tc>, window_params = [{transform_indices = @transform_0, window_bounds = array<i64: 1, 200, 216>}, {pipeline_mode = #tpu.pipeline_mode<synchronous>, transform_indices = @transform_1, window_bounds = array<i64: 216, 3072>}, {pipeline_mode = #tpu.pipeline_mode<synchronous>, transform_indices = @transform_2, window_bounds = array<i64: 1, 384>}, {pipeline_mode = #tpu.pipeline_mode<synchronous>, transform_indices = @transform_3, window_bounds = array<i64: 576, 192>}, {pipeline_mode = #tpu.pipeline_mode<synchronous>, transform_indices = @transform_4, window_bounds = array<i64: 1, 24>}, {pipeline_mode = #tpu.pipeline_mode<synchronous>, transform_indices = @transform_5, window_bounds = array<i64: 25, 24, 128>}, {pipeline_mode = #tpu.pipeline_mode<synchronous>, transform_indices = @transform_6, window_bounds = array<i64: 1, 128>}, {pipeline_mode = #tpu.pipeline_mode<synchronous>, transform_indices = @transform_7, window_bounds = array<i64: 128, 128>}, {pipeline_mode = #tpu.pipeline_mode<synchronous>, transform_indices = @transform_8, window_bounds = array<i64: 1, 128>}, {transform_indices = @transform_9, window_bounds = array<i64: 8, 128>}]} {
    %c0 = arith.constant 0 : index
    %c0_0 = arith.constant 0 : index
    %c0_1 = arith.constant 0 : index
    %0 = vector.load %arg1[%c0, %c0_0, %c0_1] : memref<1x200x216xf32, #tpu.memory_space<vmem>>, vector<1x200x216xf32>
    %1 = vector.shape_cast %0 : vector<1x200x216xf32> to vector<200x216xf32>
    %2 = arith.truncf %1 : vector<200x216xf32> to vector<200x216xbf16>
    %c0_2 = arith.constant 0 : index
    %c0_3 = arith.constant 0 : index
    %3 = vector.load %arg2[%c0_2, %c0_3] : memref<216x3072xbf16, #tpu.memory_space<vmem>>, vector<216x3072xbf16>
    %cst = arith.constant dense<0.000000e+00> : vector<200x3072xf32>
    %4 = tpu.matmul %2, %3, %cst {dimension_numbers = #tpu.dot_dimension_numbers<[1], [0], [0], [1], [0, 0, 1, 1], [], []>} : vector<200x216xbf16>, vector<216x3072xbf16>, vector<200x3072xf32> -> vector<200x3072xf32>
    %5 = vector.extract_strided_slice %4 {offsets = [0, 0], sizes = [200, 384], strides = [1, 1]} : vector<200x3072xf32> to vector<200x384xf32>
    %6 = vector.extract_strided_slice %4 {offsets = [0, 384], sizes = [200, 384], strides = [1, 1]} : vector<200x3072xf32> to vector<200x384xf32>
    %7 = vector.extract_strided_slice %4 {offsets = [0, 768], sizes = [200, 384], strides = [1, 1]} : vector<200x3072xf32> to vector<200x384xf32>
    %8 = vector.extract_strided_slice %4 {offsets = [0, 1152], sizes = [200, 384], strides = [1, 1]} : vector<200x3072xf32> to vector<200x384xf32>
    %9 = vector.extract_strided_slice %4 {offsets = [0, 1536], sizes = [200, 384], strides = [1, 1]} : vector<200x3072xf32> to vector<200x384xf32>
    %10 = vector.extract_strided_slice %4 {offsets = [0, 1920], sizes = [200, 384], strides = [1, 1]} : vector<200x3072xf32> to vector<200x384xf32>
    %11 = vector.extract_strided_slice %4 {offsets = [0, 2304], sizes = [200, 384], strides = [1, 1]} : vector<200x3072xf32> to vector<200x384xf32>
    %12 = vector.extract_strided_slice %4 {offsets = [0, 2688], sizes = [200, 384], strides = [1, 1]} : vector<200x3072xf32> to vector<200x384xf32>
    %13 = arith.maximumf %5, %6 : vector<200x384xf32>
    %14 = arith.maximumf %7, %8 : vector<200x384xf32>
    %15 = arith.maximumf %9, %10 : vector<200x384xf32>
    %16 = arith.maximumf %11, %12 : vector<200x384xf32>
    %17 = arith.maximumf %13, %14 : vector<200x384xf32>
    %18 = arith.maximumf %15, %16 : vector<200x384xf32>
    %19 = arith.maximumf %17, %18 : vector<200x384xf32>
    %c0_4 = arith.constant 0 : index
    %c0_5 = arith.constant 0 : index
    %20 = vector.load %arg3[%c0_4, %c0_5] : memref<1x384xf32, #tpu.memory_space<vmem>>, vector<1x384xf32>
    %21 = vector.broadcast %20 : vector<1x384xf32> to vector<200x384xf32>
    %22 = arith.addf %19, %21 : vector<200x384xf32>
    %cst_6 = arith.constant 0.000000e+00 : f32
    %23 = vector.broadcast %cst_6 : f32 to vector<200x384xf32>
    %24 = arith.maximumf %22, %23 : vector<200x384xf32>
    %25 = vector.extract_strided_slice %24 {offsets = [192, 0], sizes = [8, 384], strides = [1, 1]} : vector<200x384xf32> to vector<8x384xf32>
    %26 = vector.extract_strided_slice %24 {offsets = [0, 0], sizes = [192, 384], strides = [1, 1]} : vector<200x384xf32> to vector<192x384xf32>
    %27 = tpu.concatenate %25, %26 in 0 : vector<8x384xf32>, vector<192x384xf32> -> vector<200x384xf32>
    %28 = vector.extract_strided_slice %24 {offsets = [8, 0], sizes = [192, 384], strides = [1, 1]} : vector<200x384xf32> to vector<192x384xf32>
    %29 = vector.extract_strided_slice %24 {offsets = [0, 0], sizes = [8, 384], strides = [1, 1]} : vector<200x384xf32> to vector<8x384xf32>
    %30 = tpu.concatenate %28, %29 in 0 : vector<192x384xf32>, vector<8x384xf32> -> vector<200x384xf32>
    %31 = vector.extract_strided_slice %27 {offsets = [0, 288], sizes = [200, 96], strides = [1, 1]} : vector<200x384xf32> to vector<200x96xf32>
    %32 = vector.extract_strided_slice %30 {offsets = [0, 0], sizes = [200, 96], strides = [1, 1]} : vector<200x384xf32> to vector<200x96xf32>
    %33 = tpu.concatenate %31, %24, %32 in 1 : vector<200x96xf32>, vector<200x384xf32>, vector<200x96xf32> -> vector<200x576xf32>
    %34 = arith.truncf %33 : vector<200x576xf32> to vector<200x576xbf16>
    %c0_7 = arith.constant 0 : index
    %c0_8 = arith.constant 0 : index
    %35 = vector.load %arg4[%c0_7, %c0_8] : memref<576x192xbf16, #tpu.memory_space<vmem>>, vector<576x192xbf16>
    %cst_9 = arith.constant dense<0.000000e+00> : vector<200x192xf32>
    %36 = tpu.matmul %34, %35, %cst_9 {dimension_numbers = #tpu.dot_dimension_numbers<[1], [0], [0], [1], [0, 0, 1, 1], [], []>} : vector<200x576xbf16>, vector<576x192xbf16>, vector<200x192xf32> -> vector<200x192xf32>
    %37 = vector.extract_strided_slice %36 {offsets = [0, 0], sizes = [200, 24], strides = [1, 1]} : vector<200x192xf32> to vector<200x24xf32>
    %38 = vector.extract_strided_slice %36 {offsets = [0, 24], sizes = [200, 24], strides = [1, 1]} : vector<200x192xf32> to vector<200x24xf32>
    %39 = vector.extract_strided_slice %36 {offsets = [0, 48], sizes = [200, 24], strides = [1, 1]} : vector<200x192xf32> to vector<200x24xf32>
    %40 = vector.extract_strided_slice %36 {offsets = [0, 72], sizes = [200, 24], strides = [1, 1]} : vector<200x192xf32> to vector<200x24xf32>
    %41 = vector.extract_strided_slice %36 {offsets = [0, 96], sizes = [200, 24], strides = [1, 1]} : vector<200x192xf32> to vector<200x24xf32>
    %42 = vector.extract_strided_slice %36 {offsets = [0, 120], sizes = [200, 24], strides = [1, 1]} : vector<200x192xf32> to vector<200x24xf32>
    %43 = vector.extract_strided_slice %36 {offsets = [0, 144], sizes = [200, 24], strides = [1, 1]} : vector<200x192xf32> to vector<200x24xf32>
    %44 = vector.extract_strided_slice %36 {offsets = [0, 168], sizes = [200, 24], strides = [1, 1]} : vector<200x192xf32> to vector<200x24xf32>
    %45 = arith.maximumf %37, %38 : vector<200x24xf32>
    %46 = arith.maximumf %39, %40 : vector<200x24xf32>
    %47 = arith.maximumf %41, %42 : vector<200x24xf32>
    %48 = arith.maximumf %43, %44 : vector<200x24xf32>
    %49 = arith.maximumf %45, %46 : vector<200x24xf32>
    %50 = arith.maximumf %47, %48 : vector<200x24xf32>
    %51 = arith.maximumf %49, %50 : vector<200x24xf32>
    %c0_10 = arith.constant 0 : index
    %c0_11 = arith.constant 0 : index
    %52 = vector.load %arg5[%c0_10, %c0_11] : memref<1x24xf32, #tpu.memory_space<vmem>>, vector<1x24xf32>
    %53 = vector.broadcast %52 : vector<1x24xf32> to vector<200x24xf32>
    %54 = arith.addf %51, %53 : vector<200x24xf32>
    %cst_12 = arith.constant 0.000000e+00 : f32
    %55 = vector.broadcast %cst_12 : f32 to vector<200x24xf32>
    %56 = arith.maximumf %54, %55 : vector<200x24xf32>
    %57 = vector.extract_strided_slice %56 {offsets = [0, 0], sizes = [8, 24], strides = [1, 1]} : vector<200x24xf32> to vector<8x24xf32>
    %c0_13 = arith.constant 0 : index
    %c0_14 = arith.constant 0 : index
    %c0_15 = arith.constant 0 : index
    %58 = vector.load %arg6[%c0_13, %c0_14, %c0_15] : memref<25x24x128xf32, #tpu.memory_space<vmem>>, vector<1x24x128xf32>
    %59 = vector.shape_cast %58 : vector<1x24x128xf32> to vector<24x128xf32>
    %cst_16 = arith.constant dense<0.000000e+00> : vector<8x128xf32>
    %60 = tpu.matmul %57, %59, %cst_16 {dimension_numbers = #tpu.dot_dimension_numbers<[1], [0], [0], [1], [0, 0, 1, 1], [], []>} : vector<8x24xf32>, vector<24x128xf32>, vector<8x128xf32> -> vector<8x128xf32>
    %61 = vector.extract_strided_slice %56 {offsets = [8, 0], sizes = [8, 24], strides = [1, 1]} : vector<200x24xf32> to vector<8x24xf32>
    %c1 = arith.constant 1 : index
    %c0_17 = arith.constant 0 : index
    %c0_18 = arith.constant 0 : index
    %62 = vector.load %arg6[%c1, %c0_17, %c0_18] : memref<25x24x128xf32, #tpu.memory_space<vmem>>, vector<1x24x128xf32>
    %63 = vector.shape_cast %62 : vector<1x24x128xf32> to vector<24x128xf32>
    %cst_19 = arith.constant dense<0.000000e+00> : vector<8x128xf32>
    %64 = tpu.matmul %61, %63, %cst_19 {dimension_numbers = #tpu.dot_dimension_numbers<[1], [0], [0], [1], [0, 0, 1, 1], [], []>} : vector<8x24xf32>, vector<24x128xf32>, vector<8x128xf32> -> vector<8x128xf32>
    %65 = vector.extract_strided_slice %56 {offsets = [16, 0], sizes = [8, 24], strides = [1, 1]} : vector<200x24xf32> to vector<8x24xf32>
    %c2 = arith.constant 2 : index
    %c0_20 = arith.constant 0 : index
    %c0_21 = arith.constant 0 : index
    %66 = vector.load %arg6[%c2, %c0_20, %c0_21] : memref<25x24x128xf32, #tpu.memory_space<vmem>>, vector<1x24x128xf32>
    %67 = vector.shape_cast %66 : vector<1x24x128xf32> to vector<24x128xf32>
    %cst_22 = arith.constant dense<0.000000e+00> : vector<8x128xf32>
    %68 = tpu.matmul %65, %67, %cst_22 {dimension_numbers = #tpu.dot_dimension_numbers<[1], [0], [0], [1], [0, 0, 1, 1], [], []>} : vector<8x24xf32>, vector<24x128xf32>, vector<8x128xf32> -> vector<8x128xf32>
    %69 = vector.extract_strided_slice %56 {offsets = [24, 0], sizes = [8, 24], strides = [1, 1]} : vector<200x24xf32> to vector<8x24xf32>
    %c3 = arith.constant 3 : index
    %c0_23 = arith.constant 0 : index
    %c0_24 = arith.constant 0 : index
    %70 = vector.load %arg6[%c3, %c0_23, %c0_24] : memref<25x24x128xf32, #tpu.memory_space<vmem>>, vector<1x24x128xf32>
    %71 = vector.shape_cast %70 : vector<1x24x128xf32> to vector<24x128xf32>
    %cst_25 = arith.constant dense<0.000000e+00> : vector<8x128xf32>
    %72 = tpu.matmul %69, %71, %cst_25 {dimension_numbers = #tpu.dot_dimension_numbers<[1], [0], [0], [1], [0, 0, 1, 1], [], []>} : vector<8x24xf32>, vector<24x128xf32>, vector<8x128xf32> -> vector<8x128xf32>
    %73 = vector.extract_strided_slice %56 {offsets = [32, 0], sizes = [8, 24], strides = [1, 1]} : vector<200x24xf32> to vector<8x24xf32>
    %c4 = arith.constant 4 : index
    %c0_26 = arith.constant 0 : index
    %c0_27 = arith.constant 0 : index
    %74 = vector.load %arg6[%c4, %c0_26, %c0_27] : memref<25x24x128xf32, #tpu.memory_space<vmem>>, vector<1x24x128xf32>
    %75 = vector.shape_cast %74 : vector<1x24x128xf32> to vector<24x128xf32>
    %cst_28 = arith.constant dense<0.000000e+00> : vector<8x128xf32>
    %76 = tpu.matmul %73, %75, %cst_28 {dimension_numbers = #tpu.dot_dimension_numbers<[1], [0], [0], [1], [0, 0, 1, 1], [], []>} : vector<8x24xf32>, vector<24x128xf32>, vector<8x128xf32> -> vector<8x128xf32>
    %77 = vector.extract_strided_slice %56 {offsets = [40, 0], sizes = [8, 24], strides = [1, 1]} : vector<200x24xf32> to vector<8x24xf32>
    %c5 = arith.constant 5 : index
    %c0_29 = arith.constant 0 : index
    %c0_30 = arith.constant 0 : index
    %78 = vector.load %arg6[%c5, %c0_29, %c0_30] : memref<25x24x128xf32, #tpu.memory_space<vmem>>, vector<1x24x128xf32>
    %79 = vector.shape_cast %78 : vector<1x24x128xf32> to vector<24x128xf32>
    %cst_31 = arith.constant dense<0.000000e+00> : vector<8x128xf32>
    %80 = tpu.matmul %77, %79, %cst_31 {dimension_numbers = #tpu.dot_dimension_numbers<[1], [0], [0], [1], [0, 0, 1, 1], [], []>} : vector<8x24xf32>, vector<24x128xf32>, vector<8x128xf32> -> vector<8x128xf32>
    %81 = vector.extract_strided_slice %56 {offsets = [48, 0], sizes = [8, 24], strides = [1, 1]} : vector<200x24xf32> to vector<8x24xf32>
    %c6 = arith.constant 6 : index
    %c0_32 = arith.constant 0 : index
    %c0_33 = arith.constant 0 : index
    %82 = vector.load %arg6[%c6, %c0_32, %c0_33] : memref<25x24x128xf32, #tpu.memory_space<vmem>>, vector<1x24x128xf32>
    %83 = vector.shape_cast %82 : vector<1x24x128xf32> to vector<24x128xf32>
    %cst_34 = arith.constant dense<0.000000e+00> : vector<8x128xf32>
    %84 = tpu.matmul %81, %83, %cst_34 {dimension_numbers = #tpu.dot_dimension_numbers<[1], [0], [0], [1], [0, 0, 1, 1], [], []>} : vector<8x24xf32>, vector<24x128xf32>, vector<8x128xf32> -> vector<8x128xf32>
    %85 = vector.extract_strided_slice %56 {offsets = [56, 0], sizes = [8, 24], strides = [1, 1]} : vector<200x24xf32> to vector<8x24xf32>
    %c7 = arith.constant 7 : index
    %c0_35 = arith.constant 0 : index
    %c0_36 = arith.constant 0 : index
    %86 = vector.load %arg6[%c7, %c0_35, %c0_36] : memref<25x24x128xf32, #tpu.memory_space<vmem>>, vector<1x24x128xf32>
    %87 = vector.shape_cast %86 : vector<1x24x128xf32> to vector<24x128xf32>
    %cst_37 = arith.constant dense<0.000000e+00> : vector<8x128xf32>
    %88 = tpu.matmul %85, %87, %cst_37 {dimension_numbers = #tpu.dot_dimension_numbers<[1], [0], [0], [1], [0, 0, 1, 1], [], []>} : vector<8x24xf32>, vector<24x128xf32>, vector<8x128xf32> -> vector<8x128xf32>
    %89 = vector.extract_strided_slice %56 {offsets = [64, 0], sizes = [8, 24], strides = [1, 1]} : vector<200x24xf32> to vector<8x24xf32>
    %c8 = arith.constant 8 : index
    %c0_38 = arith.constant 0 : index
    %c0_39 = arith.constant 0 : index
    %90 = vector.load %arg6[%c8, %c0_38, %c0_39] : memref<25x24x128xf32, #tpu.memory_space<vmem>>, vector<1x24x128xf32>
    %91 = vector.shape_cast %90 : vector<1x24x128xf32> to vector<24x128xf32>
    %cst_40 = arith.constant dense<0.000000e+00> : vector<8x128xf32>
    %92 = tpu.matmul %89, %91, %cst_40 {dimension_numbers = #tpu.dot_dimension_numbers<[1], [0], [0], [1], [0, 0, 1, 1], [], []>} : vector<8x24xf32>, vector<24x128xf32>, vector<8x128xf32> -> vector<8x128xf32>
    %93 = vector.extract_strided_slice %56 {offsets = [72, 0], sizes = [8, 24], strides = [1, 1]} : vector<200x24xf32> to vector<8x24xf32>
    %c9 = arith.constant 9 : index
    %c0_41 = arith.constant 0 : index
    %c0_42 = arith.constant 0 : index
    %94 = vector.load %arg6[%c9, %c0_41, %c0_42] : memref<25x24x128xf32, #tpu.memory_space<vmem>>, vector<1x24x128xf32>
    %95 = vector.shape_cast %94 : vector<1x24x128xf32> to vector<24x128xf32>
    %cst_43 = arith.constant dense<0.000000e+00> : vector<8x128xf32>
    %96 = tpu.matmul %93, %95, %cst_43 {dimension_numbers = #tpu.dot_dimension_numbers<[1], [0], [0], [1], [0, 0, 1, 1], [], []>} : vector<8x24xf32>, vector<24x128xf32>, vector<8x128xf32> -> vector<8x128xf32>
    %97 = vector.extract_strided_slice %56 {offsets = [80, 0], sizes = [8, 24], strides = [1, 1]} : vector<200x24xf32> to vector<8x24xf32>
    %c10 = arith.constant 10 : index
    %c0_44 = arith.constant 0 : index
    %c0_45 = arith.constant 0 : index
    %98 = vector.load %arg6[%c10, %c0_44, %c0_45] : memref<25x24x128xf32, #tpu.memory_space<vmem>>, vector<1x24x128xf32>
    %99 = vector.shape_cast %98 : vector<1x24x128xf32> to vector<24x128xf32>
    %cst_46 = arith.constant dense<0.000000e+00> : vector<8x128xf32>
    %100 = tpu.matmul %97, %99, %cst_46 {dimension_numbers = #tpu.dot_dimension_numbers<[1], [0], [0], [1], [0, 0, 1, 1], [], []>} : vector<8x24xf32>, vector<24x128xf32>, vector<8x128xf32> -> vector<8x128xf32>
    %101 = vector.extract_strided_slice %56 {offsets = [88, 0], sizes = [8, 24], strides = [1, 1]} : vector<200x24xf32> to vector<8x24xf32>
    %c11 = arith.constant 11 : index
    %c0_47 = arith.constant 0 : index
    %c0_48 = arith.constant 0 : index
    %102 = vector.load %arg6[%c11, %c0_47, %c0_48] : memref<25x24x128xf32, #tpu.memory_space<vmem>>, vector<1x24x128xf32>
    %103 = vector.shape_cast %102 : vector<1x24x128xf32> to vector<24x128xf32>
    %cst_49 = arith.constant dense<0.000000e+00> : vector<8x128xf32>
    %104 = tpu.matmul %101, %103, %cst_49 {dimension_numbers = #tpu.dot_dimension_numbers<[1], [0], [0], [1], [0, 0, 1, 1], [], []>} : vector<8x24xf32>, vector<24x128xf32>, vector<8x128xf32> -> vector<8x128xf32>
    %105 = vector.extract_strided_slice %56 {offsets = [96, 0], sizes = [8, 24], strides = [1, 1]} : vector<200x24xf32> to vector<8x24xf32>
    %c12 = arith.constant 12 : index
    %c0_50 = arith.constant 0 : index
    %c0_51 = arith.constant 0 : index
    %106 = vector.load %arg6[%c12, %c0_50, %c0_51] : memref<25x24x128xf32, #tpu.memory_space<vmem>>, vector<1x24x128xf32>
    %107 = vector.shape_cast %106 : vector<1x24x128xf32> to vector<24x128xf32>
    %cst_52 = arith.constant dense<0.000000e+00> : vector<8x128xf32>
    %108 = tpu.matmul %105, %107, %cst_52 {dimension_numbers = #tpu.dot_dimension_numbers<[1], [0], [0], [1], [0, 0, 1, 1], [], []>} : vector<8x24xf32>, vector<24x128xf32>, vector<8x128xf32> -> vector<8x128xf32>
    %109 = vector.extract_strided_slice %56 {offsets = [104, 0], sizes = [8, 24], strides = [1, 1]} : vector<200x24xf32> to vector<8x24xf32>
    %c13 = arith.constant 13 : index
    %c0_53 = arith.constant 0 : index
    %c0_54 = arith.constant 0 : index
    %110 = vector.load %arg6[%c13, %c0_53, %c0_54] : memref<25x24x128xf32, #tpu.memory_space<vmem>>, vector<1x24x128xf32>
    %111 = vector.shape_cast %110 : vector<1x24x128xf32> to vector<24x128xf32>
    %cst_55 = arith.constant dense<0.000000e+00> : vector<8x128xf32>
    %112 = tpu.matmul %109, %111, %cst_55 {dimension_numbers = #tpu.dot_dimension_numbers<[1], [0], [0], [1], [0, 0, 1, 1], [], []>} : vector<8x24xf32>, vector<24x128xf32>, vector<8x128xf32> -> vector<8x128xf32>
    %113 = vector.extract_strided_slice %56 {offsets = [112, 0], sizes = [8, 24], strides = [1, 1]} : vector<200x24xf32> to vector<8x24xf32>
    %c14 = arith.constant 14 : index
    %c0_56 = arith.constant 0 : index
    %c0_57 = arith.constant 0 : index
    %114 = vector.load %arg6[%c14, %c0_56, %c0_57] : memref<25x24x128xf32, #tpu.memory_space<vmem>>, vector<1x24x128xf32>
    %115 = vector.shape_cast %114 : vector<1x24x128xf32> to vector<24x128xf32>
    %cst_58 = arith.constant dense<0.000000e+00> : vector<8x128xf32>
    %116 = tpu.matmul %113, %115, %cst_58 {dimension_numbers = #tpu.dot_dimension_numbers<[1], [0], [0], [1], [0, 0, 1, 1], [], []>} : vector<8x24xf32>, vector<24x128xf32>, vector<8x128xf32> -> vector<8x128xf32>
    %117 = vector.extract_strided_slice %56 {offsets = [120, 0], sizes = [8, 24], strides = [1, 1]} : vector<200x24xf32> to vector<8x24xf32>
    %c15 = arith.constant 15 : index
    %c0_59 = arith.constant 0 : index
    %c0_60 = arith.constant 0 : index
    %118 = vector.load %arg6[%c15, %c0_59, %c0_60] : memref<25x24x128xf32, #tpu.memory_space<vmem>>, vector<1x24x128xf32>
    %119 = vector.shape_cast %118 : vector<1x24x128xf32> to vector<24x128xf32>
    %cst_61 = arith.constant dense<0.000000e+00> : vector<8x128xf32>
    %120 = tpu.matmul %117, %119, %cst_61 {dimension_numbers = #tpu.dot_dimension_numbers<[1], [0], [0], [1], [0, 0, 1, 1], [], []>} : vector<8x24xf32>, vector<24x128xf32>, vector<8x128xf32> -> vector<8x128xf32>
    %121 = vector.extract_strided_slice %56 {offsets = [128, 0], sizes = [8, 24], strides = [1, 1]} : vector<200x24xf32> to vector<8x24xf32>
    %c16 = arith.constant 16 : index
    %c0_62 = arith.constant 0 : index
    %c0_63 = arith.constant 0 : index
    %122 = vector.load %arg6[%c16, %c0_62, %c0_63] : memref<25x24x128xf32, #tpu.memory_space<vmem>>, vector<1x24x128xf32>
    %123 = vector.shape_cast %122 : vector<1x24x128xf32> to vector<24x128xf32>
    %cst_64 = arith.constant dense<0.000000e+00> : vector<8x128xf32>
    %124 = tpu.matmul %121, %123, %cst_64 {dimension_numbers = #tpu.dot_dimension_numbers<[1], [0], [0], [1], [0, 0, 1, 1], [], []>} : vector<8x24xf32>, vector<24x128xf32>, vector<8x128xf32> -> vector<8x128xf32>
    %125 = vector.extract_strided_slice %56 {offsets = [136, 0], sizes = [8, 24], strides = [1, 1]} : vector<200x24xf32> to vector<8x24xf32>
    %c17 = arith.constant 17 : index
    %c0_65 = arith.constant 0 : index
    %c0_66 = arith.constant 0 : index
    %126 = vector.load %arg6[%c17, %c0_65, %c0_66] : memref<25x24x128xf32, #tpu.memory_space<vmem>>, vector<1x24x128xf32>
    %127 = vector.shape_cast %126 : vector<1x24x128xf32> to vector<24x128xf32>
    %cst_67 = arith.constant dense<0.000000e+00> : vector<8x128xf32>
    %128 = tpu.matmul %125, %127, %cst_67 {dimension_numbers = #tpu.dot_dimension_numbers<[1], [0], [0], [1], [0, 0, 1, 1], [], []>} : vector<8x24xf32>, vector<24x128xf32>, vector<8x128xf32> -> vector<8x128xf32>
    %129 = vector.extract_strided_slice %56 {offsets = [144, 0], sizes = [8, 24], strides = [1, 1]} : vector<200x24xf32> to vector<8x24xf32>
    %c18 = arith.constant 18 : index
    %c0_68 = arith.constant 0 : index
    %c0_69 = arith.constant 0 : index
    %130 = vector.load %arg6[%c18, %c0_68, %c0_69] : memref<25x24x128xf32, #tpu.memory_space<vmem>>, vector<1x24x128xf32>
    %131 = vector.shape_cast %130 : vector<1x24x128xf32> to vector<24x128xf32>
    %cst_70 = arith.constant dense<0.000000e+00> : vector<8x128xf32>
    %132 = tpu.matmul %129, %131, %cst_70 {dimension_numbers = #tpu.dot_dimension_numbers<[1], [0], [0], [1], [0, 0, 1, 1], [], []>} : vector<8x24xf32>, vector<24x128xf32>, vector<8x128xf32> -> vector<8x128xf32>
    %133 = vector.extract_strided_slice %56 {offsets = [152, 0], sizes = [8, 24], strides = [1, 1]} : vector<200x24xf32> to vector<8x24xf32>
    %c19 = arith.constant 19 : index
    %c0_71 = arith.constant 0 : index
    %c0_72 = arith.constant 0 : index
    %134 = vector.load %arg6[%c19, %c0_71, %c0_72] : memref<25x24x128xf32, #tpu.memory_space<vmem>>, vector<1x24x128xf32>
    %135 = vector.shape_cast %134 : vector<1x24x128xf32> to vector<24x128xf32>
    %cst_73 = arith.constant dense<0.000000e+00> : vector<8x128xf32>
    %136 = tpu.matmul %133, %135, %cst_73 {dimension_numbers = #tpu.dot_dimension_numbers<[1], [0], [0], [1], [0, 0, 1, 1], [], []>} : vector<8x24xf32>, vector<24x128xf32>, vector<8x128xf32> -> vector<8x128xf32>
    %137 = vector.extract_strided_slice %56 {offsets = [160, 0], sizes = [8, 24], strides = [1, 1]} : vector<200x24xf32> to vector<8x24xf32>
    %c20 = arith.constant 20 : index
    %c0_74 = arith.constant 0 : index
    %c0_75 = arith.constant 0 : index
    %138 = vector.load %arg6[%c20, %c0_74, %c0_75] : memref<25x24x128xf32, #tpu.memory_space<vmem>>, vector<1x24x128xf32>
    %139 = vector.shape_cast %138 : vector<1x24x128xf32> to vector<24x128xf32>
    %cst_76 = arith.constant dense<0.000000e+00> : vector<8x128xf32>
    %140 = tpu.matmul %137, %139, %cst_76 {dimension_numbers = #tpu.dot_dimension_numbers<[1], [0], [0], [1], [0, 0, 1, 1], [], []>} : vector<8x24xf32>, vector<24x128xf32>, vector<8x128xf32> -> vector<8x128xf32>
    %141 = vector.extract_strided_slice %56 {offsets = [168, 0], sizes = [8, 24], strides = [1, 1]} : vector<200x24xf32> to vector<8x24xf32>
    %c21 = arith.constant 21 : index
    %c0_77 = arith.constant 0 : index
    %c0_78 = arith.constant 0 : index
    %142 = vector.load %arg6[%c21, %c0_77, %c0_78] : memref<25x24x128xf32, #tpu.memory_space<vmem>>, vector<1x24x128xf32>
    %143 = vector.shape_cast %142 : vector<1x24x128xf32> to vector<24x128xf32>
    %cst_79 = arith.constant dense<0.000000e+00> : vector<8x128xf32>
    %144 = tpu.matmul %141, %143, %cst_79 {dimension_numbers = #tpu.dot_dimension_numbers<[1], [0], [0], [1], [0, 0, 1, 1], [], []>} : vector<8x24xf32>, vector<24x128xf32>, vector<8x128xf32> -> vector<8x128xf32>
    %145 = vector.extract_strided_slice %56 {offsets = [176, 0], sizes = [8, 24], strides = [1, 1]} : vector<200x24xf32> to vector<8x24xf32>
    %c22 = arith.constant 22 : index
    %c0_80 = arith.constant 0 : index
    %c0_81 = arith.constant 0 : index
    %146 = vector.load %arg6[%c22, %c0_80, %c0_81] : memref<25x24x128xf32, #tpu.memory_space<vmem>>, vector<1x24x128xf32>
    %147 = vector.shape_cast %146 : vector<1x24x128xf32> to vector<24x128xf32>
    %cst_82 = arith.constant dense<0.000000e+00> : vector<8x128xf32>
    %148 = tpu.matmul %145, %147, %cst_82 {dimension_numbers = #tpu.dot_dimension_numbers<[1], [0], [0], [1], [0, 0, 1, 1], [], []>} : vector<8x24xf32>, vector<24x128xf32>, vector<8x128xf32> -> vector<8x128xf32>
    %149 = vector.extract_strided_slice %56 {offsets = [184, 0], sizes = [8, 24], strides = [1, 1]} : vector<200x24xf32> to vector<8x24xf32>
    %c23 = arith.constant 23 : index
    %c0_83 = arith.constant 0 : index
    %c0_84 = arith.constant 0 : index
    %150 = vector.load %arg6[%c23, %c0_83, %c0_84] : memref<25x24x128xf32, #tpu.memory_space<vmem>>, vector<1x24x128xf32>
    %151 = vector.shape_cast %150 : vector<1x24x128xf32> to vector<24x128xf32>
    %cst_85 = arith.constant dense<0.000000e+00> : vector<8x128xf32>
    %152 = tpu.matmul %149, %151, %cst_85 {dimension_numbers = #tpu.dot_dimension_numbers<[1], [0], [0], [1], [0, 0, 1, 1], [], []>} : vector<8x24xf32>, vector<24x128xf32>, vector<8x128xf32> -> vector<8x128xf32>
    %153 = vector.extract_strided_slice %56 {offsets = [192, 0], sizes = [8, 24], strides = [1, 1]} : vector<200x24xf32> to vector<8x24xf32>
    %c24 = arith.constant 24 : index
    %c0_86 = arith.constant 0 : index
    %c0_87 = arith.constant 0 : index
    %154 = vector.load %arg6[%c24, %c0_86, %c0_87] : memref<25x24x128xf32, #tpu.memory_space<vmem>>, vector<1x24x128xf32>
    %155 = vector.shape_cast %154 : vector<1x24x128xf32> to vector<24x128xf32>
    %cst_88 = arith.constant dense<0.000000e+00> : vector<8x128xf32>
    %156 = tpu.matmul %153, %155, %cst_88 {dimension_numbers = #tpu.dot_dimension_numbers<[1], [0], [0], [1], [0, 0, 1, 1], [], []>} : vector<8x24xf32>, vector<24x128xf32>, vector<8x128xf32> -> vector<8x128xf32>
    %157 = arith.addf %60, %64 : vector<8x128xf32>
    %158 = arith.addf %68, %72 : vector<8x128xf32>
    %159 = arith.addf %76, %80 : vector<8x128xf32>
    %160 = arith.addf %84, %88 : vector<8x128xf32>
    %161 = arith.addf %92, %96 : vector<8x128xf32>
    %162 = arith.addf %100, %104 : vector<8x128xf32>
    %163 = arith.addf %108, %112 : vector<8x128xf32>
    %164 = arith.addf %116, %120 : vector<8x128xf32>
    %165 = arith.addf %124, %128 : vector<8x128xf32>
    %166 = arith.addf %132, %136 : vector<8x128xf32>
    %167 = arith.addf %140, %144 : vector<8x128xf32>
    %168 = arith.addf %148, %152 : vector<8x128xf32>
    %169 = arith.addf %157, %158 : vector<8x128xf32>
    %170 = arith.addf %159, %160 : vector<8x128xf32>
    %171 = arith.addf %161, %162 : vector<8x128xf32>
    %172 = arith.addf %163, %164 : vector<8x128xf32>
    %173 = arith.addf %165, %166 : vector<8x128xf32>
    %174 = arith.addf %167, %168 : vector<8x128xf32>
    %175 = arith.addf %169, %170 : vector<8x128xf32>
    %176 = arith.addf %171, %172 : vector<8x128xf32>
    %177 = arith.addf %173, %174 : vector<8x128xf32>
    %178 = arith.addf %175, %176 : vector<8x128xf32>
    %179 = arith.addf %177, %156 : vector<8x128xf32>
    %180 = arith.addf %178, %179 : vector<8x128xf32>
    %c0_89 = arith.constant 0 : index
    %c0_90 = arith.constant 0 : index
    %181 = vector.load %arg7[%c0_89, %c0_90] : memref<1x128xf32, #tpu.memory_space<vmem>>, vector<1x128xf32>
    %182 = vector.broadcast %181 : vector<1x128xf32> to vector<8x128xf32>
    %183 = arith.addf %180, %182 : vector<8x128xf32>
    %cst_91 = arith.constant 0.000000e+00 : f32
    %184 = vector.broadcast %cst_91 : f32 to vector<8x128xf32>
    %185 = arith.maximumf %183, %184 : vector<8x128xf32>
    %c0_92 = arith.constant 0 : index
    %c0_93 = arith.constant 0 : index
    %186 = vector.load %arg8[%c0_92, %c0_93] : memref<128x128xf32, #tpu.memory_space<vmem>>, vector<128x128xf32>
    %cst_94 = arith.constant dense<0.000000e+00> : vector<8x128xf32>
    %187 = tpu.matmul %185, %186, %cst_94 {dimension_numbers = #tpu.dot_dimension_numbers<[1], [0], [0], [1], [0, 0, 1, 1], [], []>} : vector<8x128xf32>, vector<128x128xf32>, vector<8x128xf32> -> vector<8x128xf32>
    %c0_95 = arith.constant 0 : index
    %c0_96 = arith.constant 0 : index
    %188 = vector.load %arg9[%c0_95, %c0_96] : memref<1x128xf32, #tpu.memory_space<vmem>>, vector<1x128xf32>
    %189 = vector.broadcast %188 : vector<1x128xf32> to vector<8x128xf32>
    %190 = arith.addf %187, %189 : vector<8x128xf32>
    %c0_97 = arith.constant 0 : index
    %c0_98 = arith.constant 0 : index
    %191 = vector.load %arg10[%c0_97, %c0_98] : memref<8x128xf32, #tpu.memory_space<vmem>>, vector<8x128xf32>
    tpu.vector_store %arg10[%c0_97, %c0_98], %190 {strides = array<i32>} : memref<8x128xf32, #tpu.memory_space<vmem>>, vector<8x128xf32>,
    return
  }
  func.func @transform_0(%arg0: i32) -> (i32, i32, i32) {
    %c0_i32 = arith.constant 0 : i32
    %c0_i32_0 = arith.constant 0 : i32
    %c0_i32_1 = arith.constant 0 : i32
    return %arg0, %c0_i32, %c0_i32_0 : i32, i32, i32
  }
  func.func @transform_1(%arg0: i32) -> (i32, i32) {
    %c0_i32 = arith.constant 0 : i32
    %c0_i32_0 = arith.constant 0 : i32
    %c0_i32_1 = arith.constant 0 : i32
    return %c0_i32, %c0_i32_0 : i32, i32
  }
  func.func @transform_2(%arg0: i32) -> (i32, i32) {
    %c0_i32 = arith.constant 0 : i32
    %c0_i32_0 = arith.constant 0 : i32
    %c0_i32_1 = arith.constant 0 : i32
    return %c0_i32, %c0_i32_0 : i32, i32
  }
  func.func @transform_3(%arg0: i32) -> (i32, i32) {
    %c0_i32 = arith.constant 0 : i32
    %c0_i32_0 = arith.constant 0 : i32
    %c0_i32_1 = arith.constant 0 : i32
    return %c0_i32, %c0_i32_0 : i32, i32
  }
  func.func @transform_4(%arg0: i32) -> (i32, i32) {
    %c0_i32 = arith.constant 0 : i32
    %c0_i32_0 = arith.constant 0 : i32
    %c0_i32_1 = arith.constant 0 : i32
    return %c0_i32, %c0_i32_0 : i32, i32
  }
  func.func @transform_5(%arg0: i32) -> (i32, i32, i32) {
    %c0_i32 = arith.constant 0 : i32
    %c0_i32_0 = arith.constant 0 : i32
    %c0_i32_1 = arith.constant 0 : i32
    %c0_i32_2 = arith.constant 0 : i32
    return %c0_i32, %c0_i32_0, %c0_i32_1 : i32, i32, i32
  }
  func.func @transform_6(%arg0: i32) -> (i32, i32) {
    %c0_i32 = arith.constant 0 : i32
    %c0_i32_0 = arith.constant 0 : i32
    %c0_i32_1 = arith.constant 0 : i32
    return %c0_i32, %c0_i32_0 : i32, i32
  }
  func.func @transform_7(%arg0: i32) -> (i32, i32) {
    %c0_i32 = arith.constant 0 : i32
    %c0_i32_0 = arith.constant 0 : i32
    %c0_i32_1 = arith.constant 0 : i32
    return %c0_i32, %c0_i32_0 : i32, i32
  }
  func.func @transform_8(%arg0: i32) -> (i32, i32) {
    %c0_i32 = arith.constant 0 : i32
    %c0_i32_0 = arith.constant 0 : i32
    %c0_i32_1 = arith.constant 0 : i32
    return %c0_i32, %c0_i32_0 : i32, i32
  }
  func.func @transform_9(%arg0: i32) -> (i32, i32) {
    %c0_i32 = arith.constant 0 : i32
    %c0_i32_0 = arith.constant 0 : i32
    return %arg0, %c0_i32 : i32, i32
  }
}

</mosaic_0001>

<llo_original>
// kernel: cnn_early_forward.1
$region0: #{cnn_early_forward.1}
  #allocation0 [shape = 'u32[]', space=smem, size = 0x4, offset = 0x4, fixed_abs, tag = 'smem constant byte address 0x4 - core index']
  #allocation1 [shape = 'u32[72,128]{1,0:T(1,128)}', space=vmem, size = 0x9000, scoped, tag = 'internal scratch']
  %s0 = inlined_call_operand.vmem [shape: f32[2,200,216], index: 0, kind: input, shape index: {}]
  %s1 = inlined_call_operand.vmem [shape: bf16[216,3072], index: 1, kind: input, shape index: {}]
  %s2 = inlined_call_operand.vmem [shape: f32[1,384], index: 2, kind: input, shape index: {}]
  %s3 = inlined_call_operand.vmem [shape: bf16[576,192], index: 3, kind: input, shape index: {}]
  %s4 = inlined_call_operand.vmem [shape: f32[1,24], index: 4, kind: input, shape index: {}]
  %s5 = inlined_call_operand.vmem [shape: f32[25,24,128], index: 5, kind: input, shape index: {}]
  %s6 = inlined_call_operand.vmem [shape: f32[1,128], index: 6, kind: input, shape index: {}]
  %s7 = inlined_call_operand.vmem [shape: f32[128,128], index: 7, kind: input, shape index: {}]
  %s8 = inlined_call_operand.vmem [shape: f32[1,128], index: 8, kind: input, shape index: {}]
  %s9 = inlined_call_operand.hbm [shape: f32[16,128], index: 9, kind: output, shape index: {}]
  %s10 = sld [smem:[#allocation0]]
  $region69: #{cnn_early_forward.1} parent=0
    _
  %s12 = ssub.s32 1, %s10
  %s13 = scalar_select 0, %s12, %s10
  $region1: #{cnn_early_forward.1} parent=0
    #allocation2 [shape = 'u8[8192]{0}', space=vmem, size = 0x2000, scoped, tag = 'output window, operand 0']
    #allocation3 [shape = 's32[2]{0}', space=sflag, size = 0x8, scoped, tag = 'scoped memory for cnn_early_forward.1']
    %14 = vsyncpa [#allocation3], 0
    %s15 = scalar_lea.sflag [#allocation3], 1
    %16 = vsyncpa %s15, 0
    loop: start=0, step=1, limit=4
    $region2: #{cnn_early_forward.1} parent=1 // loop_pre_header
      _
    $region3: #{cnn_early_forward.1} parent=1 // loop_header
      %s18 = sphi 0, %s22
      %p19 = scmp.ge.s32.totalorder %s18, 4
      %s28 = sphi 0, %s30
      %s31 = sphi 0, %s28
      %s32 = sphi 0, %s31
      %s48 = sphi 0, %s32
      %s52 = sphi 0, %s52
      %s54 = sphi 0, %s52
      %s55 = sphi 0, %s54
      %s69 = sphi 0, %s55
      %s73 = sphi 0, %s73
      %s75 = sphi 0, %s73
      %s76 = sphi 0, %s75
      %s90 = sphi 0, %s76
      %s94 = sphi 0, %s94
      %s96 = sphi 0, %s94
      %s97 = sphi 0, %s96
      %s111 = sphi 0, %s97
      %s115 = sphi 0, %s115
      %s117 = sphi 0, %s115
      %s118 = sphi 0, %s117
      %s132 = sphi 0, %s118
      %s136 = sphi 0, %s136
      %s138 = sphi 0, %s136
      %s139 = sphi 0, %s138
      %s153 = sphi 0, %s139
      %s157 = sphi 0, %s157
      %s159 = sphi 0, %s157
      %s160 = sphi 0, %s159
      %s174 = sphi 0, %s160
      %s178 = sphi 0, %s178
      %s180 = sphi 0, %s178
      %s181 = sphi 0, %s180
      %s195 = sphi 0, %s181
      %s199 = sphi 0, %s199
      %s201 = sphi 0, %s199
      %s202 = sphi 0, %s201
      %s216 = sphi 0, %s202
      %s222 = sphi 0, %s224
      %s225 = sphi 0, %s222
      %s226 = sphi 0, %s225
      %s242 = sphi 0, %s226
    $region4: #{cnn_early_forward.1} parent=1 // loop_header_branch
      %21 = sbr.rel (%p19) target = $region8
    $region5: #{cnn_early_forward.1} parent=1 // loop_body
      %s23 = ssub.s32 %s18, 1
      %s24 = ssub.s32 %s18, 2
      %s25 = sadd.s32 %s18, 1
      %s26 = ssub.s32 %s18, %s25
      %p27 = scmp.eq.s32.totalorder %s26, 0
      %s29 = sadd.s32 %s28, 1
      %s30 = scalar_select %p27, %s28, %s29
      %p33 = pneg %p27
      %p34 = scmp.eq.s32.totalorder %s18, 1
      %p35 = por %p33, %p34
      %p36 = scmp.ne.s32.totalorder %s28, %s31
      %p37 = scmp.eq.s32.totalorder %s18, 0
      %p38 = por %p36, %p37
      %p39 = scmp.ne.s32.totalorder %s28, %s31
      %p40 = scmp.eq.s32.totalorder %s23, 1
      %p41 = por %p39, %p40
      %p42 = scmp.ne.s32.totalorder %s31, %s32
      %p43 = scmp.eq.s32.totalorder %s23, 0
      %p44 = por %p42, %p43
      %p45 = scmp.ne.s32.totalorder %s31, %s32
      %p46 = scmp.eq.s32.totalorder %s24, 1
      %p47 = por %p45, %p46
      %p49 = scmp.ne.s32.totalorder %s32, %s48
      %p50 = scmp.eq.s32.totalorder %s24, 0
      %p51 = por %p49, %p50
      %s53 = sadd.s32 %s52, 1
      %p56 = scmp.eq.s32.totalorder %s18, 1
      %p57 = scmp.ne.s32.totalorder %s52, %s54
      %p58 = scmp.eq.s32.totalorder %s18, 0
      %p59 = por %p57, %p58
      %p60 = scmp.ne.s32.totalorder %s52, %s54
      %p61 = scmp.eq.s32.totalorder %s23, 1
      %p62 = por %p60, %p61
      %p63 = scmp.ne.s32.totalorder %s54, %s55
      %p64 = scmp.eq.s32.totalorder %s23, 0
      %p65 = por %p63, %p64
      %p66 = scmp.ne.s32.totalorder %s54, %s55
      %p67 = scmp.eq.s32.totalorder %s24, 1
      %p68 = por %p66, %p67
      %p70 = scmp.ne.s32.totalorder %s55, %s69
      %p71 = scmp.eq.s32.totalorder %s24, 0
      %p72 = por %p70, %p71
      %s74 = sadd.s32 %s73, 1
      %p77 = scmp.eq.s32.totalorder %s18, 1
      %p78 = scmp.ne.s32.totalorder %s73, %s75
      %p79 = scmp.eq.s32.totalorder %s18, 0
      %p80 = por %p78, %p79
      %p81 = scmp.ne.s32.totalorder %s73, %s75
      %p82 = scmp.eq.s32.totalorder %s23, 1
      %p83 = por %p81, %p82
      %p84 = scmp.ne.s32.totalorder %s75, %s76
      %p85 = scmp.eq.s32.totalorder %s23, 0
      %p86 = por %p84, %p85
      %p87 = scmp.ne.s32.totalorder %s75, %s76
      %p88 = scmp.eq.s32.totalorder %s24, 1
      %p89 = por %p87, %p88
      %p91 = scmp.ne.s32.totalorder %s76, %s90
      %p92 = scmp.eq.s32.totalorder %s24, 0
      %p93 = por %p91, %p92
      %s95 = sadd.s32 %s94, 1
      %p98 = scmp.eq.s32.totalorder %s18, 1
      %p99 = scmp.ne.s32.totalorder %s94, %s96
      %p100 = scmp.eq.s32.totalorder %s18, 0
      %p101 = por %p99, %p100
      %p102 = scmp.ne.s32.totalorder %s94, %s96
      %p103 = scmp.eq.s32.totalorder %s23, 1
      %p104 = por %p102, %p103
      %p105 = scmp.ne.s32.totalorder %s96, %s97
      %p106 = scmp.eq.s32.totalorder %s23, 0
      %p107 = por %p105, %p106
      %p108 = scmp.ne.s32.totalorder %s96, %s97
      %p109 = scmp.eq.s32.totalorder %s24, 1
      %p110 = por %p108, %p109
      %p112 = scmp.ne.s32.totalorder %s97, %s111
      %p113 = scmp.eq.s32.totalorder %s24, 0
      %p114 = por %p112, %p113
      %s116 = sadd.s32 %s115, 1
      %p119 = scmp.eq.s32.totalorder %s18, 1
      %p120 = scmp.ne.s32.totalorder %s115, %s117
      %p121 = scmp.eq.s32.totalorder %s18, 0
      %p122 = por %p120, %p121
      %p123 = scmp.ne.s32.totalorder %s115, %s117
      %p124 = scmp.eq.s32.totalorder %s23, 1
      %p125 = por %p123, %p124
      %p126 = scmp.ne.s32.totalorder %s117, %s118
      %p127 = scmp.eq.s32.totalorder %s23, 0
      %p128 = por %p126, %p127
      %p129 = scmp.ne.s32.totalorder %s117, %s118
      %p130 = scmp.eq.s32.totalorder %s24, 1
      %p131 = por %p129, %p130
      %p133 = scmp.ne.s32.totalorder %s118, %s132
      %p134 = scmp.eq.s32.totalorder %s24, 0
      %p135 = por %p133, %p134
      %s137 = sadd.s32 %s136, 1
      %p140 = scmp.eq.s32.totalorder %s18, 1
      %p141 = scmp.ne.s32.totalorder %s136, %s138
      %p142 = scmp.eq.s32.totalorder %s18, 0
      %p143 = por %p141, %p142
      %p144 = scmp.ne.s32.totalorder %s136, %s138
      %p145 = scmp.eq.s32.totalorder %s23, 1
      %p146 = por %p144, %p145
      %p147 = scmp.ne.s32.totalorder %s138, %s139
      %p148 = scmp.eq.s32.totalorder %s23, 0
      %p149 = por %p147, %p148
      %p150 = scmp.ne.s32.totalorder %s138, %s139
      %p151 = scmp.eq.s32.totalorder %s24, 1
      %p152 = por %p150, %p151
      %p154 = scmp.ne.s32.totalorder %s139, %s153
      %p155 = scmp.eq.s32.totalorder %s24, 0
      %p156 = por %p154, %p155
      %s158 = sadd.s32 %s157, 1
      %p161 = scmp.eq.s32.totalorder %s18, 1
      %p162 = scmp.ne.s32.totalorder %s157, %s159
      %p163 = scmp.eq.s32.totalorder %s18, 0
      %p164 = por %p162, %p163
      %p165 = scmp.ne.s32.totalorder %s157, %s159
      %p166 = scmp.eq.s32.totalorder %s23, 1
      %p167 = por %p165, %p166
      %p168 = scmp.ne.s32.totalorder %s159, %s160
      %p169 = scmp.eq.s32.totalorder %s23, 0
      %p170 = por %p168, %p169
      %p171 = scmp.ne.s32.totalorder %s159, %s160
      %p172 = scmp.eq.s32.totalorder %s24, 1
      %p173 = por %p171, %p172
      %p175 = scmp.ne.s32.totalorder %s160, %s174
      %p176 = scmp.eq.s32.totalorder %s24, 0
      %p177 = por %p175, %p176
      %s179 = sadd.s32 %s178, 1
      %p182 = scmp.eq.s32.totalorder %s18, 1
      %p183 = scmp.ne.s32.totalorder %s178, %s180
      %p184 = scmp.eq.s32.totalorder %s18, 0
      %p185 = por %p183, %p184
      %p186 = scmp.ne.s32.totalorder %s178, %s180
      %p187 = scmp.eq.s32.totalorder %s23, 1
      %p188 = por %p186, %p187
      %p189 = scmp.ne.s32.totalorder %s180, %s181
      %p190 = scmp.eq.s32.totalorder %s23, 0
      %p191 = por %p189, %p190
      %p192 = scmp.ne.s32.totalorder %s180, %s181
      %p193 = scmp.eq.s32.totalorder %s24, 1
      %p194 = por %p192, %p193
      %p196 = scmp.ne.s32.totalorder %s181, %s195
      %p197 = scmp.eq.s32.totalorder %s24, 0
      %p198 = por %p196, %p197
      %s200 = sadd.s32 %s199, 1
      %p203 = scmp.eq.s32.totalorder %s18, 1
      %p204 = scmp.ne.s32.totalorder %s199, %s201
      %p205 = scmp.eq.s32.totalorder %s18, 0
      %p206 = por %p204, %p205
      %p207 = scmp.ne.s32.totalorder %s199, %s201
      %p208 = scmp.eq.s32.totalorder %s23, 1
      %p209 = por %p207, %p208
      %p210 = scmp.ne.s32.totalorder %s201, %s202
      %p211 = scmp.eq.s32.totalorder %s23, 0
      %p212 = por %p210, %p211
      %p213 = scmp.ne.s32.totalorder %s201, %s202
      %p214 = scmp.eq.s32.totalorder %s24, 1
      %p215 = por %p213, %p214
      %p217 = scmp.ne.s32.totalorder %s202, %s216
      %p218 = scmp.eq.s32.totalorder %s24, 0
      %p219 = por %p217, %p218
      %s220 = ssub.s32 %s18, %s25
      %p221 = scmp.eq.s32.totalorder %s220, 0
      %s223 = sadd.s32 %s222, 1
      %s224 = scalar_select %p221, %s222, %s223
      %p227 = pneg %p221
      %p228 = scmp.eq.s32.totalorder %s18, 1
      %p229 = por %p227, %p228
      %p230 = scmp.ne.s32.totalorder %s222, %s225
      %p231 = scmp.eq.s32.totalorder %s18, 0
      %p232 = por %p230, %p231
      %p233 = scmp.ne.s32.totalorder %s222, %s225
      %p234 = scmp.eq.s32.totalorder %s23, 1
      %p235 = por %p233, %p234
      %p236 = scmp.ne.s32.totalorder %s225, %s226
      %p237 = scmp.eq.s32.totalorder %s23, 0
      %p238 = por %p236, %p237
      %p239 = scmp.ne.s32.totalorder %s225, %s226
      %p240 = scmp.eq.s32.totalorder %s24, 1
      %p241 = por %p239, %p240
      %p243 = scmp.ne.s32.totalorder %s226, %s242
      %p244 = scmp.eq.s32.totalorder %s24, 0
      %p245 = por %p243, %p244
      %p246 = scmp.le.s32.totalorder 1, %s18
      %p247 = scmp.lt.s32.totalorder %s18, 3
      %p248 = pnand %p246, %p247
      %p249 = pneg %p248
      // Predicated region
      $region9: #{cnn_early_forward.1} parent=5 // pred_check
        _
      $region10: #{cnn_early_forward.1} parent=5 // pred_check_branch
        %251 = sbr.rel (%p248) target = $region12
      $region11: #{cnn_early_forward.1} parent=5 // pred_region
        %s252 = ssub.s32 %s18, 1
        // Predicated region
        $region13: #{cnn_early_forward.1} parent=11 // pred_check
          %p253 = pneg %p65
        $region14: #{cnn_early_forward.1} parent=11 // pred_check_branch
          %255 = sbr.rel (%p253) target = $region16
        $region15: #{cnn_early_forward.1} parent=11 // pred_region
          _
        $region16: #{cnn_early_forward.1} parent=11 // pred_fallthru
          _
        // Predicated region
        $region17: #{cnn_early_forward.1} parent=11 // pred_check
          %p256 = pneg %p86
        $region18: #{cnn_early_forward.1} parent=11 // pred_check_branch
          %258 = sbr.rel (%p256) target = $region20
        $region19: #{cnn_early_forward.1} parent=11 // pred_region
          _
        $region20: #{cnn_early_forward.1} parent=11 // pred_fallthru
          _
        // Predicated region
        $region21: #{cnn_early_forward.1} parent=11 // pred_check
          %p259 = pneg %p107
        $region22: #{cnn_early_forward.1} parent=11 // pred_check_branch
          %261 = sbr.rel (%p259) target = $region24
        $region23: #{cnn_early_forward.1} parent=11 // pred_region
          _
        $region24: #{cnn_early_forward.1} parent=11 // pred_fallthru
          _
        // Predicated region
        $region25: #{cnn_early_forward.1} parent=11 // pred_check
          %p262 = pneg %p128
        $region26: #{cnn_early_forward.1} parent=11 // pred_check_branch
          %264 = sbr.rel (%p262) target = $region28
        $region27: #{cnn_early_forward.1} parent=11 // pred_region
          _
        $region28: #{cnn_early_forward.1} parent=11 // pred_fallthru
          _
        // Predicated region
        $region29: #{cnn_early_forward.1} parent=11 // pred_check
          %p265 = pneg %p149
        $region30: #{cnn_early_forward.1} parent=11 // pred_check_branch
          %267 = sbr.rel (%p265) target = $region32
        $region31: #{cnn_early_forward.1} parent=11 // pred_region
          _
        $region32: #{cnn_early_forward.1} parent=11 // pred_fallthru
          _
        // Predicated region
        $region33: #{cnn_early_forward.1} parent=11 // pred_check
          %p268 = pneg %p170
        $region34: #{cnn_early_forward.1} parent=11 // pred_check_branch
          %270 = sbr.rel (%p268) target = $region36
        $region35: #{cnn_early_forward.1} parent=11 // pred_region
          _
        $region36: #{cnn_early_forward.1} parent=11 // pred_fallthru
          _
        // Predicated region
        $region37: #{cnn_early_forward.1} parent=11 // pred_check
          %p271 = pneg %p191
        $region38: #{cnn_early_forward.1} parent=11 // pred_check_branch
          %273 = sbr.rel (%p271) target = $region40
        $region39: #{cnn_early_forward.1} parent=11 // pred_region
          _
        $region40: #{cnn_early_forward.1} parent=11 // pred_fallthru
          _
        // Predicated region
        $region41: #{cnn_early_forward.1} parent=11 // pred_check
          %p274 = pneg %p212
        $region42: #{cnn_early_forward.1} parent=11 // pred_check_branch
          %276 = sbr.rel (%p274) target = $region44
        $region43: #{cnn_early_forward.1} parent=11 // pred_region
          _
        $region44: #{cnn_early_forward.1} parent=11 // pred_fallthru
          _
      $region12: #{cnn_early_forward.1} parent=5 // pred_fallthru
        _
      %p277 = scmp.lt.s32.totalorder %s18, 2
      // Predicated region
      $region45: #{cnn_early_forward.1} parent=5 // pred_check
        %p278 = pneg %p277
      $region46: #{cnn_early_forward.1} parent=5 // pred_check_branch
        %280 = sbr.rel (%p278) target = $region48
      $region47: #{cnn_early_forward.1} parent=5 // pred_region
        // Predicated region
        $region49: #{cnn_early_forward.1} parent=47 // pred_check
          %p281 = pneg %p38
        $region50: #{cnn_early_forward.1} parent=47 // pred_check_branch
          %283 = sbr.rel (%p281) target = $region52
        $region51: #{cnn_early_forward.1} parent=47 // pred_region
          %p284 = scmp.lt.s32.totalorder %s18, 1
          %s285 = scalar_select %p284, %s18, 1
          %s286 = smul.addr %s285, 50
          %s287 = smul.addr %s286, 8
          %s288 = scalar_lea.vmem %s0, %s287
        $region52: #{cnn_early_forward.1} parent=47 // pred_fallthru
          _
      $region48: #{cnn_early_forward.1} parent=5 // pred_fallthru
        _
      %p289 = scmp.le.s32.totalorder 1, %s18
      %p290 = scmp.lt.s32.totalorder %s18, 3
      %p291 = pnand %p289, %p290
      %p292 = pneg %p291
      // Predicated region
      $region53: #{cnn_early_forward.1} parent=5 // pred_check
        _
      $region54: #{cnn_early_forward.1} parent=5 // pred_check_branch
        %294 = sbr.rel (%p291) target = $region56
      $region55: #{cnn_early_forward.1} parent=5 // pred_region
        %s295 = ssub.s32 %s18, 1
        %p296 = scmp.lt.s32.totalorder %s23, 1
        %s297 = scalar_select %p296, %s23, 1
        %s298 = smul.addr %s297, 50
        %s299 = smul.addr %s298, 8
        %s300 = scalar_lea.vmem %s0, %s299
        %p301 = pneg %p44
        %p302 = pneg %p41
        %p303 = pneg %p65
        %p304 = pneg %p62
        %p305 = pneg %p86
        %p306 = pneg %p83
        %p307 = pneg %p107
        %p308 = pneg %p104
        %p309 = pneg %p128
        %p310 = pneg %p125
        %p311 = pneg %p149
        %p312 = pneg %p146
        %p313 = pneg %p170
        %p314 = pneg %p167
        %p315 = pneg %p191
        %p316 = pneg %p188
        %p317 = pneg %p212
        %p318 = pneg %p209
        %p319 = pneg %p238
        %p320 = pneg %p235
        %s321 = sand.u32 %s225, 1
        %s322 = scalar_lea.sflag [#allocation3], %s321
        %s323 = sand.u32 %s225, 1
        %s324 = smul.addr %s323, 8
        %s325 = scalar_lea.vmem [#allocation2], %s324
        %p326 = scmp.lt.s32.totalorder %s23, 1
        %s327 = scalar_select %p326, %s23, 1
        %s328 = smul.addr %s327, 50
        %s329 = smul.addr %s328, 8
        %s330 = scalar_lea.vmem %s0, %s329
        %v332 = vld [vmem:[%s330] sm:$0xff]
        %v333 = vld [vmem:[%s330 + $0x8] sm:$0xff]
        %v334 = vld [vmem:[%s330 + $0x10] sm:$0xff]
        %v335 = vld [vmem:[%s330 + $0x18] sm:$0xff]
        %v336 = vld [vmem:[%s330 + $0x20] sm:$0xff]
        %v337 = vld [vmem:[%s330 + $0x28] sm:$0xff]
        %v338 = vld [vmem:[%s330 + $0x30] sm:$0xff]
        %v339 = vld [vmem:[%s330 + $0x38] sm:$0xff]
        %v340 = vld [vmem:[%s330 + $0x40] sm:$0xff]
        %v341 = vld [vmem:[%s330 + $0x48] sm:$0xff]
        %v342 = vld [vmem:[%s330 + $0x50] sm:$0xff]
        %v343 = vld [vmem:[%s330 + $0x58] sm:$0xff]
        %v344 = vld [vmem:[%s330 + $0x60] sm:$0xff]
        %v345 = vld [vmem:[%s330 + $0x68] sm:$0xff]
        %v346 = vld [vmem:[%s330 + $0x70] sm:$0xff]
        %v347 = vld [vmem:[%s330 + $0x78] sm:$0xff]
        %v348 = vld [vmem:[%s330 + $0x80] sm:$0xff]
        %v349 = vld [vmem:[%s330 + $0x88] sm:$0xff]
        %v350 = vld [vmem:[%s330 + $0x90] sm:$0xff]
        %v351 = vld [vmem:[%s330 + $0x98] sm:$0xff]
        %v352 = vld [vmem:[%s330 + $0xa0] sm:$0xff]
        %v353 = vld [vmem:[%s330 + $0xa8] sm:$0xff]
        %v354 = vld [vmem:[%s330 + $0xb0] sm:$0xff]
        %v355 = vld [vmem:[%s330 + $0xb8] sm:$0xff]
        %v356 = vld [vmem:[%s330 + $0xc0] sm:$0xff]
        %v357 = vld [vmem:[%s330 + $0xc8] sm:$0xff]
        %v358 = vld [vmem:[%s330 + $0xd0] sm:$0xff]
        %v359 = vld [vmem:[%s330 + $0xd8] sm:$0xff]
        %v360 = vld [vmem:[%s330 + $0xe0] sm:$0xff]
        %v361 = vld [vmem:[%s330 + $0xe8] sm:$0xff]
        %v362 = vld [vmem:[%s330 + $0xf0] sm:$0xff]
        %v363 = vld [vmem:[%s330 + $0xf8] sm:$0xff]
        %v364 = vld [vmem:[%s330 + $0x100] sm:$0xff]
        %v365 = vld [vmem:[%s330 + $0x108] sm:$0xff]
        %v366 = vld [vmem:[%s330 + $0x110] sm:$0xff]
        %v367 = vld [vmem:[%s330 + $0x118] sm:$0xff]
        %v368 = vld [vmem:[%s330 + $0x120] sm:$0xff]
        %v369 = vld [vmem:[%s330 + $0x128] sm:$0xff]
        %v370 = vld [vmem:[%s330 + $0x130] sm:$0xff]
        %v371 = vld [vmem:[%s330 + $0x138] sm:$0xff]
        %v372 = vld [vmem:[%s330 + $0x140] sm:$0xff]
        %v373 = vld [vmem:[%s330 + $0x148] sm:$0xff]
        %v374 = vld [vmem:[%s330 + $0x150] sm:$0xff]
        %v375 = vld [vmem:[%s330 + $0x158] sm:$0xff]
        %v376 = vld [vmem:[%s330 + $0x160] sm:$0xff]
        %v377 = vld [vmem:[%s330 + $0x168] sm:$0xff]
        %v378 = vld [vmem:[%s330 + $0x170] sm:$0xff]
        %v379 = vld [vmem:[%s330 + $0x178] sm:$0xff]
        %v380 = vld [vmem:[%s330 + $0x180] sm:$0xff]
        %v381 = vld [vmem:[%s330 + $0x188] sm:$0xff]
        %v382 = vpack.c.bf16 %v334, %v332
        %v383 = vpack.c.bf16 %v335, %v333
        %v384 = vpack.c.bf16 %v338, %v336
        %v385 = vpack.c.bf16 %v339, %v337
        %v386 = vpack.c.bf16 %v342, %v340
        %v387 = vpack.c.bf16 %v343, %v341
        %v388 = vpack.c.bf16 %v346, %v344
        %v389 = vpack.c.bf16 %v347, %v345
        %v390 = vpack.c.bf16 %v350, %v348
        %v391 = vpack.c.bf16 %v351, %v349
        %v392 = vpack.c.bf16 %v354, %v352
        %v393 = vpack.c.bf16 %v355, %v353
        %v394 = vpack.c.bf16 %v358, %v356
        %v395 = vpack.c.bf16 %v359, %v357
        %v396 = vpack.c.bf16 %v362, %v360
        %v397 = vpack.c.bf16 %v363, %v361
        %v398 = vpack.c.bf16 %v366, %v364
        %v399 = vpack.c.bf16 %v367, %v365
        %v400 = vpack.c.bf16 %v370, %v368
        %v401 = vpack.c.bf16 %v371, %v369
        %v402 = vpack.c.bf16 %v374, %v372
        %v403 = vpack.c.bf16 %v375, %v373
        %v404 = vpack.c.bf16 %v378, %v376
        %v405 = vpack.c.bf16 %v379, %v377
        %v406 = vpack.c.bf16 %v380, %v380
        %v407 = vpack.c.bf16 %v381, %v381
        %v408 = vld [vmem:[%s1] sm:$0xff]
        %v409 = vld [vmem:[%s1 + $0x8] sm:$0xff]
        %v410 = vld [vmem:[%s1 + $0x10] sm:$0xff]
        %v411 = vld [vmem:[%s1 + $0x18] sm:$0xff]
        %v412 = vld [vmem:[%s1 + $0x20] sm:$0xff]
        %v413 = vld [vmem:[%s1 + $0x28] sm:$0xff]
        %v414 = vld [vmem:[%s1 + $0x30] sm:$0xff]
        %v415 = vld [vmem:[%s1 + $0x38] sm:$0xff]
        %v416 = vld [vmem:[%s1 + $0x40] sm:$0xff]
        %v417 = vld [vmem:[%s1 + $0x48] sm:$0xff]
        %v418 = vld [vmem:[%s1 + $0x50] sm:$0xff]
        %v419 = vld [vmem:[%s1 + $0x58] sm:$0xff]
        %v420 = vld [vmem:[%s1 + $0x60] sm:$0xff]
        %v421 = vld [vmem:[%s1 + $0x68] sm:$0xff]
        %v422 = vld [vmem:[%s1 + $0x70] sm:$0xff]
        %v423 = vld [vmem:[%s1 + $0x78] sm:$0xff]
        %v424 = vld [vmem:[%s1 + $0x80] sm:$0xff]
        %v425 = vld [vmem:[%s1 + $0x88] sm:$0xff]
        %v426 = vld [vmem:[%s1 + $0x90] sm:$0xff]
        %v427 = vld [vmem:[%s1 + $0x98] sm:$0xff]
        %v428 = vld [vmem:[%s1 + $0xa0] sm:$0xff]
        %v429 = vld [vmem:[%s1 + $0xa8] sm:$0xff]
        %v430 = vld [vmem:[%s1 + $0xb0] sm:$0xff]
        %v431 = vld [vmem:[%s1 + $0xb8] sm:$0xff]
        %v432 = vld [vmem:[%s1 + $0xc0] sm:$0xff]
        %v433 = vld [vmem:[%s1 + $0xc8] sm:$0xff]
        %v434 = vld [vmem:[%s1 + $0xd0] sm:$0xff]
        %v435 = vld [vmem:[%s1 + $0xd8] sm:$0xff]
        %v436 = vld [vmem:[%s1 + $0xe0] sm:$0xff]
        %v437 = vld [vmem:[%s1 + $0xe8] sm:$0xff]
        %v438 = vld [vmem:[%s1 + $0xf0] sm:$0xff]
        %v439 = vld [vmem:[%s1 + $0xf8] sm:$0xff]
        %v440 = vld [vmem:[%s1 + $0x100] sm:$0xff]
        %v441 = vld [vmem:[%s1 + $0x108] sm:$0xff]
        %v442 = vld [vmem:[%s1 + $0x110] sm:$0xff]
        %v443 = vld [vmem:[%s1 + $0x118] sm:$0xff]
        %v444 = vld [vmem:[%s1 + $0x120] sm:$0xff]
        %v445 = vld [vmem:[%s1 + $0x128] sm:$0xff]
        %v446 = vld [vmem:[%s1 + $0x130] sm:$0xff]
        %v447 = vld [vmem:[%s1 + $0x138] sm:$0xff]
        %v448 = vld [vmem:[%s1 + $0x140] sm:$0xff]
        %v449 = vld [vmem:[%s1 + $0x148] sm:$0xff]
        %v450 = vld [vmem:[%s1 + $0x150] sm:$0xff]
        %v451 = vld [vmem:[%s1 + $0x158] sm:$0xff]
        %v452 = vld [vmem:[%s1 + $0x160] sm:$0xff]
        %v453 = vld [vmem:[%s1 + $0x168] sm:$0xff]
        %v454 = vld [vmem:[%s1 + $0x170] sm:$0xff]
        %v455 = vld [vmem:[%s1 + $0x178] sm:$0xff]
        %v456 = vld [vmem:[%s1 + $0x180] sm:$0xff]
        %v457 = vld [vmem:[%s1 + $0x188] sm:$0xff]
        %v458 = vld [vmem:[%s1 + $0x190] sm:$0xff]
        %v459 = vld [vmem:[%s1 + $0x198] sm:$0xff]
        %v460 = vld [vmem:[%s1 + $0x1a0] sm:$0xff]
        %v461 = vld [vmem:[%s1 + $0x1a8] sm:$0xff]
        %v462 = vld [vmem:[%s1 + $0x1b0] sm:$0xff]
        %v463 = vld [vmem:[%s1 + $0x1b8] sm:$0xff]
        %v464 = vld [vmem:[%s1 + $0x1c0] sm:$0xff]
        %v465 = vld [vmem:[%s1 + $0x1c8] sm:$0xff]
        %v466 = vld [vmem:[%s1 + $0x1d0] sm:$0xff]
        %v467 = vld [vmem:[%s1 + $0x1d8] sm:$0xff]
        %v468 = vld [vmem:[%s1 + $0x1e0] sm:$0xff]
        %v469 = vld [vmem:[%s1 + $0x1e8] sm:$0xff]
        %v470 = vld [vmem:[%s1 + $0x1f0] sm:$0xff]
        %v471 = vld [vmem:[%s1 + $0x1f8] sm:$0xff]
        %v472 = vld [vmem:[%s1 + $0x200] sm:$0xff]
        %v473 = vld [vmem:[%s1 + $0x208] sm:$0xff]
        %v474 = vld [vmem:[%s1 + $0x210] sm:$0xff]
        %v475 = vld [vmem:[%s1 + $0x218] sm:$0xff]
        %v476 = vld [vmem:[%s1 + $0x220] sm:$0xff]
        %v477 = vld [vmem:[%s1 + $0x228] sm:$0xff]
        %v478 = vld [vmem:[%s1 + $0x230] sm:$0xff]
        %v479 = vld [vmem:[%s1 + $0x238] sm:$0xff]
        %v480 = vld [vmem:[%s1 + $0x240] sm:$0xff]
        %v481 = vld [vmem:[%s1 + $0x248] sm:$0xff]
        %v482 = vld [vmem:[%s1 + $0x250] sm:$0xff]
        %v483 = vld [vmem:[%s1 + $0x258] sm:$0xff]
        %v484 = vld [vmem:[%s1 + $0x260] sm:$0xff]
        %v485 = vld [vmem:[%s1 + $0x268] sm:$0xff]
        %v486 = vld [vmem:[%s1 + $0x270] sm:$0xff]
        %v487 = vld [vmem:[%s1 + $0x278] sm:$0xff]
        %v488 = vld [vmem:[%s1 + $0x280] sm:$0xff]
        %v489 = vld [vmem:[%s1 + $0x288] sm:$0xff]
        %v490 = vld [vmem:[%s1 + $0x290] sm:$0xff]
        %v491 = vld [vmem:[%s1 + $0x298] sm:$0xff]
        %v492 = vld [vmem:[%s1 + $0x2a0] sm:$0xff]
        %v493 = vld [vmem:[%s1 + $0x2a8] sm:$0xff]
        %v494 = vld [vmem:[%s1 + $0x2b0] sm:$0xff]
        %v495 = vld [vmem:[%s1 + $0x2b8] sm:$0xff]
        %v496 = vld [vmem:[%s1 + $0x2c0] sm:$0xff]
        %v497 = vld [vmem:[%s1 + $0x2c8] sm:$0xff]
        %v498 = vld [vmem:[%s1 + $0x2d0] sm:$0xff]
        %v499 = vld [vmem:[%s1 + $0x2d8] sm:$0xff]
        %v500 = vld [vmem:[%s1 + $0x2e0] sm:$0xff]
        %v501 = vld [vmem:[%s1 + $0x2e8] sm:$0xff]
        %v502 = vld [vmem:[%s1 + $0x2f0] sm:$0xff]
        %v503 = vld [vmem:[%s1 + $0x2f8] sm:$0xff]
        %v504 = vld [vmem:[%s1 + $0x300] sm:$0xff]
        %v505 = vld [vmem:[%s1 + $0x308] sm:$0xff]
        %v506 = vld [vmem:[%s1 + $0x310] sm:$0xff]
        %v507 = vld [vmem:[%s1 + $0x318] sm:$0xff]
        %v508 = vld [vmem:[%s1 + $0x320] sm:$0xff]
        %v509 = vld [vmem:[%s1 + $0x328] sm:$0xff]
        %v510 = vld [vmem:[%s1 + $0x330] sm:$0xff]
        %v511 = vld [vmem:[%s1 + $0x338] sm:$0xff]
        %v512 = vld [vmem:[%s1 + $0x340] sm:$0xff]
        %v513 = vld [vmem:[%s1 + $0x348] sm:$0xff]
        %v514 = vld [vmem:[%s1 + $0x350] sm:$0xff]
        %v515 = vld [vmem:[%s1 + $0x358] sm:$0xff]
        %v516 = vld [vmem:[%s1 + $0x360] sm:$0xff]
        %v517 = vld [vmem:[%s1 + $0x368] sm:$0xff]
        %v518 = vld [vmem:[%s1 + $0x370] sm:$0xff]
        %v519 = vld [vmem:[%s1 + $0x378] sm:$0xff]
        %v520 = vld [vmem:[%s1 + $0x380] sm:$0xff]
        %v521 = vld [vmem:[%s1 + $0x388] sm:$0xff]
        %v522 = vld [vmem:[%s1 + $0x390] sm:$0xff]
        %v523 = vld [vmem:[%s1 + $0x398] sm:$0xff]
        %v524 = vld [vmem:[%s1 + $0x3a0] sm:$0xff]
        %v525 = vld [vmem:[%s1 + $0x3a8] sm:$0xff]
        %v526 = vld [vmem:[%s1 + $0x3b0] sm:$0xff]
        %v527 = vld [vmem:[%s1 + $0x3b8] sm:$0xff]
        %v528 = vld [vmem:[%s1 + $0x3c0] sm:$0xff]
        %v529 = vld [vmem:[%s1 + $0x3c8] sm:$0xff]
        %v530 = vld [vmem:[%s1 + $0x3d0] sm:$0xff]
        %v531 = vld [vmem:[%s1 + $0x3d8] sm:$0xff]
        %v532 = vld [vmem:[%s1 + $0x3e0] sm:$0xff]
        %v533 = vld [vmem:[%s1 + $0x3e8] sm:$0xff]
        %v534 = vld [vmem:[%s1 + $0x3f0] sm:$0xff]
        %v535 = vld [vmem:[%s1 + $0x3f8] sm:$0xff]
        %v536 = vld [vmem:[%s1 + $0x400] sm:$0xff]
        %v537 = vld [vmem:[%s1 + $0x408] sm:$0xff]
        %v538 = vld [vmem:[%s1 + $0x410] sm:$0xff]
        %v539 = vld [vmem:[%s1 + $0x418] sm:$0xff]
        %v540 = vld [vmem:[%s1 + $0x420] sm:$0xff]
        %v541 = vld [vmem:[%s1 + $0x428] sm:$0xff]
        %v542 = vld [vmem:[%s1 + $0x430] sm:$0xff]
        %v543 = vld [vmem:[%s1 + $0x438] sm:$0xff]
        %v544 = vld [vmem:[%s1 + $0x440] sm:$0xff]
        %v545 = vld [vmem:[%s1 + $0x448] sm:$0xff]
        %v546 = vld [vmem:[%s1 + $0x450] sm:$0xff]
        %v547 = vld [vmem:[%s1 + $0x458] sm:$0xff]
        %v548 = vld [vmem:[%s1 + $0x460] sm:$0xff]
        %v549 = vld [vmem:[%s1 + $0x468] sm:$0xff]
        %v550 = vld [vmem:[%s1 + $0x470] sm:$0xff]
        %v551 = vld [vmem:[%s1 + $0x478] sm:$0xff]
        %v552 = vld [vmem:[%s1 + $0x480] sm:$0xff]
        %v553 = vld [vmem:[%s1 + $0x488] sm:$0xff]
        %v554 = vld [vmem:[%s1 + $0x490] sm:$0xff]
        %v555 = vld [vmem:[%s1 + $0x498] sm:$0xff]
        %v556 = vld [vmem:[%s1 + $0x4a0] sm:$0xff]
        %v557 = vld [vmem:[%s1 + $0x4a8] sm:$0xff]
        %v558 = vld [vmem:[%s1 + $0x4b0] sm:$0xff]
        %v559 = vld [vmem:[%s1 + $0x4b8] sm:$0xff]
        %v560 = vld [vmem:[%s1 + $0x4c0] sm:$0xff]
        %v561 = vld [vmem:[%s1 + $0x4c8] sm:$0xff]
        %v562 = vld [vmem:[%s1 + $0x4d0] sm:$0xff]
        %v563 = vld [vmem:[%s1 + $0x4d8] sm:$0xff]
        %v564 = vld [vmem:[%s1 + $0x4e0] sm:$0xff]
        %v565 = vld [vmem:[%s1 + $0x4e8] sm:$0xff]
        %v566 = vld [vmem:[%s1 + $0x4f0] sm:$0xff]
        %v567 = vld [vmem:[%s1 + $0x4f8] sm:$0xff]
        %v568 = vld [vmem:[%s1 + $0x500] sm:$0xff]
        %v569 = vld [vmem:[%s1 + $0x508] sm:$0xff]
        %v570 = vld [vmem:[%s1 + $0x510] sm:$0xff]
        %v571 = vld [vmem:[%s1 + $0x518] sm:$0xff]
        %v572 = vld [vmem:[%s1 + $0x520] sm:$0xff]
        %v573 = vld [vmem:[%s1 + $0x528] sm:$0xff]
        %v574 = vld [vmem:[%s1 + $0x530] sm:$0xff]
        %v575 = vld [vmem:[%s1 + $0x538] sm:$0xff]
        %v576 = vld [vmem:[%s1 + $0x540] sm:$0xff]
        %v577 = vld [vmem:[%s1 + $0x548] sm:$0xff]
        %v578 = vld [vmem:[%s1 + $0x550] sm:$0xff]
        %v579 = vld [vmem:[%s1 + $0x558] sm:$0xff]
        %v580 = vld [vmem:[%s1 + $0x560] sm:$0xff]
        %v581 = vld [vmem:[%s1 + $0x568] sm:$0xff]
        %v582 = vld [vmem:[%s1 + $0x570] sm:$0xff]
        %v583 = vld [vmem:[%s1 + $0x578] sm:$0xff]
        %v584 = vld [vmem:[%s1 + $0x580] sm:$0xff]
        %v585 = vld [vmem:[%s1 + $0x588] sm:$0xff]
        %v586 = vld [vmem:[%s1 + $0x590] sm:$0xff]
        %v587 = vld [vmem:[%s1 + $0x598] sm:$0xff]
        %v588 = vld [vmem:[%s1 + $0x5a0] sm:$0xff]
        %v589 = vld [vmem:[%s1 + $0x5a8] sm:$0xff]
        %v590 = vld [vmem:[%s1 + $0x5b0] sm:$0xff]
        %v591 = vld [vmem:[%s1 + $0x5b8] sm:$0xff]
        %v592 = vld [vmem:[%s1 + $0x5c0] sm:$0xff]
        %v593 = vld [vmem:[%s1 + $0x5c8] sm:$0xff]
        %v594 = vld [vmem:[%s1 + $0x5d0] sm:$0xff]
        %v595 = vld [vmem:[%s1 + $0x5d8] sm:$0xff]
        %v596 = vld [vmem:[%s1 + $0x5e0] sm:$0xff]
        %v597 = vld [vmem:[%s1 + $0x5e8] sm:$0xff]
        %v598 = vld [vmem:[%s1 + $0x5f0] sm:$0xff]
        %v599 = vld [vmem:[%s1 + $0x5f8] sm:$0xff]
        %v600 = vld [vmem:[%s1 + $0x600] sm:$0xff]
        %v601 = vld [vmem:[%s1 + $0x608] sm:$0xff]
        %v602 = vld [vmem:[%s1 + $0x610] sm:$0xff]
        %v603 = vld [vmem:[%s1 + $0x618] sm:$0xff]
        %v604 = vld [vmem:[%s1 + $0x620] sm:$0xff]
        %v605 = vld [vmem:[%s1 + $0x628] sm:$0xff]
        %v606 = vld [vmem:[%s1 + $0x630] sm:$0xff]
        %v607 = vld [vmem:[%s1 + $0x638] sm:$0xff]
        %v608 = vld [vmem:[%s1 + $0x640] sm:$0xff]
        %v609 = vld [vmem:[%s1 + $0x648] sm:$0xff]
        %v610 = vld [vmem:[%s1 + $0x650] sm:$0xff]
        %v611 = vld [vmem:[%s1 + $0x658] sm:$0xff]
        %v612 = vld [vmem:[%s1 + $0x660] sm:$0xff]
        %v613 = vld [vmem:[%s1 + $0x668] sm:$0xff]
        %v614 = vld [vmem:[%s1 + $0x670] sm:$0xff]
        %v615 = vld [vmem:[%s1 + $0x678] sm:$0xff]
        %v616 = vld [vmem:[%s1 + $0x680] sm:$0xff]
        %v617 = vld [vmem:[%s1 + $0x688] sm:$0xff]
        %v618 = vld [vmem:[%s1 + $0x690] sm:$0xff]
        %v619 = vld [vmem:[%s1 + $0x698] sm:$0xff]
        %v620 = vld [vmem:[%s1 + $0x6a0] sm:$0xff]
        %v621 = vld [vmem:[%s1 + $0x6a8] sm:$0xff]
        %v622 = vld [vmem:[%s1 + $0x6b0] sm:$0xff]
        %v623 = vld [vmem:[%s1 + $0x6b8] sm:$0xff]
        %v624 = vld [vmem:[%s1 + $0x6c0] sm:$0xff]
        %v625 = vld [vmem:[%s1 + $0x6c8] sm:$0xff]
        %v626 = vld [vmem:[%s1 + $0x6d0] sm:$0xff]
        %v627 = vld [vmem:[%s1 + $0x6d8] sm:$0xff]
        %v628 = vld [vmem:[%s1 + $0x6e0] sm:$0xff]
        %v629 = vld [vmem:[%s1 + $0x6e8] sm:$0xff]
        %v630 = vld [vmem:[%s1 + $0x6f0] sm:$0xff]
        %v631 = vld [vmem:[%s1 + $0x6f8] sm:$0xff]
        %v632 = vld [vmem:[%s1 + $0x700] sm:$0xff]
        %v633 = vld [vmem:[%s1 + $0x708] sm:$0xff]
        %v634 = vld [vmem:[%s1 + $0x710] sm:$0xff]
        %v635 = vld [vmem:[%s1 + $0x718] sm:$0xff]
        %v636 = vld [vmem:[%s1 + $0x720] sm:$0xff]
        %v637 = vld [vmem:[%s1 + $0x728] sm:$0xff]
        %v638 = vld [vmem:[%s1 + $0x730] sm:$0xff]
        %v639 = vld [vmem:[%s1 + $0x738] sm:$0xff]
        %v640 = vld [vmem:[%s1 + $0x740] sm:$0xff]
        %v641 = vld [vmem:[%s1 + $0x748] sm:$0xff]
        %v642 = vld [vmem:[%s1 + $0x750] sm:$0xff]
        %v643 = vld [vmem:[%s1 + $0x758] sm:$0xff]
        %v644 = vld [vmem:[%s1 + $0x760] sm:$0xff]
        %v645 = vld [vmem:[%s1 + $0x768] sm:$0xff]
        %v646 = vld [vmem:[%s1 + $0x770] sm:$0xff]
        %v647 = vld [vmem:[%s1 + $0x778] sm:$0xff]
        %v648 = vld [vmem:[%s1 + $0x780] sm:$0xff]
        %v649 = vld [vmem:[%s1 + $0x788] sm:$0xff]
        %v650 = vld [vmem:[%s1 + $0x790] sm:$0xff]
        %v651 = vld [vmem:[%s1 + $0x798] sm:$0xff]
        %v652 = vld [vmem:[%s1 + $0x7a0] sm:$0xff]
        %v653 = vld [vmem:[%s1 + $0x7a8] sm:$0xff]
        %v654 = vld [vmem:[%s1 + $0x7b0] sm:$0xff]
        %v655 = vld [vmem:[%s1 + $0x7b8] sm:$0xff]
        %v656 = vld [vmem:[%s1 + $0x7c0] sm:$0xff]
        %v657 = vld [vmem:[%s1 + $0x7c8] sm:$0xff]
        %v658 = vld [vmem:[%s1 + $0x7d0] sm:$0xff]
        %v659 = vld [vmem:[%s1 + $0x7d8] sm:$0xff]
        %v660 = vld [vmem:[%s1 + $0x7e0] sm:$0xff]
        %v661 = vld [vmem:[%s1 + $0x7e8] sm:$0xff]
        %v662 = vld [vmem:[%s1 + $0x7f0] sm:$0xff]
        %v663 = vld [vmem:[%s1 + $0x7f8] sm:$0xff]
        %v664 = vld [vmem:[%s1 + $0x800] sm:$0xff]
        %v665 = vld [vmem:[%s1 + $0x808] sm:$0xff]
        %v666 = vld [vmem:[%s1 + $0x810] sm:$0xff]
        %v667 = vld [vmem:[%s1 + $0x818] sm:$0xff]
        %v668 = vld [vmem:[%s1 + $0x820] sm:$0xff]
        %v669 = vld [vmem:[%s1 + $0x828] sm:$0xff]
        %v670 = vld [vmem:[%s1 + $0x830] sm:$0xff]
        %v671 = vld [vmem:[%s1 + $0x838] sm:$0xff]
        %v672 = vld [vmem:[%s1 + $0x840] sm:$0xff]
        %v673 = vld [vmem:[%s1 + $0x848] sm:$0xff]
        %v674 = vld [vmem:[%s1 + $0x850] sm:$0xff]
        %v675 = vld [vmem:[%s1 + $0x858] sm:$0xff]
        %v676 = vld [vmem:[%s1 + $0x860] sm:$0xff]
        %v677 = vld [vmem:[%s1 + $0x868] sm:$0xff]
        %v678 = vld [vmem:[%s1 + $0x870] sm:$0xff]
        %v679 = vld [vmem:[%s1 + $0x878] sm:$0xff]
        %v680 = vld [vmem:[%s1 + $0x880] sm:$0xff]
        %v681 = vld [vmem:[%s1 + $0x888] sm:$0xff]
        %v682 = vld [vmem:[%s1 + $0x890] sm:$0xff]
        %v683 = vld [vmem:[%s1 + $0x898] sm:$0xff]
        %v684 = vld [vmem:[%s1 + $0x8a0] sm:$0xff]
        %v685 = vld [vmem:[%s1 + $0x8a8] sm:$0xff]
        %v686 = vld [vmem:[%s1 + $0x8b0] sm:$0xff]
        %v687 = vld [vmem:[%s1 + $0x8b8] sm:$0xff]
        %v688 = vld [vmem:[%s1 + $0x8c0] sm:$0xff]
        %v689 = vld [vmem:[%s1 + $0x8c8] sm:$0xff]
        %v690 = vld [vmem:[%s1 + $0x8d0] sm:$0xff]
        %v691 = vld [vmem:[%s1 + $0x8d8] sm:$0xff]
        %v692 = vld [vmem:[%s1 + $0x8e0] sm:$0xff]
        %v693 = vld [vmem:[%s1 + $0x8e8] sm:$0xff]
        %v694 = vld [vmem:[%s1 + $0x8f0] sm:$0xff]
        %v695 = vld [vmem:[%s1 + $0x8f8] sm:$0xff]
        %v696 = vld [vmem:[%s1 + $0x900] sm:$0xff]
        %v697 = vld [vmem:[%s1 + $0x908] sm:$0xff]
        %v698 = vld [vmem:[%s1 + $0x910] sm:$0xff]
        %v699 = vld [vmem:[%s1 + $0x918] sm:$0xff]
        %v700 = vld [vmem:[%s1 + $0x920] sm:$0xff]
        %v701 = vld [vmem:[%s1 + $0x928] sm:$0xff]
        %v702 = vld [vmem:[%s1 + $0x930] sm:$0xff]
        %v703 = vld [vmem:[%s1 + $0x938] sm:$0xff]
        %v704 = vld [vmem:[%s1 + $0x940] sm:$0xff]
        %v705 = vld [vmem:[%s1 + $0x948] sm:$0xff]
        %v706 = vld [vmem:[%s1 + $0x950] sm:$0xff]
        %v707 = vld [vmem:[%s1 + $0x958] sm:$0xff]
        %v708 = vld [vmem:[%s1 + $0x960] sm:$0xff]
        %v709 = vld [vmem:[%s1 + $0x968] sm:$0xff]
        %v710 = vld [vmem:[%s1 + $0x970] sm:$0xff]
        %v711 = vld [vmem:[%s1 + $0x978] sm:$0xff]
        %v712 = vld [vmem:[%s1 + $0x980] sm:$0xff]
        %v713 = vld [vmem:[%s1 + $0x988] sm:$0xff]
        %v714 = vld [vmem:[%s1 + $0x990] sm:$0xff]
        %v715 = vld [vmem:[%s1 + $0x998] sm:$0xff]
        %v716 = vld [vmem:[%s1 + $0x9a0] sm:$0xff]
        %v717 = vld [vmem:[%s1 + $0x9a8] sm:$0xff]
        %v718 = vld [vmem:[%s1 + $0x9b0] sm:$0xff]
        %v719 = vld [vmem:[%s1 + $0x9b8] sm:$0xff]
        %v720 = vld [vmem:[%s1 + $0x9c0] sm:$0xff]
        %v721 = vld [vmem:[%s1 + $0x9c8] sm:$0xff]
        %v722 = vld [vmem:[%s1 + $0x9d0] sm:$0xff]
        %v723 = vld [vmem:[%s1 + $0x9d8] sm:$0xff]
        %v724 = vld [vmem:[%s1 + $0x9e0] sm:$0xff]
        %v725 = vld [vmem:[%s1 + $0x9e8] sm:$0xff]
        %v726 = vld [vmem:[%s1 + $0x9f0] sm:$0xff]
        %v727 = vld [vmem:[%s1 + $0x9f8] sm:$0xff]
        %v728 = vld [vmem:[%s1 + $0xa00] sm:$0xff]
        %v729 = vld [vmem:[%s1 + $0xa08] sm:$0xff]
        %v730 = vld [vmem:[%s1 + $0xa10] sm:$0xff]
        %v731 = vld [vmem:[%s1 + $0xa18] sm:$0xff]
        %v1056 = vunpack.c.l.b16 %v408
        %v1057 = vunpack.c.h.b16 %v408
        %v1058 = vunpack.c.l.b16 %v409
        %v1059 = vunpack.c.h.b16 %v409
        %v1060 = vunpack.c.l.b16 %v410
        %v1061 = vunpack.c.h.b16 %v410
        %v1062 = vunpack.c.l.b16 %v411
        %v1063 = vunpack.c.h.b16 %v411
        %v1064 = vunpack.c.l.b16 %v412
        %v1065 = vunpack.c.h.b16 %v412
        %v1066 = vunpack.c.l.b16 %v413
        %v1067 = vunpack.c.h.b16 %v413
        %v1068 = vunpack.c.l.b16 %v414
        %v1069 = vunpack.c.h.b16 %v414
        %v1070 = vunpack.c.l.b16 %v415
        %v1071 = vunpack.c.h.b16 %v415
        %v1072 = vunpack.c.l.b16 %v416
        %v1073 = vunpack.c.h.b16 %v416
        %v1074 = vunpack.c.l.b16 %v417
        %v1075 = vunpack.c.h.b16 %v417
        %v1076 = vunpack.c.l.b16 %v418
        %v1077 = vunpack.c.h.b16 %v418
        %v1078 = vunpack.c.l.b16 %v419
        %v1079 = vunpack.c.h.b16 %v419
        %v1080 = vunpack.c.l.b16 %v420
        %v1081 = vunpack.c.h.b16 %v420
        %v1082 = vunpack.c.l.b16 %v421
        %v1083 = vunpack.c.h.b16 %v421
        %v1084 = vunpack.c.l.b16 %v422
        %v1085 = vunpack.c.h.b16 %v422
        %v1086 = vunpack.c.l.b16 %v423
        %v1087 = vunpack.c.h.b16 %v423
        %v1088 = vunpack.c.l.b16 %v424
        %v1089 = vunpack.c.h.b16 %v424
        %v1090 = vunpack.c.l.b16 %v425
        %v1091 = vunpack.c.h.b16 %v425
        %v1092 = vunpack.c.l.b16 %v426
        %v1093 = vunpack.c.h.b16 %v426
        %v1094 = vunpack.c.l.b16 %v427
        %v1095 = vunpack.c.h.b16 %v427
        %v1096 = vunpack.c.l.b16 %v428
        %v1097 = vunpack.c.h.b16 %v428
        %v1098 = vunpack.c.l.b16 %v429
        %v1099 = vunpack.c.h.b16 %v429
        %v1100 = vunpack.c.l.b16 %v430
        %v1101 = vunpack.c.h.b16 %v430
        %v1102 = vunpack.c.l.b16 %v431
        %v1103 = vunpack.c.h.b16 %v431
        %v1104 = vunpack.c.l.b16 %v432
        %v1105 = vunpack.c.h.b16 %v432
        %v1106 = vunpack.c.l.b16 %v433
        %v1107 = vunpack.c.h.b16 %v433
        %v1108 = vunpack.c.l.b16 %v434
        %v1109 = vunpack.c.h.b16 %v434
        %v1110 = vunpack.c.l.b16 %v435
        %v1111 = vunpack.c.h.b16 %v435
        %v1112 = vunpack.c.l.b16 %v436
        %v1113 = vunpack.c.h.b16 %v436
        %v1114 = vunpack.c.l.b16 %v437
        %v1115 = vunpack.c.h.b16 %v437
        %v1116 = vunpack.c.l.b16 %v438
        %v1117 = vunpack.c.h.b16 %v438
        %v1118 = vunpack.c.l.b16 %v439
        %v1119 = vunpack.c.h.b16 %v439
        %v1120 = vunpack.c.l.b16 %v440
        %v1121 = vunpack.c.h.b16 %v440
        %v1122 = vunpack.c.l.b16 %v441
        %v1123 = vunpack.c.h.b16 %v441
        %v1124 = vunpack.c.l.b16 %v442
        %v1125 = vunpack.c.h.b16 %v442
        %v1126 = vunpack.c.l.b16 %v443
        %v1127 = vunpack.c.h.b16 %v443
        %v1128 = vunpack.c.l.b16 %v444
        %v1129 = vunpack.c.h.b16 %v444
        %v1130 = vunpack.c.l.b16 %v445
        %v1131 = vunpack.c.h.b16 %v445
        %v1132 = vunpack.c.l.b16 %v446
        %v1133 = vunpack.c.h.b16 %v446
        %v1134 = vunpack.c.l.b16 %v447
        %v1135 = vunpack.c.h.b16 %v447
        %v1136 = vunpack.c.l.b16 %v448
        %v1137 = vunpack.c.h.b16 %v448
        %v1138 = vunpack.c.l.b16 %v449
        %v1139 = vunpack.c.h.b16 %v449
        %v1140 = vunpack.c.l.b16 %v450
        %v1141 = vunpack.c.h.b16 %v450
        %v1142 = vunpack.c.l.b16 %v451
        %v1143 = vunpack.c.h.b16 %v451
        %v1144 = vunpack.c.l.b16 %v452
        %v1145 = vunpack.c.h.b16 %v452
        %v1146 = vunpack.c.l.b16 %v453
        %v1147 = vunpack.c.h.b16 %v453
        %v1148 = vunpack.c.l.b16 %v454
        %v1149 = vunpack.c.h.b16 %v454
        %v1150 = vunpack.c.l.b16 %v455
        %v1151 = vunpack.c.h.b16 %v455
        %v1152 = vunpack.c.l.b16 %v456
        %v1153 = vunpack.c.h.b16 %v456
        %v1154 = vunpack.c.l.b16 %v457
        %v1155 = vunpack.c.h.b16 %v457
        %v1156 = vunpack.c.l.b16 %v458
        %v1157 = vunpack.c.h.b16 %v458
        %v1158 = vunpack.c.l.b16 %v459
        %v1159 = vunpack.c.h.b16 %v459
        %v1160 = vunpack.c.l.b16 %v460
        %v1161 = vunpack.c.h.b16 %v460
        %v1162 = vunpack.c.l.b16 %v461
        %v1163 = vunpack.c.h.b16 %v461
        %v1164 = vunpack.c.l.b16 %v462
        %v1165 = vunpack.c.h.b16 %v462
        %v1166 = vunpack.c.l.b16 %v463
        %v1167 = vunpack.c.h.b16 %v463
        %v1168 = vunpack.c.l.b16 %v464
        %v1169 = vunpack.c.h.b16 %v464
        %v1170 = vunpack.c.l.b16 %v465
        %v1171 = vunpack.c.h.b16 %v465
        %v1172 = vunpack.c.l.b16 %v466
        %v1173 = vunpack.c.h.b16 %v466
        %v1174 = vunpack.c.l.b16 %v467
        %v1175 = vunpack.c.h.b16 %v467
        %v1176 = vunpack.c.l.b16 %v468
        %v1177 = vunpack.c.h.b16 %v468
        %v1178 = vunpack.c.l.b16 %v469
        %v1179 = vunpack.c.h.b16 %v469
        %v1180 = vunpack.c.l.b16 %v470
        %v1181 = vunpack.c.h.b16 %v470
        %v1182 = vunpack.c.l.b16 %v471
        %v1183 = vunpack.c.h.b16 %v471
        %v1184 = vunpack.c.l.b16 %v472
        %v1185 = vunpack.c.h.b16 %v472
        %v1186 = vunpack.c.l.b16 %v473
        %v1187 = vunpack.c.h.b16 %v473
        %v1188 = vunpack.c.l.b16 %v474
        %v1189 = vunpack.c.h.b16 %v474
        %v1190 = vunpack.c.l.b16 %v475
        %v1191 = vunpack.c.h.b16 %v475
        %v1192 = vunpack.c.l.b16 %v476
        %v1193 = vunpack.c.h.b16 %v476
        %v1194 = vunpack.c.l.b16 %v477
        %v1195 = vunpack.c.h.b16 %v477
        %v1196 = vunpack.c.l.b16 %v478
        %v1197 = vunpack.c.h.b16 %v478
        %v1198 = vunpack.c.l.b16 %v479
        %v1199 = vunpack.c.h.b16 %v479
        %v1200 = vunpack.c.l.b16 %v480
        %v1201 = vunpack.c.h.b16 %v480
        %v1202 = vunpack.c.l.b16 %v481
        %v1203 = vunpack.c.h.b16 %v481
        %v1204 = vunpack.c.l.b16 %v482
        %v1205 = vunpack.c.h.b16 %v482
        %v1206 = vunpack.c.l.b16 %v483
        %v1207 = vunpack.c.h.b16 %v483
        %v1208 = vunpack.c.l.b16 %v484
        %v1209 = vunpack.c.h.b16 %v484
        %v1210 = vunpack.c.l.b16 %v485
        %v1211 = vunpack.c.h.b16 %v485
        %v1212 = vunpack.c.l.b16 %v486
        %v1213 = vunpack.c.h.b16 %v486
        %v1214 = vunpack.c.l.b16 %v487
        %v1215 = vunpack.c.h.b16 %v487
        %v1216 = vunpack.c.l.b16 %v488
        %v1217 = vunpack.c.h.b16 %v488
        %v1218 = vunpack.c.l.b16 %v489
        %v1219 = vunpack.c.h.b16 %v489
        %v1220 = vunpack.c.l.b16 %v490
        %v1221 = vunpack.c.h.b16 %v490
        %v1222 = vunpack.c.l.b16 %v491
        %v1223 = vunpack.c.h.b16 %v491
        %v1224 = vunpack.c.l.b16 %v492
        %v1225 = vunpack.c.h.b16 %v492
        %v1226 = vunpack.c.l.b16 %v493
        %v1227 = vunpack.c.h.b16 %v493
        %v1228 = vunpack.c.l.b16 %v494
        %v1229 = vunpack.c.h.b16 %v494
        %v1230 = vunpack.c.l.b16 %v495
        %v1231 = vunpack.c.h.b16 %v495
        %v1232 = vunpack.c.l.b16 %v496
        %v1233 = vunpack.c.h.b16 %v496
        %v1234 = vunpack.c.l.b16 %v497
        %v1235 = vunpack.c.h.b16 %v497
        %v1236 = vunpack.c.l.b16 %v498
        %v1237 = vunpack.c.h.b16 %v498
        %v1238 = vunpack.c.l.b16 %v499
        %v1239 = vunpack.c.h.b16 %v499
        %v1240 = vunpack.c.l.b16 %v500
        %v1241 = vunpack.c.h.b16 %v500
        %v1242 = vunpack.c.l.b16 %v501
        %v1243 = vunpack.c.h.b16 %v501
        %v1244 = vunpack.c.l.b16 %v502
        %v1245 = vunpack.c.h.b16 %v502
        %v1246 = vunpack.c.l.b16 %v503
        %v1247 = vunpack.c.h.b16 %v503
        %v1248 = vunpack.c.l.b16 %v504
        %v1249 = vunpack.c.h.b16 %v504
        %v1250 = vunpack.c.l.b16 %v505
        %v1251 = vunpack.c.h.b16 %v505
        %v1252 = vunpack.c.l.b16 %v506
        %v1253 = vunpack.c.h.b16 %v506
        %v1254 = vunpack.c.l.b16 %v507
        %v1255 = vunpack.c.h.b16 %v507
        %v1256 = vunpack.c.l.b16 %v508
        %v1257 = vunpack.c.h.b16 %v508
        %v1258 = vunpack.c.l.b16 %v509
        %v1259 = vunpack.c.h.b16 %v509
        %v1260 = vunpack.c.l.b16 %v510
        %v1261 = vunpack.c.h.b16 %v510
        %v1262 = vunpack.c.l.b16 %v511
        %v1263 = vunpack.c.h.b16 %v511
        %v1264 = vunpack.c.l.b16 %v512
        %v1265 = vunpack.c.h.b16 %v512
        %v1266 = vunpack.c.l.b16 %v513
        %v1267 = vunpack.c.h.b16 %v513
        %v1268 = vunpack.c.l.b16 %v514
        %v1269 = vunpack.c.h.b16 %v514
        %v1270 = vunpack.c.l.b16 %v515
        %v1271 = vunpack.c.h.b16 %v515
        %v1272 = vunpack.c.l.b16 %v516
        %v1273 = vunpack.c.h.b16 %v516
        %v1274 = vunpack.c.l.b16 %v517
        %v1275 = vunpack.c.h.b16 %v517
        %v1276 = vunpack.c.l.b16 %v518
        %v1277 = vunpack.c.h.b16 %v518
        %v1278 = vunpack.c.l.b16 %v519
        %v1279 = vunpack.c.h.b16 %v519
        %v1280 = vunpack.c.l.b16 %v520
        %v1281 = vunpack.c.h.b16 %v520
        %v1282 = vunpack.c.l.b16 %v521
        %v1283 = vunpack.c.h.b16 %v521
        %v1284 = vunpack.c.l.b16 %v522
        %v1285 = vunpack.c.h.b16 %v522
        %v1286 = vunpack.c.l.b16 %v523
        %v1287 = vunpack.c.h.b16 %v523
        %v1288 = vunpack.c.l.b16 %v524
        %v1289 = vunpack.c.h.b16 %v524
        %v1290 = vunpack.c.l.b16 %v525
        %v1291 = vunpack.c.h.b16 %v525
        %v1292 = vunpack.c.l.b16 %v526
        %v1293 = vunpack.c.h.b16 %v526
        %v1294 = vunpack.c.l.b16 %v527
        %v1295 = vunpack.c.h.b16 %v527
        %v1296 = vunpack.c.l.b16 %v528
        %v1297 = vunpack.c.h.b16 %v528
        %v1298 = vunpack.c.l.b16 %v529
        %v1299 = vunpack.c.h.b16 %v529
        %v1300 = vunpack.c.l.b16 %v530
        %v1301 = vunpack.c.h.b16 %v530
        %v1302 = vunpack.c.l.b16 %v531
        %v1303 = vunpack.c.h.b16 %v531
        %v1304 = vunpack.c.l.b16 %v532
        %v1305 = vunpack.c.h.b16 %v532
        %v1306 = vunpack.c.l.b16 %v533
        %v1307 = vunpack.c.h.b16 %v533
        %v1308 = vunpack.c.l.b16 %v534
        %v1309 = vunpack.c.h.b16 %v534
        %v1310 = vunpack.c.l.b16 %v535
        %v1311 = vunpack.c.h.b16 %v535
        %v1312 = vunpack.c.l.b16 %v536
        %v1313 = vunpack.c.h.b16 %v536
        %v1314 = vunpack.c.l.b16 %v537
        %v1315 = vunpack.c.h.b16 %v537
        %v1316 = vunpack.c.l.b16 %v538
        %v1317 = vunpack.c.h.b16 %v538
        %v1318 = vunpack.c.l.b16 %v539
        %v1319 = vunpack.c.h.b16 %v539
        %v1320 = vunpack.c.l.b16 %v540
        %v1321 = vunpack.c.h.b16 %v540
        %v1322 = vunpack.c.l.b16 %v541
        %v1323 = vunpack.c.h.b16 %v541
        %v1324 = vunpack.c.l.b16 %v542
        %v1325 = vunpack.c.h.b16 %v542
        %v1326 = vunpack.c.l.b16 %v543
        %v1327 = vunpack.c.h.b16 %v543
        %v1328 = vunpack.c.l.b16 %v544
        %v1329 = vunpack.c.h.b16 %v544
        %v1330 = vunpack.c.l.b16 %v545
        %v1331 = vunpack.c.h.b16 %v545
        %v1332 = vunpack.c.l.b16 %v546
        %v1333 = vunpack.c.h.b16 %v546
        %v1334 = vunpack.c.l.b16 %v547
        %v1335 = vunpack.c.h.b16 %v547
        %v1336 = vunpack.c.l.b16 %v548
        %v1337 = vunpack.c.h.b16 %v548
        %v1338 = vunpack.c.l.b16 %v549
        %v1339 = vunpack.c.h.b16 %v549
        %v1340 = vunpack.c.l.b16 %v550
        %v1341 = vunpack.c.h.b16 %v550
        %v1342 = vunpack.c.l.b16 %v551
        %v1343 = vunpack.c.h.b16 %v551
        %v1344 = vunpack.c.l.b16 %v552
        %v1345 = vunpack.c.h.b16 %v552
        %v1346 = vunpack.c.l.b16 %v553
        %v1347 = vunpack.c.h.b16 %v553
        %v1348 = vunpack.c.l.b16 %v554
        %v1349 = vunpack.c.h.b16 %v554
        %v1350 = vunpack.c.l.b16 %v555
        %v1351 = vunpack.c.h.b16 %v555
        %v1352 = vunpack.c.l.b16 %v556
        %v1353 = vunpack.c.h.b16 %v556
        %v1354 = vunpack.c.l.b16 %v557
        %v1355 = vunpack.c.h.b16 %v557
        %v1356 = vunpack.c.l.b16 %v558
        %v1357 = vunpack.c.h.b16 %v558
        %v1358 = vunpack.c.l.b16 %v559
        %v1359 = vunpack.c.h.b16 %v559
        %v1360 = vunpack.c.l.b16 %v560
        %v1361 = vunpack.c.h.b16 %v560
        %v1362 = vunpack.c.l.b16 %v561
        %v1363 = vunpack.c.h.b16 %v561
        %v1364 = vunpack.c.l.b16 %v562
        %v1365 = vunpack.c.h.b16 %v562
        %v1366 = vunpack.c.l.b16 %v563
        %v1367 = vunpack.c.h.b16 %v563
        %v1368 = vunpack.c.l.b16 %v564
        %v1369 = vunpack.c.h.b16 %v564
        %v1370 = vunpack.c.l.b16 %v565
        %v1371 = vunpack.c.h.b16 %v565
        %v1372 = vunpack.c.l.b16 %v566
        %v1373 = vunpack.c.h.b16 %v566
        %v1374 = vunpack.c.l.b16 %v567
        %v1375 = vunpack.c.h.b16 %v567
        %v1376 = vunpack.c.l.b16 %v568
        %v1377 = vunpack.c.h.b16 %v568
        %v1378 = vunpack.c.l.b16 %v569
        %v1379 = vunpack.c.h.b16 %v569
        %v1380 = vunpack.c.l.b16 %v570
        %v1381 = vunpack.c.h.b16 %v570
        %v1382 = vunpack.c.l.b16 %v571
        %v1383 = vunpack.c.h.b16 %v571
        %v1384 = vunpack.c.l.b16 %v572
        %v1385 = vunpack.c.h.b16 %v572
        %v1386 = vunpack.c.l.b16 %v573
        %v1387 = vunpack.c.h.b16 %v573
        %v1388 = vunpack.c.l.b16 %v574
        %v1389 = vunpack.c.h.b16 %v574
        %v1390 = vunpack.c.l.b16 %v575
        %v1391 = vunpack.c.h.b16 %v575
        %v1392 = vunpack.c.l.b16 %v576
        %v1393 = vunpack.c.h.b16 %v576
        %v1394 = vunpack.c.l.b16 %v577
        %v1395 = vunpack.c.h.b16 %v577
        %v1396 = vunpack.c.l.b16 %v578
        %v1397 = vunpack.c.h.b16 %v578
        %v1398 = vunpack.c.l.b16 %v579
        %v1399 = vunpack.c.h.b16 %v579
        %v1400 = vunpack.c.l.b16 %v580
        %v1401 = vunpack.c.h.b16 %v580
        %v1402 = vunpack.c.l.b16 %v581
        %v1403 = vunpack.c.h.b16 %v581
        %v1404 = vunpack.c.l.b16 %v582
        %v1405 = vunpack.c.h.b16 %v582
        %v1406 = vunpack.c.l.b16 %v583
        %v1407 = vunpack.c.h.b16 %v583
        %v1408 = vunpack.c.l.b16 %v584
        %v1409 = vunpack.c.h.b16 %v584
        %v1410 = vunpack.c.l.b16 %v585
        %v1411 = vunpack.c.h.b16 %v585
        %v1412 = vunpack.c.l.b16 %v586
        %v1413 = vunpack.c.h.b16 %v586
        %v1414 = vunpack.c.l.b16 %v587
        %v1415 = vunpack.c.h.b16 %v587
        %v1416 = vunpack.c.l.b16 %v588
        %v1417 = vunpack.c.h.b16 %v588
        %v1418 = vunpack.c.l.b16 %v589
        %v1419 = vunpack.c.h.b16 %v589
        %v1420 = vunpack.c.l.b16 %v590
        %v1421 = vunpack.c.h.b16 %v590
        %v1422 = vunpack.c.l.b16 %v591
        %v1423 = vunpack.c.h.b16 %v591
        %v1424 = vunpack.c.l.b16 %v592
        %v1425 = vunpack.c.h.b16 %v592
        %v1426 = vunpack.c.l.b16 %v593
        %v1427 = vunpack.c.h.b16 %v593
        %v1428 = vunpack.c.l.b16 %v594
        %v1429 = vunpack.c.h.b16 %v594
        %v1430 = vunpack.c.l.b16 %v595
        %v1431 = vunpack.c.h.b16 %v595
        %v1432 = vunpack.c.l.b16 %v596
        %v1433 = vunpack.c.h.b16 %v596
        %v1434 = vunpack.c.l.b16 %v597
        %v1435 = vunpack.c.h.b16 %v597
        %v1436 = vunpack.c.l.b16 %v598
        %v1437 = vunpack.c.h.b16 %v598
        %v1438 = vunpack.c.l.b16 %v599
        %v1439 = vunpack.c.h.b16 %v599
        %v1440 = vunpack.c.l.b16 %v600
        %v1441 = vunpack.c.h.b16 %v600
        %v1442 = vunpack.c.l.b16 %v601
        %v1443 = vunpack.c.h.b16 %v601
        %v1444 = vunpack.c.l.b16 %v602
        %v1445 = vunpack.c.h.b16 %v602
        %v1446 = vunpack.c.l.b16 %v603
        %v1447 = vunpack.c.h.b16 %v603
        %v1448 = vunpack.c.l.b16 %v604
        %v1449 = vunpack.c.h.b16 %v604
        %v1450 = vunpack.c.l.b16 %v605
        %v1451 = vunpack.c.h.b16 %v605
        %v1452 = vunpack.c.l.b16 %v606
        %v1453 = vunpack.c.h.b16 %v606
        %v1454 = vunpack.c.l.b16 %v607
        %v1455 = vunpack.c.h.b16 %v607
        %v1456 = vunpack.c.l.b16 %v608
        %v1457 = vunpack.c.h.b16 %v608
        %v1458 = vunpack.c.l.b16 %v609
        %v1459 = vunpack.c.h.b16 %v609
        %v1460 = vunpack.c.l.b16 %v610
        %v1461 = vunpack.c.h.b16 %v610
        %v1462 = vunpack.c.l.b16 %v611
        %v1463 = vunpack.c.h.b16 %v611
        %v1464 = vunpack.c.l.b16 %v612
        %v1465 = vunpack.c.h.b16 %v612
        %v1466 = vunpack.c.l.b16 %v613
        %v1467 = vunpack.c.h.b16 %v613
        %v1468 = vunpack.c.l.b16 %v614
        %v1469 = vunpack.c.h.b16 %v614
        %v1470 = vunpack.c.l.b16 %v615
        %v1471 = vunpack.c.h.b16 %v615
        %v1472 = vunpack.c.l.b16 %v616
        %v1473 = vunpack.c.h.b16 %v616
        %v1474 = vunpack.c.l.b16 %v617
        %v1475 = vunpack.c.h.b16 %v617
        %v1476 = vunpack.c.l.b16 %v618
        %v1477 = vunpack.c.h.b16 %v618
        %v1478 = vunpack.c.l.b16 %v619
        %v1479 = vunpack.c.h.b16 %v619
        %v1480 = vunpack.c.l.b16 %v620
        %v1481 = vunpack.c.h.b16 %v620
        %v1482 = vunpack.c.l.b16 %v621
        %v1483 = vunpack.c.h.b16 %v621
        %v1484 = vunpack.c.l.b16 %v622
        %v1485 = vunpack.c.h.b16 %v622
        %v1486 = vunpack.c.l.b16 %v623
        %v1487 = vunpack.c.h.b16 %v623
        %v1488 = vunpack.c.l.b16 %v624
        %v1489 = vunpack.c.h.b16 %v624
        %v1490 = vunpack.c.l.b16 %v625
        %v1491 = vunpack.c.h.b16 %v625
        %v1492 = vunpack.c.l.b16 %v626
        %v1493 = vunpack.c.h.b16 %v626
        %v1494 = vunpack.c.l.b16 %v627
        %v1495 = vunpack.c.h.b16 %v627
        %v1496 = vunpack.c.l.b16 %v628
        %v1497 = vunpack.c.h.b16 %v628
        %v1498 = vunpack.c.l.b16 %v629
        %v1499 = vunpack.c.h.b16 %v629
        %v1500 = vunpack.c.l.b16 %v630
        %v1501 = vunpack.c.h.b16 %v630
        %v1502 = vunpack.c.l.b16 %v631
        %v1503 = vunpack.c.h.b16 %v631
        %v1504 = vunpack.c.l.b16 %v632
        %v1505 = vunpack.c.h.b16 %v632
        %v1506 = vunpack.c.l.b16 %v633
        %v1507 = vunpack.c.h.b16 %v633
        %v1508 = vunpack.c.l.b16 %v634
        %v1509 = vunpack.c.h.b16 %v634
        %v1510 = vunpack.c.l.b16 %v635
        %v1511 = vunpack.c.h.b16 %v635
        %v1512 = vunpack.c.l.b16 %v636
        %v1513 = vunpack.c.h.b16 %v636
        %v1514 = vunpack.c.l.b16 %v637
        %v1515 = vunpack.c.h.b16 %v637
        %v1516 = vunpack.c.l.b16 %v638
        %v1517 = vunpack.c.h.b16 %v638
        %v1518 = vunpack.c.l.b16 %v639
        %v1519 = vunpack.c.h.b16 %v639
        %v1520 = vunpack.c.l.b16 %v640
        %v1521 = vunpack.c.h.b16 %v640
        %v1522 = vunpack.c.l.b16 %v641
        %v1523 = vunpack.c.h.b16 %v641
        %v1524 = vunpack.c.l.b16 %v642
        %v1525 = vunpack.c.h.b16 %v642
        %v1526 = vunpack.c.l.b16 %v643
        %v1527 = vunpack.c.h.b16 %v643
        %v1528 = vunpack.c.l.b16 %v644
        %v1529 = vunpack.c.h.b16 %v644
        %v1530 = vunpack.c.l.b16 %v645
        %v1531 = vunpack.c.h.b16 %v645
        %v1532 = vunpack.c.l.b16 %v646
        %v1533 = vunpack.c.h.b16 %v646
        %v1534 = vunpack.c.l.b16 %v647
        %v1535 = vunpack.c.h.b16 %v647
        %v1536 = vunpack.c.l.b16 %v648
        %v1537 = vunpack.c.h.b16 %v648
        %v1538 = vunpack.c.l.b16 %v649
        %v1539 = vunpack.c.h.b16 %v649
        %v1540 = vunpack.c.l.b16 %v650
        %v1541 = vunpack.c.h.b16 %v650
        %v1542 = vunpack.c.l.b16 %v651
        %v1543 = vunpack.c.h.b16 %v651
        %v1544 = vunpack.c.l.b16 %v652
        %v1545 = vunpack.c.h.b16 %v652
        %v1546 = vunpack.c.l.b16 %v653
        %v1547 = vunpack.c.h.b16 %v653
        %v1548 = vunpack.c.l.b16 %v654
        %v1549 = vunpack.c.h.b16 %v654
        %v1550 = vunpack.c.l.b16 %v655
        %v1551 = vunpack.c.h.b16 %v655
        %v1552 = vunpack.c.l.b16 %v656
        %v1553 = vunpack.c.h.b16 %v656
        %v1554 = vunpack.c.l.b16 %v657
        %v1555 = vunpack.c.h.b16 %v657
        %v1556 = vunpack.c.l.b16 %v658
        %v1557 = vunpack.c.h.b16 %v658
        %v1558 = vunpack.c.l.b16 %v659
        %v1559 = vunpack.c.h.b16 %v659
        %v1560 = vunpack.c.l.b16 %v660
        %v1561 = vunpack.c.h.b16 %v660
        %v1562 = vunpack.c.l.b16 %v661
        %v1563 = vunpack.c.h.b16 %v661
        %v1564 = vunpack.c.l.b16 %v662
        %v1565 = vunpack.c.h.b16 %v662
        %v1566 = vunpack.c.l.b16 %v663
        %v1567 = vunpack.c.h.b16 %v663
        %v1568 = vunpack.c.l.b16 %v664
        %v1569 = vunpack.c.h.b16 %v664
        %v1570 = vunpack.c.l.b16 %v665
        %v1571 = vunpack.c.h.b16 %v665
        %v1572 = vunpack.c.l.b16 %v666
        %v1573 = vunpack.c.h.b16 %v666
        %v1574 = vunpack.c.l.b16 %v667
        %v1575 = vunpack.c.h.b16 %v667
        %v1576 = vunpack.c.l.b16 %v668
        %v1577 = vunpack.c.h.b16 %v668
        %v1578 = vunpack.c.l.b16 %v669
        %v1579 = vunpack.c.h.b16 %v669
        %v1580 = vunpack.c.l.b16 %v670
        %v1581 = vunpack.c.h.b16 %v670
        %v1582 = vunpack.c.l.b16 %v671
        %v1583 = vunpack.c.h.b16 %v671
        %v1584 = vunpack.c.l.b16 %v672
        %v1585 = vunpack.c.h.b16 %v672
        %v1586 = vunpack.c.l.b16 %v673
        %v1587 = vunpack.c.h.b16 %v673
        %v1588 = vunpack.c.l.b16 %v674
        %v1589 = vunpack.c.h.b16 %v674
        %v1590 = vunpack.c.l.b16 %v675
        %v1591 = vunpack.c.h.b16 %v675
        %v1592 = vunpack.c.l.b16 %v676
        %v1593 = vunpack.c.h.b16 %v676
        %v1594 = vunpack.c.l.b16 %v677
        %v1595 = vunpack.c.h.b16 %v677
        %v1596 = vunpack.c.l.b16 %v678
        %v1597 = vunpack.c.h.b16 %v678
        %v1598 = vunpack.c.l.b16 %v679
        %v1599 = vunpack.c.h.b16 %v679
        %v1600 = vunpack.c.l.b16 %v680
        %v1601 = vunpack.c.h.b16 %v680
        %v1602 = vunpack.c.l.b16 %v681
        %v1603 = vunpack.c.h.b16 %v681
        %v1604 = vunpack.c.l.b16 %v682
        %v1605 = vunpack.c.h.b16 %v682
        %v1606 = vunpack.c.l.b16 %v683
        %v1607 = vunpack.c.h.b16 %v683
        %v1608 = vunpack.c.l.b16 %v684
        %v1609 = vunpack.c.h.b16 %v684
        %v1610 = vunpack.c.l.b16 %v685
        %v1611 = vunpack.c.h.b16 %v685
        %v1612 = vunpack.c.l.b16 %v686
        %v1613 = vunpack.c.h.b16 %v686
        %v1614 = vunpack.c.l.b16 %v687
        %v1615 = vunpack.c.h.b16 %v687
        %v1616 = vunpack.c.l.b16 %v688
        %v1617 = vunpack.c.h.b16 %v688
        %v1618 = vunpack.c.l.b16 %v689
        %v1619 = vunpack.c.h.b16 %v689
        %v1620 = vunpack.c.l.b16 %v690
        %v1621 = vunpack.c.h.b16 %v690
        %v1622 = vunpack.c.l.b16 %v691
        %v1623 = vunpack.c.h.b16 %v691
        %v1624 = vunpack.c.l.b16 %v692
        %v1625 = vunpack.c.h.b16 %v692
        %v1626 = vunpack.c.l.b16 %v693
        %v1627 = vunpack.c.h.b16 %v693
        %v1628 = vunpack.c.l.b16 %v694
        %v1629 = vunpack.c.h.b16 %v694
        %v1630 = vunpack.c.l.b16 %v695
        %v1631 = vunpack.c.h.b16 %v695
        %v1632 = vunpack.c.l.b16 %v696
        %v1633 = vunpack.c.h.b16 %v696
        %v1634 = vunpack.c.l.b16 %v697
        %v1635 = vunpack.c.h.b16 %v697
        %v1636 = vunpack.c.l.b16 %v698
        %v1637 = vunpack.c.h.b16 %v698
        %v1638 = vunpack.c.l.b16 %v699
        %v1639 = vunpack.c.h.b16 %v699
        %v1640 = vunpack.c.l.b16 %v700
        %v1641 = vunpack.c.h.b16 %v700
        %v1642 = vunpack.c.l.b16 %v701
        %v1643 = vunpack.c.h.b16 %v701
        %v1644 = vunpack.c.l.b16 %v702
        %v1645 = vunpack.c.h.b16 %v702
        %v1646 = vunpack.c.l.b16 %v703
        %v1647 = vunpack.c.h.b16 %v703
        %v1648 = vunpack.c.l.b16 %v704
        %v1649 = vunpack.c.h.b16 %v704
        %v1650 = vunpack.c.l.b16 %v705
        %v1651 = vunpack.c.h.b16 %v705
        %v1652 = vunpack.c.l.b16 %v706
        %v1653 = vunpack.c.h.b16 %v706
        %v1654 = vunpack.c.l.b16 %v707
        %v1655 = vunpack.c.h.b16 %v707
        %v1656 = vunpack.c.l.b16 %v708
        %v1657 = vunpack.c.h.b16 %v708
        %v1658 = vunpack.c.l.b16 %v709
        %v1659 = vunpack.c.h.b16 %v709
        %v1660 = vunpack.c.l.b16 %v710
        %v1661 = vunpack.c.h.b16 %v710
        %v1662 = vunpack.c.l.b16 %v711
        %v1663 = vunpack.c.h.b16 %v711
        %v1664 = vunpack.c.l.b16 %v712
        %v1665 = vunpack.c.h.b16 %v712
        %v1666 = vunpack.c.l.b16 %v713
        %v1667 = vunpack.c.h.b16 %v713
        %v1668 = vunpack.c.l.b16 %v714
        %v1669 = vunpack.c.h.b16 %v714
        %v1670 = vunpack.c.l.b16 %v715
        %v1671 = vunpack.c.h.b16 %v715
        %v1672 = vunpack.c.l.b16 %v716
        %v1673 = vunpack.c.h.b16 %v716
        %v1674 = vunpack.c.l.b16 %v717
        %v1675 = vunpack.c.h.b16 %v717
        %v1676 = vunpack.c.l.b16 %v718
        %v1677 = vunpack.c.h.b16 %v718
        %v1678 = vunpack.c.l.b16 %v719
        %v1679 = vunpack.c.h.b16 %v719
        %v1680 = vunpack.c.l.b16 %v720
        %v1681 = vunpack.c.h.b16 %v720
        %v1682 = vunpack.c.l.b16 %v721
        %v1683 = vunpack.c.h.b16 %v721
        %v1684 = vunpack.c.l.b16 %v722
        %v1685 = vunpack.c.h.b16 %v722
        %v1686 = vunpack.c.l.b16 %v723
        %v1687 = vunpack.c.h.b16 %v723
        %v1688 = vunpack.c.l.b16 %v724
        %v1689 = vunpack.c.h.b16 %v724
        %v1690 = vunpack.c.l.b16 %v725
        %v1691 = vunpack.c.h.b16 %v725
        %v1692 = vunpack.c.l.b16 %v726
        %v1693 = vunpack.c.h.b16 %v726
        %v1694 = vunpack.c.l.b16 %v727
        %v1695 = vunpack.c.h.b16 %v727
        %v1696 = vunpack.c.l.b16 %v728
        %v1697 = vunpack.c.h.b16 %v728
        %v1698 = vunpack.c.l.b16 %v729
        %v1699 = vunpack.c.h.b16 %v729
        %v1700 = vunpack.c.l.b16 %v730
        %v1701 = vunpack.c.h.b16 %v730
        %v1702 = vunpack.c.l.b16 %v731
        %v1703 = vunpack.c.h.b16 %v731
        %v1704 = vpack.c.b16 %v1080, %v1056
        %v1705 = vpack.c.b16 %v1081, %v1057
        %v1706 = vpack.c.b16 %v1082, %v1058
        %v1707 = vpack.c.b16 %v1083, %v1059
        %v1708 = vpack.c.b16 %v1084, %v1060
        %v1709 = vpack.c.b16 %v1085, %v1061
        %v1710 = vpack.c.b16 %v1086, %v1062
        %v1711 = vpack.c.b16 %v1087, %v1063
        %v1712 = vpack.c.b16 %v1088, %v1064
        %v1713 = vpack.c.b16 %v1089, %v1065
        %v1714 = vpack.c.b16 %v1090, %v1066
        %v1715 = vpack.c.b16 %v1091, %v1067
        %v1716 = vpack.c.b16 %v1092, %v1068
        %v1717 = vpack.c.b16 %v1093, %v1069
        %v1718 = vpack.c.b16 %v1094, %v1070
        %v1719 = vpack.c.b16 %v1095, %v1071
        %v1720 = vpack.c.b16 %v1096, %v1072
        %v1721 = vpack.c.b16 %v1097, %v1073
        %v1722 = vpack.c.b16 %v1098, %v1074
        %v1723 = vpack.c.b16 %v1099, %v1075
        %v1724 = vpack.c.b16 %v1100, %v1076
        %v1725 = vpack.c.b16 %v1101, %v1077
        %v1726 = vpack.c.b16 %v1102, %v1078
        %v1727 = vpack.c.b16 %v1103, %v1079
        %v1728 = vpack.c.b16 %v1128, %v1104
        %v1729 = vpack.c.b16 %v1129, %v1105
        %v1730 = vpack.c.b16 %v1130, %v1106
        %v1731 = vpack.c.b16 %v1131, %v1107
        %v1732 = vpack.c.b16 %v1132, %v1108
        %v1733 = vpack.c.b16 %v1133, %v1109
        %v1734 = vpack.c.b16 %v1134, %v1110
        %v1735 = vpack.c.b16 %v1135, %v1111
        %v1736 = vpack.c.b16 %v1136, %v1112
        %v1737 = vpack.c.b16 %v1137, %v1113
        %v1738 = vpack.c.b16 %v1138, %v1114
        %v1739 = vpack.c.b16 %v1139, %v1115
        %v1740 = vpack.c.b16 %v1140, %v1116
        %v1741 = vpack.c.b16 %v1141, %v1117
        %v1742 = vpack.c.b16 %v1142, %v1118
        %v1743 = vpack.c.b16 %v1143, %v1119
        %v1744 = vpack.c.b16 %v1144, %v1120
        %v1745 = vpack.c.b16 %v1145, %v1121
        %v1746 = vpack.c.b16 %v1146, %v1122
        %v1747 = vpack.c.b16 %v1147, %v1123
        %v1748 = vpack.c.b16 %v1148, %v1124
        %v1749 = vpack.c.b16 %v1149, %v1125
        %v1750 = vpack.c.b16 %v1150, %v1126
        %v1751 = vpack.c.b16 %v1151, %v1127
        %v1752 = vpack.c.b16 %v1176, %v1152
        %v1753 = vpack.c.b16 %v1177, %v1153
        %v1754 = vpack.c.b16 %v1178, %v1154
        %v1755 = vpack.c.b16 %v1179, %v1155
        %v1756 = vpack.c.b16 %v1180, %v1156
        %v1757 = vpack.c.b16 %v1181, %v1157
        %v1758 = vpack.c.b16 %v1182, %v1158
        %v1759 = vpack.c.b16 %v1183, %v1159
        %v1760 = vpack.c.b16 %v1184, %v1160
        %v1761 = vpack.c.b16 %v1185, %v1161
        %v1762 = vpack.c.b16 %v1186, %v1162
        %v1763 = vpack.c.b16 %v1187, %v1163
        %v1764 = vpack.c.b16 %v1188, %v1164
        %v1765 = vpack.c.b16 %v1189, %v1165
        %v1766 = vpack.c.b16 %v1190, %v1166
        %v1767 = vpack.c.b16 %v1191, %v1167
        %v1768 = vpack.c.b16 %v1192, %v1168
        %v1769 = vpack.c.b16 %v1193, %v1169
        %v1770 = vpack.c.b16 %v1194, %v1170
        %v1771 = vpack.c.b16 %v1195, %v1171
        %v1772 = vpack.c.b16 %v1196, %v1172
        %v1773 = vpack.c.b16 %v1197, %v1173
        %v1774 = vpack.c.b16 %v1198, %v1174
        %v1775 = vpack.c.b16 %v1199, %v1175
        %v1776 = vpack.c.b16 %v1224, %v1200
        %v1777 = vpack.c.b16 %v1225, %v1201
        %v1778 = vpack.c.b16 %v1226, %v1202
        %v1779 = vpack.c.b16 %v1227, %v1203
        %v1780 = vpack.c.b16 %v1228, %v1204
        %v1781 = vpack.c.b16 %v1229, %v1205
        %v1782 = vpack.c.b16 %v1230, %v1206
        %v1783 = vpack.c.b16 %v1231, %v1207
        %v1784 = vpack.c.b16 %v1232, %v1208
        %v1785 = vpack.c.b16 %v1233, %v1209
        %v1786 = vpack.c.b16 %v1234, %v1210
        %v1787 = vpack.c.b16 %v1235, %v1211
        %v1788 = vpack.c.b16 %v1236, %v1212
        %v1789 = vpack.c.b16 %v1237, %v1213
        %v1790 = vpack.c.b16 %v1238, %v1214
        %v1791 = vpack.c.b16 %v1239, %v1215
        %v1792 = vpack.c.b16 %v1240, %v1216
        %v1793 = vpack.c.b16 %v1241, %v1217
        %v1794 = vpack.c.b16 %v1242, %v1218
        %v1795 = vpack.c.b16 %v1243, %v1219
        %v1796 = vpack.c.b16 %v1244, %v1220
        %v1797 = vpack.c.b16 %v1245, %v1221
        %v1798 = vpack.c.b16 %v1246, %v1222
        %v1799 = vpack.c.b16 %v1247, %v1223
        %v1800 = vpack.c.b16 %v1272, %v1248
        %v1801 = vpack.c.b16 %v1273, %v1249
        %v1802 = vpack.c.b16 %v1274, %v1250
        %v1803 = vpack.c.b16 %v1275, %v1251
        %v1804 = vpack.c.b16 %v1276, %v1252
        %v1805 = vpack.c.b16 %v1277, %v1253
        %v1806 = vpack.c.b16 %v1278, %v1254
        %v1807 = vpack.c.b16 %v1279, %v1255
        %v1808 = vpack.c.b16 %v1280, %v1256
        %v1809 = vpack.c.b16 %v1281, %v1257
        %v1810 = vpack.c.b16 %v1282, %v1258
        %v1811 = vpack.c.b16 %v1283, %v1259
        %v1812 = vpack.c.b16 %v1284, %v1260
        %v1813 = vpack.c.b16 %v1285, %v1261
        %v1814 = vpack.c.b16 %v1286, %v1262
        %v1815 = vpack.c.b16 %v1287, %v1263
        %v1816 = vpack.c.b16 %v1288, %v1264
        %v1817 = vpack.c.b16 %v1289, %v1265
        %v1818 = vpack.c.b16 %v1290, %v1266
        %v1819 = vpack.c.b16 %v1291, %v1267
        %v1820 = vpack.c.b16 %v1292, %v1268
        %v1821 = vpack.c.b16 %v1293, %v1269
        %v1822 = vpack.c.b16 %v1294, %v1270
        %v1823 = vpack.c.b16 %v1295, %v1271
        %v1824 = vpack.c.b16 %v1320, %v1296
        %v1825 = vpack.c.b16 %v1321, %v1297
        %v1826 = vpack.c.b16 %v1322, %v1298
        %v1827 = vpack.c.b16 %v1323, %v1299
        %v1828 = vpack.c.b16 %v1324, %v1300
        %v1829 = vpack.c.b16 %v1325, %v1301
        %v1830 = vpack.c.b16 %v1326, %v1302
        %v1831 = vpack.c.b16 %v1327, %v1303
        %v1832 = vpack.c.b16 %v1328, %v1304
        %v1833 = vpack.c.b16 %v1329, %v1305
        %v1834 = vpack.c.b16 %v1330, %v1306
        %v1835 = vpack.c.b16 %v1331, %v1307
        %v1836 = vpack.c.b16 %v1332, %v1308
        %v1837 = vpack.c.b16 %v1333, %v1309
        %v1838 = vpack.c.b16 %v1334, %v1310
        %v1839 = vpack.c.b16 %v1335, %v1311
        %v1840 = vpack.c.b16 %v1336, %v1312
        %v1841 = vpack.c.b16 %v1337, %v1313
        %v1842 = vpack.c.b16 %v1338, %v1314
        %v1843 = vpack.c.b16 %v1339, %v1315
        %v1844 = vpack.c.b16 %v1340, %v1316
        %v1845 = vpack.c.b16 %v1341, %v1317
        %v1846 = vpack.c.b16 %v1342, %v1318
        %v1847 = vpack.c.b16 %v1343, %v1319
        %v1848 = vpack.c.b16 %v1368, %v1344
        %v1849 = vpack.c.b16 %v1369, %v1345
        %v1850 = vpack.c.b16 %v1370, %v1346
        %v1851 = vpack.c.b16 %v1371, %v1347
        %v1852 = vpack.c.b16 %v1372, %v1348
        %v1853 = vpack.c.b16 %v1373, %v1349
        %v1854 = vpack.c.b16 %v1374, %v1350
        %v1855 = vpack.c.b16 %v1375, %v1351
        %v1856 = vpack.c.b16 %v1376, %v1352
        %v1857 = vpack.c.b16 %v1377, %v1353
        %v1858 = vpack.c.b16 %v1378, %v1354
        %v1859 = vpack.c.b16 %v1379, %v1355
        %v1860 = vpack.c.b16 %v1380, %v1356
        %v1861 = vpack.c.b16 %v1381, %v1357
        %v1862 = vpack.c.b16 %v1382, %v1358
        %v1863 = vpack.c.b16 %v1383, %v1359
        %v1864 = vpack.c.b16 %v1384, %v1360
        %v1865 = vpack.c.b16 %v1385, %v1361
        %v1866 = vpack.c.b16 %v1386, %v1362
        %v1867 = vpack.c.b16 %v1387, %v1363
        %v1868 = vpack.c.b16 %v1388, %v1364
        %v1869 = vpack.c.b16 %v1389, %v1365
        %v1870 = vpack.c.b16 %v1390, %v1366
        %v1871 = vpack.c.b16 %v1391, %v1367
        %v1872 = vpack.c.b16 %v1416, %v1392
        %v1873 = vpack.c.b16 %v1417, %v1393
        %v1874 = vpack.c.b16 %v1418, %v1394
        %v1875 = vpack.c.b16 %v1419, %v1395
        %v1876 = vpack.c.b16 %v1420, %v1396
        %v1877 = vpack.c.b16 %v1421, %v1397
        %v1878 = vpack.c.b16 %v1422, %v1398
        %v1879 = vpack.c.b16 %v1423, %v1399
        %v1880 = vpack.c.b16 %v1424, %v1400
        %v1881 = vpack.c.b16 %v1425, %v1401
        %v1882 = vpack.c.b16 %v1426, %v1402
        %v1883 = vpack.c.b16 %v1427, %v1403
        %v1884 = vpack.c.b16 %v1428, %v1404
        %v1885 = vpack.c.b16 %v1429, %v1405
        %v1886 = vpack.c.b16 %v1430, %v1406
        %v1887 = vpack.c.b16 %v1431, %v1407
        %v1888 = vpack.c.b16 %v1432, %v1408
        %v1889 = vpack.c.b16 %v1433, %v1409
        %v1890 = vpack.c.b16 %v1434, %v1410
        %v1891 = vpack.c.b16 %v1435, %v1411
        %v1892 = vpack.c.b16 %v1436, %v1412
        %v1893 = vpack.c.b16 %v1437, %v1413
        %v1894 = vpack.c.b16 %v1438, %v1414
        %v1895 = vpack.c.b16 %v1439, %v1415
        %v1896 = vpack.c.b16 %v1464, %v1440
        %v1897 = vpack.c.b16 %v1465, %v1441
        %v1898 = vpack.c.b16 %v1466, %v1442
        %v1899 = vpack.c.b16 %v1467, %v1443
        %v1900 = vpack.c.b16 %v1468, %v1444
        %v1901 = vpack.c.b16 %v1469, %v1445
        %v1902 = vpack.c.b16 %v1470, %v1446
        %v1903 = vpack.c.b16 %v1471, %v1447
        %v1904 = vpack.c.b16 %v1472, %v1448
        %v1905 = vpack.c.b16 %v1473, %v1449
        %v1906 = vpack.c.b16 %v1474, %v1450
        %v1907 = vpack.c.b16 %v1475, %v1451
        %v1908 = vpack.c.b16 %v1476, %v1452
        %v1909 = vpack.c.b16 %v1477, %v1453
        %v1910 = vpack.c.b16 %v1478, %v1454
        %v1911 = vpack.c.b16 %v1479, %v1455
        %v1912 = vpack.c.b16 %v1480, %v1456
        %v1913 = vpack.c.b16 %v1481, %v1457
        %v1914 = vpack.c.b16 %v1482, %v1458
        %v1915 = vpack.c.b16 %v1483, %v1459
        %v1916 = vpack.c.b16 %v1484, %v1460
        %v1917 = vpack.c.b16 %v1485, %v1461
        %v1918 = vpack.c.b16 %v1486, %v1462
        %v1919 = vpack.c.b16 %v1487, %v1463
        %v1920 = vpack.c.b16 %v1512, %v1488
        %v1921 = vpack.c.b16 %v1513, %v1489
        %v1922 = vpack.c.b16 %v1514, %v1490
        %v1923 = vpack.c.b16 %v1515, %v1491
        %v1924 = vpack.c.b16 %v1516, %v1492
        %v1925 = vpack.c.b16 %v1517, %v1493
        %v1926 = vpack.c.b16 %v1518, %v1494
        %v1927 = vpack.c.b16 %v1519, %v1495
        %v1928 = vpack.c.b16 %v1520, %v1496
        %v1929 = vpack.c.b16 %v1521, %v1497
        %v1930 = vpack.c.b16 %v1522, %v1498
        %v1931 = vpack.c.b16 %v1523, %v1499
        %v1932 = vpack.c.b16 %v1524, %v1500
        %v1933 = vpack.c.b16 %v1525, %v1501
        %v1934 = vpack.c.b16 %v1526, %v1502
        %v1935 = vpack.c.b16 %v1527, %v1503
        %v1936 = vpack.c.b16 %v1528, %v1504
        %v1937 = vpack.c.b16 %v1529, %v1505
        %v1938 = vpack.c.b16 %v1530, %v1506
        %v1939 = vpack.c.b16 %v1531, %v1507
        %v1940 = vpack.c.b16 %v1532, %v1508
        %v1941 = vpack.c.b16 %v1533, %v1509
        %v1942 = vpack.c.b16 %v1534, %v1510
        %v1943 = vpack.c.b16 %v1535, %v1511
        %v1944 = vpack.c.b16 %v1560, %v1536
        %v1945 = vpack.c.b16 %v1561, %v1537
        %v1946 = vpack.c.b16 %v1562, %v1538
        %v1947 = vpack.c.b16 %v1563, %v1539
        %v1948 = vpack.c.b16 %v1564, %v1540
        %v1949 = vpack.c.b16 %v1565, %v1541
        %v1950 = vpack.c.b16 %v1566, %v1542
        %v1951 = vpack.c.b16 %v1567, %v1543
        %v1952 = vpack.c.b16 %v1568, %v1544
        %v1953 = vpack.c.b16 %v1569, %v1545
        %v1954 = vpack.c.b16 %v1570, %v1546
        %v1955 = vpack.c.b16 %v1571, %v1547
        %v1956 = vpack.c.b16 %v1572, %v1548
        %v1957 = vpack.c.b16 %v1573, %v1549
        %v1958 = vpack.c.b16 %v1574, %v1550
        %v1959 = vpack.c.b16 %v1575, %v1551
        %v1960 = vpack.c.b16 %v1576, %v1552
        %v1961 = vpack.c.b16 %v1577, %v1553
        %v1962 = vpack.c.b16 %v1578, %v1554
        %v1963 = vpack.c.b16 %v1579, %v1555
        %v1964 = vpack.c.b16 %v1580, %v1556
        %v1965 = vpack.c.b16 %v1581, %v1557
        %v1966 = vpack.c.b16 %v1582, %v1558
        %v1967 = vpack.c.b16 %v1583, %v1559
        %v1968 = vpack.c.b16 %v1608, %v1584
        %v1969 = vpack.c.b16 %v1609, %v1585
        %v1970 = vpack.c.b16 %v1610, %v1586
        %v1971 = vpack.c.b16 %v1611, %v1587
        %v1972 = vpack.c.b16 %v1612, %v1588
        %v1973 = vpack.c.b16 %v1613, %v1589
        %v1974 = vpack.c.b16 %v1614, %v1590
        %v1975 = vpack.c.b16 %v1615, %v1591
        %v1976 = vpack.c.b16 %v1616, %v1592
        %v1977 = vpack.c.b16 %v1617, %v1593
        %v1978 = vpack.c.b16 %v1618, %v1594
        %v1979 = vpack.c.b16 %v1619, %v1595
        %v1980 = vpack.c.b16 %v1620, %v1596
        %v1981 = vpack.c.b16 %v1621, %v1597
        %v1982 = vpack.c.b16 %v1622, %v1598
        %v1983 = vpack.c.b16 %v1623, %v1599
        %v1984 = vpack.c.b16 %v1624, %v1600
        %v1985 = vpack.c.b16 %v1625, %v1601
        %v1986 = vpack.c.b16 %v1626, %v1602
        %v1987 = vpack.c.b16 %v1627, %v1603
        %v1988 = vpack.c.b16 %v1628, %v1604
        %v1989 = vpack.c.b16 %v1629, %v1605
        %v1990 = vpack.c.b16 %v1630, %v1606
        %v1991 = vpack.c.b16 %v1631, %v1607
        %v1992 = vpack.c.b16 %v1656, %v1632
        %v1993 = vpack.c.b16 %v1657, %v1633
        %v1994 = vpack.c.b16 %v1658, %v1634
        %v1995 = vpack.c.b16 %v1659, %v1635
        %v1996 = vpack.c.b16 %v1660, %v1636
        %v1997 = vpack.c.b16 %v1661, %v1637
        %v1998 = vpack.c.b16 %v1662, %v1638
        %v1999 = vpack.c.b16 %v1663, %v1639
        %v2000 = vpack.c.b16 %v1664, %v1640
        %v2001 = vpack.c.b16 %v1665, %v1641
        %v2002 = vpack.c.b16 %v1666, %v1642
        %v2003 = vpack.c.b16 %v1667, %v1643
        %v2004 = vpack.c.b16 %v1668, %v1644
        %v2005 = vpack.c.b16 %v1669, %v1645
        %v2006 = vpack.c.b16 %v1670, %v1646
        %v2007 = vpack.c.b16 %v1671, %v1647
        %v2008 = vpack.c.b16 %v1672, %v1648
        %v2009 = vpack.c.b16 %v1673, %v1649
        %v2010 = vpack.c.b16 %v1674, %v1650
        %v2011 = vpack.c.b16 %v1675, %v1651
        %v2012 = vpack.c.b16 %v1676, %v1652
        %v2013 = vpack.c.b16 %v1677, %v1653
        %v2014 = vpack.c.b16 %v1678, %v1654
        %v2015 = vpack.c.b16 %v1679, %v1655
        %v2016 = vpack.c.b16 %v1680, %v1680
        %v2017 = vpack.c.b16 %v1681, %v1681
        %v2018 = vpack.c.b16 %v1682, %v1682
        %v2019 = vpack.c.b16 %v1683, %v1683
        %v2020 = vpack.c.b16 %v1684, %v1684
        %v2021 = vpack.c.b16 %v1685, %v1685
        %v2022 = vpack.c.b16 %v1686, %v1686
        %v2023 = vpack.c.b16 %v1687, %v1687
        %v2024 = vpack.c.b16 %v1688, %v1688
        %v2025 = vpack.c.b16 %v1689, %v1689
        %v2026 = vpack.c.b16 %v1690, %v1690
        %v2027 = vpack.c.b16 %v1691, %v1691
        %v2028 = vpack.c.b16 %v1692, %v1692
        %v2029 = vpack.c.b16 %v1693, %v1693
        %v2030 = vpack.c.b16 %v1694, %v1694
        %v2031 = vpack.c.b16 %v1695, %v1695
        %v2032 = vpack.c.b16 %v1696, %v1696
        %v2033 = vpack.c.b16 %v1697, %v1697
        %v2034 = vpack.c.b16 %v1698, %v1698
        %v2035 = vpack.c.b16 %v1699, %v1699
        %v2036 = vpack.c.b16 %v1700, %v1700
        %v2037 = vpack.c.b16 %v1701, %v1701
        %v2038 = vpack.c.b16 %v1702, %v1702
        %v2039 = vpack.c.b16 %v1703, %v1703
        %vm2352 = vcmask 719872
        %v2354 = vsel %vm2352, %v383, 0
        %v2357 = vsel %vm2352, %v385, 0
        %v2360 = vsel %vm2352, %v387, 0
        %v2363 = vsel %vm2352, %v389, 0
        %v2366 = vsel %vm2352, %v391, 0
        %v2369 = vsel %vm2352, %v393, 0
        %v2372 = vsel %vm2352, %v395, 0
        %v2375 = vsel %vm2352, %v397, 0
        %v2378 = vsel %vm2352, %v399, 0
        %v2381 = vsel %vm2352, %v401, 0
        %v2384 = vsel %vm2352, %v403, 0
        %v2387 = vsel %vm2352, %v405, 0
        %v2390 = vsel %vm2352, %v407, 0
        %vm2392 = vcmask 1043456
        %v2394 = vsel %vm2392, %v2016, 0
        %v2397 = vsel %vm2392, %v2017, 0
        %v2400 = vsel %vm2392, %v2018, 0
        %v2403 = vsel %vm2392, %v2019, 0
        %v2406 = vsel %vm2392, %v2020, 0
        %v2409 = vsel %vm2392, %v2021, 0
        %v2412 = vsel %vm2392, %v2022, 0
        %v2415 = vsel %vm2392, %v2023, 0
        %v2418 = vsel %vm2392, %v2024, 0
        %v2421 = vsel %vm2392, %v2025, 0
        %v2424 = vsel %vm2392, %v2026, 0
        %v2427 = vsel %vm2392, %v2027, 0
        %v2430 = vsel %vm2392, %v2028, 0
        %v2433 = vsel %vm2392, %v2029, 0
        %v2436 = vsel %vm2392, %v2030, 0
        %v2439 = vsel %vm2392, %v2031, 0
        %v2442 = vsel %vm2392, %v2032, 0
        %v2445 = vsel %vm2392, %v2033, 0
        %v2448 = vsel %vm2392, %v2034, 0
        %v2451 = vsel %vm2392, %v2035, 0
        %v2454 = vsel %vm2392, %v2036, 0
        %v2457 = vsel %vm2392, %v2037, 0
        %v2460 = vsel %vm2392, %v2038, 0
        %v2463 = vsel %vm2392, %v2039, 0
        %2465 = vmatpush.bf16.msra.mxu0 %v1872
        %2466 = vmatpush.bf16.msra.mxu0 %v1848
        %2467 = vmatpush.bf16.msra.mxu0 %v1824
        %2468 = vmatpush.bf16.msra.mxu0 %v1800
        %2469 = vmatpush.bf16.msra.mxu0 %v1776
        %2470 = vmatpush.bf16.msra.mxu0 %v1752
        %2471 = vmatpush.bf16.msra.mxu0 %v1728
        %2472 = vmatpush.bf16.msra.mxu0 %v1704
        %2473 = vmatmul.bf16.gmra.mxu0 %v382
        %v2474 = vpop.f32.mrf.mxu0
        %v2475 = vadd.f32 0.0, %v2474
        %v2476 = vpop.f32.mrf.mxu0
        %v2477 = vadd.f32 0.0, %v2476
        %2478 = vmatmul.bf16.gmra.mxu0 %v384
        %v2479 = vpop.f32.mrf.mxu0
        %v2480 = vadd.f32 0.0, %v2479
        %v2481 = vpop.f32.mrf.mxu0
        %v2482 = vadd.f32 0.0, %v2481
        %2483 = vmatmul.bf16.gmra.mxu0 %v386
        %v2484 = vpop.f32.mrf.mxu0
        %v2485 = vadd.f32 0.0, %v2484
        %v2486 = vpop.f32.mrf.mxu0
        %v2487 = vadd.f32 0.0, %v2486
        %2488 = vmatmul.bf16.gmra.mxu0 %v388
        %v2489 = vpop.f32.mrf.mxu0
        %v2490 = vadd.f32 0.0, %v2489
        %v2491 = vpop.f32.mrf.mxu0
        %v2492 = vadd.f32 0.0, %v2491
        %2493 = vmatmul.bf16.gmra.mxu0 %v390
        %v2494 = vpop.f32.mrf.mxu0
        %v2495 = vadd.f32 0.0, %v2494
        %v2496 = vpop.f32.mrf.mxu0
        %v2497 = vadd.f32 0.0, %v2496
        %2498 = vmatmul.bf16.gmra.mxu0 %v392
        %v2499 = vpop.f32.mrf.mxu0
        %v2500 = vadd.f32 0.0, %v2499
        %v2501 = vpop.f32.mrf.mxu0
        %v2502 = vadd.f32 0.0, %v2501
        %2503 = vmatmul.bf16.gmra.mxu0 %v394
        %v2504 = vpop.f32.mrf.mxu0
        %v2505 = vadd.f32 0.0, %v2504
        %v2506 = vpop.f32.mrf.mxu0
        %v2507 = vadd.f32 0.0, %v2506
        %2508 = vmatmul.bf16.gmra.mxu0 %v396
        %v2509 = vpop.f32.mrf.mxu0
        %v2510 = vadd.f32 0.0, %v2509
        %v2511 = vpop.f32.mrf.mxu0
        %v2512 = vadd.f32 0.0, %v2511
        %2513 = vmatmul.bf16.gmra.mxu0 %v398
        %v2514 = vpop.f32.mrf.mxu0
        %v2515 = vadd.f32 0.0, %v2514
        %v2516 = vpop.f32.mrf.mxu0
        %v2517 = vadd.f32 0.0, %v2516
        %2518 = vmatmul.bf16.gmra.mxu0 %v400
        %v2519 = vpop.f32.mrf.mxu0
        %v2520 = vadd.f32 0.0, %v2519
        %v2521 = vpop.f32.mrf.mxu0
        %v2522 = vadd.f32 0.0, %v2521
        %2523 = vmatmul.bf16.gmra.mxu0 %v402
        %v2524 = vpop.f32.mrf.mxu0
        %v2525 = vadd.f32 0.0, %v2524
        %v2526 = vpop.f32.mrf.mxu0
        %v2527 = vadd.f32 0.0, %v2526
        %2528 = vmatmul.bf16.gmra.mxu0 %v404
        %v2529 = vpop.f32.mrf.mxu0
        %v2530 = vadd.f32 0.0, %v2529
        %v2531 = vpop.f32.mrf.mxu0
        %v2532 = vadd.f32 0.0, %v2531
        %2533 = vmatmul.bf16.gmra.mxu0 %v406
        %v2534 = vpop.f32.mrf.mxu0
        %v2535 = vadd.f32 0.0, %v2534
        %v2536 = vpop.f32.mrf.mxu0
        %2537 = vdwg.mxu0
        %2538 = vmatpush.bf16.msra.mxu0 0
        %2539 = vmatpush.bf16.msra.mxu0 0
        %2540 = vmatpush.bf16.msra.mxu0 %v2394
        %2541 = vmatpush.bf16.msra.mxu0 %v1992
        %2542 = vmatpush.bf16.msra.mxu0 %v1968
        %2543 = vmatpush.bf16.msra.mxu0 %v1944
        %2544 = vmatpush.bf16.msra.mxu0 %v1920
        %2545 = vmatpush.bf16.msra.mxu0 %v1896
        %2546 = vmatmul.bf16.gmra.mxu0 %v2354
        %v2547 = vpop.f32.mrf.mxu0
        %v2548 = vadd.f32 %v2475, %v2547
        %v2549 = vpop.f32.mrf.mxu0
        %v2550 = vadd.f32 %v2477, %v2549
        %2551 = vmatmul.bf16.gmra.mxu0 %v2357
        %v2552 = vpop.f32.mrf.mxu0
        %v2553 = vadd.f32 %v2480, %v2552
        %v2554 = vpop.f32.mrf.mxu0
        %v2555 = vadd.f32 %v2482, %v2554
        %2556 = vmatmul.bf16.gmra.mxu0 %v2360
        %v2557 = vpop.f32.mrf.mxu0
        %v2558 = vadd.f32 %v2485, %v2557
        %v2559 = vpop.f32.mrf.mxu0
        %v2560 = vadd.f32 %v2487, %v2559
        %2561 = vmatmul.bf16.gmra.mxu0 %v2363
        %v2562 = vpop.f32.mrf.mxu0
        %v2563 = vadd.f32 %v2490, %v2562
        %v2564 = vpop.f32.mrf.mxu0
        %v2565 = vadd.f32 %v2492, %v2564
        %2566 = vmatmul.bf16.gmra.mxu0 %v2366
        %v2567 = vpop.f32.mrf.mxu0
        %v2568 = vadd.f32 %v2495, %v2567
        %v2569 = vpop.f32.mrf.mxu0
        %v2570 = vadd.f32 %v2497, %v2569
        %2571 = vmatmul.bf16.gmra.mxu0 %v2369
        %v2572 = vpop.f32.mrf.mxu0
        %v2573 = vadd.f32 %v2500, %v2572
        %v2574 = vpop.f32.mrf.mxu0
        %v2575 = vadd.f32 %v2502, %v2574
        %2576 = vmatmul.bf16.gmra.mxu0 %v2372
        %v2577 = vpop.f32.mrf.mxu0
        %v2578 = vadd.f32 %v2505, %v2577
        %v2579 = vpop.f32.mrf.mxu0
        %v2580 = vadd.f32 %v2507, %v2579
        %2581 = vmatmul.bf16.gmra.mxu0 %v2375
        %v2582 = vpop.f32.mrf.mxu0
        %v2583 = vadd.f32 %v2510, %v2582
        %v2584 = vpop.f32.mrf.mxu0
        %v2585 = vadd.f32 %v2512, %v2584
        %2586 = vmatmul.bf16.gmra.mxu0 %v2378
        %v2587 = vpop.f32.mrf.mxu0
        %v2588 = vadd.f32 %v2515, %v2587
        %v2589 = vpop.f32.mrf.mxu0
        %v2590 = vadd.f32 %v2517, %v2589
        %2591 = vmatmul.bf16.gmra.mxu0 %v2381
        %v2592 = vpop.f32.mrf.mxu0
        %v2593 = vadd.f32 %v2520, %v2592
        %v2594 = vpop.f32.mrf.mxu0
        %v2595 = vadd.f32 %v2522, %v2594
        %2596 = vmatmul.bf16.gmra.mxu0 %v2384
        %v2597 = vpop.f32.mrf.mxu0
        %v2598 = vadd.f32 %v2525, %v2597
        %v2599 = vpop.f32.mrf.mxu0
        %v2600 = vadd.f32 %v2527, %v2599
        %2601 = vmatmul.bf16.gmra.mxu0 %v2387
        %v2602 = vpop.f32.mrf.mxu0
        %v2603 = vadd.f32 %v2530, %v2602
        %v2604 = vpop.f32.mrf.mxu0
        %v2605 = vadd.f32 %v2532, %v2604
        %2606 = vmatmul.bf16.gmra.mxu0 %v2390
        %v2607 = vpop.f32.mrf.mxu0
        %v2608 = vadd.f32 %v2535, %v2607
        %v2609 = vpop.f32.mrf.mxu0
        %2610 = vdwg.mxu0
        %2611 = vmatpush.bf16.msra.mxu0 %v1873
        %2612 = vmatpush.bf16.msra.mxu0 %v1849
        %2613 = vmatpush.bf16.msra.mxu0 %v1825
        %2614 = vmatpush.bf16.msra.mxu0 %v1801
        %2615 = vmatpush.bf16.msra.mxu0 %v1777
        %2616 = vmatpush.bf16.msra.mxu0 %v1753
        %2617 = vmatpush.bf16.msra.mxu0 %v1729
        %2618 = vmatpush.bf16.msra.mxu0 %v1705
        %2619 = vmatmul.bf16.gmra.mxu0 %v382
        %v2620 = vpop.f32.mrf.mxu0
        %v2621 = vadd.f32 0.0, %v2620
        %v2622 = vpop.f32.mrf.mxu0
        %v2623 = vadd.f32 0.0, %v2622
        %2624 = vmatmul.bf16.gmra.mxu0 %v384
        %v2625 = vpop.f32.mrf.mxu0
        %v2626 = vadd.f32 0.0, %v2625
        %v2627 = vpop.f32.mrf.mxu0
        %v2628 = vadd.f32 0.0, %v2627
        %2629 = vmatmul.bf16.gmra.mxu0 %v386
        %v2630 = vpop.f32.mrf.mxu0
        %v2631 = vadd.f32 0.0, %v2630
        %v2632 = vpop.f32.mrf.mxu0
        %v2633 = vadd.f32 0.0, %v2632
        %2634 = vmatmul.bf16.gmra.mxu0 %v388
        %v2635 = vpop.f32.mrf.mxu0
        %v2636 = vadd.f32 0.0, %v2635
        %v2637 = vpop.f32.mrf.mxu0
        %v2638 = vadd.f32 0.0, %v2637
        %2639 = vmatmul.bf16.gmra.mxu0 %v390
        %v2640 = vpop.f32.mrf.mxu0
        %v2641 = vadd.f32 0.0, %v2640
        %v2642 = vpop.f32.mrf.mxu0
        %v2643 = vadd.f32 0.0, %v2642
        %2644 = vmatmul.bf16.gmra.mxu0 %v392
        %v2645 = vpop.f32.mrf.mxu0
        %v2646 = vadd.f32 0.0, %v2645
        %v2647 = vpop.f32.mrf.mxu0
        %v2648 = vadd.f32 0.0, %v2647
        %2649 = vmatmul.bf16.gmra.mxu0 %v394
        %v2650 = vpop.f32.mrf.mxu0
        %v2651 = vadd.f32 0.0, %v2650
        %v2652 = vpop.f32.mrf.mxu0
        %v2653 = vadd.f32 0.0, %v2652
        %2654 = vmatmul.bf16.gmra.mxu0 %v396
        %v2655 = vpop.f32.mrf.mxu0
        %v2656 = vadd.f32 0.0, %v2655
        %v2657 = vpop.f32.mrf.mxu0
        %v2658 = vadd.f32 0.0, %v2657
        %2659 = vmatmul.bf16.gmra.mxu0 %v398
        %v2660 = vpop.f32.mrf.mxu0
        %v2661 = vadd.f32 0.0, %v2660
        %v2662 = vpop.f32.mrf.mxu0
        %v2663 = vadd.f32 0.0, %v2662
        %2664 = vmatmul.bf16.gmra.mxu0 %v400
        %v2665 = vpop.f32.mrf.mxu0
        %v2666 = vadd.f32 0.0, %v2665
        %v2667 = vpop.f32.mrf.mxu0
        %v2668 = vadd.f32 0.0, %v2667
        %2669 = vmatmul.bf16.gmra.mxu0 %v402
        %v2670 = vpop.f32.mrf.mxu0
        %v2671 = vadd.f32 0.0, %v2670
        %v2672 = vpop.f32.mrf.mxu0
        %v2673 = vadd.f32 0.0, %v2672
        %2674 = vmatmul.bf16.gmra.mxu0 %v404
        %v2675 = vpop.f32.mrf.mxu0
        %v2676 = vadd.f32 0.0, %v2675
        %v2677 = vpop.f32.mrf.mxu0
        %v2678 = vadd.f32 0.0, %v2677
        %2679 = vmatmul.bf16.gmra.mxu0 %v406
        %v2680 = vpop.f32.mrf.mxu0
        %v2681 = vadd.f32 0.0, %v2680
        %v2682 = vpop.f32.mrf.mxu0
        %2683 = vdwg.mxu0
        %2684 = vmatpush.bf16.msra.mxu0 0
        %2685 = vmatpush.bf16.msra.mxu0 0
        %2686 = vmatpush.bf16.msra.mxu0 %v2397
        %2687 = vmatpush.bf16.msra.mxu0 %v1993
        %2688 = vmatpush.bf16.msra.mxu0 %v1969
        %2689 = vmatpush.bf16.msra.mxu0 %v1945
        %2690 = vmatpush.bf16.msra.mxu0 %v1921
        %2691 = vmatpush.bf16.msra.mxu0 %v1897
        %2692 = vmatmul.bf16.gmra.mxu0 %v2354
        %v2693 = vpop.f32.mrf.mxu0
        %v2694 = vadd.f32 %v2621, %v2693
        %v2695 = vpop.f32.mrf.mxu0
        %v2696 = vadd.f32 %v2623, %v2695
        %2697 = vmatmul.bf16.gmra.mxu0 %v2357
        %v2698 = vpop.f32.mrf.mxu0
        %v2699 = vadd.f32 %v2626, %v2698
        %v2700 = vpop.f32.mrf.mxu0
        %v2701 = vadd.f32 %v2628, %v2700
        %2702 = vmatmul.bf16.gmra.mxu0 %v2360
        %v2703 = vpop.f32.mrf.mxu0
        %v2704 = vadd.f32 %v2631, %v2703
        %v2705 = vpop.f32.mrf.mxu0
        %v2706 = vadd.f32 %v2633, %v2705
        %2707 = vmatmul.bf16.gmra.mxu0 %v2363
        %v2708 = vpop.f32.mrf.mxu0
        %v2709 = vadd.f32 %v2636, %v2708
        %v2710 = vpop.f32.mrf.mxu0
        %v2711 = vadd.f32 %v2638, %v2710
        %2712 = vmatmul.bf16.gmra.mxu0 %v2366
        %v2713 = vpop.f32.mrf.mxu0
        %v2714 = vadd.f32 %v2641, %v2713
        %v2715 = vpop.f32.mrf.mxu0
        %v2716 = vadd.f32 %v2643, %v2715
        %2717 = vmatmul.bf16.gmra.mxu0 %v2369
        %v2718 = vpop.f32.mrf.mxu0
        %v2719 = vadd.f32 %v2646, %v2718
        %v2720 = vpop.f32.mrf.mxu0
        %v2721 = vadd.f32 %v2648, %v2720
        %2722 = vmatmul.bf16.gmra.mxu0 %v2372
        %v2723 = vpop.f32.mrf.mxu0
        %v2724 = vadd.f32 %v2651, %v2723
        %v2725 = vpop.f32.mrf.mxu0
        %v2726 = vadd.f32 %v2653, %v2725
        %2727 = vmatmul.bf16.gmra.mxu0 %v2375
        %v2728 = vpop.f32.mrf.mxu0
        %v2729 = vadd.f32 %v2656, %v2728
        %v2730 = vpop.f32.mrf.mxu0
        %v2731 = vadd.f32 %v2658, %v2730
        %2732 = vmatmul.bf16.gmra.mxu0 %v2378
        %v2733 = vpop.f32.mrf.mxu0
        %v2734 = vadd.f32 %v2661, %v2733
        %v2735 = vpop.f32.mrf.mxu0
        %v2736 = vadd.f32 %v2663, %v2735
        %2737 = vmatmul.bf16.gmra.mxu0 %v2381
        %v2738 = vpop.f32.mrf.mxu0
        %v2739 = vadd.f32 %v2666, %v2738
        %v2740 = vpop.f32.mrf.mxu0
        %v2741 = vadd.f32 %v2668, %v2740
        %2742 = vmatmul.bf16.gmra.mxu0 %v2384
        %v2743 = vpop.f32.mrf.mxu0
        %v2744 = vadd.f32 %v2671, %v2743
        %v2745 = vpop.f32.mrf.mxu0
        %v2746 = vadd.f32 %v2673, %v2745
        %2747 = vmatmul.bf16.gmra.mxu0 %v2387
        %v2748 = vpop.f32.mrf.mxu0
        %v2749 = vadd.f32 %v2676, %v2748
        %v2750 = vpop.f32.mrf.mxu0
        %v2751 = vadd.f32 %v2678, %v2750
        %2752 = vmatmul.bf16.gmra.mxu0 %v2390
        %v2753 = vpop.f32.mrf.mxu0
        %v2754 = vadd.f32 %v2681, %v2753
        %v2755 = vpop.f32.mrf.mxu0
        %2756 = vdwg.mxu0
        %2757 = vmatpush.bf16.msra.mxu0 %v1874
        %2758 = vmatpush.bf16.msra.mxu0 %v1850
        %2759 = vmatpush.bf16.msra.mxu0 %v1826
        %2760 = vmatpush.bf16.msra.mxu0 %v1802
        %2761 = vmatpush.bf16.msra.mxu0 %v1778
        %2762 = vmatpush.bf16.msra.mxu0 %v1754
        %2763 = vmatpush.bf16.msra.mxu0 %v1730
        %2764 = vmatpush.bf16.msra.mxu0 %v1706
        %2765 = vmatmul.bf16.gmra.mxu0 %v382
        %v2766 = vpop.f32.mrf.mxu0
        %v2767 = vadd.f32 0.0, %v2766
        %v2768 = vpop.f32.mrf.mxu0
        %v2769 = vadd.f32 0.0, %v2768
        %2770 = vmatmul.bf16.gmra.mxu0 %v384
        %v2771 = vpop.f32.mrf.mxu0
        %v2772 = vadd.f32 0.0, %v2771
        %v2773 = vpop.f32.mrf.mxu0
        %v2774 = vadd.f32 0.0, %v2773
        %2775 = vmatmul.bf16.gmra.mxu0 %v386
        %v2776 = vpop.f32.mrf.mxu0
        %v2777 = vadd.f32 0.0, %v2776
        %v2778 = vpop.f32.mrf.mxu0
        %v2779 = vadd.f32 0.0, %v2778
        %2780 = vmatmul.bf16.gmra.mxu0 %v388
        %v2781 = vpop.f32.mrf.mxu0
        %v2782 = vadd.f32 0.0, %v2781
        %v2783 = vpop.f32.mrf.mxu0
        %v2784 = vadd.f32 0.0, %v2783
        %2785 = vmatmul.bf16.gmra.mxu0 %v390
        %v2786 = vpop.f32.mrf.mxu0
        %v2787 = vadd.f32 0.0, %v2786
        %v2788 = vpop.f32.mrf.mxu0
        %v2789 = vadd.f32 0.0, %v2788
        %2790 = vmatmul.bf16.gmra.mxu0 %v392
        %v2791 = vpop.f32.mrf.mxu0
        %v2792 = vadd.f32 0.0, %v2791
        %v2793 = vpop.f32.mrf.mxu0
        %v2794 = vadd.f32 0.0, %v2793
        %2795 = vmatmul.bf16.gmra.mxu0 %v394
        %v2796 = vpop.f32.mrf.mxu0
        %v2797 = vadd.f32 0.0, %v2796
        %v2798 = vpop.f32.mrf.mxu0
        %v2799 = vadd.f32 0.0, %v2798
        %2800 = vmatmul.bf16.gmra.mxu0 %v396
        %v2801 = vpop.f32.mrf.mxu0
        %v2802 = vadd.f32 0.0, %v2801
        %v2803 = vpop.f32.mrf.mxu0
        %v2804 = vadd.f32 0.0, %v2803
        %2805 = vmatmul.bf16.gmra.mxu0 %v398
        %v2806 = vpop.f32.mrf.mxu0
        %v2807 = vadd.f32 0.0, %v2806
        %v2808 = vpop.f32.mrf.mxu0
        %v2809 = vadd.f32 0.0, %v2808
        %2810 = vmatmul.bf16.gmra.mxu0 %v400
        %v2811 = vpop.f32.mrf.mxu0
        %v2812 = vadd.f32 0.0, %v2811
        %v2813 = vpop.f32.mrf.mxu0
        %v2814 = vadd.f32 0.0, %v2813
        %2815 = vmatmul.bf16.gmra.mxu0 %v402
        %v2816 = vpop.f32.mrf.mxu0
        %v2817 = vadd.f32 0.0, %v2816
        %v2818 = vpop.f32.mrf.mxu0
        %v2819 = vadd.f32 0.0, %v2818
        %2820 = vmatmul.bf16.gmra.mxu0 %v404
        %v2821 = vpop.f32.mrf.mxu0
        %v2822 = vadd.f32 0.0, %v2821
        %v2823 = vpop.f32.mrf.mxu0
        %v2824 = vadd.f32 0.0, %v2823
        %2825 = vmatmul.bf16.gmra.mxu0 %v406
        %v2826 = vpop.f32.mrf.mxu0
        %v2827 = vadd.f32 0.0, %v2826
        %v2828 = vpop.f32.mrf.mxu0
        %2829 = vdwg.mxu0
        %2830 = vmatpush.bf16.msra.mxu0 0
        %2831 = vmatpush.bf16.msra.mxu0 0
        %2832 = vmatpush.bf16.msra.mxu0 %v2400
        %2833 = vmatpush.bf16.msra.mxu0 %v1994
        %2834 = vmatpush.bf16.msra.mxu0 %v1970
        %2835 = vmatpush.bf16.msra.mxu0 %v1946
        %2836 = vmatpush.bf16.msra.mxu0 %v1922
        %2837 = vmatpush.bf16.msra.mxu0 %v1898
        %2838 = vmatmul.bf16.gmra.mxu0 %v2354
        %v2839 = vpop.f32.mrf.mxu0
        %v2840 = vadd.f32 %v2767, %v2839
        %v2841 = vpop.f32.mrf.mxu0
        %v2842 = vadd.f32 %v2769, %v2841
        %2843 = vmatmul.bf16.gmra.mxu0 %v2357
        %v2844 = vpop.f32.mrf.mxu0
        %v2845 = vadd.f32 %v2772, %v2844
        %v2846 = vpop.f32.mrf.mxu0
        %v2847 = vadd.f32 %v2774, %v2846
        %2848 = vmatmul.bf16.gmra.mxu0 %v2360
        %v2849 = vpop.f32.mrf.mxu0
        %v2850 = vadd.f32 %v2777, %v2849
        %v2851 = vpop.f32.mrf.mxu0
        %v2852 = vadd.f32 %v2779, %v2851
        %2853 = vmatmul.bf16.gmra.mxu0 %v2363
        %v2854 = vpop.f32.mrf.mxu0
        %v2855 = vadd.f32 %v2782, %v2854
        %v2856 = vpop.f32.mrf.mxu0
        %v2857 = vadd.f32 %v2784, %v2856
        %2858 = vmatmul.bf16.gmra.mxu0 %v2366
        %v2859 = vpop.f32.mrf.mxu0
        %v2860 = vadd.f32 %v2787, %v2859
        %v2861 = vpop.f32.mrf.mxu0
        %v2862 = vadd.f32 %v2789, %v2861
        %2863 = vmatmul.bf16.gmra.mxu0 %v2369
        %v2864 = vpop.f32.mrf.mxu0
        %v2865 = vadd.f32 %v2792, %v2864
        %v2866 = vpop.f32.mrf.mxu0
        %v2867 = vadd.f32 %v2794, %v2866
        %2868 = vmatmul.bf16.gmra.mxu0 %v2372
        %v2869 = vpop.f32.mrf.mxu0
        %v2870 = vadd.f32 %v2797, %v2869
        %v2871 = vpop.f32.mrf.mxu0
        %v2872 = vadd.f32 %v2799, %v2871
        %2873 = vmatmul.bf16.gmra.mxu0 %v2375
        %v2874 = vpop.f32.mrf.mxu0
        %v2875 = vadd.f32 %v2802, %v2874
        %v2876 = vpop.f32.mrf.mxu0
        %v2877 = vadd.f32 %v2804, %v2876
        %2878 = vmatmul.bf16.gmra.mxu0 %v2378
        %v2879 = vpop.f32.mrf.mxu0
        %v2880 = vadd.f32 %v2807, %v2879
        %v2881 = vpop.f32.mrf.mxu0
        %v2882 = vadd.f32 %v2809, %v2881
        %2883 = vmatmul.bf16.gmra.mxu0 %v2381
        %v2884 = vpop.f32.mrf.mxu0
        %v2885 = vadd.f32 %v2812, %v2884
        %v2886 = vpop.f32.mrf.mxu0
        %v2887 = vadd.f32 %v2814, %v2886
        %2888 = vmatmul.bf16.gmra.mxu0 %v2384
        %v2889 = vpop.f32.mrf.mxu0
        %v2890 = vadd.f32 %v2817, %v2889
        %v2891 = vpop.f32.mrf.mxu0
        %v2892 = vadd.f32 %v2819, %v2891
        %2893 = vmatmul.bf16.gmra.mxu0 %v2387
        %v2894 = vpop.f32.mrf.mxu0
        %v2895 = vadd.f32 %v2822, %v2894
        %v2896 = vpop.f32.mrf.mxu0
        %v2897 = vadd.f32 %v2824, %v2896
        %2898 = vmatmul.bf16.gmra.mxu0 %v2390
        %v2899 = vpop.f32.mrf.mxu0
        %v2900 = vadd.f32 %v2827, %v2899
        %v2901 = vpop.f32.mrf.mxu0
        %2902 = vdwg.mxu0
        %2903 = vmatpush.bf16.msra.mxu0 %v1875
        %2904 = vmatpush.bf16.msra.mxu0 %v1851
        %2905 = vmatpush.bf16.msra.mxu0 %v1827
        %2906 = vmatpush.bf16.msra.mxu0 %v1803
        %2907 = vmatpush.bf16.msra.mxu0 %v1779
        %2908 = vmatpush.bf16.msra.mxu0 %v1755
        %2909 = vmatpush.bf16.msra.mxu0 %v1731
        %2910 = vmatpush.bf16.msra.mxu0 %v1707
        %2911 = vmatmul.bf16.gmra.mxu0 %v382
        %v2912 = vpop.f32.mrf.mxu0
        %v2913 = vadd.f32 0.0, %v2912
        %v2914 = vpop.f32.mrf.mxu0
        %v2915 = vadd.f32 0.0, %v2914
        %2916 = vmatmul.bf16.gmra.mxu0 %v384
        %v2917 = vpop.f32.mrf.mxu0
        %v2918 = vadd.f32 0.0, %v2917
        %v2919 = vpop.f32.mrf.mxu0
        %v2920 = vadd.f32 0.0, %v2919
        %2921 = vmatmul.bf16.gmra.mxu0 %v386
        %v2922 = vpop.f32.mrf.mxu0
        %v2923 = vadd.f32 0.0, %v2922
        %v2924 = vpop.f32.mrf.mxu0
        %v2925 = vadd.f32 0.0, %v2924
        %2926 = vmatmul.bf16.gmra.mxu0 %v388
        %v2927 = vpop.f32.mrf.mxu0
        %v2928 = vadd.f32 0.0, %v2927
        %v2929 = vpop.f32.mrf.mxu0
        %v2930 = vadd.f32 0.0, %v2929
        %2931 = vmatmul.bf16.gmra.mxu0 %v390
        %v2932 = vpop.f32.mrf.mxu0
        %v2933 = vadd.f32 0.0, %v2932
        %v2934 = vpop.f32.mrf.mxu0
        %v2935 = vadd.f32 0.0, %v2934
        %2936 = vmatmul.bf16.gmra.mxu0 %v392
        %v2937 = vpop.f32.mrf.mxu0
        %v2938 = vadd.f32 0.0, %v2937
        %v2939 = vpop.f32.mrf.mxu0
        %v2940 = vadd.f32 0.0, %v2939
        %2941 = vmatmul.bf16.gmra.mxu0 %v394
        %v2942 = vpop.f32.mrf.mxu0
        %v2943 = vadd.f32 0.0, %v2942
        %v2944 = vpop.f32.mrf.mxu0
        %v2945 = vadd.f32 0.0, %v2944
        %2946 = vmatmul.bf16.gmra.mxu0 %v396
        %v2947 = vpop.f32.mrf.mxu0
        %v2948 = vadd.f32 0.0, %v2947
        %v2949 = vpop.f32.mrf.mxu0
        %v2950 = vadd.f32 0.0, %v2949
        %2951 = vmatmul.bf16.gmra.mxu0 %v398
        %v2952 = vpop.f32.mrf.mxu0
        %v2953 = vadd.f32 0.0, %v2952
        %v2954 = vpop.f32.mrf.mxu0
        %v2955 = vadd.f32 0.0, %v2954
        %2956 = vmatmul.bf16.gmra.mxu0 %v400
        %v2957 = vpop.f32.mrf.mxu0
        %v2958 = vadd.f32 0.0, %v2957
        %v2959 = vpop.f32.mrf.mxu0
        %v2960 = vadd.f32 0.0, %v2959
        %2961 = vmatmul.bf16.gmra.mxu0 %v402
        %v2962 = vpop.f32.mrf.mxu0
        %v2963 = vadd.f32 0.0, %v2962
        %v2964 = vpop.f32.mrf.mxu0
        %v2965 = vadd.f32 0.0, %v2964
        %2966 = vmatmul.bf16.gmra.mxu0 %v404
        %v2967 = vpop.f32.mrf.mxu0
        %v2968 = vadd.f32 0.0, %v2967
        %v2969 = vpop.f32.mrf.mxu0
        %v2970 = vadd.f32 0.0, %v2969
        %2971 = vmatmul.bf16.gmra.mxu0 %v406
        %v2972 = vpop.f32.mrf.mxu0
        %v2973 = vadd.f32 0.0, %v2972
        %v2974 = vpop.f32.mrf.mxu0
        %2975 = vdwg.mxu0
        %2976 = vmatpush.bf16.msra.mxu0 0
        %2977 = vmatpush.bf16.msra.mxu0 0
        %2978 = vmatpush.bf16.msra.mxu0 %v2403
        %2979 = vmatpush.bf16.msra.mxu0 %v1995
        %2980 = vmatpush.bf16.msra.mxu0 %v1971
        %2981 = vmatpush.bf16.msra.mxu0 %v1947
        %2982 = vmatpush.bf16.msra.mxu0 %v1923
        %2983 = vmatpush.bf16.msra.mxu0 %v1899
        %2984 = vmatmul.bf16.gmra.mxu0 %v2354
        %v2985 = vpop.f32.mrf.mxu0
        %v2986 = vadd.f32 %v2913, %v2985
        %v2987 = vpop.f32.mrf.mxu0
        %v2988 = vadd.f32 %v2915, %v2987
        %2989 = vmatmul.bf16.gmra.mxu0 %v2357
        %v2990 = vpop.f32.mrf.mxu0
        %v2991 = vadd.f32 %v2918, %v2990
        %v2992 = vpop.f32.mrf.mxu0
        %v2993 = vadd.f32 %v2920, %v2992
        %2994 = vmatmul.bf16.gmra.mxu0 %v2360
        %v2995 = vpop.f32.mrf.mxu0
        %v2996 = vadd.f32 %v2923, %v2995
        %v2997 = vpop.f32.mrf.mxu0
        %v2998 = vadd.f32 %v2925, %v2997
        %2999 = vmatmul.bf16.gmra.mxu0 %v2363
        %v3000 = vpop.f32.mrf.mxu0
        %v3001 = vadd.f32 %v2928, %v3000
        %v3002 = vpop.f32.mrf.mxu0
        %v3003 = vadd.f32 %v2930, %v3002
        %3004 = vmatmul.bf16.gmra.mxu0 %v2366
        %v3005 = vpop.f32.mrf.mxu0
        %v3006 = vadd.f32 %v2933, %v3005
        %v3007 = vpop.f32.mrf.mxu0
        %v3008 = vadd.f32 %v2935, %v3007
        %3009 = vmatmul.bf16.gmra.mxu0 %v2369
        %v3010 = vpop.f32.mrf.mxu0
        %v3011 = vadd.f32 %v2938, %v3010
        %v3012 = vpop.f32.mrf.mxu0
        %v3013 = vadd.f32 %v2940, %v3012
        %3014 = vmatmul.bf16.gmra.mxu0 %v2372
        %v3015 = vpop.f32.mrf.mxu0
        %v3016 = vadd.f32 %v2943, %v3015
        %v3017 = vpop.f32.mrf.mxu0
        %v3018 = vadd.f32 %v2945, %v3017
        %3019 = vmatmul.bf16.gmra.mxu0 %v2375
        %v3020 = vpop.f32.mrf.mxu0
        %v3021 = vadd.f32 %v2948, %v3020
        %v3022 = vpop.f32.mrf.mxu0
        %v3023 = vadd.f32 %v2950, %v3022
        %3024 = vmatmul.bf16.gmra.mxu0 %v2378
        %v3025 = vpop.f32.mrf.mxu0
        %v3026 = vadd.f32 %v2953, %v3025
        %v3027 = vpop.f32.mrf.mxu0
        %v3028 = vadd.f32 %v2955, %v3027
        %3029 = vmatmul.bf16.gmra.mxu0 %v2381
        %v3030 = vpop.f32.mrf.mxu0
        %v3031 = vadd.f32 %v2958, %v3030
        %v3032 = vpop.f32.mrf.mxu0
        %v3033 = vadd.f32 %v2960, %v3032
        %3034 = vmatmul.bf16.gmra.mxu0 %v2384
        %v3035 = vpop.f32.mrf.mxu0
        %v3036 = vadd.f32 %v2963, %v3035
        %v3037 = vpop.f32.mrf.mxu0
        %v3038 = vadd.f32 %v2965, %v3037
        %3039 = vmatmul.bf16.gmra.mxu0 %v2387
        %v3040 = vpop.f32.mrf.mxu0
        %v3041 = vadd.f32 %v2968, %v3040
        %v3042 = vpop.f32.mrf.mxu0
        %v3043 = vadd.f32 %v2970, %v3042
        %3044 = vmatmul.bf16.gmra.mxu0 %v2390
        %v3045 = vpop.f32.mrf.mxu0
        %v3046 = vadd.f32 %v2973, %v3045
        %v3047 = vpop.f32.mrf.mxu0
        %3048 = vdwg.mxu0
        %3049 = vmatpush.bf16.msra.mxu0 %v1876
        %3050 = vmatpush.bf16.msra.mxu0 %v1852
        %3051 = vmatpush.bf16.msra.mxu0 %v1828
        %3052 = vmatpush.bf16.msra.mxu0 %v1804
        %3053 = vmatpush.bf16.msra.mxu0 %v1780
        %3054 = vmatpush.bf16.msra.mxu0 %v1756
        %3055 = vmatpush.bf16.msra.mxu0 %v1732
        %3056 = vmatpush.bf16.msra.mxu0 %v1708
        %3057 = vmatmul.bf16.gmra.mxu0 %v382
        %v3058 = vpop.f32.mrf.mxu0
        %v3059 = vadd.f32 0.0, %v3058
        %v3060 = vpop.f32.mrf.mxu0
        %v3061 = vadd.f32 0.0, %v3060
        %3062 = vmatmul.bf16.gmra.mxu0 %v384
        %v3063 = vpop.f32.mrf.mxu0
        %v3064 = vadd.f32 0.0, %v3063
        %v3065 = vpop.f32.mrf.mxu0
        %v3066 = vadd.f32 0.0, %v3065
        %3067 = vmatmul.bf16.gmra.mxu0 %v386
        %v3068 = vpop.f32.mrf.mxu0
        %v3069 = vadd.f32 0.0, %v3068
        %v3070 = vpop.f32.mrf.mxu0
        %v3071 = vadd.f32 0.0, %v3070
        %3072 = vmatmul.bf16.gmra.mxu0 %v388
        %v3073 = vpop.f32.mrf.mxu0
        %v3074 = vadd.f32 0.0, %v3073
        %v3075 = vpop.f32.mrf.mxu0
        %v3076 = vadd.f32 0.0, %v3075
        %3077 = vmatmul.bf16.gmra.mxu0 %v390
        %v3078 = vpop.f32.mrf.mxu0
        %v3079 = vadd.f32 0.0, %v3078
        %v3080 = vpop.f32.mrf.mxu0
        %v3081 = vadd.f32 0.0, %v3080
        %3082 = vmatmul.bf16.gmra.mxu0 %v392
        %v3083 = vpop.f32.mrf.mxu0
        %v3084 = vadd.f32 0.0, %v3083
        %v3085 = vpop.f32.mrf.mxu0
        %v3086 = vadd.f32 0.0, %v3085
        %3087 = vmatmul.bf16.gmra.mxu0 %v394
        %v3088 = vpop.f32.mrf.mxu0
        %v3089 = vadd.f32 0.0, %v3088
        %v3090 = vpop.f32.mrf.mxu0
        %v3091 = vadd.f32 0.0, %v3090
        %3092 = vmatmul.bf16.gmra.mxu0 %v396
        %v3093 = vpop.f32.mrf.mxu0
        %v3094 = vadd.f32 0.0, %v3093
        %v3095 = vpop.f32.mrf.mxu0
        %v3096 = vadd.f32 0.0, %v3095
        %3097 = vmatmul.bf16.gmra.mxu0 %v398
        %v3098 = vpop.f32.mrf.mxu0
        %v3099 = vadd.f32 0.0, %v3098
        %v3100 = vpop.f32.mrf.mxu0
        %v3101 = vadd.f32 0.0, %v3100
        %3102 = vmatmul.bf16.gmra.mxu0 %v400
        %v3103 = vpop.f32.mrf.mxu0
        %v3104 = vadd.f32 0.0, %v3103
        %v3105 = vpop.f32.mrf.mxu0
        %v3106 = vadd.f32 0.0, %v3105
        %3107 = vmatmul.bf16.gmra.mxu0 %v402
        %v3108 = vpop.f32.mrf.mxu0
        %v3109 = vadd.f32 0.0, %v3108
        %v3110 = vpop.f32.mrf.mxu0
        %v3111 = vadd.f32 0.0, %v3110
        %3112 = vmatmul.bf16.gmra.mxu0 %v404
        %v3113 = vpop.f32.mrf.mxu0
        %v3114 = vadd.f32 0.0, %v3113
        %v3115 = vpop.f32.mrf.mxu0
        %v3116 = vadd.f32 0.0, %v3115
        %3117 = vmatmul.bf16.gmra.mxu0 %v406
        %v3118 = vpop.f32.mrf.mxu0
        %v3119 = vadd.f32 0.0, %v3118
        %v3120 = vpop.f32.mrf.mxu0
        %3121 = vdwg.mxu0
        %3122 = vmatpush.bf16.msra.mxu0 0
        %3123 = vmatpush.bf16.msra.mxu0 0
        %3124 = vmatpush.bf16.msra.mxu0 %v2406
        %3125 = vmatpush.bf16.msra.mxu0 %v1996
        %3126 = vmatpush.bf16.msra.mxu0 %v1972
        %3127 = vmatpush.bf16.msra.mxu0 %v1948
        %3128 = vmatpush.bf16.msra.mxu0 %v1924
        %3129 = vmatpush.bf16.msra.mxu0 %v1900
        %3130 = vmatmul.bf16.gmra.mxu0 %v2354
        %v3131 = vpop.f32.mrf.mxu0
        %v3132 = vadd.f32 %v3059, %v3131
        %v3133 = vpop.f32.mrf.mxu0
        %v3134 = vadd.f32 %v3061, %v3133
        %3135 = vmatmul.bf16.gmra.mxu0 %v2357
        %v3136 = vpop.f32.mrf.mxu0
        %v3137 = vadd.f32 %v3064, %v3136
        %v3138 = vpop.f32.mrf.mxu0
        %v3139 = vadd.f32 %v3066, %v3138
        %3140 = vmatmul.bf16.gmra.mxu0 %v2360
        %v3141 = vpop.f32.mrf.mxu0
        %v3142 = vadd.f32 %v3069, %v3141
        %v3143 = vpop.f32.mrf.mxu0
        %v3144 = vadd.f32 %v3071, %v3143
        %3145 = vmatmul.bf16.gmra.mxu0 %v2363
        %v3146 = vpop.f32.mrf.mxu0
        %v3147 = vadd.f32 %v3074, %v3146
        %v3148 = vpop.f32.mrf.mxu0
        %v3149 = vadd.f32 %v3076, %v3148
        %3150 = vmatmul.bf16.gmra.mxu0 %v2366
        %v3151 = vpop.f32.mrf.mxu0
        %v3152 = vadd.f32 %v3079, %v3151
        %v3153 = vpop.f32.mrf.mxu0
        %v3154 = vadd.f32 %v3081, %v3153
        %3155 = vmatmul.bf16.gmra.mxu0 %v2369
        %v3156 = vpop.f32.mrf.mxu0
        %v3157 = vadd.f32 %v3084, %v3156
        %v3158 = vpop.f32.mrf.mxu0
        %v3159 = vadd.f32 %v3086, %v3158
        %3160 = vmatmul.bf16.gmra.mxu0 %v2372
        %v3161 = vpop.f32.mrf.mxu0
        %v3162 = vadd.f32 %v3089, %v3161
        %v3163 = vpop.f32.mrf.mxu0
        %v3164 = vadd.f32 %v3091, %v3163
        %3165 = vmatmul.bf16.gmra.mxu0 %v2375
        %v3166 = vpop.f32.mrf.mxu0
        %v3167 = vadd.f32 %v3094, %v3166
        %v3168 = vpop.f32.mrf.mxu0
        %v3169 = vadd.f32 %v3096, %v3168
        %3170 = vmatmul.bf16.gmra.mxu0 %v2378
        %v3171 = vpop.f32.mrf.mxu0
        %v3172 = vadd.f32 %v3099, %v3171
        %v3173 = vpop.f32.mrf.mxu0
        %v3174 = vadd.f32 %v3101, %v3173
        %3175 = vmatmul.bf16.gmra.mxu0 %v2381
        %v3176 = vpop.f32.mrf.mxu0
        %v3177 = vadd.f32 %v3104, %v3176
        %v3178 = vpop.f32.mrf.mxu0
        %v3179 = vadd.f32 %v3106, %v3178
        %3180 = vmatmul.bf16.gmra.mxu0 %v2384
        %v3181 = vpop.f32.mrf.mxu0
        %v3182 = vadd.f32 %v3109, %v3181
        %v3183 = vpop.f32.mrf.mxu0
        %v3184 = vadd.f32 %v3111, %v3183
        %3185 = vmatmul.bf16.gmra.mxu0 %v2387
        %v3186 = vpop.f32.mrf.mxu0
        %v3187 = vadd.f32 %v3114, %v3186
        %v3188 = vpop.f32.mrf.mxu0
        %v3189 = vadd.f32 %v3116, %v3188
        %3190 = vmatmul.bf16.gmra.mxu0 %v2390
        %v3191 = vpop.f32.mrf.mxu0
        %v3192 = vadd.f32 %v3119, %v3191
        %v3193 = vpop.f32.mrf.mxu0
        %3194 = vdwg.mxu0
        %3195 = vmatpush.bf16.msra.mxu0 %v1877
        %3196 = vmatpush.bf16.msra.mxu0 %v1853
        %3197 = vmatpush.bf16.msra.mxu0 %v1829
        %3198 = vmatpush.bf16.msra.mxu0 %v1805
        %3199 = vmatpush.bf16.msra.mxu0 %v1781
        %3200 = vmatpush.bf16.msra.mxu0 %v1757
        %3201 = vmatpush.bf16.msra.mxu0 %v1733
        %3202 = vmatpush.bf16.msra.mxu0 %v1709
        %3203 = vmatmul.bf16.gmra.mxu0 %v382
        %v3204 = vpop.f32.mrf.mxu0
        %v3205 = vadd.f32 0.0, %v3204
        %v3206 = vpop.f32.mrf.mxu0
        %v3207 = vadd.f32 0.0, %v3206
        %3208 = vmatmul.bf16.gmra.mxu0 %v384
        %v3209 = vpop.f32.mrf.mxu0
        %v3210 = vadd.f32 0.0, %v3209
        %v3211 = vpop.f32.mrf.mxu0
        %v3212 = vadd.f32 0.0, %v3211
        %3213 = vmatmul.bf16.gmra.mxu0 %v386
        %v3214 = vpop.f32.mrf.mxu0
        %v3215 = vadd.f32 0.0, %v3214
        %v3216 = vpop.f32.mrf.mxu0
        %v3217 = vadd.f32 0.0, %v3216
        %3218 = vmatmul.bf16.gmra.mxu0 %v388
        %v3219 = vpop.f32.mrf.mxu0
        %v3220 = vadd.f32 0.0, %v3219
        %v3221 = vpop.f32.mrf.mxu0
        %v3222 = vadd.f32 0.0, %v3221
        %3223 = vmatmul.bf16.gmra.mxu0 %v390
        %v3224 = vpop.f32.mrf.mxu0
        %v3225 = vadd.f32 0.0, %v3224
        %v3226 = vpop.f32.mrf.mxu0
        %v3227 = vadd.f32 0.0, %v3226
        %3228 = vmatmul.bf16.gmra.mxu0 %v392
        %v3229 = vpop.f32.mrf.mxu0
        %v3230 = vadd.f32 0.0, %v3229
        %v3231 = vpop.f32.mrf.mxu0
        %v3232 = vadd.f32 0.0, %v3231
        %3233 = vmatmul.bf16.gmra.mxu0 %v394
        %v3234 = vpop.f32.mrf.mxu0
        %v3235 = vadd.f32 0.0, %v3234
        %v3236 = vpop.f32.mrf.mxu0
        %v3237 = vadd.f32 0.0, %v3236
        %3238 = vmatmul.bf16.gmra.mxu0 %v396
        %v3239 = vpop.f32.mrf.mxu0
        %v3240 = vadd.f32 0.0, %v3239
        %v3241 = vpop.f32.mrf.mxu0
        %v3242 = vadd.f32 0.0, %v3241
        %3243 = vmatmul.bf16.gmra.mxu0 %v398
        %v3244 = vpop.f32.mrf.mxu0
        %v3245 = vadd.f32 0.0, %v3244
        %v3246 = vpop.f32.mrf.mxu0
        %v3247 = vadd.f32 0.0, %v3246
        %3248 = vmatmul.bf16.gmra.mxu0 %v400
        %v3249 = vpop.f32.mrf.mxu0
        %v3250 = vadd.f32 0.0, %v3249
        %v3251 = vpop.f32.mrf.mxu0
        %v3252 = vadd.f32 0.0, %v3251
        %3253 = vmatmul.bf16.gmra.mxu0 %v402
        %v3254 = vpop.f32.mrf.mxu0
        %v3255 = vadd.f32 0.0, %v3254
        %v3256 = vpop.f32.mrf.mxu0
        %v3257 = vadd.f32 0.0, %v3256
        %3258 = vmatmul.bf16.gmra.mxu0 %v404
        %v3259 = vpop.f32.mrf.mxu0
        %v3260 = vadd.f32 0.0, %v3259
        %v3261 = vpop.f32.mrf.mxu0
        %v3262 = vadd.f32 0.0, %v3261
        %3263 = vmatmul.bf16.gmra.mxu0 %v406
        %v3264 = vpop.f32.mrf.mxu0
        %v3265 = vadd.f32 0.0, %v3264
        %v3266 = vpop.f32.mrf.mxu0
        %3267 = vdwg.mxu0
        %3268 = vmatpush.bf16.msra.mxu0 0
        %3269 = vmatpush.bf16.msra.mxu0 0
        %3270 = vmatpush.bf16.msra.mxu0 %v2409
        %3271 = vmatpush.bf16.msra.mxu0 %v1997
        %3272 = vmatpush.bf16.msra.mxu0 %v1973
        %3273 = vmatpush.bf16.msra.mxu0 %v1949
        %3274 = vmatpush.bf16.msra.mxu0 %v1925
        %3275 = vmatpush.bf16.msra.mxu0 %v1901
        %3276 = vmatmul.bf16.gmra.mxu0 %v2354
        %v3277 = vpop.f32.mrf.mxu0
        %v3278 = vadd.f32 %v3205, %v3277
        %v3279 = vpop.f32.mrf.mxu0
        %v3280 = vadd.f32 %v3207, %v3279
        %3281 = vmatmul.bf16.gmra.mxu0 %v2357
        %v3282 = vpop.f32.mrf.mxu0
        %v3283 = vadd.f32 %v3210, %v3282
        %v3284 = vpop.f32.mrf.mxu0
        %v3285 = vadd.f32 %v3212, %v3284
        %3286 = vmatmul.bf16.gmra.mxu0 %v2360
        %v3287 = vpop.f32.mrf.mxu0
        %v3288 = vadd.f32 %v3215, %v3287
        %v3289 = vpop.f32.mrf.mxu0
        %v3290 = vadd.f32 %v3217, %v3289
        %3291 = vmatmul.bf16.gmra.mxu0 %v2363
        %v3292 = vpop.f32.mrf.mxu0
        %v3293 = vadd.f32 %v3220, %v3292
        %v3294 = vpop.f32.mrf.mxu0
        %v3295 = vadd.f32 %v3222, %v3294
        %3296 = vmatmul.bf16.gmra.mxu0 %v2366
        %v3297 = vpop.f32.mrf.mxu0
        %v3298 = vadd.f32 %v3225, %v3297
        %v3299 = vpop.f32.mrf.mxu0
        %v3300 = vadd.f32 %v3227, %v3299
        %3301 = vmatmul.bf16.gmra.mxu0 %v2369
        %v3302 = vpop.f32.mrf.mxu0
        %v3303 = vadd.f32 %v3230, %v3302
        %v3304 = vpop.f32.mrf.mxu0
        %v3305 = vadd.f32 %v3232, %v3304
        %3306 = vmatmul.bf16.gmra.mxu0 %v2372
        %v3307 = vpop.f32.mrf.mxu0
        %v3308 = vadd.f32 %v3235, %v3307
        %v3309 = vpop.f32.mrf.mxu0
        %v3310 = vadd.f32 %v3237, %v3309
        %3311 = vmatmul.bf16.gmra.mxu0 %v2375
        %v3312 = vpop.f32.mrf.mxu0
        %v3313 = vadd.f32 %v3240, %v3312
        %v3314 = vpop.f32.mrf.mxu0
        %v3315 = vadd.f32 %v3242, %v3314
        %3316 = vmatmul.bf16.gmra.mxu0 %v2378
        %v3317 = vpop.f32.mrf.mxu0
        %v3318 = vadd.f32 %v3245, %v3317
        %v3319 = vpop.f32.mrf.mxu0
        %v3320 = vadd.f32 %v3247, %v3319
        %3321 = vmatmul.bf16.gmra.mxu0 %v2381
        %v3322 = vpop.f32.mrf.mxu0
        %v3323 = vadd.f32 %v3250, %v3322
        %v3324 = vpop.f32.mrf.mxu0
        %v3325 = vadd.f32 %v3252, %v3324
        %3326 = vmatmul.bf16.gmra.mxu0 %v2384
        %v3327 = vpop.f32.mrf.mxu0
        %v3328 = vadd.f32 %v3255, %v3327
        %v3329 = vpop.f32.mrf.mxu0
        %v3330 = vadd.f32 %v3257, %v3329
        %3331 = vmatmul.bf16.gmra.mxu0 %v2387
        %v3332 = vpop.f32.mrf.mxu0
        %v3333 = vadd.f32 %v3260, %v3332
        %v3334 = vpop.f32.mrf.mxu0
        %v3335 = vadd.f32 %v3262, %v3334
        %3336 = vmatmul.bf16.gmra.mxu0 %v2390
        %v3337 = vpop.f32.mrf.mxu0
        %v3338 = vadd.f32 %v3265, %v3337
        %v3339 = vpop.f32.mrf.mxu0
        %3340 = vdwg.mxu0
        %3341 = vmatpush.bf16.msra.mxu0 %v1878
        %3342 = vmatpush.bf16.msra.mxu0 %v1854
        %3343 = vmatpush.bf16.msra.mxu0 %v1830
        %3344 = vmatpush.bf16.msra.mxu0 %v1806
        %3345 = vmatpush.bf16.msra.mxu0 %v1782
        %3346 = vmatpush.bf16.msra.mxu0 %v1758
        %3347 = vmatpush.bf16.msra.mxu0 %v1734
        %3348 = vmatpush.bf16.msra.mxu0 %v1710
        %3349 = vmatmul.bf16.gmra.mxu0 %v382
        %v3350 = vpop.f32.mrf.mxu0
        %v3351 = vadd.f32 0.0, %v3350
        %v3352 = vpop.f32.mrf.mxu0
        %v3353 = vadd.f32 0.0, %v3352
        %3354 = vmatmul.bf16.gmra.mxu0 %v384
        %v3355 = vpop.f32.mrf.mxu0
        %v3356 = vadd.f32 0.0, %v3355
        %v3357 = vpop.f32.mrf.mxu0
        %v3358 = vadd.f32 0.0, %v3357
        %3359 = vmatmul.bf16.gmra.mxu0 %v386
        %v3360 = vpop.f32.mrf.mxu0
        %v3361 = vadd.f32 0.0, %v3360
        %v3362 = vpop.f32.mrf.mxu0
        %v3363 = vadd.f32 0.0, %v3362
        %3364 = vmatmul.bf16.gmra.mxu0 %v388
        %v3365 = vpop.f32.mrf.mxu0
        %v3366 = vadd.f32 0.0, %v3365
        %v3367 = vpop.f32.mrf.mxu0
        %v3368 = vadd.f32 0.0, %v3367
        %3369 = vmatmul.bf16.gmra.mxu0 %v390
        %v3370 = vpop.f32.mrf.mxu0
        %v3371 = vadd.f32 0.0, %v3370
        %v3372 = vpop.f32.mrf.mxu0
        %v3373 = vadd.f32 0.0, %v3372
        %3374 = vmatmul.bf16.gmra.mxu0 %v392
        %v3375 = vpop.f32.mrf.mxu0
        %v3376 = vadd.f32 0.0, %v3375
        %v3377 = vpop.f32.mrf.mxu0
        %v3378 = vadd.f32 0.0, %v3377
        %3379 = vmatmul.bf16.gmra.mxu0 %v394
        %v3380 = vpop.f32.mrf.mxu0
        %v3381 = vadd.f32 0.0, %v3380
        %v3382 = vpop.f32.mrf.mxu0
        %v3383 = vadd.f32 0.0, %v3382
        %3384 = vmatmul.bf16.gmra.mxu0 %v396
        %v3385 = vpop.f32.mrf.mxu0
        %v3386 = vadd.f32 0.0, %v3385
        %v3387 = vpop.f32.mrf.mxu0
        %v3388 = vadd.f32 0.0, %v3387
        %3389 = vmatmul.bf16.gmra.mxu0 %v398
        %v3390 = vpop.f32.mrf.mxu0
        %v3391 = vadd.f32 0.0, %v3390
        %v3392 = vpop.f32.mrf.mxu0
        %v3393 = vadd.f32 0.0, %v3392
        %3394 = vmatmul.bf16.gmra.mxu0 %v400
        %v3395 = vpop.f32.mrf.mxu0
        %v3396 = vadd.f32 0.0, %v3395
        %v3397 = vpop.f32.mrf.mxu0
        %v3398 = vadd.f32 0.0, %v3397
        %3399 = vmatmul.bf16.gmra.mxu0 %v402
        %v3400 = vpop.f32.mrf.mxu0
        %v3401 = vadd.f32 0.0, %v3400
        %v3402 = vpop.f32.mrf.mxu0
        %v3403 = vadd.f32 0.0, %v3402
        %3404 = vmatmul.bf16.gmra.mxu0 %v404
        %v3405 = vpop.f32.mrf.mxu0
        %v3406 = vadd.f32 0.0, %v3405
        %v3407 = vpop.f32.mrf.mxu0
        %v3408 = vadd.f32 0.0, %v3407
        %3409 = vmatmul.bf16.gmra.mxu0 %v406
        %v3410 = vpop.f32.mrf.mxu0
        %v3411 = vadd.f32 0.0, %v3410
        %v3412 = vpop.f32.mrf.mxu0
        %3413 = vdwg.mxu0
        %3414 = vmatpush.bf16.msra.mxu0 0
        %3415 = vmatpush.bf16.msra.mxu0 0
        %3416 = vmatpush.bf16.msra.mxu0 %v2412
        %3417 = vmatpush.bf16.msra.mxu0 %v1998
        %3418 = vmatpush.bf16.msra.mxu0 %v1974
        %3419 = vmatpush.bf16.msra.mxu0 %v1950
        %3420 = vmatpush.bf16.msra.mxu0 %v1926
        %3421 = vmatpush.bf16.msra.mxu0 %v1902
        %3422 = vmatmul.bf16.gmra.mxu0 %v2354
        %v3423 = vpop.f32.mrf.mxu0
        %v3424 = vadd.f32 %v3351, %v3423
        %v3425 = vpop.f32.mrf.mxu0
        %v3426 = vadd.f32 %v3353, %v3425
        %3427 = vmatmul.bf16.gmra.mxu0 %v2357
        %v3428 = vpop.f32.mrf.mxu0
        %v3429 = vadd.f32 %v3356, %v3428
        %v3430 = vpop.f32.mrf.mxu0
        %v3431 = vadd.f32 %v3358, %v3430
        %3432 = vmatmul.bf16.gmra.mxu0 %v2360
        %v3433 = vpop.f32.mrf.mxu0
        %v3434 = vadd.f32 %v3361, %v3433
        %v3435 = vpop.f32.mrf.mxu0
        %v3436 = vadd.f32 %v3363, %v3435
        %3437 = vmatmul.bf16.gmra.mxu0 %v2363
        %v3438 = vpop.f32.mrf.mxu0
        %v3439 = vadd.f32 %v3366, %v3438
        %v3440 = vpop.f32.mrf.mxu0
        %v3441 = vadd.f32 %v3368, %v3440
        %3442 = vmatmul.bf16.gmra.mxu0 %v2366
        %v3443 = vpop.f32.mrf.mxu0
        %v3444 = vadd.f32 %v3371, %v3443
        %v3445 = vpop.f32.mrf.mxu0
        %v3446 = vadd.f32 %v3373, %v3445
        %3447 = vmatmul.bf16.gmra.mxu0 %v2369
        %v3448 = vpop.f32.mrf.mxu0
        %v3449 = vadd.f32 %v3376, %v3448
        %v3450 = vpop.f32.mrf.mxu0
        %v3451 = vadd.f32 %v3378, %v3450
        %3452 = vmatmul.bf16.gmra.mxu0 %v2372
        %v3453 = vpop.f32.mrf.mxu0
        %v3454 = vadd.f32 %v3381, %v3453
        %v3455 = vpop.f32.mrf.mxu0
        %v3456 = vadd.f32 %v3383, %v3455
        %3457 = vmatmul.bf16.gmra.mxu0 %v2375
        %v3458 = vpop.f32.mrf.mxu0
        %v3459 = vadd.f32 %v3386, %v3458
        %v3460 = vpop.f32.mrf.mxu0
        %v3461 = vadd.f32 %v3388, %v3460
        %3462 = vmatmul.bf16.gmra.mxu0 %v2378
        %v3463 = vpop.f32.mrf.mxu0
        %v3464 = vadd.f32 %v3391, %v3463
        %v3465 = vpop.f32.mrf.mxu0
        %v3466 = vadd.f32 %v3393, %v3465
        %3467 = vmatmul.bf16.gmra.mxu0 %v2381
        %v3468 = vpop.f32.mrf.mxu0
        %v3469 = vadd.f32 %v3396, %v3468
        %v3470 = vpop.f32.mrf.mxu0
        %v3471 = vadd.f32 %v3398, %v3470
        %3472 = vmatmul.bf16.gmra.mxu0 %v2384
        %v3473 = vpop.f32.mrf.mxu0
        %v3474 = vadd.f32 %v3401, %v3473
        %v3475 = vpop.f32.mrf.mxu0
        %v3476 = vadd.f32 %v3403, %v3475
        %3477 = vmatmul.bf16.gmra.mxu0 %v2387
        %v3478 = vpop.f32.mrf.mxu0
        %v3479 = vadd.f32 %v3406, %v3478
        %v3480 = vpop.f32.mrf.mxu0
        %v3481 = vadd.f32 %v3408, %v3480
        %3482 = vmatmul.bf16.gmra.mxu0 %v2390
        %v3483 = vpop.f32.mrf.mxu0
        %v3484 = vadd.f32 %v3411, %v3483
        %v3485 = vpop.f32.mrf.mxu0
        %3486 = vdwg.mxu0
        %3487 = vmatpush.bf16.msra.mxu0 %v1879
        %3488 = vmatpush.bf16.msra.mxu0 %v1855
        %3489 = vmatpush.bf16.msra.mxu0 %v1831
        %3490 = vmatpush.bf16.msra.mxu0 %v1807
        %3491 = vmatpush.bf16.msra.mxu0 %v1783
        %3492 = vmatpush.bf16.msra.mxu0 %v1759
        %3493 = vmatpush.bf16.msra.mxu0 %v1735
        %3494 = vmatpush.bf16.msra.mxu0 %v1711
        %3495 = vmatmul.bf16.gmra.mxu0 %v382
        %v3496 = vpop.f32.mrf.mxu0
        %v3497 = vadd.f32 0.0, %v3496
        %v3498 = vpop.f32.mrf.mxu0
        %v3499 = vadd.f32 0.0, %v3498
        %3500 = vmatmul.bf16.gmra.mxu0 %v384
        %v3501 = vpop.f32.mrf.mxu0
        %v3502 = vadd.f32 0.0, %v3501
        %v3503 = vpop.f32.mrf.mxu0
        %v3504 = vadd.f32 0.0, %v3503
        %3505 = vmatmul.bf16.gmra.mxu0 %v386
        %v3506 = vpop.f32.mrf.mxu0
        %v3507 = vadd.f32 0.0, %v3506
        %v3508 = vpop.f32.mrf.mxu0
        %v3509 = vadd.f32 0.0, %v3508
        %3510 = vmatmul.bf16.gmra.mxu0 %v388
        %v3511 = vpop.f32.mrf.mxu0
        %v3512 = vadd.f32 0.0, %v3511
        %v3513 = vpop.f32.mrf.mxu0
        %v3514 = vadd.f32 0.0, %v3513
        %3515 = vmatmul.bf16.gmra.mxu0 %v390
        %v3516 = vpop.f32.mrf.mxu0
        %v3517 = vadd.f32 0.0, %v3516
        %v3518 = vpop.f32.mrf.mxu0
        %v3519 = vadd.f32 0.0, %v3518
        %3520 = vmatmul.bf16.gmra.mxu0 %v392
        %v3521 = vpop.f32.mrf.mxu0
        %v3522 = vadd.f32 0.0, %v3521
        %v3523 = vpop.f32.mrf.mxu0
        %v3524 = vadd.f32 0.0, %v3523
        %3525 = vmatmul.bf16.gmra.mxu0 %v394
        %v3526 = vpop.f32.mrf.mxu0
        %v3527 = vadd.f32 0.0, %v3526
        %v3528 = vpop.f32.mrf.mxu0
        %v3529 = vadd.f32 0.0, %v3528
        %3530 = vmatmul.bf16.gmra.mxu0 %v396
        %v3531 = vpop.f32.mrf.mxu0
        %v3532 = vadd.f32 0.0, %v3531
        %v3533 = vpop.f32.mrf.mxu0
        %v3534 = vadd.f32 0.0, %v3533
        %3535 = vmatmul.bf16.gmra.mxu0 %v398
        %v3536 = vpop.f32.mrf.mxu0
        %v3537 = vadd.f32 0.0, %v3536
        %v3538 = vpop.f32.mrf.mxu0
        %v3539 = vadd.f32 0.0, %v3538
        %3540 = vmatmul.bf16.gmra.mxu0 %v400
        %v3541 = vpop.f32.mrf.mxu0
        %v3542 = vadd.f32 0.0, %v3541
        %v3543 = vpop.f32.mrf.mxu0
        %v3544 = vadd.f32 0.0, %v3543
        %3545 = vmatmul.bf16.gmra.mxu0 %v402
        %v3546 = vpop.f32.mrf.mxu0
        %v3547 = vadd.f32 0.0, %v3546
        %v3548 = vpop.f32.mrf.mxu0
        %v3549 = vadd.f32 0.0, %v3548
        %3550 = vmatmul.bf16.gmra.mxu0 %v404
        %v3551 = vpop.f32.mrf.mxu0
        %v3552 = vadd.f32 0.0, %v3551
        %v3553 = vpop.f32.mrf.mxu0
        %v3554 = vadd.f32 0.0, %v3553
        %3555 = vmatmul.bf16.gmra.mxu0 %v406
        %v3556 = vpop.f32.mrf.mxu0
        %v3557 = vadd.f32 0.0, %v3556
        %v3558 = vpop.f32.mrf.mxu0
        %3559 = vdwg.mxu0
        %3560 = vmatpush.bf16.msra.mxu0 0
        %3561 = vmatpush.bf16.msra.mxu0 0
        %3562 = vmatpush.bf16.msra.mxu0 %v2415
        %3563 = vmatpush.bf16.msra.mxu0 %v1999
        %3564 = vmatpush.bf16.msra.mxu0 %v1975
        %3565 = vmatpush.bf16.msra.mxu0 %v1951
        %3566 = vmatpush.bf16.msra.mxu0 %v1927
        %3567 = vmatpush.bf16.msra.mxu0 %v1903
        %3568 = vmatmul.bf16.gmra.mxu0 %v2354
        %v3569 = vpop.f32.mrf.mxu0
        %v3570 = vadd.f32 %v3497, %v3569
        %v3571 = vpop.f32.mrf.mxu0
        %v3572 = vadd.f32 %v3499, %v3571
        %3573 = vmatmul.bf16.gmra.mxu0 %v2357
        %v3574 = vpop.f32.mrf.mxu0
        %v3575 = vadd.f32 %v3502, %v3574
        %v3576 = vpop.f32.mrf.mxu0
        %v3577 = vadd.f32 %v3504, %v3576
        %3578 = vmatmul.bf16.gmra.mxu0 %v2360
        %v3579 = vpop.f32.mrf.mxu0
        %v3580 = vadd.f32 %v3507, %v3579
        %v3581 = vpop.f32.mrf.mxu0
        %v3582 = vadd.f32 %v3509, %v3581
        %3583 = vmatmul.bf16.gmra.mxu0 %v2363
        %v3584 = vpop.f32.mrf.mxu0
        %v3585 = vadd.f32 %v3512, %v3584
        %v3586 = vpop.f32.mrf.mxu0
        %v3587 = vadd.f32 %v3514, %v3586
        %3588 = vmatmul.bf16.gmra.mxu0 %v2366
        %v3589 = vpop.f32.mrf.mxu0
        %v3590 = vadd.f32 %v3517, %v3589
        %v3591 = vpop.f32.mrf.mxu0
        %v3592 = vadd.f32 %v3519, %v3591
        %3593 = vmatmul.bf16.gmra.mxu0 %v2369
        %v3594 = vpop.f32.mrf.mxu0
        %v3595 = vadd.f32 %v3522, %v3594
        %v3596 = vpop.f32.mrf.mxu0
        %v3597 = vadd.f32 %v3524, %v3596
        %3598 = vmatmul.bf16.gmra.mxu0 %v2372
        %v3599 = vpop.f32.mrf.mxu0
        %v3600 = vadd.f32 %v3527, %v3599
        %v3601 = vpop.f32.mrf.mxu0
        %v3602 = vadd.f32 %v3529, %v3601
        %3603 = vmatmul.bf16.gmra.mxu0 %v2375
        %v3604 = vpop.f32.mrf.mxu0
        %v3605 = vadd.f32 %v3532, %v3604
        %v3606 = vpop.f32.mrf.mxu0
        %v3607 = vadd.f32 %v3534, %v3606
        %3608 = vmatmul.bf16.gmra.mxu0 %v2378
        %v3609 = vpop.f32.mrf.mxu0
        %v3610 = vadd.f32 %v3537, %v3609
        %v3611 = vpop.f32.mrf.mxu0
        %v3612 = vadd.f32 %v3539, %v3611
        %3613 = vmatmul.bf16.gmra.mxu0 %v2381
        %v3614 = vpop.f32.mrf.mxu0
        %v3615 = vadd.f32 %v3542, %v3614
        %v3616 = vpop.f32.mrf.mxu0
        %v3617 = vadd.f32 %v3544, %v3616
        %3618 = vmatmul.bf16.gmra.mxu0 %v2384
        %v3619 = vpop.f32.mrf.mxu0
        %v3620 = vadd.f32 %v3547, %v3619
        %v3621 = vpop.f32.mrf.mxu0
        %v3622 = vadd.f32 %v3549, %v3621
        %3623 = vmatmul.bf16.gmra.mxu0 %v2387
        %v3624 = vpop.f32.mrf.mxu0
        %v3625 = vadd.f32 %v3552, %v3624
        %v3626 = vpop.f32.mrf.mxu0
        %v3627 = vadd.f32 %v3554, %v3626
        %3628 = vmatmul.bf16.gmra.mxu0 %v2390
        %v3629 = vpop.f32.mrf.mxu0
        %v3630 = vadd.f32 %v3557, %v3629
        %v3631 = vpop.f32.mrf.mxu0
        %3632 = vdwg.mxu0
        %3633 = vmatpush.bf16.msra.mxu0 %v1880
        %3634 = vmatpush.bf16.msra.mxu0 %v1856
        %3635 = vmatpush.bf16.msra.mxu0 %v1832
        %3636 = vmatpush.bf16.msra.mxu0 %v1808
        %3637 = vmatpush.bf16.msra.mxu0 %v1784
        %3638 = vmatpush.bf16.msra.mxu0 %v1760
        %3639 = vmatpush.bf16.msra.mxu0 %v1736
        %3640 = vmatpush.bf16.msra.mxu0 %v1712
        %3641 = vmatmul.bf16.gmra.mxu0 %v382
        %v3642 = vpop.f32.mrf.mxu0
        %v3643 = vadd.f32 0.0, %v3642
        %v3644 = vpop.f32.mrf.mxu0
        %v3645 = vadd.f32 0.0, %v3644
        %3646 = vmatmul.bf16.gmra.mxu0 %v384
        %v3647 = vpop.f32.mrf.mxu0
        %v3648 = vadd.f32 0.0, %v3647
        %v3649 = vpop.f32.mrf.mxu0
        %v3650 = vadd.f32 0.0, %v3649
        %3651 = vmatmul.bf16.gmra.mxu0 %v386
        %v3652 = vpop.f32.mrf.mxu0
        %v3653 = vadd.f32 0.0, %v3652
        %v3654 = vpop.f32.mrf.mxu0
        %v3655 = vadd.f32 0.0, %v3654
        %3656 = vmatmul.bf16.gmra.mxu0 %v388
        %v3657 = vpop.f32.mrf.mxu0
        %v3658 = vadd.f32 0.0, %v3657
        %v3659 = vpop.f32.mrf.mxu0
        %v3660 = vadd.f32 0.0, %v3659
        %3661 = vmatmul.bf16.gmra.mxu0 %v390
        %v3662 = vpop.f32.mrf.mxu0
        %v3663 = vadd.f32 0.0, %v3662
        %v3664 = vpop.f32.mrf.mxu0
        %v3665 = vadd.f32 0.0, %v3664
        %3666 = vmatmul.bf16.gmra.mxu0 %v392
        %v3667 = vpop.f32.mrf.mxu0
        %v3668 = vadd.f32 0.0, %v3667
        %v3669 = vpop.f32.mrf.mxu0
        %v3670 = vadd.f32 0.0, %v3669
        %3671 = vmatmul.bf16.gmra.mxu0 %v394
        %v3672 = vpop.f32.mrf.mxu0
        %v3673 = vadd.f32 0.0, %v3672
        %v3674 = vpop.f32.mrf.mxu0
        %v3675 = vadd.f32 0.0, %v3674
        %3676 = vmatmul.bf16.gmra.mxu0 %v396
        %v3677 = vpop.f32.mrf.mxu0
        %v3678 = vadd.f32 0.0, %v3677
        %v3679 = vpop.f32.mrf.mxu0
        %v3680 = vadd.f32 0.0, %v3679
        %3681 = vmatmul.bf16.gmra.mxu0 %v398
        %v3682 = vpop.f32.mrf.mxu0
        %v3683 = vadd.f32 0.0, %v3682
        %v3684 = vpop.f32.mrf.mxu0
        %v3685 = vadd.f32 0.0, %v3684
        %3686 = vmatmul.bf16.gmra.mxu0 %v400
        %v3687 = vpop.f32.mrf.mxu0
        %v3688 = vadd.f32 0.0, %v3687
        %v3689 = vpop.f32.mrf.mxu0
        %v3690 = vadd.f32 0.0, %v3689
        %3691 = vmatmul.bf16.gmra.mxu0 %v402
        %v3692 = vpop.f32.mrf.mxu0
        %v3693 = vadd.f32 0.0, %v3692
        %v3694 = vpop.f32.mrf.mxu0
        %v3695 = vadd.f32 0.0, %v3694
        %3696 = vmatmul.bf16.gmra.mxu0 %v404
        %v3697 = vpop.f32.mrf.mxu0
        %v3698 = vadd.f32 0.0, %v3697
        %v3699 = vpop.f32.mrf.mxu0
        %v3700 = vadd.f32 0.0, %v3699
        %3701 = vmatmul.bf16.gmra.mxu0 %v406
        %v3702 = vpop.f32.mrf.mxu0
        %v3703 = vadd.f32 0.0, %v3702
        %v3704 = vpop.f32.mrf.mxu0
        %3705 = vdwg.mxu0
        %3706 = vmatpush.bf16.msra.mxu0 0
        %3707 = vmatpush.bf16.msra.mxu0 0
        %3708 = vmatpush.bf16.msra.mxu0 %v2418
        %3709 = vmatpush.bf16.msra.mxu0 %v2000
        %3710 = vmatpush.bf16.msra.mxu0 %v1976
        %3711 = vmatpush.bf16.msra.mxu0 %v1952
        %3712 = vmatpush.bf16.msra.mxu0 %v1928
        %3713 = vmatpush.bf16.msra.mxu0 %v1904
        %3714 = vmatmul.bf16.gmra.mxu0 %v2354
        %v3715 = vpop.f32.mrf.mxu0
        %v3716 = vadd.f32 %v3643, %v3715
        %v3717 = vpop.f32.mrf.mxu0
        %v3718 = vadd.f32 %v3645, %v3717
        %3719 = vmatmul.bf16.gmra.mxu0 %v2357
        %v3720 = vpop.f32.mrf.mxu0
        %v3721 = vadd.f32 %v3648, %v3720
        %v3722 = vpop.f32.mrf.mxu0
        %v3723 = vadd.f32 %v3650, %v3722
        %3724 = vmatmul.bf16.gmra.mxu0 %v2360
        %v3725 = vpop.f32.mrf.mxu0
        %v3726 = vadd.f32 %v3653, %v3725
        %v3727 = vpop.f32.mrf.mxu0
        %v3728 = vadd.f32 %v3655, %v3727
        %3729 = vmatmul.bf16.gmra.mxu0 %v2363
        %v3730 = vpop.f32.mrf.mxu0
        %v3731 = vadd.f32 %v3658, %v3730
        %v3732 = vpop.f32.mrf.mxu0
        %v3733 = vadd.f32 %v3660, %v3732
        %3734 = vmatmul.bf16.gmra.mxu0 %v2366
        %v3735 = vpop.f32.mrf.mxu0
        %v3736 = vadd.f32 %v3663, %v3735
        %v3737 = vpop.f32.mrf.mxu0
        %v3738 = vadd.f32 %v3665, %v3737
        %3739 = vmatmul.bf16.gmra.mxu0 %v2369
        %v3740 = vpop.f32.mrf.mxu0
        %v3741 = vadd.f32 %v3668, %v3740
        %v3742 = vpop.f32.mrf.mxu0
        %v3743 = vadd.f32 %v3670, %v3742
        %3744 = vmatmul.bf16.gmra.mxu0 %v2372
        %v3745 = vpop.f32.mrf.mxu0
        %v3746 = vadd.f32 %v3673, %v3745
        %v3747 = vpop.f32.mrf.mxu0
        %v3748 = vadd.f32 %v3675, %v3747
        %3749 = vmatmul.bf16.gmra.mxu0 %v2375
        %v3750 = vpop.f32.mrf.mxu0
        %v3751 = vadd.f32 %v3678, %v3750
        %v3752 = vpop.f32.mrf.mxu0
        %v3753 = vadd.f32 %v3680, %v3752
        %3754 = vmatmul.bf16.gmra.mxu0 %v2378
        %v3755 = vpop.f32.mrf.mxu0
        %v3756 = vadd.f32 %v3683, %v3755
        %v3757 = vpop.f32.mrf.mxu0
        %v3758 = vadd.f32 %v3685, %v3757
        %3759 = vmatmul.bf16.gmra.mxu0 %v2381
        %v3760 = vpop.f32.mrf.mxu0
        %v3761 = vadd.f32 %v3688, %v3760
        %v3762 = vpop.f32.mrf.mxu0
        %v3763 = vadd.f32 %v3690, %v3762
        %3764 = vmatmul.bf16.gmra.mxu0 %v2384
        %v3765 = vpop.f32.mrf.mxu0
        %v3766 = vadd.f32 %v3693, %v3765
        %v3767 = vpop.f32.mrf.mxu0
        %v3768 = vadd.f32 %v3695, %v3767
        %3769 = vmatmul.bf16.gmra.mxu0 %v2387
        %v3770 = vpop.f32.mrf.mxu0
        %v3771 = vadd.f32 %v3698, %v3770
        %v3772 = vpop.f32.mrf.mxu0
        %v3773 = vadd.f32 %v3700, %v3772
        %3774 = vmatmul.bf16.gmra.mxu0 %v2390
        %v3775 = vpop.f32.mrf.mxu0
        %v3776 = vadd.f32 %v3703, %v3775
        %v3777 = vpop.f32.mrf.mxu0
        %3778 = vdwg.mxu0
        %3779 = vmatpush.bf16.msra.mxu0 %v1881
        %3780 = vmatpush.bf16.msra.mxu0 %v1857
        %3781 = vmatpush.bf16.msra.mxu0 %v1833
        %3782 = vmatpush.bf16.msra.mxu0 %v1809
        %3783 = vmatpush.bf16.msra.mxu0 %v1785
        %3784 = vmatpush.bf16.msra.mxu0 %v1761
        %3785 = vmatpush.bf16.msra.mxu0 %v1737
        %3786 = vmatpush.bf16.msra.mxu0 %v1713
        %3787 = vmatmul.bf16.gmra.mxu0 %v382
        %v3788 = vpop.f32.mrf.mxu0
        %v3789 = vadd.f32 0.0, %v3788
        %v3790 = vpop.f32.mrf.mxu0
        %v3791 = vadd.f32 0.0, %v3790
        %3792 = vmatmul.bf16.gmra.mxu0 %v384
        %v3793 = vpop.f32.mrf.mxu0
        %v3794 = vadd.f32 0.0, %v3793
        %v3795 = vpop.f32.mrf.mxu0
        %v3796 = vadd.f32 0.0, %v3795
        %3797 = vmatmul.bf16.gmra.mxu0 %v386
        %v3798 = vpop.f32.mrf.mxu0
        %v3799 = vadd.f32 0.0, %v3798
        %v3800 = vpop.f32.mrf.mxu0
        %v3801 = vadd.f32 0.0, %v3800
        %3802 = vmatmul.bf16.gmra.mxu0 %v388
        %v3803 = vpop.f32.mrf.mxu0
        %v3804 = vadd.f32 0.0, %v3803
        %v3805 = vpop.f32.mrf.mxu0
        %v3806 = vadd.f32 0.0, %v3805
        %3807 = vmatmul.bf16.gmra.mxu0 %v390
        %v3808 = vpop.f32.mrf.mxu0
        %v3809 = vadd.f32 0.0, %v3808
        %v3810 = vpop.f32.mrf.mxu0
        %v3811 = vadd.f32 0.0, %v3810
        %3812 = vmatmul.bf16.gmra.mxu0 %v392
        %v3813 = vpop.f32.mrf.mxu0
        %v3814 = vadd.f32 0.0, %v3813
        %v3815 = vpop.f32.mrf.mxu0
        %v3816 = vadd.f32 0.0, %v3815
        %3817 = vmatmul.bf16.gmra.mxu0 %v394
        %v3818 = vpop.f32.mrf.mxu0
        %v3819 = vadd.f32 0.0, %v3818
        %v3820 = vpop.f32.mrf.mxu0
        %v3821 = vadd.f32 0.0, %v3820
        %3822 = vmatmul.bf16.gmra.mxu0 %v396
        %v3823 = vpop.f32.mrf.mxu0
        %v3824 = vadd.f32 0.0, %v3823
        %v3825 = vpop.f32.mrf.mxu0
        %v3826 = vadd.f32 0.0, %v3825
        %3827 = vmatmul.bf16.gmra.mxu0 %v398
        %v3828 = vpop.f32.mrf.mxu0
        %v3829 = vadd.f32 0.0, %v3828
        %v3830 = vpop.f32.mrf.mxu0
        %v3831 = vadd.f32 0.0, %v3830
        %3832 = vmatmul.bf16.gmra.mxu0 %v400
        %v3833 = vpop.f32.mrf.mxu0
        %v3834 = vadd.f32 0.0, %v3833
        %v3835 = vpop.f32.mrf.mxu0
        %v3836 = vadd.f32 0.0, %v3835
        %3837 = vmatmul.bf16.gmra.mxu0 %v402
        %v3838 = vpop.f32.mrf.mxu0
        %v3839 = vadd.f32 0.0, %v3838
        %v3840 = vpop.f32.mrf.mxu0
        %v3841 = vadd.f32 0.0, %v3840
        %3842 = vmatmul.bf16.gmra.mxu0 %v404
        %v3843 = vpop.f32.mrf.mxu0
        %v3844 = vadd.f32 0.0, %v3843
        %v3845 = vpop.f32.mrf.mxu0
        %v3846 = vadd.f32 0.0, %v3845
        %3847 = vmatmul.bf16.gmra.mxu0 %v406
        %v3848 = vpop.f32.mrf.mxu0
        %v3849 = vadd.f32 0.0, %v3848
        %v3850 = vpop.f32.mrf.mxu0
        %3851 = vdwg.mxu0
        %3852 = vmatpush.bf16.msra.mxu0 0
        %3853 = vmatpush.bf16.msra.mxu0 0
        %3854 = vmatpush.bf16.msra.mxu0 %v2421
        %3855 = vmatpush.bf16.msra.mxu0 %v2001
        %3856 = vmatpush.bf16.msra.mxu0 %v1977
        %3857 = vmatpush.bf16.msra.mxu0 %v1953
        %3858 = vmatpush.bf16.msra.mxu0 %v1929
        %3859 = vmatpush.bf16.msra.mxu0 %v1905
        %3860 = vmatmul.bf16.gmra.mxu0 %v2354
        %v3861 = vpop.f32.mrf.mxu0
        %v3862 = vadd.f32 %v3789, %v3861
        %v3863 = vpop.f32.mrf.mxu0
        %v3864 = vadd.f32 %v3791, %v3863
        %3865 = vmatmul.bf16.gmra.mxu0 %v2357
        %v3866 = vpop.f32.mrf.mxu0
        %v3867 = vadd.f32 %v3794, %v3866
        %v3868 = vpop.f32.mrf.mxu0
        %v3869 = vadd.f32 %v3796, %v3868
        %3870 = vmatmul.bf16.gmra.mxu0 %v2360
        %v3871 = vpop.f32.mrf.mxu0
        %v3872 = vadd.f32 %v3799, %v3871
        %v3873 = vpop.f32.mrf.mxu0
        %v3874 = vadd.f32 %v3801, %v3873
        %3875 = vmatmul.bf16.gmra.mxu0 %v2363
        %v3876 = vpop.f32.mrf.mxu0
        %v3877 = vadd.f32 %v3804, %v3876
        %v3878 = vpop.f32.mrf.mxu0
        %v3879 = vadd.f32 %v3806, %v3878
        %3880 = vmatmul.bf16.gmra.mxu0 %v2366
        %v3881 = vpop.f32.mrf.mxu0
        %v3882 = vadd.f32 %v3809, %v3881
        %v3883 = vpop.f32.mrf.mxu0
        %v3884 = vadd.f32 %v3811, %v3883
        %3885 = vmatmul.bf16.gmra.mxu0 %v2369
        %v3886 = vpop.f32.mrf.mxu0
        %v3887 = vadd.f32 %v3814, %v3886
        %v3888 = vpop.f32.mrf.mxu0
        %v3889 = vadd.f32 %v3816, %v3888
        %3890 = vmatmul.bf16.gmra.mxu0 %v2372
        %v3891 = vpop.f32.mrf.mxu0
        %v3892 = vadd.f32 %v3819, %v3891
        %v3893 = vpop.f32.mrf.mxu0
        %v3894 = vadd.f32 %v3821, %v3893
        %3895 = vmatmul.bf16.gmra.mxu0 %v2375
        %v3896 = vpop.f32.mrf.mxu0
        %v3897 = vadd.f32 %v3824, %v3896
        %v3898 = vpop.f32.mrf.mxu0
        %v3899 = vadd.f32 %v3826, %v3898
        %3900 = vmatmul.bf16.gmra.mxu0 %v2378
        %v3901 = vpop.f32.mrf.mxu0
        %v3902 = vadd.f32 %v3829, %v3901
        %v3903 = vpop.f32.mrf.mxu0
        %v3904 = vadd.f32 %v3831, %v3903
        %3905 = vmatmul.bf16.gmra.mxu0 %v2381
        %v3906 = vpop.f32.mrf.mxu0
        %v3907 = vadd.f32 %v3834, %v3906
        %v3908 = vpop.f32.mrf.mxu0
        %v3909 = vadd.f32 %v3836, %v3908
        %3910 = vmatmul.bf16.gmra.mxu0 %v2384
        %v3911 = vpop.f32.mrf.mxu0
        %v3912 = vadd.f32 %v3839, %v3911
        %v3913 = vpop.f32.mrf.mxu0
        %v3914 = vadd.f32 %v3841, %v3913
        %3915 = vmatmul.bf16.gmra.mxu0 %v2387
        %v3916 = vpop.f32.mrf.mxu0
        %v3917 = vadd.f32 %v3844, %v3916
        %v3918 = vpop.f32.mrf.mxu0
        %v3919 = vadd.f32 %v3846, %v3918
        %3920 = vmatmul.bf16.gmra.mxu0 %v2390
        %v3921 = vpop.f32.mrf.mxu0
        %v3922 = vadd.f32 %v3849, %v3921
        %v3923 = vpop.f32.mrf.mxu0
        %3924 = vdwg.mxu0
        %3925 = vmatpush.bf16.msra.mxu0 %v1882
        %3926 = vmatpush.bf16.msra.mxu0 %v1858
        %3927 = vmatpush.bf16.msra.mxu0 %v1834
        %3928 = vmatpush.bf16.msra.mxu0 %v1810
        %3929 = vmatpush.bf16.msra.mxu0 %v1786
        %3930 = vmatpush.bf16.msra.mxu0 %v1762
        %3931 = vmatpush.bf16.msra.mxu0 %v1738
        %3932 = vmatpush.bf16.msra.mxu0 %v1714
        %3933 = vmatmul.bf16.gmra.mxu0 %v382
        %v3934 = vpop.f32.mrf.mxu0
        %v3935 = vadd.f32 0.0, %v3934
        %v3936 = vpop.f32.mrf.mxu0
        %v3937 = vadd.f32 0.0, %v3936
        %3938 = vmatmul.bf16.gmra.mxu0 %v384
        %v3939 = vpop.f32.mrf.mxu0
        %v3940 = vadd.f32 0.0, %v3939
        %v3941 = vpop.f32.mrf.mxu0
        %v3942 = vadd.f32 0.0, %v3941
        %3943 = vmatmul.bf16.gmra.mxu0 %v386
        %v3944 = vpop.f32.mrf.mxu0
        %v3945 = vadd.f32 0.0, %v3944
        %v3946 = vpop.f32.mrf.mxu0
        %v3947 = vadd.f32 0.0, %v3946
        %3948 = vmatmul.bf16.gmra.mxu0 %v388
        %v3949 = vpop.f32.mrf.mxu0
        %v3950 = vadd.f32 0.0, %v3949
        %v3951 = vpop.f32.mrf.mxu0
        %v3952 = vadd.f32 0.0, %v3951
        %3953 = vmatmul.bf16.gmra.mxu0 %v390
        %v3954 = vpop.f32.mrf.mxu0
        %v3955 = vadd.f32 0.0, %v3954
        %v3956 = vpop.f32.mrf.mxu0
        %v3957 = vadd.f32 0.0, %v3956
        %3958 = vmatmul.bf16.gmra.mxu0 %v392
        %v3959 = vpop.f32.mrf.mxu0
        %v3960 = vadd.f32 0.0, %v3959
        %v3961 = vpop.f32.mrf.mxu0
        %v3962 = vadd.f32 0.0, %v3961
        %3963 = vmatmul.bf16.gmra.mxu0 %v394
        %v3964 = vpop.f32.mrf.mxu0
        %v3965 = vadd.f32 0.0, %v3964
        %v3966 = vpop.f32.mrf.mxu0
        %v3967 = vadd.f32 0.0, %v3966
        %3968 = vmatmul.bf16.gmra.mxu0 %v396
        %v3969 = vpop.f32.mrf.mxu0
        %v3970 = vadd.f32 0.0, %v3969
        %v3971 = vpop.f32.mrf.mxu0
        %v3972 = vadd.f32 0.0, %v3971
        %3973 = vmatmul.bf16.gmra.mxu0 %v398
        %v3974 = vpop.f32.mrf.mxu0
        %v3975 = vadd.f32 0.0, %v3974
        %v3976 = vpop.f32.mrf.mxu0
        %v3977 = vadd.f32 0.0, %v3976
        %3978 = vmatmul.bf16.gmra.mxu0 %v400
        %v3979 = vpop.f32.mrf.mxu0
        %v3980 = vadd.f32 0.0, %v3979
        %v3981 = vpop.f32.mrf.mxu0
        %v3982 = vadd.f32 0.0, %v3981
        %3983 = vmatmul.bf16.gmra.mxu0 %v402
        %v3984 = vpop.f32.mrf.mxu0
        %v3985 = vadd.f32 0.0, %v3984
        %v3986 = vpop.f32.mrf.mxu0
        %v3987 = vadd.f32 0.0, %v3986
        %3988 = vmatmul.bf16.gmra.mxu0 %v404
        %v3989 = vpop.f32.mrf.mxu0
        %v3990 = vadd.f32 0.0, %v3989
        %v3991 = vpop.f32.mrf.mxu0
        %v3992 = vadd.f32 0.0, %v3991
        %3993 = vmatmul.bf16.gmra.mxu0 %v406
        %v3994 = vpop.f32.mrf.mxu0
        %v3995 = vadd.f32 0.0, %v3994
        %v3996 = vpop.f32.mrf.mxu0
        %3997 = vdwg.mxu0
        %3998 = vmatpush.bf16.msra.mxu0 0
        %3999 = vmatpush.bf16.msra.mxu0 0
        %4000 = vmatpush.bf16.msra.mxu0 %v2424
        %4001 = vmatpush.bf16.msra.mxu0 %v2002
        %4002 = vmatpush.bf16.msra.mxu0 %v1978
        %4003 = vmatpush.bf16.msra.mxu0 %v1954
        %4004 = vmatpush.bf16.msra.mxu0 %v1930
        %4005 = vmatpush.bf16.msra.mxu0 %v1906
        %4006 = vmatmul.bf16.gmra.mxu0 %v2354
        %v4007 = vpop.f32.mrf.mxu0
        %v4008 = vadd.f32 %v3935, %v4007
        %v4009 = vpop.f32.mrf.mxu0
        %v4010 = vadd.f32 %v3937, %v4009
        %4011 = vmatmul.bf16.gmra.mxu0 %v2357
        %v4012 = vpop.f32.mrf.mxu0
        %v4013 = vadd.f32 %v3940, %v4012
        %v4014 = vpop.f32.mrf.mxu0
        %v4015 = vadd.f32 %v3942, %v4014
        %4016 = vmatmul.bf16.gmra.mxu0 %v2360
        %v4017 = vpop.f32.mrf.mxu0
        %v4018 = vadd.f32 %v3945, %v4017
        %v4019 = vpop.f32.mrf.mxu0
        %v4020 = vadd.f32 %v3947, %v4019
        %4021 = vmatmul.bf16.gmra.mxu0 %v2363
        %v4022 = vpop.f32.mrf.mxu0
        %v4023 = vadd.f32 %v3950, %v4022
        %v4024 = vpop.f32.mrf.mxu0
        %v4025 = vadd.f32 %v3952, %v4024
        %4026 = vmatmul.bf16.gmra.mxu0 %v2366
        %v4027 = vpop.f32.mrf.mxu0
        %v4028 = vadd.f32 %v3955, %v4027
        %v4029 = vpop.f32.mrf.mxu0
        %v4030 = vadd.f32 %v3957, %v4029
        %4031 = vmatmul.bf16.gmra.mxu0 %v2369
        %v4032 = vpop.f32.mrf.mxu0
        %v4033 = vadd.f32 %v3960, %v4032
        %v4034 = vpop.f32.mrf.mxu0
        %v4035 = vadd.f32 %v3962, %v4034
        %4036 = vmatmul.bf16.gmra.mxu0 %v2372
        %v4037 = vpop.f32.mrf.mxu0
        %v4038 = vadd.f32 %v3965, %v4037
        %v4039 = vpop.f32.mrf.mxu0
        %v4040 = vadd.f32 %v3967, %v4039
        %4041 = vmatmul.bf16.gmra.mxu0 %v2375
        %v4042 = vpop.f32.mrf.mxu0
        %v4043 = vadd.f32 %v3970, %v4042
        %v4044 = vpop.f32.mrf.mxu0
        %v4045 = vadd.f32 %v3972, %v4044
        %4046 = vmatmul.bf16.gmra.mxu0 %v2378
        %v4047 = vpop.f32.mrf.mxu0
        %v4048 = vadd.f32 %v3975, %v4047
        %v4049 = vpop.f32.mrf.mxu0
        %v4050 = vadd.f32 %v3977, %v4049
        %4051 = vmatmul.bf16.gmra.mxu0 %v2381
        %v4052 = vpop.f32.mrf.mxu0
        %v4053 = vadd.f32 %v3980, %v4052
        %v4054 = vpop.f32.mrf.mxu0
        %v4055 = vadd.f32 %v3982, %v4054
        %4056 = vmatmul.bf16.gmra.mxu0 %v2384
        %v4057 = vpop.f32.mrf.mxu0
        %v4058 = vadd.f32 %v3985, %v4057
        %v4059 = vpop.f32.mrf.mxu0
        %v4060 = vadd.f32 %v3987, %v4059
        %4061 = vmatmul.bf16.gmra.mxu0 %v2387
        %v4062 = vpop.f32.mrf.mxu0
        %v4063 = vadd.f32 %v3990, %v4062
        %v4064 = vpop.f32.mrf.mxu0
        %v4065 = vadd.f32 %v3992, %v4064
        %4066 = vmatmul.bf16.gmra.mxu0 %v2390
        %v4067 = vpop.f32.mrf.mxu0
        %v4068 = vadd.f32 %v3995, %v4067
        %v4069 = vpop.f32.mrf.mxu0
        %4070 = vdwg.mxu0
        %4071 = vmatpush.bf16.msra.mxu0 %v1883
        %4072 = vmatpush.bf16.msra.mxu0 %v1859
        %4073 = vmatpush.bf16.msra.mxu0 %v1835
        %4074 = vmatpush.bf16.msra.mxu0 %v1811
        %4075 = vmatpush.bf16.msra.mxu0 %v1787
        %4076 = vmatpush.bf16.msra.mxu0 %v1763
        %4077 = vmatpush.bf16.msra.mxu0 %v1739
        %4078 = vmatpush.bf16.msra.mxu0 %v1715
        %4079 = vmatmul.bf16.gmra.mxu0 %v382
        %v4080 = vpop.f32.mrf.mxu0
        %v4081 = vadd.f32 0.0, %v4080
        %v4082 = vpop.f32.mrf.mxu0
        %v4083 = vadd.f32 0.0, %v4082
        %4084 = vmatmul.bf16.gmra.mxu0 %v384
        %v4085 = vpop.f32.mrf.mxu0
        %v4086 = vadd.f32 0.0, %v4085
        %v4087 = vpop.f32.mrf.mxu0
        %v4088 = vadd.f32 0.0, %v4087
        %4089 = vmatmul.bf16.gmra.mxu0 %v386
        %v4090 = vpop.f32.mrf.mxu0
        %v4091 = vadd.f32 0.0, %v4090
        %v4092 = vpop.f32.mrf.mxu0
        %v4093 = vadd.f32 0.0, %v4092
        %4094 = vmatmul.bf16.gmra.mxu0 %v388
        %v4095 = vpop.f32.mrf.mxu0
        %v4096 = vadd.f32 0.0, %v4095
        %v4097 = vpop.f32.mrf.mxu0
        %v4098 = vadd.f32 0.0, %v4097
        %4099 = vmatmul.bf16.gmra.mxu0 %v390
        %v4100 = vpop.f32.mrf.mxu0
        %v4101 = vadd.f32 0.0, %v4100
        %v4102 = vpop.f32.mrf.mxu0
        %v4103 = vadd.f32 0.0, %v4102
        %4104 = vmatmul.bf16.gmra.mxu0 %v392
        %v4105 = vpop.f32.mrf.mxu0
        %v4106 = vadd.f32 0.0, %v4105
        %v4107 = vpop.f32.mrf.mxu0
        %v4108 = vadd.f32 0.0, %v4107
        %4109 = vmatmul.bf16.gmra.mxu0 %v394
        %v4110 = vpop.f32.mrf.mxu0
        %v4111 = vadd.f32 0.0, %v4110
        %v4112 = vpop.f32.mrf.mxu0
        %v4113 = vadd.f32 0.0, %v4112
        %4114 = vmatmul.bf16.gmra.mxu0 %v396
        %v4115 = vpop.f32.mrf.mxu0
        %v4116 = vadd.f32 0.0, %v4115
        %v4117 = vpop.f32.mrf.mxu0
        %v4118 = vadd.f32 0.0, %v4117
        %4119 = vmatmul.bf16.gmra.mxu0 %v398
        %v4120 = vpop.f32.mrf.mxu0
        %v4121 = vadd.f32 0.0, %v4120
        %v4122 = vpop.f32.mrf.mxu0
        %v4123 = vadd.f32 0.0, %v4122
        %4124 = vmatmul.bf16.gmra.mxu0 %v400
        %v4125 = vpop.f32.mrf.mxu0
        %v4126 = vadd.f32 0.0, %v4125
        %v4127 = vpop.f32.mrf.mxu0
        %v4128 = vadd.f32 0.0, %v4127
        %4129 = vmatmul.bf16.gmra.mxu0 %v402
        %v4130 = vpop.f32.mrf.mxu0
        %v4131 = vadd.f32 0.0, %v4130
        %v4132 = vpop.f32.mrf.mxu0
        %v4133 = vadd.f32 0.0, %v4132
        %4134 = vmatmul.bf16.gmra.mxu0 %v404
        %v4135 = vpop.f32.mrf.mxu0
        %v4136 = vadd.f32 0.0, %v4135
        %v4137 = vpop.f32.mrf.mxu0
        %v4138 = vadd.f32 0.0, %v4137
        %4139 = vmatmul.bf16.gmra.mxu0 %v406
        %v4140 = vpop.f32.mrf.mxu0
        %v4141 = vadd.f32 0.0, %v4140
        %v4142 = vpop.f32.mrf.mxu0
        %4143 = vdwg.mxu0
        %4144 = vmatpush.bf16.msra.mxu0 0
        %4145 = vmatpush.bf16.msra.mxu0 0
        %4146 = vmatpush.bf16.msra.mxu0 %v2427
        %4147 = vmatpush.bf16.msra.mxu0 %v2003
        %4148 = vmatpush.bf16.msra.mxu0 %v1979
        %4149 = vmatpush.bf16.msra.mxu0 %v1955
        %4150 = vmatpush.bf16.msra.mxu0 %v1931
        %4151 = vmatpush.bf16.msra.mxu0 %v1907
        %4152 = vmatmul.bf16.gmra.mxu0 %v2354
        %v4153 = vpop.f32.mrf.mxu0
        %v4154 = vadd.f32 %v4081, %v4153
        %v4155 = vpop.f32.mrf.mxu0
        %v4156 = vadd.f32 %v4083, %v4155
        %4157 = vmatmul.bf16.gmra.mxu0 %v2357
        %v4158 = vpop.f32.mrf.mxu0
        %v4159 = vadd.f32 %v4086, %v4158
        %v4160 = vpop.f32.mrf.mxu0
        %v4161 = vadd.f32 %v4088, %v4160
        %4162 = vmatmul.bf16.gmra.mxu0 %v2360
        %v4163 = vpop.f32.mrf.mxu0
        %v4164 = vadd.f32 %v4091, %v4163
        %v4165 = vpop.f32.mrf.mxu0
        %v4166 = vadd.f32 %v4093, %v4165
        %4167 = vmatmul.bf16.gmra.mxu0 %v2363
        %v4168 = vpop.f32.mrf.mxu0
        %v4169 = vadd.f32 %v4096, %v4168
        %v4170 = vpop.f32.mrf.mxu0
        %v4171 = vadd.f32 %v4098, %v4170
        %4172 = vmatmul.bf16.gmra.mxu0 %v2366
        %v4173 = vpop.f32.mrf.mxu0
        %v4174 = vadd.f32 %v4101, %v4173
        %v4175 = vpop.f32.mrf.mxu0
        %v4176 = vadd.f32 %v4103, %v4175
        %4177 = vmatmul.bf16.gmra.mxu0 %v2369
        %v4178 = vpop.f32.mrf.mxu0
        %v4179 = vadd.f32 %v4106, %v4178
        %v4180 = vpop.f32.mrf.mxu0
        %v4181 = vadd.f32 %v4108, %v4180
        %4182 = vmatmul.bf16.gmra.mxu0 %v2372
        %v4183 = vpop.f32.mrf.mxu0
        %v4184 = vadd.f32 %v4111, %v4183
        %v4185 = vpop.f32.mrf.mxu0
        %v4186 = vadd.f32 %v4113, %v4185
        %4187 = vmatmul.bf16.gmra.mxu0 %v2375
        %v4188 = vpop.f32.mrf.mxu0
        %v4189 = vadd.f32 %v4116, %v4188
        %v4190 = vpop.f32.mrf.mxu0
        %v4191 = vadd.f32 %v4118, %v4190
        %4192 = vmatmul.bf16.gmra.mxu0 %v2378
        %v4193 = vpop.f32.mrf.mxu0
        %v4194 = vadd.f32 %v4121, %v4193
        %v4195 = vpop.f32.mrf.mxu0
        %v4196 = vadd.f32 %v4123, %v4195
        %4197 = vmatmul.bf16.gmra.mxu0 %v2381
        %v4198 = vpop.f32.mrf.mxu0
        %v4199 = vadd.f32 %v4126, %v4198
        %v4200 = vpop.f32.mrf.mxu0
        %v4201 = vadd.f32 %v4128, %v4200
        %4202 = vmatmul.bf16.gmra.mxu0 %v2384
        %v4203 = vpop.f32.mrf.mxu0
        %v4204 = vadd.f32 %v4131, %v4203
        %v4205 = vpop.f32.mrf.mxu0
        %v4206 = vadd.f32 %v4133, %v4205
        %4207 = vmatmul.bf16.gmra.mxu0 %v2387
        %v4208 = vpop.f32.mrf.mxu0
        %v4209 = vadd.f32 %v4136, %v4208
        %v4210 = vpop.f32.mrf.mxu0
        %v4211 = vadd.f32 %v4138, %v4210
        %4212 = vmatmul.bf16.gmra.mxu0 %v2390
        %v4213 = vpop.f32.mrf.mxu0
        %v4214 = vadd.f32 %v4141, %v4213
        %v4215 = vpop.f32.mrf.mxu0
        %4216 = vdwg.mxu0
        %4217 = vmatpush.bf16.msra.mxu0 %v1884
        %4218 = vmatpush.bf16.msra.mxu0 %v1860
        %4219 = vmatpush.bf16.msra.mxu0 %v1836
        %4220 = vmatpush.bf16.msra.mxu0 %v1812
        %4221 = vmatpush.bf16.msra.mxu0 %v1788
        %4222 = vmatpush.bf16.msra.mxu0 %v1764
        %4223 = vmatpush.bf16.msra.mxu0 %v1740
        %4224 = vmatpush.bf16.msra.mxu0 %v1716
        %4225 = vmatmul.bf16.gmra.mxu0 %v382
        %v4226 = vpop.f32.mrf.mxu0
        %v4227 = vadd.f32 0.0, %v4226
        %v4228 = vpop.f32.mrf.mxu0
        %v4229 = vadd.f32 0.0, %v4228
        %4230 = vmatmul.bf16.gmra.mxu0 %v384
        %v4231 = vpop.f32.mrf.mxu0
        %v4232 = vadd.f32 0.0, %v4231
        %v4233 = vpop.f32.mrf.mxu0
        %v4234 = vadd.f32 0.0, %v4233
        %4235 = vmatmul.bf16.gmra.mxu0 %v386
        %v4236 = vpop.f32.mrf.mxu0
        %v4237 = vadd.f32 0.0, %v4236
        %v4238 = vpop.f32.mrf.mxu0
        %v4239 = vadd.f32 0.0, %v4238
        %4240 = vmatmul.bf16.gmra.mxu0 %v388
        %v4241 = vpop.f32.mrf.mxu0
        %v4242 = vadd.f32 0.0, %v4241
        %v4243 = vpop.f32.mrf.mxu0
        %v4244 = vadd.f32 0.0, %v4243
        %4245 = vmatmul.bf16.gmra.mxu0 %v390
        %v4246 = vpop.f32.mrf.mxu0
        %v4247 = vadd.f32 0.0, %v4246
        %v4248 = vpop.f32.mrf.mxu0
        %v4249 = vadd.f32 0.0, %v4248
        %4250 = vmatmul.bf16.gmra.mxu0 %v392
        %v4251 = vpop.f32.mrf.mxu0
        %v4252 = vadd.f32 0.0, %v4251
        %v4253 = vpop.f32.mrf.mxu0
        %v4254 = vadd.f32 0.0, %v4253
        %4255 = vmatmul.bf16.gmra.mxu0 %v394
        %v4256 = vpop.f32.mrf.mxu0
        %v4257 = vadd.f32 0.0, %v4256
        %v4258 = vpop.f32.mrf.mxu0
        %v4259 = vadd.f32 0.0, %v4258
        %4260 = vmatmul.bf16.gmra.mxu0 %v396
        %v4261 = vpop.f32.mrf.mxu0
        %v4262 = vadd.f32 0.0, %v4261
        %v4263 = vpop.f32.mrf.mxu0
        %v4264 = vadd.f32 0.0, %v4263
        %4265 = vmatmul.bf16.gmra.mxu0 %v398
        %v4266 = vpop.f32.mrf.mxu0
        %v4267 = vadd.f32 0.0, %v4266
        %v4268 = vpop.f32.mrf.mxu0
        %v4269 = vadd.f32 0.0, %v4268
        %4270 = vmatmul.bf16.gmra.mxu0 %v400
        %v4271 = vpop.f32.mrf.mxu0
        %v4272 = vadd.f32 0.0, %v4271
        %v4273 = vpop.f32.mrf.mxu0
        %v4274 = vadd.f32 0.0, %v4273
        %4275 = vmatmul.bf16.gmra.mxu0 %v402
        %v4276 = vpop.f32.mrf.mxu0
        %v4277 = vadd.f32 0.0, %v4276
        %v4278 = vpop.f32.mrf.mxu0
        %v4279 = vadd.f32 0.0, %v4278
        %4280 = vmatmul.bf16.gmra.mxu0 %v404
        %v4281 = vpop.f32.mrf.mxu0
        %v4282 = vadd.f32 0.0, %v4281
        %v4283 = vpop.f32.mrf.mxu0
        %v4284 = vadd.f32 0.0, %v4283
        %4285 = vmatmul.bf16.gmra.mxu0 %v406
        %v4286 = vpop.f32.mrf.mxu0
        %v4287 = vadd.f32 0.0, %v4286
        %v4288 = vpop.f32.mrf.mxu0
        %4289 = vdwg.mxu0
        %4290 = vmatpush.bf16.msra.mxu0 0
        %4291 = vmatpush.bf16.msra.mxu0 0
        %4292 = vmatpush.bf16.msra.mxu0 %v2430
        %4293 = vmatpush.bf16.msra.mxu0 %v2004
        %4294 = vmatpush.bf16.msra.mxu0 %v1980
        %4295 = vmatpush.bf16.msra.mxu0 %v1956
        %4296 = vmatpush.bf16.msra.mxu0 %v1932
        %4297 = vmatpush.bf16.msra.mxu0 %v1908
        %4298 = vmatmul.bf16.gmra.mxu0 %v2354
        %v4299 = vpop.f32.mrf.mxu0
        %v4300 = vadd.f32 %v4227, %v4299
        %v4301 = vpop.f32.mrf.mxu0
        %v4302 = vadd.f32 %v4229, %v4301
        %4303 = vmatmul.bf16.gmra.mxu0 %v2357
        %v4304 = vpop.f32.mrf.mxu0
        %v4305 = vadd.f32 %v4232, %v4304
        %v4306 = vpop.f32.mrf.mxu0
        %v4307 = vadd.f32 %v4234, %v4306
        %4308 = vmatmul.bf16.gmra.mxu0 %v2360
        %v4309 = vpop.f32.mrf.mxu0
        %v4310 = vadd.f32 %v4237, %v4309
        %v4311 = vpop.f32.mrf.mxu0
        %v4312 = vadd.f32 %v4239, %v4311
        %4313 = vmatmul.bf16.gmra.mxu0 %v2363
        %v4314 = vpop.f32.mrf.mxu0
        %v4315 = vadd.f32 %v4242, %v4314
        %v4316 = vpop.f32.mrf.mxu0
        %v4317 = vadd.f32 %v4244, %v4316
        %4318 = vmatmul.bf16.gmra.mxu0 %v2366
        %v4319 = vpop.f32.mrf.mxu0
        %v4320 = vadd.f32 %v4247, %v4319
        %v4321 = vpop.f32.mrf.mxu0
        %v4322 = vadd.f32 %v4249, %v4321
        %4323 = vmatmul.bf16.gmra.mxu0 %v2369
        %v4324 = vpop.f32.mrf.mxu0
        %v4325 = vadd.f32 %v4252, %v4324
        %v4326 = vpop.f32.mrf.mxu0
        %v4327 = vadd.f32 %v4254, %v4326
        %4328 = vmatmul.bf16.gmra.mxu0 %v2372
        %v4329 = vpop.f32.mrf.mxu0
        %v4330 = vadd.f32 %v4257, %v4329
        %v4331 = vpop.f32.mrf.mxu0
        %v4332 = vadd.f32 %v4259, %v4331
        %4333 = vmatmul.bf16.gmra.mxu0 %v2375
        %v4334 = vpop.f32.mrf.mxu0
        %v4335 = vadd.f32 %v4262, %v4334
        %v4336 = vpop.f32.mrf.mxu0
        %v4337 = vadd.f32 %v4264, %v4336
        %4338 = vmatmul.bf16.gmra.mxu0 %v2378
        %v4339 = vpop.f32.mrf.mxu0
        %v4340 = vadd.f32 %v4267, %v4339
        %v4341 = vpop.f32.mrf.mxu0
        %v4342 = vadd.f32 %v4269, %v4341
        %4343 = vmatmul.bf16.gmra.mxu0 %v2381
        %v4344 = vpop.f32.mrf.mxu0
        %v4345 = vadd.f32 %v4272, %v4344
        %v4346 = vpop.f32.mrf.mxu0
        %v4347 = vadd.f32 %v4274, %v4346
        %4348 = vmatmul.bf16.gmra.mxu0 %v2384
        %v4349 = vpop.f32.mrf.mxu0
        %v4350 = vadd.f32 %v4277, %v4349
        %v4351 = vpop.f32.mrf.mxu0
        %v4352 = vadd.f32 %v4279, %v4351
        %4353 = vmatmul.bf16.gmra.mxu0 %v2387
        %v4354 = vpop.f32.mrf.mxu0
        %v4355 = vadd.f32 %v4282, %v4354
        %v4356 = vpop.f32.mrf.mxu0
        %v4357 = vadd.f32 %v4284, %v4356
        %4358 = vmatmul.bf16.gmra.mxu0 %v2390
        %v4359 = vpop.f32.mrf.mxu0
        %v4360 = vadd.f32 %v4287, %v4359
        %v4361 = vpop.f32.mrf.mxu0
        %4362 = vdwg.mxu0
        %4363 = vmatpush.bf16.msra.mxu0 %v1885
        %4364 = vmatpush.bf16.msra.mxu0 %v1861
        %4365 = vmatpush.bf16.msra.mxu0 %v1837
        %4366 = vmatpush.bf16.msra.mxu0 %v1813
        %4367 = vmatpush.bf16.msra.mxu0 %v1789
        %4368 = vmatpush.bf16.msra.mxu0 %v1765
        %4369 = vmatpush.bf16.msra.mxu0 %v1741
        %4370 = vmatpush.bf16.msra.mxu0 %v1717
        %4371 = vmatmul.bf16.gmra.mxu0 %v382
        %v4372 = vpop.f32.mrf.mxu0
        %v4373 = vadd.f32 0.0, %v4372
        %v4374 = vpop.f32.mrf.mxu0
        %v4375 = vadd.f32 0.0, %v4374
        %4376 = vmatmul.bf16.gmra.mxu0 %v384
        %v4377 = vpop.f32.mrf.mxu0
        %v4378 = vadd.f32 0.0, %v4377
        %v4379 = vpop.f32.mrf.mxu0
        %v4380 = vadd.f32 0.0, %v4379
        %4381 = vmatmul.bf16.gmra.mxu0 %v386
        %v4382 = vpop.f32.mrf.mxu0
        %v4383 = vadd.f32 0.0, %v4382
        %v4384 = vpop.f32.mrf.mxu0
        %v4385 = vadd.f32 0.0, %v4384
        %4386 = vmatmul.bf16.gmra.mxu0 %v388
        %v4387 = vpop.f32.mrf.mxu0
        %v4388 = vadd.f32 0.0, %v4387
        %v4389 = vpop.f32.mrf.mxu0
        %v4390 = vadd.f32 0.0, %v4389
        %4391 = vmatmul.bf16.gmra.mxu0 %v390
        %v4392 = vpop.f32.mrf.mxu0
        %v4393 = vadd.f32 0.0, %v4392
        %v4394 = vpop.f32.mrf.mxu0
        %v4395 = vadd.f32 0.0, %v4394
        %4396 = vmatmul.bf16.gmra.mxu0 %v392
        %v4397 = vpop.f32.mrf.mxu0
        %v4398 = vadd.f32 0.0, %v4397
        %v4399 = vpop.f32.mrf.mxu0
        %v4400 = vadd.f32 0.0, %v4399
        %4401 = vmatmul.bf16.gmra.mxu0 %v394
        %v4402 = vpop.f32.mrf.mxu0
        %v4403 = vadd.f32 0.0, %v4402
        %v4404 = vpop.f32.mrf.mxu0
        %v4405 = vadd.f32 0.0, %v4404
        %4406 = vmatmul.bf16.gmra.mxu0 %v396
        %v4407 = vpop.f32.mrf.mxu0
        %v4408 = vadd.f32 0.0, %v4407
        %v4409 = vpop.f32.mrf.mxu0
        %v4410 = vadd.f32 0.0, %v4409
        %4411 = vmatmul.bf16.gmra.mxu0 %v398
        %v4412 = vpop.f32.mrf.mxu0
        %v4413 = vadd.f32 0.0, %v4412
        %v4414 = vpop.f32.mrf.mxu0
        %v4415 = vadd.f32 0.0, %v4414
        %4416 = vmatmul.bf16.gmra.mxu0 %v400
        %v4417 = vpop.f32.mrf.mxu0
        %v4418 = vadd.f32 0.0, %v4417
        %v4419 = vpop.f32.mrf.mxu0
        %v4420 = vadd.f32 0.0, %v4419
        %4421 = vmatmul.bf16.gmra.mxu0 %v402
        %v4422 = vpop.f32.mrf.mxu0
        %v4423 = vadd.f32 0.0, %v4422
        %v4424 = vpop.f32.mrf.mxu0
        %v4425 = vadd.f32 0.0, %v4424
        %4426 = vmatmul.bf16.gmra.mxu0 %v404
        %v4427 = vpop.f32.mrf.mxu0
        %v4428 = vadd.f32 0.0, %v4427
        %v4429 = vpop.f32.mrf.mxu0
        %v4430 = vadd.f32 0.0, %v4429
        %4431 = vmatmul.bf16.gmra.mxu0 %v406
        %v4432 = vpop.f32.mrf.mxu0
        %v4433 = vadd.f32 0.0, %v4432
        %v4434 = vpop.f32.mrf.mxu0
        %4435 = vdwg.mxu0
        %4436 = vmatpush.bf16.msra.mxu0 0
        %4437 = vmatpush.bf16.msra.mxu0 0
        %4438 = vmatpush.bf16.msra.mxu0 %v2433
        %4439 = vmatpush.bf16.msra.mxu0 %v2005
        %4440 = vmatpush.bf16.msra.mxu0 %v1981
        %4441 = vmatpush.bf16.msra.mxu0 %v1957
        %4442 = vmatpush.bf16.msra.mxu0 %v1933
        %4443 = vmatpush.bf16.msra.mxu0 %v1909
        %4444 = vmatmul.bf16.gmra.mxu0 %v2354
        %v4445 = vpop.f32.mrf.mxu0
        %v4446 = vadd.f32 %v4373, %v4445
        %v4447 = vpop.f32.mrf.mxu0
        %v4448 = vadd.f32 %v4375, %v4447
        %4449 = vmatmul.bf16.gmra.mxu0 %v2357
        %v4450 = vpop.f32.mrf.mxu0
        %v4451 = vadd.f32 %v4378, %v4450
        %v4452 = vpop.f32.mrf.mxu0
        %v4453 = vadd.f32 %v4380, %v4452
        %4454 = vmatmul.bf16.gmra.mxu0 %v2360
        %v4455 = vpop.f32.mrf.mxu0
        %v4456 = vadd.f32 %v4383, %v4455
        %v4457 = vpop.f32.mrf.mxu0
        %v4458 = vadd.f32 %v4385, %v4457
        %4459 = vmatmul.bf16.gmra.mxu0 %v2363
        %v4460 = vpop.f32.mrf.mxu0
        %v4461 = vadd.f32 %v4388, %v4460
        %v4462 = vpop.f32.mrf.mxu0
        %v4463 = vadd.f32 %v4390, %v4462
        %4464 = vmatmul.bf16.gmra.mxu0 %v2366
        %v4465 = vpop.f32.mrf.mxu0
        %v4466 = vadd.f32 %v4393, %v4465
        %v4467 = vpop.f32.mrf.mxu0
        %v4468 = vadd.f32 %v4395, %v4467
        %4469 = vmatmul.bf16.gmra.mxu0 %v2369
        %v4470 = vpop.f32.mrf.mxu0
        %v4471 = vadd.f32 %v4398, %v4470
        %v4472 = vpop.f32.mrf.mxu0
        %v4473 = vadd.f32 %v4400, %v4472
        %4474 = vmatmul.bf16.gmra.mxu0 %v2372
        %v4475 = vpop.f32.mrf.mxu0
        %v4476 = vadd.f32 %v4403, %v4475
        %v4477 = vpop.f32.mrf.mxu0
        %v4478 = vadd.f32 %v4405, %v4477
        %4479 = vmatmul.bf16.gmra.mxu0 %v2375
        %v4480 = vpop.f32.mrf.mxu0
        %v4481 = vadd.f32 %v4408, %v4480
        %v4482 = vpop.f32.mrf.mxu0
        %v4483 = vadd.f32 %v4410, %v4482
        %4484 = vmatmul.bf16.gmra.mxu0 %v2378
        %v4485 = vpop.f32.mrf.mxu0
        %v4486 = vadd.f32 %v4413, %v4485
        %v4487 = vpop.f32.mrf.mxu0
        %v4488 = vadd.f32 %v4415, %v4487
        %4489 = vmatmul.bf16.gmra.mxu0 %v2381
        %v4490 = vpop.f32.mrf.mxu0
        %v4491 = vadd.f32 %v4418, %v4490
        %v4492 = vpop.f32.mrf.mxu0
        %v4493 = vadd.f32 %v4420, %v4492
        %4494 = vmatmul.bf16.gmra.mxu0 %v2384
        %v4495 = vpop.f32.mrf.mxu0
        %v4496 = vadd.f32 %v4423, %v4495
        %v4497 = vpop.f32.mrf.mxu0
        %v4498 = vadd.f32 %v4425, %v4497
        %4499 = vmatmul.bf16.gmra.mxu0 %v2387
        %v4500 = vpop.f32.mrf.mxu0
        %v4501 = vadd.f32 %v4428, %v4500
        %v4502 = vpop.f32.mrf.mxu0
        %v4503 = vadd.f32 %v4430, %v4502
        %4504 = vmatmul.bf16.gmra.mxu0 %v2390
        %v4505 = vpop.f32.mrf.mxu0
        %v4506 = vadd.f32 %v4433, %v4505
        %v4507 = vpop.f32.mrf.mxu0
        %4508 = vdwg.mxu0
        %4509 = vmatpush.bf16.msra.mxu0 %v1886
        %4510 = vmatpush.bf16.msra.mxu0 %v1862
        %4511 = vmatpush.bf16.msra.mxu0 %v1838
        %4512 = vmatpush.bf16.msra.mxu0 %v1814
        %4513 = vmatpush.bf16.msra.mxu0 %v1790
        %4514 = vmatpush.bf16.msra.mxu0 %v1766
        %4515 = vmatpush.bf16.msra.mxu0 %v1742
        %4516 = vmatpush.bf16.msra.mxu0 %v1718
        %4517 = vmatmul.bf16.gmra.mxu0 %v382
        %v4518 = vpop.f32.mrf.mxu0
        %v4519 = vadd.f32 0.0, %v4518
        %v4520 = vpop.f32.mrf.mxu0
        %v4521 = vadd.f32 0.0, %v4520
        %4522 = vmatmul.bf16.gmra.mxu0 %v384
        %v4523 = vpop.f32.mrf.mxu0
        %v4524 = vadd.f32 0.0, %v4523
        %v4525 = vpop.f32.mrf.mxu0
        %v4526 = vadd.f32 0.0, %v4525
        %4527 = vmatmul.bf16.gmra.mxu0 %v386
        %v4528 = vpop.f32.mrf.mxu0
        %v4529 = vadd.f32 0.0, %v4528
        %v4530 = vpop.f32.mrf.mxu0
        %v4531 = vadd.f32 0.0, %v4530
        %4532 = vmatmul.bf16.gmra.mxu0 %v388
        %v4533 = vpop.f32.mrf.mxu0
        %v4534 = vadd.f32 0.0, %v4533
        %v4535 = vpop.f32.mrf.mxu0
        %v4536 = vadd.f32 0.0, %v4535
        %4537 = vmatmul.bf16.gmra.mxu0 %v390
        %v4538 = vpop.f32.mrf.mxu0
        %v4539 = vadd.f32 0.0, %v4538
        %v4540 = vpop.f32.mrf.mxu0
        %v4541 = vadd.f32 0.0, %v4540
        %4542 = vmatmul.bf16.gmra.mxu0 %v392
        %v4543 = vpop.f32.mrf.mxu0
        %v4544 = vadd.f32 0.0, %v4543
        %v4545 = vpop.f32.mrf.mxu0
        %v4546 = vadd.f32 0.0, %v4545
        %4547 = vmatmul.bf16.gmra.mxu0 %v394
        %v4548 = vpop.f32.mrf.mxu0
        %v4549 = vadd.f32 0.0, %v4548
        %v4550 = vpop.f32.mrf.mxu0
        %v4551 = vadd.f32 0.0, %v4550
        %4552 = vmatmul.bf16.gmra.mxu0 %v396
        %v4553 = vpop.f32.mrf.mxu0
        %v4554 = vadd.f32 0.0, %v4553
        %v4555 = vpop.f32.mrf.mxu0
        %v4556 = vadd.f32 0.0, %v4555
        %4557 = vmatmul.bf16.gmra.mxu0 %v398
        %v4558 = vpop.f32.mrf.mxu0
        %v4559 = vadd.f32 0.0, %v4558
        %v4560 = vpop.f32.mrf.mxu0
        %v4561 = vadd.f32 0.0, %v4560
        %4562 = vmatmul.bf16.gmra.mxu0 %v400
        %v4563 = vpop.f32.mrf.mxu0
        %v4564 = vadd.f32 0.0, %v4563
        %v4565 = vpop.f32.mrf.mxu0
        %v4566 = vadd.f32 0.0, %v4565
        %4567 = vmatmul.bf16.gmra.mxu0 %v402
        %v4568 = vpop.f32.mrf.mxu0
        %v4569 = vadd.f32 0.0, %v4568
        %v4570 = vpop.f32.mrf.mxu0
        %v4571 = vadd.f32 0.0, %v4570
        %4572 = vmatmul.bf16.gmra.mxu0 %v404
        %v4573 = vpop.f32.mrf.mxu0
        %v4574 = vadd.f32 0.0, %v4573
        %v4575 = vpop.f32.mrf.mxu0
        %v4576 = vadd.f32 0.0, %v4575
        %4577 = vmatmul.bf16.gmra.mxu0 %v406
        %v4578 = vpop.f32.mrf.mxu0
        %v4579 = vadd.f32 0.0, %v4578
        %v4580 = vpop.f32.mrf.mxu0
        %4581 = vdwg.mxu0
        %4582 = vmatpush.bf16.msra.mxu0 0
        %4583 = vmatpush.bf16.msra.mxu0 0
        %4584 = vmatpush.bf16.msra.mxu0 %v2436
        %4585 = vmatpush.bf16.msra.mxu0 %v2006
        %4586 = vmatpush.bf16.msra.mxu0 %v1982
        %4587 = vmatpush.bf16.msra.mxu0 %v1958
        %4588 = vmatpush.bf16.msra.mxu0 %v1934
        %4589 = vmatpush.bf16.msra.mxu0 %v1910
        %4590 = vmatmul.bf16.gmra.mxu0 %v2354
        %v4591 = vpop.f32.mrf.mxu0
        %v4592 = vadd.f32 %v4519, %v4591
        %v4593 = vpop.f32.mrf.mxu0
        %v4594 = vadd.f32 %v4521, %v4593
        %4595 = vmatmul.bf16.gmra.mxu0 %v2357
        %v4596 = vpop.f32.mrf.mxu0
        %v4597 = vadd.f32 %v4524, %v4596
        %v4598 = vpop.f32.mrf.mxu0
        %v4599 = vadd.f32 %v4526, %v4598
        %4600 = vmatmul.bf16.gmra.mxu0 %v2360
        %v4601 = vpop.f32.mrf.mxu0
        %v4602 = vadd.f32 %v4529, %v4601
        %v4603 = vpop.f32.mrf.mxu0
        %v4604 = vadd.f32 %v4531, %v4603
        %4605 = vmatmul.bf16.gmra.mxu0 %v2363
        %v4606 = vpop.f32.mrf.mxu0
        %v4607 = vadd.f32 %v4534, %v4606
        %v4608 = vpop.f32.mrf.mxu0
        %v4609 = vadd.f32 %v4536, %v4608
        %4610 = vmatmul.bf16.gmra.mxu0 %v2366
        %v4611 = vpop.f32.mrf.mxu0
        %v4612 = vadd.f32 %v4539, %v4611
        %v4613 = vpop.f32.mrf.mxu0
        %v4614 = vadd.f32 %v4541, %v4613
        %4615 = vmatmul.bf16.gmra.mxu0 %v2369
        %v4616 = vpop.f32.mrf.mxu0
        %v4617 = vadd.f32 %v4544, %v4616
        %v4618 = vpop.f32.mrf.mxu0
        %v4619 = vadd.f32 %v4546, %v4618
        %4620 = vmatmul.bf16.gmra.mxu0 %v2372
        %v4621 = vpop.f32.mrf.mxu0
        %v4622 = vadd.f32 %v4549, %v4621
        %v4623 = vpop.f32.mrf.mxu0
        %v4624 = vadd.f32 %v4551, %v4623
        %4625 = vmatmul.bf16.gmra.mxu0 %v2375
        %v4626 = vpop.f32.mrf.mxu0
        %v4627 = vadd.f32 %v4554, %v4626
        %v4628 = vpop.f32.mrf.mxu0
        %v4629 = vadd.f32 %v4556, %v4628
        %4630 = vmatmul.bf16.gmra.mxu0 %v2378
        %v4631 = vpop.f32.mrf.mxu0
        %v4632 = vadd.f32 %v4559, %v4631
        %v4633 = vpop.f32.mrf.mxu0
        %v4634 = vadd.f32 %v4561, %v4633
        %4635 = vmatmul.bf16.gmra.mxu0 %v2381
        %v4636 = vpop.f32.mrf.mxu0
        %v4637 = vadd.f32 %v4564, %v4636
        %v4638 = vpop.f32.mrf.mxu0
        %v4639 = vadd.f32 %v4566, %v4638
        %4640 = vmatmul.bf16.gmra.mxu0 %v2384
        %v4641 = vpop.f32.mrf.mxu0
        %v4642 = vadd.f32 %v4569, %v4641
        %v4643 = vpop.f32.mrf.mxu0
        %v4644 = vadd.f32 %v4571, %v4643
        %4645 = vmatmul.bf16.gmra.mxu0 %v2387
        %v4646 = vpop.f32.mrf.mxu0
        %v4647 = vadd.f32 %v4574, %v4646
        %v4648 = vpop.f32.mrf.mxu0
        %v4649 = vadd.f32 %v4576, %v4648
        %4650 = vmatmul.bf16.gmra.mxu0 %v2390
        %v4651 = vpop.f32.mrf.mxu0
        %v4652 = vadd.f32 %v4579, %v4651
        %v4653 = vpop.f32.mrf.mxu0
        %4654 = vdwg.mxu0
        %4655 = vmatpush.bf16.msra.mxu0 %v1887
        %4656 = vmatpush.bf16.msra.mxu0 %v1863
        %4657 = vmatpush.bf16.msra.mxu0 %v1839
        %4658 = vmatpush.bf16.msra.mxu0 %v1815
        %4659 = vmatpush.bf16.msra.mxu0 %v1791
        %4660 = vmatpush.bf16.msra.mxu0 %v1767
        %4661 = vmatpush.bf16.msra.mxu0 %v1743
        %4662 = vmatpush.bf16.msra.mxu0 %v1719
        %4663 = vmatmul.bf16.gmra.mxu0 %v382
        %v4664 = vpop.f32.mrf.mxu0
        %v4665 = vadd.f32 0.0, %v4664
        %v4666 = vpop.f32.mrf.mxu0
        %v4667 = vadd.f32 0.0, %v4666
        %4668 = vmatmul.bf16.gmra.mxu0 %v384
        %v4669 = vpop.f32.mrf.mxu0
        %v4670 = vadd.f32 0.0, %v4669
        %v4671 = vpop.f32.mrf.mxu0
        %v4672 = vadd.f32 0.0, %v4671
        %4673 = vmatmul.bf16.gmra.mxu0 %v386
        %v4674 = vpop.f32.mrf.mxu0
        %v4675 = vadd.f32 0.0, %v4674
        %v4676 = vpop.f32.mrf.mxu0
        %v4677 = vadd.f32 0.0, %v4676
        %4678 = vmatmul.bf16.gmra.mxu0 %v388
        %v4679 = vpop.f32.mrf.mxu0
        %v4680 = vadd.f32 0.0, %v4679
        %v4681 = vpop.f32.mrf.mxu0
        %v4682 = vadd.f32 0.0, %v4681
        %4683 = vmatmul.bf16.gmra.mxu0 %v390
        %v4684 = vpop.f32.mrf.mxu0
        %v4685 = vadd.f32 0.0, %v4684
        %v4686 = vpop.f32.mrf.mxu0
        %v4687 = vadd.f32 0.0, %v4686
        %4688 = vmatmul.bf16.gmra.mxu0 %v392
        %v4689 = vpop.f32.mrf.mxu0
        %v4690 = vadd.f32 0.0, %v4689
        %v4691 = vpop.f32.mrf.mxu0
        %v4692 = vadd.f32 0.0, %v4691
        %4693 = vmatmul.bf16.gmra.mxu0 %v394
        %v4694 = vpop.f32.mrf.mxu0
        %v4695 = vadd.f32 0.0, %v4694
        %v4696 = vpop.f32.mrf.mxu0
        %v4697 = vadd.f32 0.0, %v4696
        %4698 = vmatmul.bf16.gmra.mxu0 %v396
        %v4699 = vpop.f32.mrf.mxu0
        %v4700 = vadd.f32 0.0, %v4699
        %v4701 = vpop.f32.mrf.mxu0
        %v4702 = vadd.f32 0.0, %v4701
        %4703 = vmatmul.bf16.gmra.mxu0 %v398
        %v4704 = vpop.f32.mrf.mxu0
        %v4705 = vadd.f32 0.0, %v4704
        %v4706 = vpop.f32.mrf.mxu0
        %v4707 = vadd.f32 0.0, %v4706
        %4708 = vmatmul.bf16.gmra.mxu0 %v400
        %v4709 = vpop.f32.mrf.mxu0
        %v4710 = vadd.f32 0.0, %v4709
        %v4711 = vpop.f32.mrf.mxu0
        %v4712 = vadd.f32 0.0, %v4711
        %4713 = vmatmul.bf16.gmra.mxu0 %v402
        %v4714 = vpop.f32.mrf.mxu0
        %v4715 = vadd.f32 0.0, %v4714
        %v4716 = vpop.f32.mrf.mxu0
        %v4717 = vadd.f32 0.0, %v4716
        %4718 = vmatmul.bf16.gmra.mxu0 %v404
        %v4719 = vpop.f32.mrf.mxu0
        %v4720 = vadd.f32 0.0, %v4719
        %v4721 = vpop.f32.mrf.mxu0
        %v4722 = vadd.f32 0.0, %v4721
        %4723 = vmatmul.bf16.gmra.mxu0 %v406
        %v4724 = vpop.f32.mrf.mxu0
        %v4725 = vadd.f32 0.0, %v4724
        %v4726 = vpop.f32.mrf.mxu0
        %4727 = vdwg.mxu0
        %4728 = vmatpush.bf16.msra.mxu0 0
        %4729 = vmatpush.bf16.msra.mxu0 0
        %4730 = vmatpush.bf16.msra.mxu0 %v2439
        %4731 = vmatpush.bf16.msra.mxu0 %v2007
        %4732 = vmatpush.bf16.msra.mxu0 %v1983
        %4733 = vmatpush.bf16.msra.mxu0 %v1959
        %4734 = vmatpush.bf16.msra.mxu0 %v1935
        %4735 = vmatpush.bf16.msra.mxu0 %v1911
        %4736 = vmatmul.bf16.gmra.mxu0 %v2354
        %v4737 = vpop.f32.mrf.mxu0
        %v4738 = vadd.f32 %v4665, %v4737
        %v4739 = vpop.f32.mrf.mxu0
        %v4740 = vadd.f32 %v4667, %v4739
        %4741 = vmatmul.bf16.gmra.mxu0 %v2357
        %v4742 = vpop.f32.mrf.mxu0
        %v4743 = vadd.f32 %v4670, %v4742
        %v4744 = vpop.f32.mrf.mxu0
        %v4745 = vadd.f32 %v4672, %v4744
        %4746 = vmatmul.bf16.gmra.mxu0 %v2360
        %v4747 = vpop.f32.mrf.mxu0
        %v4748 = vadd.f32 %v4675, %v4747
        %v4749 = vpop.f32.mrf.mxu0
        %v4750 = vadd.f32 %v4677, %v4749
        %4751 = vmatmul.bf16.gmra.mxu0 %v2363
        %v4752 = vpop.f32.mrf.mxu0
        %v4753 = vadd.f32 %v4680, %v4752
        %v4754 = vpop.f32.mrf.mxu0
        %v4755 = vadd.f32 %v4682, %v4754
        %4756 = vmatmul.bf16.gmra.mxu0 %v2366
        %v4757 = vpop.f32.mrf.mxu0
        %v4758 = vadd.f32 %v4685, %v4757
        %v4759 = vpop.f32.mrf.mxu0
        %v4760 = vadd.f32 %v4687, %v4759
        %4761 = vmatmul.bf16.gmra.mxu0 %v2369
        %v4762 = vpop.f32.mrf.mxu0
        %v4763 = vadd.f32 %v4690, %v4762
        %v4764 = vpop.f32.mrf.mxu0
        %v4765 = vadd.f32 %v4692, %v4764
        %4766 = vmatmul.bf16.gmra.mxu0 %v2372
        %v4767 = vpop.f32.mrf.mxu0
        %v4768 = vadd.f32 %v4695, %v4767
        %v4769 = vpop.f32.mrf.mxu0
        %v4770 = vadd.f32 %v4697, %v4769
        %4771 = vmatmul.bf16.gmra.mxu0 %v2375
        %v4772 = vpop.f32.mrf.mxu0
        %v4773 = vadd.f32 %v4700, %v4772
        %v4774 = vpop.f32.mrf.mxu0
        %v4775 = vadd.f32 %v4702, %v4774
        %4776 = vmatmul.bf16.gmra.mxu0 %v2378
        %v4777 = vpop.f32.mrf.mxu0
        %v4778 = vadd.f32 %v4705, %v4777
        %v4779 = vpop.f32.mrf.mxu0
        %v4780 = vadd.f32 %v4707, %v4779
        %4781 = vmatmul.bf16.gmra.mxu0 %v2381
        %v4782 = vpop.f32.mrf.mxu0
        %v4783 = vadd.f32 %v4710, %v4782
        %v4784 = vpop.f32.mrf.mxu0
        %v4785 = vadd.f32 %v4712, %v4784
        %4786 = vmatmul.bf16.gmra.mxu0 %v2384
        %v4787 = vpop.f32.mrf.mxu0
        %v4788 = vadd.f32 %v4715, %v4787
        %v4789 = vpop.f32.mrf.mxu0
        %v4790 = vadd.f32 %v4717, %v4789
        %4791 = vmatmul.bf16.gmra.mxu0 %v2387
        %v4792 = vpop.f32.mrf.mxu0
        %v4793 = vadd.f32 %v4720, %v4792
        %v4794 = vpop.f32.mrf.mxu0
        %v4795 = vadd.f32 %v4722, %v4794
        %4796 = vmatmul.bf16.gmra.mxu0 %v2390
        %v4797 = vpop.f32.mrf.mxu0
        %v4798 = vadd.f32 %v4725, %v4797
        %v4799 = vpop.f32.mrf.mxu0
        %4800 = vdwg.mxu0
        %4801 = vmatpush.bf16.msra.mxu0 %v1888
        %4802 = vmatpush.bf16.msra.mxu0 %v1864
        %4803 = vmatpush.bf16.msra.mxu0 %v1840
        %4804 = vmatpush.bf16.msra.mxu0 %v1816
        %4805 = vmatpush.bf16.msra.mxu0 %v1792
        %4806 = vmatpush.bf16.msra.mxu0 %v1768
        %4807 = vmatpush.bf16.msra.mxu0 %v1744
        %4808 = vmatpush.bf16.msra.mxu0 %v1720
        %4809 = vmatmul.bf16.gmra.mxu0 %v382
        %v4810 = vpop.f32.mrf.mxu0
        %v4811 = vadd.f32 0.0, %v4810
        %v4812 = vpop.f32.mrf.mxu0
        %v4813 = vadd.f32 0.0, %v4812
        %4814 = vmatmul.bf16.gmra.mxu0 %v384
        %v4815 = vpop.f32.mrf.mxu0
        %v4816 = vadd.f32 0.0, %v4815
        %v4817 = vpop.f32.mrf.mxu0
        %v4818 = vadd.f32 0.0, %v4817
        %4819 = vmatmul.bf16.gmra.mxu0 %v386
        %v4820 = vpop.f32.mrf.mxu0
        %v4821 = vadd.f32 0.0, %v4820
        %v4822 = vpop.f32.mrf.mxu0
        %v4823 = vadd.f32 0.0, %v4822
        %4824 = vmatmul.bf16.gmra.mxu0 %v388
        %v4825 = vpop.f32.mrf.mxu0
        %v4826 = vadd.f32 0.0, %v4825
        %v4827 = vpop.f32.mrf.mxu0
        %v4828 = vadd.f32 0.0, %v4827
        %4829 = vmatmul.bf16.gmra.mxu0 %v390
        %v4830 = vpop.f32.mrf.mxu0
        %v4831 = vadd.f32 0.0, %v4830
        %v4832 = vpop.f32.mrf.mxu0
        %v4833 = vadd.f32 0.0, %v4832
        %4834 = vmatmul.bf16.gmra.mxu0 %v392
        %v4835 = vpop.f32.mrf.mxu0
        %v4836 = vadd.f32 0.0, %v4835
        %v4837 = vpop.f32.mrf.mxu0
        %v4838 = vadd.f32 0.0, %v4837
        %4839 = vmatmul.bf16.gmra.mxu0 %v394
        %v4840 = vpop.f32.mrf.mxu0
        %v4841 = vadd.f32 0.0, %v4840
        %v4842 = vpop.f32.mrf.mxu0
        %v4843 = vadd.f32 0.0, %v4842
        %4844 = vmatmul.bf16.gmra.mxu0 %v396
        %v4845 = vpop.f32.mrf.mxu0
        %v4846 = vadd.f32 0.0, %v4845
        %v4847 = vpop.f32.mrf.mxu0
        %v4848 = vadd.f32 0.0, %v4847
        %4849 = vmatmul.bf16.gmra.mxu0 %v398
        %v4850 = vpop.f32.mrf.mxu0
        %v4851 = vadd.f32 0.0, %v4850
        %v4852 = vpop.f32.mrf.mxu0
        %v4853 = vadd.f32 0.0, %v4852
        %4854 = vmatmul.bf16.gmra.mxu0 %v400
        %v4855 = vpop.f32.mrf.mxu0
        %v4856 = vadd.f32 0.0, %v4855
        %v4857 = vpop.f32.mrf.mxu0
        %v4858 = vadd.f32 0.0, %v4857
        %4859 = vmatmul.bf16.gmra.mxu0 %v402
        %v4860 = vpop.f32.mrf.mxu0
        %v4861 = vadd.f32 0.0, %v4860
        %v4862 = vpop.f32.mrf.mxu0
        %v4863 = vadd.f32 0.0, %v4862
        %4864 = vmatmul.bf16.gmra.mxu0 %v404
        %v4865 = vpop.f32.mrf.mxu0
        %v4866 = vadd.f32 0.0, %v4865
        %v4867 = vpop.f32.mrf.mxu0
        %v4868 = vadd.f32 0.0, %v4867
        %4869 = vmatmul.bf16.gmra.mxu0 %v406
        %v4870 = vpop.f32.mrf.mxu0
        %v4871 = vadd.f32 0.0, %v4870
        %v4872 = vpop.f32.mrf.mxu0
        %4873 = vdwg.mxu0
        %4874 = vmatpush.bf16.msra.mxu0 0
        %4875 = vmatpush.bf16.msra.mxu0 0
        %4876 = vmatpush.bf16.msra.mxu0 %v2442
        %4877 = vmatpush.bf16.msra.mxu0 %v2008
        %4878 = vmatpush.bf16.msra.mxu0 %v1984
        %4879 = vmatpush.bf16.msra.mxu0 %v1960
        %4880 = vmatpush.bf16.msra.mxu0 %v1936
        %4881 = vmatpush.bf16.msra.mxu0 %v1912
        %4882 = vmatmul.bf16.gmra.mxu0 %v2354
        %v4883 = vpop.f32.mrf.mxu0
        %v4884 = vadd.f32 %v4811, %v4883
        %v4885 = vpop.f32.mrf.mxu0
        %v4886 = vadd.f32 %v4813, %v4885
        %4887 = vmatmul.bf16.gmra.mxu0 %v2357
        %v4888 = vpop.f32.mrf.mxu0
        %v4889 = vadd.f32 %v4816, %v4888
        %v4890 = vpop.f32.mrf.mxu0
        %v4891 = vadd.f32 %v4818, %v4890
        %4892 = vmatmul.bf16.gmra.mxu0 %v2360
        %v4893 = vpop.f32.mrf.mxu0
        %v4894 = vadd.f32 %v4821, %v4893
        %v4895 = vpop.f32.mrf.mxu0
        %v4896 = vadd.f32 %v4823, %v4895
        %4897 = vmatmul.bf16.gmra.mxu0 %v2363
        %v4898 = vpop.f32.mrf.mxu0
        %v4899 = vadd.f32 %v4826, %v4898
        %v4900 = vpop.f32.mrf.mxu0
        %v4901 = vadd.f32 %v4828, %v4900
        %4902 = vmatmul.bf16.gmra.mxu0 %v2366
        %v4903 = vpop.f32.mrf.mxu0
        %v4904 = vadd.f32 %v4831, %v4903
        %v4905 = vpop.f32.mrf.mxu0
        %v4906 = vadd.f32 %v4833, %v4905
        %4907 = vmatmul.bf16.gmra.mxu0 %v2369
        %v4908 = vpop.f32.mrf.mxu0
        %v4909 = vadd.f32 %v4836, %v4908
        %v4910 = vpop.f32.mrf.mxu0
        %v4911 = vadd.f32 %v4838, %v4910
        %4912 = vmatmul.bf16.gmra.mxu0 %v2372
        %v4913 = vpop.f32.mrf.mxu0
        %v4914 = vadd.f32 %v4841, %v4913
        %v4915 = vpop.f32.mrf.mxu0
        %v4916 = vadd.f32 %v4843, %v4915
        %4917 = vmatmul.bf16.gmra.mxu0 %v2375
        %v4918 = vpop.f32.mrf.mxu0
        %v4919 = vadd.f32 %v4846, %v4918
        %v4920 = vpop.f32.mrf.mxu0
        %v4921 = vadd.f32 %v4848, %v4920
        %4922 = vmatmul.bf16.gmra.mxu0 %v2378
        %v4923 = vpop.f32.mrf.mxu0
        %v4924 = vadd.f32 %v4851, %v4923
        %v4925 = vpop.f32.mrf.mxu0
        %v4926 = vadd.f32 %v4853, %v4925
        %4927 = vmatmul.bf16.gmra.mxu0 %v2381
        %v4928 = vpop.f32.mrf.mxu0
        %v4929 = vadd.f32 %v4856, %v4928
        %v4930 = vpop.f32.mrf.mxu0
        %v4931 = vadd.f32 %v4858, %v4930
        %4932 = vmatmul.bf16.gmra.mxu0 %v2384
        %v4933 = vpop.f32.mrf.mxu0
        %v4934 = vadd.f32 %v4861, %v4933
        %v4935 = vpop.f32.mrf.mxu0
        %v4936 = vadd.f32 %v4863, %v4935
        %4937 = vmatmul.bf16.gmra.mxu0 %v2387
        %v4938 = vpop.f32.mrf.mxu0
        %v4939 = vadd.f32 %v4866, %v4938
        %v4940 = vpop.f32.mrf.mxu0
        %v4941 = vadd.f32 %v4868, %v4940
        %4942 = vmatmul.bf16.gmra.mxu0 %v2390
        %v4943 = vpop.f32.mrf.mxu0
        %v4944 = vadd.f32 %v4871, %v4943
        %v4945 = vpop.f32.mrf.mxu0
        %4946 = vdwg.mxu0
        %4947 = vmatpush.bf16.msra.mxu0 %v1889
        %4948 = vmatpush.bf16.msra.mxu0 %v1865
        %4949 = vmatpush.bf16.msra.mxu0 %v1841
        %4950 = vmatpush.bf16.msra.mxu0 %v1817
        %4951 = vmatpush.bf16.msra.mxu0 %v1793
        %4952 = vmatpush.bf16.msra.mxu0 %v1769
        %4953 = vmatpush.bf16.msra.mxu0 %v1745
        %4954 = vmatpush.bf16.msra.mxu0 %v1721
        %4955 = vmatmul.bf16.gmra.mxu0 %v382
        %v4956 = vpop.f32.mrf.mxu0
        %v4957 = vadd.f32 0.0, %v4956
        %v4958 = vpop.f32.mrf.mxu0
        %v4959 = vadd.f32 0.0, %v4958
        %4960 = vmatmul.bf16.gmra.mxu0 %v384
        %v4961 = vpop.f32.mrf.mxu0
        %v4962 = vadd.f32 0.0, %v4961
        %v4963 = vpop.f32.mrf.mxu0
        %v4964 = vadd.f32 0.0, %v4963
        %4965 = vmatmul.bf16.gmra.mxu0 %v386
        %v4966 = vpop.f32.mrf.mxu0
        %v4967 = vadd.f32 0.0, %v4966
        %v4968 = vpop.f32.mrf.mxu0
        %v4969 = vadd.f32 0.0, %v4968
        %4970 = vmatmul.bf16.gmra.mxu0 %v388
        %v4971 = vpop.f32.mrf.mxu0
        %v4972 = vadd.f32 0.0, %v4971
        %v4973 = vpop.f32.mrf.mxu0
        %v4974 = vadd.f32 0.0, %v4973
        %4975 = vmatmul.bf16.gmra.mxu0 %v390
        %v4976 = vpop.f32.mrf.mxu0
        %v4977 = vadd.f32 0.0, %v4976
        %v4978 = vpop.f32.mrf.mxu0
        %v4979 = vadd.f32 0.0, %v4978
        %4980 = vmatmul.bf16.gmra.mxu0 %v392
        %v4981 = vpop.f32.mrf.mxu0
        %v4982 = vadd.f32 0.0, %v4981
        %v4983 = vpop.f32.mrf.mxu0
        %v4984 = vadd.f32 0.0, %v4983
        %4985 = vmatmul.bf16.gmra.mxu0 %v394
        %v4986 = vpop.f32.mrf.mxu0
        %v4987 = vadd.f32 0.0, %v4986
        %v4988 = vpop.f32.mrf.mxu0
        %v4989 = vadd.f32 0.0, %v4988
        %4990 = vmatmul.bf16.gmra.mxu0 %v396
        %v4991 = vpop.f32.mrf.mxu0
        %v4992 = vadd.f32 0.0, %v4991
        %v4993 = vpop.f32.mrf.mxu0
        %v4994 = vadd.f32 0.0, %v4993
        %4995 = vmatmul.bf16.gmra.mxu0 %v398
        %v4996 = vpop.f32.mrf.mxu0
        %v4997 = vadd.f32 0.0, %v4996
        %v4998 = vpop.f32.mrf.mxu0
        %v4999 = vadd.f32 0.0, %v4998
        %5000 = vmatmul.bf16.gmra.mxu0 %v400
        %v5001 = vpop.f32.mrf.mxu0
        %v5002 = vadd.f32 0.0, %v5001
        %v5003 = vpop.f32.mrf.mxu0
        %v5004 = vadd.f32 0.0, %v5003
        %5005 = vmatmul.bf16.gmra.mxu0 %v402
        %v5006 = vpop.f32.mrf.mxu0
        %v5007 = vadd.f32 0.0, %v5006
        %v5008 = vpop.f32.mrf.mxu0
        %v5009 = vadd.f32 0.0, %v5008
        %5010 = vmatmul.bf16.gmra.mxu0 %v404
        %v5011 = vpop.f32.mrf.mxu0
        %v5012 = vadd.f32 0.0, %v5011
        %v5013 = vpop.f32.mrf.mxu0
        %v5014 = vadd.f32 0.0, %v5013
        %5015 = vmatmul.bf16.gmra.mxu0 %v406
        %v5016 = vpop.f32.mrf.mxu0
        %v5017 = vadd.f32 0.0, %v5016
        %v5018 = vpop.f32.mrf.mxu0
        %5019 = vdwg.mxu0
        %5020 = vmatpush.bf16.msra.mxu0 0
        %5021 = vmatpush.bf16.msra.mxu0 0
        %5022 = vmatpush.bf16.msra.mxu0 %v2445
        %5023 = vmatpush.bf16.msra.mxu0 %v2009
        %5024 = vmatpush.bf16.msra.mxu0 %v1985
        %5025 = vmatpush.bf16.msra.mxu0 %v1961
        %5026 = vmatpush.bf16.msra.mxu0 %v1937
        %5027 = vmatpush.bf16.msra.mxu0 %v1913
        %5028 = vmatmul.bf16.gmra.mxu0 %v2354
        %v5029 = vpop.f32.mrf.mxu0
        %v5030 = vadd.f32 %v4957, %v5029
        %v5031 = vpop.f32.mrf.mxu0
        %v5032 = vadd.f32 %v4959, %v5031
        %5033 = vmatmul.bf16.gmra.mxu0 %v2357
        %v5034 = vpop.f32.mrf.mxu0
        %v5035 = vadd.f32 %v4962, %v5034
        %v5036 = vpop.f32.mrf.mxu0
        %v5037 = vadd.f32 %v4964, %v5036
        %5038 = vmatmul.bf16.gmra.mxu0 %v2360
        %v5039 = vpop.f32.mrf.mxu0
        %v5040 = vadd.f32 %v4967, %v5039
        %v5041 = vpop.f32.mrf.mxu0
        %v5042 = vadd.f32 %v4969, %v5041
        %5043 = vmatmul.bf16.gmra.mxu0 %v2363
        %v5044 = vpop.f32.mrf.mxu0
        %v5045 = vadd.f32 %v4972, %v5044
        %v5046 = vpop.f32.mrf.mxu0
        %v5047 = vadd.f32 %v4974, %v5046
        %5048 = vmatmul.bf16.gmra.mxu0 %v2366
        %v5049 = vpop.f32.mrf.mxu0
        %v5050 = vadd.f32 %v4977, %v5049
        %v5051 = vpop.f32.mrf.mxu0
        %v5052 = vadd.f32 %v4979, %v5051
        %5053 = vmatmul.bf16.gmra.mxu0 %v2369
        %v5054 = vpop.f32.mrf.mxu0
        %v5055 = vadd.f32 %v4982, %v5054
        %v5056 = vpop.f32.mrf.mxu0
        %v5057 = vadd.f32 %v4984, %v5056
        %5058 = vmatmul.bf16.gmra.mxu0 %v2372
        %v5059 = vpop.f32.mrf.mxu0
        %v5060 = vadd.f32 %v4987, %v5059
        %v5061 = vpop.f32.mrf.mxu0
        %v5062 = vadd.f32 %v4989, %v5061
        %5063 = vmatmul.bf16.gmra.mxu0 %v2375
        %v5064 = vpop.f32.mrf.mxu0
        %v5065 = vadd.f32 %v4992, %v5064
        %v5066 = vpop.f32.mrf.mxu0
        %v5067 = vadd.f32 %v4994, %v5066
        %5068 = vmatmul.bf16.gmra.mxu0 %v2378
        %v5069 = vpop.f32.mrf.mxu0
        %v5070 = vadd.f32 %v4997, %v5069
        %v5071 = vpop.f32.mrf.mxu0
        %v5072 = vadd.f32 %v4999, %v5071
        %5073 = vmatmul.bf16.gmra.mxu0 %v2381
        %v5074 = vpop.f32.mrf.mxu0
        %v5075 = vadd.f32 %v5002, %v5074
        %v5076 = vpop.f32.mrf.mxu0
        %v5077 = vadd.f32 %v5004, %v5076
        %5078 = vmatmul.bf16.gmra.mxu0 %v2384
        %v5079 = vpop.f32.mrf.mxu0
        %v5080 = vadd.f32 %v5007, %v5079
        %v5081 = vpop.f32.mrf.mxu0
        %v5082 = vadd.f32 %v5009, %v5081
        %5083 = vmatmul.bf16.gmra.mxu0 %v2387
        %v5084 = vpop.f32.mrf.mxu0
        %v5085 = vadd.f32 %v5012, %v5084
        %v5086 = vpop.f32.mrf.mxu0
        %v5087 = vadd.f32 %v5014, %v5086
        %5088 = vmatmul.bf16.gmra.mxu0 %v2390
        %v5089 = vpop.f32.mrf.mxu0
        %v5090 = vadd.f32 %v5017, %v5089
        %v5091 = vpop.f32.mrf.mxu0
        %5092 = vdwg.mxu0
        %5093 = vmatpush.bf16.msra.mxu0 %v1890
        %5094 = vmatpush.bf16.msra.mxu0 %v1866
        %5095 = vmatpush.bf16.msra.mxu0 %v1842
        %5096 = vmatpush.bf16.msra.mxu0 %v1818
        %5097 = vmatpush.bf16.msra.mxu0 %v1794
        %5098 = vmatpush.bf16.msra.mxu0 %v1770
        %5099 = vmatpush.bf16.msra.mxu0 %v1746
        %5100 = vmatpush.bf16.msra.mxu0 %v1722
        %5101 = vmatmul.bf16.gmra.mxu0 %v382
        %v5102 = vpop.f32.mrf.mxu0
        %v5103 = vadd.f32 0.0, %v5102
        %v5104 = vpop.f32.mrf.mxu0
        %v5105 = vadd.f32 0.0, %v5104
        %5106 = vmatmul.bf16.gmra.mxu0 %v384
        %v5107 = vpop.f32.mrf.mxu0
        %v5108 = vadd.f32 0.0, %v5107
        %v5109 = vpop.f32.mrf.mxu0
        %v5110 = vadd.f32 0.0, %v5109
        %5111 = vmatmul.bf16.gmra.mxu0 %v386
        %v5112 = vpop.f32.mrf.mxu0
        %v5113 = vadd.f32 0.0, %v5112
        %v5114 = vpop.f32.mrf.mxu0
        %v5115 = vadd.f32 0.0, %v5114
        %5116 = vmatmul.bf16.gmra.mxu0 %v388
        %v5117 = vpop.f32.mrf.mxu0
        %v5118 = vadd.f32 0.0, %v5117
        %v5119 = vpop.f32.mrf.mxu0
        %v5120 = vadd.f32 0.0, %v5119
        %5121 = vmatmul.bf16.gmra.mxu0 %v390
        %v5122 = vpop.f32.mrf.mxu0
        %v5123 = vadd.f32 0.0, %v5122
        %v5124 = vpop.f32.mrf.mxu0
        %v5125 = vadd.f32 0.0, %v5124
        %5126 = vmatmul.bf16.gmra.mxu0 %v392
        %v5127 = vpop.f32.mrf.mxu0
        %v5128 = vadd.f32 0.0, %v5127
        %v5129 = vpop.f32.mrf.mxu0
        %v5130 = vadd.f32 0.0, %v5129
        %5131 = vmatmul.bf16.gmra.mxu0 %v394
        %v5132 = vpop.f32.mrf.mxu0
        %v5133 = vadd.f32 0.0, %v5132
        %v5134 = vpop.f32.mrf.mxu0
        %v5135 = vadd.f32 0.0, %v5134
        %5136 = vmatmul.bf16.gmra.mxu0 %v396
        %v5137 = vpop.f32.mrf.mxu0
        %v5138 = vadd.f32 0.0, %v5137
        %v5139 = vpop.f32.mrf.mxu0
        %v5140 = vadd.f32 0.0, %v5139
        %5141 = vmatmul.bf16.gmra.mxu0 %v398
        %v5142 = vpop.f32.mrf.mxu0
        %v5143 = vadd.f32 0.0, %v5142
        %v5144 = vpop.f32.mrf.mxu0
        %v5145 = vadd.f32 0.0, %v5144
        %5146 = vmatmul.bf16.gmra.mxu0 %v400
        %v5147 = vpop.f32.mrf.mxu0
        %v5148 = vadd.f32 0.0, %v5147
        %v5149 = vpop.f32.mrf.mxu0
        %v5150 = vadd.f32 0.0, %v5149
        %5151 = vmatmul.bf16.gmra.mxu0 %v402
        %v5152 = vpop.f32.mrf.mxu0
        %v5153 = vadd.f32 0.0, %v5152
        %v5154 = vpop.f32.mrf.mxu0
        %v5155 = vadd.f32 0.0, %v5154
        %5156 = vmatmul.bf16.gmra.mxu0 %v404
        %v5157 = vpop.f32.mrf.mxu0
        %v5158 = vadd.f32 0.0, %v5157
        %v5159 = vpop.f32.mrf.mxu0
        %v5160 = vadd.f32 0.0, %v5159
        %5161 = vmatmul.bf16.gmra.mxu0 %v406
        %v5162 = vpop.f32.mrf.mxu0
        %v5163 = vadd.f32 0.0, %v5162
        %v5164 = vpop.f32.mrf.mxu0
        %5165 = vdwg.mxu0
        %5166 = vmatpush.bf16.msra.mxu0 0
        %5167 = vmatpush.bf16.msra.mxu0 0
        %5168 = vmatpush.bf16.msra.mxu0 %v2448
        %5169 = vmatpush.bf16.msra.mxu0 %v2010
        %5170 = vmatpush.bf16.msra.mxu0 %v1986
        %5171 = vmatpush.bf16.msra.mxu0 %v1962
        %5172 = vmatpush.bf16.msra.mxu0 %v1938
        %5173 = vmatpush.bf16.msra.mxu0 %v1914
        %5174 = vmatmul.bf16.gmra.mxu0 %v2354
        %v5175 = vpop.f32.mrf.mxu0
        %v5176 = vadd.f32 %v5103, %v5175
        %v5177 = vpop.f32.mrf.mxu0
        %v5178 = vadd.f32 %v5105, %v5177
        %5179 = vmatmul.bf16.gmra.mxu0 %v2357
        %v5180 = vpop.f32.mrf.mxu0
        %v5181 = vadd.f32 %v5108, %v5180
        %v5182 = vpop.f32.mrf.mxu0
        %v5183 = vadd.f32 %v5110, %v5182
        %5184 = vmatmul.bf16.gmra.mxu0 %v2360
        %v5185 = vpop.f32.mrf.mxu0
        %v5186 = vadd.f32 %v5113, %v5185
        %v5187 = vpop.f32.mrf.mxu0
        %v5188 = vadd.f32 %v5115, %v5187
        %5189 = vmatmul.bf16.gmra.mxu0 %v2363
        %v5190 = vpop.f32.mrf.mxu0
        %v5191 = vadd.f32 %v5118, %v5190
        %v5192 = vpop.f32.mrf.mxu0
        %v5193 = vadd.f32 %v5120, %v5192
        %5194 = vmatmul.bf16.gmra.mxu0 %v2366
        %v5195 = vpop.f32.mrf.mxu0
        %v5196 = vadd.f32 %v5123, %v5195
        %v5197 = vpop.f32.mrf.mxu0
        %v5198 = vadd.f32 %v5125, %v5197
        %5199 = vmatmul.bf16.gmra.mxu0 %v2369
        %v5200 = vpop.f32.mrf.mxu0
        %v5201 = vadd.f32 %v5128, %v5200
        %v5202 = vpop.f32.mrf.mxu0
        %v5203 = vadd.f32 %v5130, %v5202
        %5204 = vmatmul.bf16.gmra.mxu0 %v2372
        %v5205 = vpop.f32.mrf.mxu0
        %v5206 = vadd.f32 %v5133, %v5205
        %v5207 = vpop.f32.mrf.mxu0
        %v5208 = vadd.f32 %v5135, %v5207
        %5209 = vmatmul.bf16.gmra.mxu0 %v2375
        %v5210 = vpop.f32.mrf.mxu0
        %v5211 = vadd.f32 %v5138, %v5210
        %v5212 = vpop.f32.mrf.mxu0
        %v5213 = vadd.f32 %v5140, %v5212
        %5214 = vmatmul.bf16.gmra.mxu0 %v2378
        %v5215 = vpop.f32.mrf.mxu0
        %v5216 = vadd.f32 %v5143, %v5215
        %v5217 = vpop.f32.mrf.mxu0
        %v5218 = vadd.f32 %v5145, %v5217
        %5219 = vmatmul.bf16.gmra.mxu0 %v2381
        %v5220 = vpop.f32.mrf.mxu0
        %v5221 = vadd.f32 %v5148, %v5220
        %v5222 = vpop.f32.mrf.mxu0
        %v5223 = vadd.f32 %v5150, %v5222
        %5224 = vmatmul.bf16.gmra.mxu0 %v2384
        %v5225 = vpop.f32.mrf.mxu0
        %v5226 = vadd.f32 %v5153, %v5225
        %v5227 = vpop.f32.mrf.mxu0
        %v5228 = vadd.f32 %v5155, %v5227
        %5229 = vmatmul.bf16.gmra.mxu0 %v2387
        %v5230 = vpop.f32.mrf.mxu0
        %v5231 = vadd.f32 %v5158, %v5230
        %v5232 = vpop.f32.mrf.mxu0
        %v5233 = vadd.f32 %v5160, %v5232
        %5234 = vmatmul.bf16.gmra.mxu0 %v2390
        %v5235 = vpop.f32.mrf.mxu0
        %v5236 = vadd.f32 %v5163, %v5235
        %v5237 = vpop.f32.mrf.mxu0
        %5238 = vdwg.mxu0
        %5239 = vmatpush.bf16.msra.mxu0 %v1891
        %5240 = vmatpush.bf16.msra.mxu0 %v1867
        %5241 = vmatpush.bf16.msra.mxu0 %v1843
        %5242 = vmatpush.bf16.msra.mxu0 %v1819
        %5243 = vmatpush.bf16.msra.mxu0 %v1795
        %5244 = vmatpush.bf16.msra.mxu0 %v1771
        %5245 = vmatpush.bf16.msra.mxu0 %v1747
        %5246 = vmatpush.bf16.msra.mxu0 %v1723
        %5247 = vmatmul.bf16.gmra.mxu0 %v382
        %v5248 = vpop.f32.mrf.mxu0
        %v5249 = vadd.f32 0.0, %v5248
        %v5250 = vpop.f32.mrf.mxu0
        %v5251 = vadd.f32 0.0, %v5250
        %5252 = vmatmul.bf16.gmra.mxu0 %v384
        %v5253 = vpop.f32.mrf.mxu0
        %v5254 = vadd.f32 0.0, %v5253
        %v5255 = vpop.f32.mrf.mxu0
        %v5256 = vadd.f32 0.0, %v5255
        %5257 = vmatmul.bf16.gmra.mxu0 %v386
        %v5258 = vpop.f32.mrf.mxu0
        %v5259 = vadd.f32 0.0, %v5258
        %v5260 = vpop.f32.mrf.mxu0
        %v5261 = vadd.f32 0.0, %v5260
        %5262 = vmatmul.bf16.gmra.mxu0 %v388
        %v5263 = vpop.f32.mrf.mxu0
        %v5264 = vadd.f32 0.0, %v5263
        %v5265 = vpop.f32.mrf.mxu0
        %v5266 = vadd.f32 0.0, %v5265
        %5267 = vmatmul.bf16.gmra.mxu0 %v390
        %v5268 = vpop.f32.mrf.mxu0
        %v5269 = vadd.f32 0.0, %v5268
        %v5270 = vpop.f32.mrf.mxu0
        %v5271 = vadd.f32 0.0, %v5270
        %5272 = vmatmul.bf16.gmra.mxu0 %v392
        %v5273 = vpop.f32.mrf.mxu0
        %v5274 = vadd.f32 0.0, %v5273
        %v5275 = vpop.f32.mrf.mxu0
        %v5276 = vadd.f32 0.0, %v5275
        %5277 = vmatmul.bf16.gmra.mxu0 %v394
        %v5278 = vpop.f32.mrf.mxu0
        %v5279 = vadd.f32 0.0, %v5278
        %v5280 = vpop.f32.mrf.mxu0
        %v5281 = vadd.f32 0.0, %v5280
        %5282 = vmatmul.bf16.gmra.mxu0 %v396
        %v5283 = vpop.f32.mrf.mxu0
        %v5284 = vadd.f32 0.0, %v5283
        %v5285 = vpop.f32.mrf.mxu0
        %v5286 = vadd.f32 0.0, %v5285
        %5287 = vmatmul.bf16.gmra.mxu0 %v398
        %v5288 = vpop.f32.mrf.mxu0
        %v5289 = vadd.f32 0.0, %v5288
        %v5290 = vpop.f32.mrf.mxu0
        %v5291 = vadd.f32 0.0, %v5290
        %5292 = vmatmul.bf16.gmra.mxu0 %v400
        %v5293 = vpop.f32.mrf.mxu0
        %v5294 = vadd.f32 0.0, %v5293
        %v5295 = vpop.f32.mrf.mxu0
        %v5296 = vadd.f32 0.0, %v5295
        %5297 = vmatmul.bf16.gmra.mxu0 %v402
        %v5298 = vpop.f32.mrf.mxu0
        %v5299 = vadd.f32 0.0, %v5298
        %v5300 = vpop.f32.mrf.mxu0
        %v5301 = vadd.f32 0.0, %v5300
        %5302 = vmatmul.bf16.gmra.mxu0 %v404
        %v5303 = vpop.f32.mrf.mxu0
        %v5304 = vadd.f32 0.0, %v5303
        %v5305 = vpop.f32.mrf.mxu0
        %v5306 = vadd.f32 0.0, %v5305
        %5307 = vmatmul.bf16.gmra.mxu0 %v406
        %v5308 = vpop.f32.mrf.mxu0
        %v5309 = vadd.f32 0.0, %v5308
        %v5310 = vpop.f32.mrf.mxu0
        %5311 = vdwg.mxu0
        %5312 = vmatpush.bf16.msra.mxu0 0
        %5313 = vmatpush.bf16.msra.mxu0 0
        %5314 = vmatpush.bf16.msra.mxu0 %v2451
        %5315 = vmatpush.bf16.msra.mxu0 %v2011
        %5316 = vmatpush.bf16.msra.mxu0 %v1987
        %5317 = vmatpush.bf16.msra.mxu0 %v1963
        %5318 = vmatpush.bf16.msra.mxu0 %v1939
        %5319 = vmatpush.bf16.msra.mxu0 %v1915
        %5320 = vmatmul.bf16.gmra.mxu0 %v2354
        %v5321 = vpop.f32.mrf.mxu0
        %v5322 = vadd.f32 %v5249, %v5321
        %v5323 = vpop.f32.mrf.mxu0
        %v5324 = vadd.f32 %v5251, %v5323
        %5325 = vmatmul.bf16.gmra.mxu0 %v2357
        %v5326 = vpop.f32.mrf.mxu0
        %v5327 = vadd.f32 %v5254, %v5326
        %v5328 = vpop.f32.mrf.mxu0
        %v5329 = vadd.f32 %v5256, %v5328
        %5330 = vmatmul.bf16.gmra.mxu0 %v2360
        %v5331 = vpop.f32.mrf.mxu0
        %v5332 = vadd.f32 %v5259, %v5331
        %v5333 = vpop.f32.mrf.mxu0
        %v5334 = vadd.f32 %v5261, %v5333
        %5335 = vmatmul.bf16.gmra.mxu0 %v2363
        %v5336 = vpop.f32.mrf.mxu0
        %v5337 = vadd.f32 %v5264, %v5336
        %v5338 = vpop.f32.mrf.mxu0
        %v5339 = vadd.f32 %v5266, %v5338
        %5340 = vmatmul.bf16.gmra.mxu0 %v2366
        %v5341 = vpop.f32.mrf.mxu0
        %v5342 = vadd.f32 %v5269, %v5341
        %v5343 = vpop.f32.mrf.mxu0
        %v5344 = vadd.f32 %v5271, %v5343
        %5345 = vmatmul.bf16.gmra.mxu0 %v2369
        %v5346 = vpop.f32.mrf.mxu0
        %v5347 = vadd.f32 %v5274, %v5346
        %v5348 = vpop.f32.mrf.mxu0
        %v5349 = vadd.f32 %v5276, %v5348
        %5350 = vmatmul.bf16.gmra.mxu0 %v2372
        %v5351 = vpop.f32.mrf.mxu0
        %v5352 = vadd.f32 %v5279, %v5351
        %v5353 = vpop.f32.mrf.mxu0
        %v5354 = vadd.f32 %v5281, %v5353
        %5355 = vmatmul.bf16.gmra.mxu0 %v2375
        %v5356 = vpop.f32.mrf.mxu0
        %v5357 = vadd.f32 %v5284, %v5356
        %v5358 = vpop.f32.mrf.mxu0
        %v5359 = vadd.f32 %v5286, %v5358
        %5360 = vmatmul.bf16.gmra.mxu0 %v2378
        %v5361 = vpop.f32.mrf.mxu0
        %v5362 = vadd.f32 %v5289, %v5361
        %v5363 = vpop.f32.mrf.mxu0
        %v5364 = vadd.f32 %v5291, %v5363
        %5365 = vmatmul.bf16.gmra.mxu0 %v2381
        %v5366 = vpop.f32.mrf.mxu0
        %v5367 = vadd.f32 %v5294, %v5366
        %v5368 = vpop.f32.mrf.mxu0
        %v5369 = vadd.f32 %v5296, %v5368
        %5370 = vmatmul.bf16.gmra.mxu0 %v2384
        %v5371 = vpop.f32.mrf.mxu0
        %v5372 = vadd.f32 %v5299, %v5371
        %v5373 = vpop.f32.mrf.mxu0
        %v5374 = vadd.f32 %v5301, %v5373
        %5375 = vmatmul.bf16.gmra.mxu0 %v2387
        %v5376 = vpop.f32.mrf.mxu0
        %v5377 = vadd.f32 %v5304, %v5376
        %v5378 = vpop.f32.mrf.mxu0
        %v5379 = vadd.f32 %v5306, %v5378
        %5380 = vmatmul.bf16.gmra.mxu0 %v2390
        %v5381 = vpop.f32.mrf.mxu0
        %v5382 = vadd.f32 %v5309, %v5381
        %v5383 = vpop.f32.mrf.mxu0
        %5384 = vdwg.mxu0
        %5385 = vmatpush.bf16.msra.mxu0 %v1892
        %5386 = vmatpush.bf16.msra.mxu0 %v1868
        %5387 = vmatpush.bf16.msra.mxu0 %v1844
        %5388 = vmatpush.bf16.msra.mxu0 %v1820
        %5389 = vmatpush.bf16.msra.mxu0 %v1796
        %5390 = vmatpush.bf16.msra.mxu0 %v1772
        %5391 = vmatpush.bf16.msra.mxu0 %v1748
        %5392 = vmatpush.bf16.msra.mxu0 %v1724
        %5393 = vmatmul.bf16.gmra.mxu0 %v382
        %v5394 = vpop.f32.mrf.mxu0
        %v5395 = vadd.f32 0.0, %v5394
        %v5396 = vpop.f32.mrf.mxu0
        %v5397 = vadd.f32 0.0, %v5396
        %5398 = vmatmul.bf16.gmra.mxu0 %v384
        %v5399 = vpop.f32.mrf.mxu0
        %v5400 = vadd.f32 0.0, %v5399
        %v5401 = vpop.f32.mrf.mxu0
        %v5402 = vadd.f32 0.0, %v5401
        %5403 = vmatmul.bf16.gmra.mxu0 %v386
        %v5404 = vpop.f32.mrf.mxu0
        %v5405 = vadd.f32 0.0, %v5404
        %v5406 = vpop.f32.mrf.mxu0
        %v5407 = vadd.f32 0.0, %v5406
        %5408 = vmatmul.bf16.gmra.mxu0 %v388
        %v5409 = vpop.f32.mrf.mxu0
        %v5410 = vadd.f32 0.0, %v5409
        %v5411 = vpop.f32.mrf.mxu0
        %v5412 = vadd.f32 0.0, %v5411
        %5413 = vmatmul.bf16.gmra.mxu0 %v390
        %v5414 = vpop.f32.mrf.mxu0
        %v5415 = vadd.f32 0.0, %v5414
        %v5416 = vpop.f32.mrf.mxu0
        %v5417 = vadd.f32 0.0, %v5416
        %5418 = vmatmul.bf16.gmra.mxu0 %v392
        %v5419 = vpop.f32.mrf.mxu0
        %v5420 = vadd.f32 0.0, %v5419
        %v5421 = vpop.f32.mrf.mxu0
        %v5422 = vadd.f32 0.0, %v5421
        %5423 = vmatmul.bf16.gmra.mxu0 %v394
        %v5424 = vpop.f32.mrf.mxu0
        %v5425 = vadd.f32 0.0, %v5424
        %v5426 = vpop.f32.mrf.mxu0
        %v5427 = vadd.f32 0.0, %v5426
        %5428 = vmatmul.bf16.gmra.mxu0 %v396
        %v5429 = vpop.f32.mrf.mxu0
        %v5430 = vadd.f32 0.0, %v5429
        %v5431 = vpop.f32.mrf.mxu0
        %v5432 = vadd.f32 0.0, %v5431
        %5433 = vmatmul.bf16.gmra.mxu0 %v398
        %v5434 = vpop.f32.mrf.mxu0
        %v5435 = vadd.f32 0.0, %v5434
        %v5436 = vpop.f32.mrf.mxu0
        %v5437 = vadd.f32 0.0, %v5436
        %5438 = vmatmul.bf16.gmra.mxu0 %v400
        %v5439 = vpop.f32.mrf.mxu0
        %v5440 = vadd.f32 0.0, %v5439
        %v5441 = vpop.f32.mrf.mxu0
        %v5442 = vadd.f32 0.0, %v5441
        %5443 = vmatmul.bf16.gmra.mxu0 %v402
        %v5444 = vpop.f32.mrf.mxu0
        %v5445 = vadd.f32 0.0, %v5444
        %v5446 = vpop.f32.mrf.mxu0
        %v5447 = vadd.f32 0.0, %v5446
        %5448 = vmatmul.bf16.gmra.mxu0 %v404
        %v5449 = vpop.f32.mrf.mxu0
        %v5450 = vadd.f32 0.0, %v5449
        %v5451 = vpop.f32.mrf.mxu0
        %v5452 = vadd.f32 0.0, %v5451
        %5453 = vmatmul.bf16.gmra.mxu0 %v406
        %v5454 = vpop.f32.mrf.mxu0
        %v5455 = vadd.f32 0.0, %v5454
        %v5456 = vpop.f32.mrf.mxu0
        %5457 = vdwg.mxu0
        %5458 = vmatpush.bf16.msra.mxu0 0
        %5459 = vmatpush.bf16.msra.mxu0 0
        %5460 = vmatpush.bf16.msra.mxu0 %v2454
        %5461 = vmatpush.bf16.msra.mxu0 %v2012
        %5462 = vmatpush.bf16.msra.mxu0 %v1988
        %5463 = vmatpush.bf16.msra.mxu0 %v1964
        %5464 = vmatpush.bf16.msra.mxu0 %v1940
        %5465 = vmatpush.bf16.msra.mxu0 %v1916
        %5466 = vmatmul.bf16.gmra.mxu0 %v2354
        %v5467 = vpop.f32.mrf.mxu0
        %v5468 = vadd.f32 %v5395, %v5467
        %v5469 = vpop.f32.mrf.mxu0
        %v5470 = vadd.f32 %v5397, %v5469
        %5471 = vmatmul.bf16.gmra.mxu0 %v2357
        %v5472 = vpop.f32.mrf.mxu0
        %v5473 = vadd.f32 %v5400, %v5472
        %v5474 = vpop.f32.mrf.mxu0
        %v5475 = vadd.f32 %v5402, %v5474
        %5476 = vmatmul.bf16.gmra.mxu0 %v2360
        %v5477 = vpop.f32.mrf.mxu0
        %v5478 = vadd.f32 %v5405, %v5477
        %v5479 = vpop.f32.mrf.mxu0
        %v5480 = vadd.f32 %v5407, %v5479
        %5481 = vmatmul.bf16.gmra.mxu0 %v2363
        %v5482 = vpop.f32.mrf.mxu0
        %v5483 = vadd.f32 %v5410, %v5482
        %v5484 = vpop.f32.mrf.mxu0
        %v5485 = vadd.f32 %v5412, %v5484
        %5486 = vmatmul.bf16.gmra.mxu0 %v2366
        %v5487 = vpop.f32.mrf.mxu0
        %v5488 = vadd.f32 %v5415, %v5487
        %v5489 = vpop.f32.mrf.mxu0
        %v5490 = vadd.f32 %v5417, %v5489
        %5491 = vmatmul.bf16.gmra.mxu0 %v2369
        %v5492 = vpop.f32.mrf.mxu0
        %v5493 = vadd.f32 %v5420, %v5492
        %v5494 = vpop.f32.mrf.mxu0
        %v5495 = vadd.f32 %v5422, %v5494
        %5496 = vmatmul.bf16.gmra.mxu0 %v2372
        %v5497 = vpop.f32.mrf.mxu0
        %v5498 = vadd.f32 %v5425, %v5497
        %v5499 = vpop.f32.mrf.mxu0
        %v5500 = vadd.f32 %v5427, %v5499
        %5501 = vmatmul.bf16.gmra.mxu0 %v2375
        %v5502 = vpop.f32.mrf.mxu0
        %v5503 = vadd.f32 %v5430, %v5502
        %v5504 = vpop.f32.mrf.mxu0
        %v5505 = vadd.f32 %v5432, %v5504
        %5506 = vmatmul.bf16.gmra.mxu0 %v2378
        %v5507 = vpop.f32.mrf.mxu0
        %v5508 = vadd.f32 %v5435, %v5507
        %v5509 = vpop.f32.mrf.mxu0
        %v5510 = vadd.f32 %v5437, %v5509
        %5511 = vmatmul.bf16.gmra.mxu0 %v2381
        %v5512 = vpop.f32.mrf.mxu0
        %v5513 = vadd.f32 %v5440, %v5512
        %v5514 = vpop.f32.mrf.mxu0
        %v5515 = vadd.f32 %v5442, %v5514
        %5516 = vmatmul.bf16.gmra.mxu0 %v2384
        %v5517 = vpop.f32.mrf.mxu0
        %v5518 = vadd.f32 %v5445, %v5517
        %v5519 = vpop.f32.mrf.mxu0
        %v5520 = vadd.f32 %v5447, %v5519
        %5521 = vmatmul.bf16.gmra.mxu0 %v2387
        %v5522 = vpop.f32.mrf.mxu0
        %v5523 = vadd.f32 %v5450, %v5522
        %v5524 = vpop.f32.mrf.mxu0
        %v5525 = vadd.f32 %v5452, %v5524
        %5526 = vmatmul.bf16.gmra.mxu0 %v2390
        %v5527 = vpop.f32.mrf.mxu0
        %v5528 = vadd.f32 %v5455, %v5527
        %v5529 = vpop.f32.mrf.mxu0
        %5530 = vdwg.mxu0
        %5531 = vmatpush.bf16.msra.mxu0 %v1893
        %5532 = vmatpush.bf16.msra.mxu0 %v1869
        %5533 = vmatpush.bf16.msra.mxu0 %v1845
        %5534 = vmatpush.bf16.msra.mxu0 %v1821
        %5535 = vmatpush.bf16.msra.mxu0 %v1797
        %5536 = vmatpush.bf16.msra.mxu0 %v1773
        %5537 = vmatpush.bf16.msra.mxu0 %v1749
        %5538 = vmatpush.bf16.msra.mxu0 %v1725
        %5539 = vmatmul.bf16.gmra.mxu0 %v382
        %v5540 = vpop.f32.mrf.mxu0
        %v5541 = vadd.f32 0.0, %v5540
        %v5542 = vpop.f32.mrf.mxu0
        %v5543 = vadd.f32 0.0, %v5542
        %5544 = vmatmul.bf16.gmra.mxu0 %v384
        %v5545 = vpop.f32.mrf.mxu0
        %v5546 = vadd.f32 0.0, %v5545
        %v5547 = vpop.f32.mrf.mxu0
        %v5548 = vadd.f32 0.0, %v5547
        %5549 = vmatmul.bf16.gmra.mxu0 %v386
        %v5550 = vpop.f32.mrf.mxu0
        %v5551 = vadd.f32 0.0, %v5550
        %v5552 = vpop.f32.mrf.mxu0
        %v5553 = vadd.f32 0.0, %v5552
        %5554 = vmatmul.bf16.gmra.mxu0 %v388
        %v5555 = vpop.f32.mrf.mxu0
        %v5556 = vadd.f32 0.0, %v5555
        %v5557 = vpop.f32.mrf.mxu0
        %v5558 = vadd.f32 0.0, %v5557
        %5559 = vmatmul.bf16.gmra.mxu0 %v390
        %v5560 = vpop.f32.mrf.mxu0
        %v5561 = vadd.f32 0.0, %v5560
        %v5562 = vpop.f32.mrf.mxu0
        %v5563 = vadd.f32 0.0, %v5562
        %5564 = vmatmul.bf16.gmra.mxu0 %v392
        %v5565 = vpop.f32.mrf.mxu0
        %v5566 = vadd.f32 0.0, %v5565
        %v5567 = vpop.f32.mrf.mxu0
        %v5568 = vadd.f32 0.0, %v5567
        %5569 = vmatmul.bf16.gmra.mxu0 %v394
        %v5570 = vpop.f32.mrf.mxu0
        %v5571 = vadd.f32 0.0, %v5570
        %v5572 = vpop.f32.mrf.mxu0
        %v5573 = vadd.f32 0.0, %v5572
        %5574 = vmatmul.bf16.gmra.mxu0 %v396
        %v5575 = vpop.f32.mrf.mxu0
        %v5576 = vadd.f32 0.0, %v5575
        %v5577 = vpop.f32.mrf.mxu0
        %v5578 = vadd.f32 0.0, %v5577
        %5579 = vmatmul.bf16.gmra.mxu0 %v398
        %v5580 = vpop.f32.mrf.mxu0
        %v5581 = vadd.f32 0.0, %v5580
        %v5582 = vpop.f32.mrf.mxu0
        %v5583 = vadd.f32 0.0, %v5582
        %5584 = vmatmul.bf16.gmra.mxu0 %v400
        %v5585 = vpop.f32.mrf.mxu0
        %v5586 = vadd.f32 0.0, %v5585
        %v5587 = vpop.f32.mrf.mxu0
        %v5588 = vadd.f32 0.0, %v5587
        %5589 = vmatmul.bf16.gmra.mxu0 %v402
        %v5590 = vpop.f32.mrf.mxu0
        %v5591 = vadd.f32 0.0, %v5590
        %v5592 = vpop.f32.mrf.mxu0
        %v5593 = vadd.f32 0.0, %v5592
        %5594 = vmatmul.bf16.gmra.mxu0 %v404
        %v5595 = vpop.f32.mrf.mxu0
        %v5596 = vadd.f32 0.0, %v5595
        %v5597 = vpop.f32.mrf.mxu0
        %v5598 = vadd.f32 0.0, %v5597
        %5599 = vmatmul.bf16.gmra.mxu0 %v406
        %v5600 = vpop.f32.mrf.mxu0
        %v5601 = vadd.f32 0.0, %v5600
        %v5602 = vpop.f32.mrf.mxu0
        %5603 = vdwg.mxu0
        %5604 = vmatpush.bf16.msra.mxu0 0
        %5605 = vmatpush.bf16.msra.mxu0 0
        %5606 = vmatpush.bf16.msra.mxu0 %v2457
        %5607 = vmatpush.bf16.msra.mxu0 %v2013
        %5608 = vmatpush.bf16.msra.mxu0 %v1989
        %5609 = vmatpush.bf16.msra.mxu0 %v1965
        %5610 = vmatpush.bf16.msra.mxu0 %v1941
        %5611 = vmatpush.bf16.msra.mxu0 %v1917
        %5612 = vmatmul.bf16.gmra.mxu0 %v2354
        %v5613 = vpop.f32.mrf.mxu0
        %v5614 = vadd.f32 %v5541, %v5613
        %v5615 = vpop.f32.mrf.mxu0
        %v5616 = vadd.f32 %v5543, %v5615
        %5617 = vmatmul.bf16.gmra.mxu0 %v2357
        %v5618 = vpop.f32.mrf.mxu0
        %v5619 = vadd.f32 %v5546, %v5618
        %v5620 = vpop.f32.mrf.mxu0
        %v5621 = vadd.f32 %v5548, %v5620
        %5622 = vmatmul.bf16.gmra.mxu0 %v2360
        %v5623 = vpop.f32.mrf.mxu0
        %v5624 = vadd.f32 %v5551, %v5623
        %v5625 = vpop.f32.mrf.mxu0
        %v5626 = vadd.f32 %v5553, %v5625
        %5627 = vmatmul.bf16.gmra.mxu0 %v2363
        %v5628 = vpop.f32.mrf.mxu0
        %v5629 = vadd.f32 %v5556, %v5628
        %v5630 = vpop.f32.mrf.mxu0
        %v5631 = vadd.f32 %v5558, %v5630
        %5632 = vmatmul.bf16.gmra.mxu0 %v2366
        %v5633 = vpop.f32.mrf.mxu0
        %v5634 = vadd.f32 %v5561, %v5633
        %v5635 = vpop.f32.mrf.mxu0
        %v5636 = vadd.f32 %v5563, %v5635
        %5637 = vmatmul.bf16.gmra.mxu0 %v2369
        %v5638 = vpop.f32.mrf.mxu0
        %v5639 = vadd.f32 %v5566, %v5638
        %v5640 = vpop.f32.mrf.mxu0
        %v5641 = vadd.f32 %v5568, %v5640
        %5642 = vmatmul.bf16.gmra.mxu0 %v2372
        %v5643 = vpop.f32.mrf.mxu0
        %v5644 = vadd.f32 %v5571, %v5643
        %v5645 = vpop.f32.mrf.mxu0
        %v5646 = vadd.f32 %v5573, %v5645
        %5647 = vmatmul.bf16.gmra.mxu0 %v2375
        %v5648 = vpop.f32.mrf.mxu0
        %v5649 = vadd.f32 %v5576, %v5648
        %v5650 = vpop.f32.mrf.mxu0
        %v5651 = vadd.f32 %v5578, %v5650
        %5652 = vmatmul.bf16.gmra.mxu0 %v2378
        %v5653 = vpop.f32.mrf.mxu0
        %v5654 = vadd.f32 %v5581, %v5653
        %v5655 = vpop.f32.mrf.mxu0
        %v5656 = vadd.f32 %v5583, %v5655
        %5657 = vmatmul.bf16.gmra.mxu0 %v2381
        %v5658 = vpop.f32.mrf.mxu0
        %v5659 = vadd.f32 %v5586, %v5658
        %v5660 = vpop.f32.mrf.mxu0
        %v5661 = vadd.f32 %v5588, %v5660
        %5662 = vmatmul.bf16.gmra.mxu0 %v2384
        %v5663 = vpop.f32.mrf.mxu0
        %v5664 = vadd.f32 %v5591, %v5663
        %v5665 = vpop.f32.mrf.mxu0
        %v5666 = vadd.f32 %v5593, %v5665
        %5667 = vmatmul.bf16.gmra.mxu0 %v2387
        %v5668 = vpop.f32.mrf.mxu0
        %v5669 = vadd.f32 %v5596, %v5668
        %v5670 = vpop.f32.mrf.mxu0
        %v5671 = vadd.f32 %v5598, %v5670
        %5672 = vmatmul.bf16.gmra.mxu0 %v2390
        %v5673 = vpop.f32.mrf.mxu0
        %v5674 = vadd.f32 %v5601, %v5673
        %v5675 = vpop.f32.mrf.mxu0
        %5676 = vdwg.mxu0
        %5677 = vmatpush.bf16.msra.mxu0 %v1894
        %5678 = vmatpush.bf16.msra.mxu0 %v1870
        %5679 = vmatpush.bf16.msra.mxu0 %v1846
        %5680 = vmatpush.bf16.msra.mxu0 %v1822
        %5681 = vmatpush.bf16.msra.mxu0 %v1798
        %5682 = vmatpush.bf16.msra.mxu0 %v1774
        %5683 = vmatpush.bf16.msra.mxu0 %v1750
        %5684 = vmatpush.bf16.msra.mxu0 %v1726
        %5685 = vmatmul.bf16.gmra.mxu0 %v382
        %v5686 = vpop.f32.mrf.mxu0
        %v5687 = vadd.f32 0.0, %v5686
        %v5688 = vpop.f32.mrf.mxu0
        %v5689 = vadd.f32 0.0, %v5688
        %5690 = vmatmul.bf16.gmra.mxu0 %v384
        %v5691 = vpop.f32.mrf.mxu0
        %v5692 = vadd.f32 0.0, %v5691
        %v5693 = vpop.f32.mrf.mxu0
        %v5694 = vadd.f32 0.0, %v5693
        %5695 = vmatmul.bf16.gmra.mxu0 %v386
        %v5696 = vpop.f32.mrf.mxu0
        %v5697 = vadd.f32 0.0, %v5696
        %v5698 = vpop.f32.mrf.mxu0
        %v5699 = vadd.f32 0.0, %v5698
        %5700 = vmatmul.bf16.gmra.mxu0 %v388
        %v5701 = vpop.f32.mrf.mxu0
        %v5702 = vadd.f32 0.0, %v5701
        %v5703 = vpop.f32.mrf.mxu0
        %v5704 = vadd.f32 0.0, %v5703
        %5705 = vmatmul.bf16.gmra.mxu0 %v390
        %v5706 = vpop.f32.mrf.mxu0
        %v5707 = vadd.f32 0.0, %v5706
        %v5708 = vpop.f32.mrf.mxu0
        %v5709 = vadd.f32 0.0, %v5708
        %5710 = vmatmul.bf16.gmra.mxu0 %v392
        %v5711 = vpop.f32.mrf.mxu0
        %v5712 = vadd.f32 0.0, %v5711
        %v5713 = vpop.f32.mrf.mxu0
        %v5714 = vadd.f32 0.0, %v5713
        %5715 = vmatmul.bf16.gmra.mxu0 %v394
        %v5716 = vpop.f32.mrf.mxu0
        %v5717 = vadd.f32 0.0, %v5716
        %v5718 = vpop.f32.mrf.mxu0
        %v5719 = vadd.f32 0.0, %v5718
        %5720 = vmatmul.bf16.gmra.mxu0 %v396
        %v5721 = vpop.f32.mrf.mxu0
        %v5722 = vadd.f32 0.0, %v5721
        %v5723 = vpop.f32.mrf.mxu0
        %v5724 = vadd.f32 0.0, %v5723
        %5725 = vmatmul.bf16.gmra.mxu0 %v398
        %v5726 = vpop.f32.mrf.mxu0
        %v5727 = vadd.f32 0.0, %v5726
        %v5728 = vpop.f32.mrf.mxu0
        %v5729 = vadd.f32 0.0, %v5728
        %5730 = vmatmul.bf16.gmra.mxu0 %v400
        %v5731 = vpop.f32.mrf.mxu0
        %v5732 = vadd.f32 0.0, %v5731
        %v5733 = vpop.f32.mrf.mxu0
        %v5734 = vadd.f32 0.0, %v5733
        %5735 = vmatmul.bf16.gmra.mxu0 %v402
        %v5736 = vpop.f32.mrf.mxu0
        %v5737 = vadd.f32 0.0, %v5736
        %v5738 = vpop.f32.mrf.mxu0
        %v5739 = vadd.f32 0.0, %v5738
        %5740 = vmatmul.bf16.gmra.mxu0 %v404
        %v5741 = vpop.f32.mrf.mxu0
        %v5742 = vadd.f32 0.0, %v5741
        %v5743 = vpop.f32.mrf.mxu0
        %v5744 = vadd.f32 0.0, %v5743
        %5745 = vmatmul.bf16.gmra.mxu0 %v406
        %v5746 = vpop.f32.mrf.mxu0
        %v5747 = vadd.f32 0.0, %v5746
        %v5748 = vpop.f32.mrf.mxu0
        %5749 = vdwg.mxu0
        %5750 = vmatpush.bf16.msra.mxu0 0
        %5751 = vmatpush.bf16.msra.mxu0 0
        %5752 = vmatpush.bf16.msra.mxu0 %v2460
        %5753 = vmatpush.bf16.msra.mxu0 %v2014
        %5754 = vmatpush.bf16.msra.mxu0 %v1990
        %5755 = vmatpush.bf16.msra.mxu0 %v1966
        %5756 = vmatpush.bf16.msra.mxu0 %v1942
        %5757 = vmatpush.bf16.msra.mxu0 %v1918
        %5758 = vmatmul.bf16.gmra.mxu0 %v2354
        %v5759 = vpop.f32.mrf.mxu0
        %v5760 = vadd.f32 %v5687, %v5759
        %v5761 = vpop.f32.mrf.mxu0
        %v5762 = vadd.f32 %v5689, %v5761
        %5763 = vmatmul.bf16.gmra.mxu0 %v2357
        %v5764 = vpop.f32.mrf.mxu0
        %v5765 = vadd.f32 %v5692, %v5764
        %v5766 = vpop.f32.mrf.mxu0
        %v5767 = vadd.f32 %v5694, %v5766
        %5768 = vmatmul.bf16.gmra.mxu0 %v2360
        %v5769 = vpop.f32.mrf.mxu0
        %v5770 = vadd.f32 %v5697, %v5769
        %v5771 = vpop.f32.mrf.mxu0
        %v5772 = vadd.f32 %v5699, %v5771
        %5773 = vmatmul.bf16.gmra.mxu0 %v2363
        %v5774 = vpop.f32.mrf.mxu0
        %v5775 = vadd.f32 %v5702, %v5774
        %v5776 = vpop.f32.mrf.mxu0
        %v5777 = vadd.f32 %v5704, %v5776
        %5778 = vmatmul.bf16.gmra.mxu0 %v2366
        %v5779 = vpop.f32.mrf.mxu0
        %v5780 = vadd.f32 %v5707, %v5779
        %v5781 = vpop.f32.mrf.mxu0
        %v5782 = vadd.f32 %v5709, %v5781
        %5783 = vmatmul.bf16.gmra.mxu0 %v2369
        %v5784 = vpop.f32.mrf.mxu0
        %v5785 = vadd.f32 %v5712, %v5784
        %v5786 = vpop.f32.mrf.mxu0
        %v5787 = vadd.f32 %v5714, %v5786
        %5788 = vmatmul.bf16.gmra.mxu0 %v2372
        %v5789 = vpop.f32.mrf.mxu0
        %v5790 = vadd.f32 %v5717, %v5789
        %v5791 = vpop.f32.mrf.mxu0
        %v5792 = vadd.f32 %v5719, %v5791
        %5793 = vmatmul.bf16.gmra.mxu0 %v2375
        %v5794 = vpop.f32.mrf.mxu0
        %v5795 = vadd.f32 %v5722, %v5794
        %v5796 = vpop.f32.mrf.mxu0
        %v5797 = vadd.f32 %v5724, %v5796
        %5798 = vmatmul.bf16.gmra.mxu0 %v2378
        %v5799 = vpop.f32.mrf.mxu0
        %v5800 = vadd.f32 %v5727, %v5799
        %v5801 = vpop.f32.mrf.mxu0
        %v5802 = vadd.f32 %v5729, %v5801
        %5803 = vmatmul.bf16.gmra.mxu0 %v2381
        %v5804 = vpop.f32.mrf.mxu0
        %v5805 = vadd.f32 %v5732, %v5804
        %v5806 = vpop.f32.mrf.mxu0
        %v5807 = vadd.f32 %v5734, %v5806
        %5808 = vmatmul.bf16.gmra.mxu0 %v2384
        %v5809 = vpop.f32.mrf.mxu0
        %v5810 = vadd.f32 %v5737, %v5809
        %v5811 = vpop.f32.mrf.mxu0
        %v5812 = vadd.f32 %v5739, %v5811
        %5813 = vmatmul.bf16.gmra.mxu0 %v2387
        %v5814 = vpop.f32.mrf.mxu0
        %v5815 = vadd.f32 %v5742, %v5814
        %v5816 = vpop.f32.mrf.mxu0
        %v5817 = vadd.f32 %v5744, %v5816
        %5818 = vmatmul.bf16.gmra.mxu0 %v2390
        %v5819 = vpop.f32.mrf.mxu0
        %v5820 = vadd.f32 %v5747, %v5819
        %v5821 = vpop.f32.mrf.mxu0
        %5822 = vdwg.mxu0
        %5823 = vmatpush.bf16.msra.mxu0 %v1895
        %5824 = vmatpush.bf16.msra.mxu0 %v1871
        %5825 = vmatpush.bf16.msra.mxu0 %v1847
        %5826 = vmatpush.bf16.msra.mxu0 %v1823
        %5827 = vmatpush.bf16.msra.mxu0 %v1799
        %5828 = vmatpush.bf16.msra.mxu0 %v1775
        %5829 = vmatpush.bf16.msra.mxu0 %v1751
        %5830 = vmatpush.bf16.msra.mxu0 %v1727
        %5831 = vmatmul.bf16.gmra.mxu0 %v382
        %v5832 = vpop.f32.mrf.mxu0
        %v5833 = vadd.f32 0.0, %v5832
        %v5834 = vpop.f32.mrf.mxu0
        %v5835 = vadd.f32 0.0, %v5834
        %5836 = vmatmul.bf16.gmra.mxu0 %v384
        %v5837 = vpop.f32.mrf.mxu0
        %v5838 = vadd.f32 0.0, %v5837
        %v5839 = vpop.f32.mrf.mxu0
        %v5840 = vadd.f32 0.0, %v5839
        %5841 = vmatmul.bf16.gmra.mxu0 %v386
        %v5842 = vpop.f32.mrf.mxu0
        %v5843 = vadd.f32 0.0, %v5842
        %v5844 = vpop.f32.mrf.mxu0
        %v5845 = vadd.f32 0.0, %v5844
        %5846 = vmatmul.bf16.gmra.mxu0 %v388
        %v5847 = vpop.f32.mrf.mxu0
        %v5848 = vadd.f32 0.0, %v5847
        %v5849 = vpop.f32.mrf.mxu0
        %v5850 = vadd.f32 0.0, %v5849
        %5851 = vmatmul.bf16.gmra.mxu0 %v390
        %v5852 = vpop.f32.mrf.mxu0
        %v5853 = vadd.f32 0.0, %v5852
        %v5854 = vpop.f32.mrf.mxu0
        %v5855 = vadd.f32 0.0, %v5854
        %5856 = vmatmul.bf16.gmra.mxu0 %v392
        %v5857 = vpop.f32.mrf.mxu0
        %v5858 = vadd.f32 0.0, %v5857
        %v5859 = vpop.f32.mrf.mxu0
        %v5860 = vadd.f32 0.0, %v5859
        %5861 = vmatmul.bf16.gmra.mxu0 %v394
        %v5862 = vpop.f32.mrf.mxu0
        %v5863 = vadd.f32 0.0, %v5862
        %v5864 = vpop.f32.mrf.mxu0
        %v5865 = vadd.f32 0.0, %v5864
        %5866 = vmatmul.bf16.gmra.mxu0 %v396
        %v5867 = vpop.f32.mrf.mxu0
        %v5868 = vadd.f32 0.0, %v5867
        %v5869 = vpop.f32.mrf.mxu0
        %v5870 = vadd.f32 0.0, %v5869
        %5871 = vmatmul.bf16.gmra.mxu0 %v398
        %v5872 = vpop.f32.mrf.mxu0
        %v5873 = vadd.f32 0.0, %v5872
        %v5874 = vpop.f32.mrf.mxu0
        %v5875 = vadd.f32 0.0, %v5874
        %5876 = vmatmul.bf16.gmra.mxu0 %v400
        %v5877 = vpop.f32.mrf.mxu0
        %v5878 = vadd.f32 0.0, %v5877
        %v5879 = vpop.f32.mrf.mxu0
        %v5880 = vadd.f32 0.0, %v5879
        %5881 = vmatmul.bf16.gmra.mxu0 %v402
        %v5882 = vpop.f32.mrf.mxu0
        %v5883 = vadd.f32 0.0, %v5882
        %v5884 = vpop.f32.mrf.mxu0
        %v5885 = vadd.f32 0.0, %v5884
        %5886 = vmatmul.bf16.gmra.mxu0 %v404
        %v5887 = vpop.f32.mrf.mxu0
        %v5888 = vadd.f32 0.0, %v5887
        %v5889 = vpop.f32.mrf.mxu0
        %v5890 = vadd.f32 0.0, %v5889
        %5891 = vmatmul.bf16.gmra.mxu0 %v406
        %v5892 = vpop.f32.mrf.mxu0
        %v5893 = vadd.f32 0.0, %v5892
        %v5894 = vpop.f32.mrf.mxu0
        %5895 = vdwg.mxu0
        %5896 = vmatpush.bf16.msra.mxu0 0
        %5897 = vmatpush.bf16.msra.mxu0 0
        %5898 = vmatpush.bf16.msra.mxu0 %v2463
        %5899 = vmatpush.bf16.msra.mxu0 %v2015
        %5900 = vmatpush.bf16.msra.mxu0 %v1991
        %5901 = vmatpush.bf16.msra.mxu0 %v1967
        %5902 = vmatpush.bf16.msra.mxu0 %v1943
        %5903 = vmatpush.bf16.msra.mxu0 %v1919
        %5904 = vmatmul.bf16.gmra.mxu0 %v2354
        %v5905 = vpop.f32.mrf.mxu0
        %v5906 = vadd.f32 %v5833, %v5905
        %v5907 = vpop.f32.mrf.mxu0
        %v5908 = vadd.f32 %v5835, %v5907
        %5909 = vmatmul.bf16.gmra.mxu0 %v2357
        %v5910 = vpop.f32.mrf.mxu0
        %v5911 = vadd.f32 %v5838, %v5910
        %v5912 = vpop.f32.mrf.mxu0
        %v5913 = vadd.f32 %v5840, %v5912
        %5914 = vmatmul.bf16.gmra.mxu0 %v2360
        %v5915 = vpop.f32.mrf.mxu0
        %v5916 = vadd.f32 %v5843, %v5915
        %v5917 = vpop.f32.mrf.mxu0
        %v5918 = vadd.f32 %v5845, %v5917
        %5919 = vmatmul.bf16.gmra.mxu0 %v2363
        %v5920 = vpop.f32.mrf.mxu0
        %v5921 = vadd.f32 %v5848, %v5920
        %v5922 = vpop.f32.mrf.mxu0
        %v5923 = vadd.f32 %v5850, %v5922
        %5924 = vmatmul.bf16.gmra.mxu0 %v2366
        %v5925 = vpop.f32.mrf.mxu0
        %v5926 = vadd.f32 %v5853, %v5925
        %v5927 = vpop.f32.mrf.mxu0
        %v5928 = vadd.f32 %v5855, %v5927
        %5929 = vmatmul.bf16.gmra.mxu0 %v2369
        %v5930 = vpop.f32.mrf.mxu0
        %v5931 = vadd.f32 %v5858, %v5930
        %v5932 = vpop.f32.mrf.mxu0
        %v5933 = vadd.f32 %v5860, %v5932
        %5934 = vmatmul.bf16.gmra.mxu0 %v2372
        %v5935 = vpop.f32.mrf.mxu0
        %v5936 = vadd.f32 %v5863, %v5935
        %v5937 = vpop.f32.mrf.mxu0
        %v5938 = vadd.f32 %v5865, %v5937
        %5939 = vmatmul.bf16.gmra.mxu0 %v2375
        %v5940 = vpop.f32.mrf.mxu0
        %v5941 = vadd.f32 %v5868, %v5940
        %v5942 = vpop.f32.mrf.mxu0
        %v5943 = vadd.f32 %v5870, %v5942
        %5944 = vmatmul.bf16.gmra.mxu0 %v2378
        %v5945 = vpop.f32.mrf.mxu0
        %v5946 = vadd.f32 %v5873, %v5945
        %v5947 = vpop.f32.mrf.mxu0
        %v5948 = vadd.f32 %v5875, %v5947
        %5949 = vmatmul.bf16.gmra.mxu0 %v2381
        %v5950 = vpop.f32.mrf.mxu0
        %v5951 = vadd.f32 %v5878, %v5950
        %v5952 = vpop.f32.mrf.mxu0
        %v5953 = vadd.f32 %v5880, %v5952
        %5954 = vmatmul.bf16.gmra.mxu0 %v2384
        %v5955 = vpop.f32.mrf.mxu0
        %v5956 = vadd.f32 %v5883, %v5955
        %v5957 = vpop.f32.mrf.mxu0
        %v5958 = vadd.f32 %v5885, %v5957
        %5959 = vmatmul.bf16.gmra.mxu0 %v2387
        %v5960 = vpop.f32.mrf.mxu0
        %v5961 = vadd.f32 %v5888, %v5960
        %v5962 = vpop.f32.mrf.mxu0
        %v5963 = vadd.f32 %v5890, %v5962
        %5964 = vmatmul.bf16.gmra.mxu0 %v2390
        %v5965 = vpop.f32.mrf.mxu0
        %v5966 = vadd.f32 %v5893, %v5965
        %v5967 = vpop.f32.mrf.mxu0
        %5968 = vdwg.mxu0
        %v5969 = vmax.f32 %v2548, %v2986
        %v5970 = vmax.f32 %v2694, %v3132
        %v5971 = vmax.f32 %v2840, %v3278
        %v5972 = vmax.f32 %v2550, %v2988
        %v5973 = vmax.f32 %v2696, %v3134
        %v5974 = vmax.f32 %v2842, %v3280
        %v5975 = vmax.f32 %v2553, %v2991
        %v5976 = vmax.f32 %v2699, %v3137
        %v5977 = vmax.f32 %v2845, %v3283
        %v5978 = vmax.f32 %v2555, %v2993
        %v5979 = vmax.f32 %v2701, %v3139
        %v5980 = vmax.f32 %v2847, %v3285
        %v5981 = vmax.f32 %v2558, %v2996
        %v5982 = vmax.f32 %v2704, %v3142
        %v5983 = vmax.f32 %v2850, %v3288
        %v5984 = vmax.f32 %v2560, %v2998
        %v5985 = vmax.f32 %v2706, %v3144
        %v5986 = vmax.f32 %v2852, %v3290
        %v5987 = vmax.f32 %v2563, %v3001
        %v5988 = vmax.f32 %v2709, %v3147
        %v5989 = vmax.f32 %v2855, %v3293
        %v5990 = vmax.f32 %v2565, %v3003
        %v5991 = vmax.f32 %v2711, %v3149
        %v5992 = vmax.f32 %v2857, %v3295
        %v5993 = vmax.f32 %v2568, %v3006
        %v5994 = vmax.f32 %v2714, %v3152
        %v5995 = vmax.f32 %v2860, %v3298
        %v5996 = vmax.f32 %v2570, %v3008
        %v5997 = vmax.f32 %v2716, %v3154
        %v5998 = vmax.f32 %v2862, %v3300
        %v5999 = vmax.f32 %v2573, %v3011
        %v6000 = vmax.f32 %v2719, %v3157
        %v6001 = vmax.f32 %v2865, %v3303
        %v6002 = vmax.f32 %v2575, %v3013
        %v6003 = vmax.f32 %v2721, %v3159
        %v6004 = vmax.f32 %v2867, %v3305
        %v6005 = vmax.f32 %v2578, %v3016
        %v6006 = vmax.f32 %v2724, %v3162
        %v6007 = vmax.f32 %v2870, %v3308
        %v6008 = vmax.f32 %v2580, %v3018
        %v6009 = vmax.f32 %v2726, %v3164
        %v6010 = vmax.f32 %v2872, %v3310
        %v6011 = vmax.f32 %v2583, %v3021
        %v6012 = vmax.f32 %v2729, %v3167
        %v6013 = vmax.f32 %v2875, %v3313
        %v6014 = vmax.f32 %v2585, %v3023
        %v6015 = vmax.f32 %v2731, %v3169
        %v6016 = vmax.f32 %v2877, %v3315
        %v6017 = vmax.f32 %v2588, %v3026
        %v6018 = vmax.f32 %v2734, %v3172
        %v6019 = vmax.f32 %v2880, %v3318
        %v6020 = vmax.f32 %v2590, %v3028
        %v6021 = vmax.f32 %v2736, %v3174
        %v6022 = vmax.f32 %v2882, %v3320
        %v6023 = vmax.f32 %v2593, %v3031
        %v6024 = vmax.f32 %v2739, %v3177
        %v6025 = vmax.f32 %v2885, %v3323
        %v6026 = vmax.f32 %v2595, %v3033
        %v6027 = vmax.f32 %v2741, %v3179
        %v6028 = vmax.f32 %v2887, %v3325
        %v6029 = vmax.f32 %v2598, %v3036
        %v6030 = vmax.f32 %v2744, %v3182
        %v6031 = vmax.f32 %v2890, %v3328
        %v6032 = vmax.f32 %v2600, %v3038
        %v6033 = vmax.f32 %v2746, %v3184
        %v6034 = vmax.f32 %v2892, %v3330
        %v6035 = vmax.f32 %v2603, %v3041
        %v6036 = vmax.f32 %v2749, %v3187
        %v6037 = vmax.f32 %v2895, %v3333
        %v6038 = vmax.f32 %v2605, %v3043
        %v6039 = vmax.f32 %v2751, %v3189
        %v6040 = vmax.f32 %v2897, %v3335
        %v6041 = vmax.f32 %v2608, %v3046
        %v6042 = vmax.f32 %v2754, %v3192
        %v6043 = vmax.f32 %v2900, %v3338
        %v6044 = vmax.f32 %v3424, %v3862
        %v6045 = vmax.f32 %v3570, %v4008
        %v6046 = vmax.f32 %v3716, %v4154
        %v6047 = vmax.f32 %v3426, %v3864
        %v6048 = vmax.f32 %v3572, %v4010
        %v6049 = vmax.f32 %v3718, %v4156
        %v6050 = vmax.f32 %v3429, %v3867
        %v6051 = vmax.f32 %v3575, %v4013
        %v6052 = vmax.f32 %v3721, %v4159
        %v6053 = vmax.f32 %v3431, %v3869
        %v6054 = vmax.f32 %v3577, %v4015
        %v6055 = vmax.f32 %v3723, %v4161
        %v6056 = vmax.f32 %v3434, %v3872
        %v6057 = vmax.f32 %v3580, %v4018
        %v6058 = vmax.f32 %v3726, %v4164
        %v6059 = vmax.f32 %v3436, %v3874
        %v6060 = vmax.f32 %v3582, %v4020
        %v6061 = vmax.f32 %v3728, %v4166
        %v6062 = vmax.f32 %v3439, %v3877
        %v6063 = vmax.f32 %v3585, %v4023
        %v6064 = vmax.f32 %v3731, %v4169
        %v6065 = vmax.f32 %v3441, %v3879
        %v6066 = vmax.f32 %v3587, %v4025
        %v6067 = vmax.f32 %v3733, %v4171
        %v6068 = vmax.f32 %v3444, %v3882
        %v6069 = vmax.f32 %v3590, %v4028
        %v6070 = vmax.f32 %v3736, %v4174
        %v6071 = vmax.f32 %v3446, %v3884
        %v6072 = vmax.f32 %v3592, %v4030
        %v6073 = vmax.f32 %v3738, %v4176
        %v6074 = vmax.f32 %v3449, %v3887
        %v6075 = vmax.f32 %v3595, %v4033
        %v6076 = vmax.f32 %v3741, %v4179
        %v6077 = vmax.f32 %v3451, %v3889
        %v6078 = vmax.f32 %v3597, %v4035
        %v6079 = vmax.f32 %v3743, %v4181
        %v6080 = vmax.f32 %v3454, %v3892
        %v6081 = vmax.f32 %v3600, %v4038
        %v6082 = vmax.f32 %v3746, %v4184
        %v6083 = vmax.f32 %v3456, %v3894
        %v6084 = vmax.f32 %v3602, %v4040
        %v6085 = vmax.f32 %v3748, %v4186
        %v6086 = vmax.f32 %v3459, %v3897
        %v6087 = vmax.f32 %v3605, %v4043
        %v6088 = vmax.f32 %v3751, %v4189
        %v6089 = vmax.f32 %v3461, %v3899
        %v6090 = vmax.f32 %v3607, %v4045
        %v6091 = vmax.f32 %v3753, %v4191
        %v6092 = vmax.f32 %v3464, %v3902
        %v6093 = vmax.f32 %v3610, %v4048
        %v6094 = vmax.f32 %v3756, %v4194
        %v6095 = vmax.f32 %v3466, %v3904
        %v6096 = vmax.f32 %v3612, %v4050
        %v6097 = vmax.f32 %v3758, %v4196
        %v6098 = vmax.f32 %v3469, %v3907
        %v6099 = vmax.f32 %v3615, %v4053
        %v6100 = vmax.f32 %v3761, %v4199
        %v6101 = vmax.f32 %v3471, %v3909
        %v6102 = vmax.f32 %v3617, %v4055
        %v6103 = vmax.f32 %v3763, %v4201
        %v6104 = vmax.f32 %v3474, %v3912
        %v6105 = vmax.f32 %v3620, %v4058
        %v6106 = vmax.f32 %v3766, %v4204
        %v6107 = vmax.f32 %v3476, %v3914
        %v6108 = vmax.f32 %v3622, %v4060
        %v6109 = vmax.f32 %v3768, %v4206
        %v6110 = vmax.f32 %v3479, %v3917
        %v6111 = vmax.f32 %v3625, %v4063
        %v6112 = vmax.f32 %v3771, %v4209
        %v6113 = vmax.f32 %v3481, %v3919
        %v6114 = vmax.f32 %v3627, %v4065
        %v6115 = vmax.f32 %v3773, %v4211
        %v6116 = vmax.f32 %v3484, %v3922
        %v6117 = vmax.f32 %v3630, %v4068
        %v6118 = vmax.f32 %v3776, %v4214
        %v6119 = vmax.f32 %v4300, %v4738
        %v6120 = vmax.f32 %v4446, %v4884
        %v6121 = vmax.f32 %v4592, %v5030
        %v6122 = vmax.f32 %v4302, %v4740
        %v6123 = vmax.f32 %v4448, %v4886
        %v6124 = vmax.f32 %v4594, %v5032
        %v6125 = vmax.f32 %v4305, %v4743
        %v6126 = vmax.f32 %v4451, %v4889
        %v6127 = vmax.f32 %v4597, %v5035
        %v6128 = vmax.f32 %v4307, %v4745
        %v6129 = vmax.f32 %v4453, %v4891
        %v6130 = vmax.f32 %v4599, %v5037
        %v6131 = vmax.f32 %v4310, %v4748
        %v6132 = vmax.f32 %v4456, %v4894
        %v6133 = vmax.f32 %v4602, %v5040
        %v6134 = vmax.f32 %v4312, %v4750
        %v6135 = vmax.f32 %v4458, %v4896
        %v6136 = vmax.f32 %v4604, %v5042
        %v6137 = vmax.f32 %v4315, %v4753
        %v6138 = vmax.f32 %v4461, %v4899
        %v6139 = vmax.f32 %v4607, %v5045
        %v6140 = vmax.f32 %v4317, %v4755
        %v6141 = vmax.f32 %v4463, %v4901
        %v6142 = vmax.f32 %v4609, %v5047
        %v6143 = vmax.f32 %v4320, %v4758
        %v6144 = vmax.f32 %v4466, %v4904
        %v6145 = vmax.f32 %v4612, %v5050
        %v6146 = vmax.f32 %v4322, %v4760
        %v6147 = vmax.f32 %v4468, %v4906
        %v6148 = vmax.f32 %v4614, %v5052
        %v6149 = vmax.f32 %v4325, %v4763
        %v6150 = vmax.f32 %v4471, %v4909
        %v6151 = vmax.f32 %v4617, %v5055
        %v6152 = vmax.f32 %v4327, %v4765
        %v6153 = vmax.f32 %v4473, %v4911
        %v6154 = vmax.f32 %v4619, %v5057
        %v6155 = vmax.f32 %v4330, %v4768
        %v6156 = vmax.f32 %v4476, %v4914
        %v6157 = vmax.f32 %v4622, %v5060
        %v6158 = vmax.f32 %v4332, %v4770
        %v6159 = vmax.f32 %v4478, %v4916
        %v6160 = vmax.f32 %v4624, %v5062
        %v6161 = vmax.f32 %v4335, %v4773
        %v6162 = vmax.f32 %v4481, %v4919
        %v6163 = vmax.f32 %v4627, %v5065
        %v6164 = vmax.f32 %v4337, %v4775
        %v6165 = vmax.f32 %v4483, %v4921
        %v6166 = vmax.f32 %v4629, %v5067
        %v6167 = vmax.f32 %v4340, %v4778
        %v6168 = vmax.f32 %v4486, %v4924
        %v6169 = vmax.f32 %v4632, %v5070
        %v6170 = vmax.f32 %v4342, %v4780
        %v6171 = vmax.f32 %v4488, %v4926
        %v6172 = vmax.f32 %v4634, %v5072
        %v6173 = vmax.f32 %v4345, %v4783
        %v6174 = vmax.f32 %v4491, %v4929
        %v6175 = vmax.f32 %v4637, %v5075
        %v6176 = vmax.f32 %v4347, %v4785
        %v6177 = vmax.f32 %v4493, %v4931
        %v6178 = vmax.f32 %v4639, %v5077
        %v6179 = vmax.f32 %v4350, %v4788
        %v6180 = vmax.f32 %v4496, %v4934
        %v6181 = vmax.f32 %v4642, %v5080
        %v6182 = vmax.f32 %v4352, %v4790
        %v6183 = vmax.f32 %v4498, %v4936
        %v6184 = vmax.f32 %v4644, %v5082
        %v6185 = vmax.f32 %v4355, %v4793
        %v6186 = vmax.f32 %v4501, %v4939
        %v6187 = vmax.f32 %v4647, %v5085
        %v6188 = vmax.f32 %v4357, %v4795
        %v6189 = vmax.f32 %v4503, %v4941
        %v6190 = vmax.f32 %v4649, %v5087
        %v6191 = vmax.f32 %v4360, %v4798
        %v6192 = vmax.f32 %v4506, %v4944
        %v6193 = vmax.f32 %v4652, %v5090
        %v6194 = vmax.f32 %v5176, %v5614
        %v6195 = vmax.f32 %v5322, %v5760
        %v6196 = vmax.f32 %v5468, %v5906
        %v6197 = vmax.f32 %v5178, %v5616
        %v6198 = vmax.f32 %v5324, %v5762
        %v6199 = vmax.f32 %v5470, %v5908
        %v6200 = vmax.f32 %v5181, %v5619
        %v6201 = vmax.f32 %v5327, %v5765
        %v6202 = vmax.f32 %v5473, %v5911
        %v6203 = vmax.f32 %v5183, %v5621
        %v6204 = vmax.f32 %v5329, %v5767
        %v6205 = vmax.f32 %v5475, %v5913
        %v6206 = vmax.f32 %v5186, %v5624
        %v6207 = vmax.f32 %v5332, %v5770
        %v6208 = vmax.f32 %v5478, %v5916
        %v6209 = vmax.f32 %v5188, %v5626
        %v6210 = vmax.f32 %v5334, %v5772
        %v6211 = vmax.f32 %v5480, %v5918
        %v6212 = vmax.f32 %v5191, %v5629
        %v6213 = vmax.f32 %v5337, %v5775
        %v6214 = vmax.f32 %v5483, %v5921
        %v6215 = vmax.f32 %v5193, %v5631
        %v6216 = vmax.f32 %v5339, %v5777
        %v6217 = vmax.f32 %v5485, %v5923
        %v6218 = vmax.f32 %v5196, %v5634
        %v6219 = vmax.f32 %v5342, %v5780
        %v6220 = vmax.f32 %v5488, %v5926
        %v6221 = vmax.f32 %v5198, %v5636
        %v6222 = vmax.f32 %v5344, %v5782
        %v6223 = vmax.f32 %v5490, %v5928
        %v6224 = vmax.f32 %v5201, %v5639
        %v6225 = vmax.f32 %v5347, %v5785
        %v6226 = vmax.f32 %v5493, %v5931
        %v6227 = vmax.f32 %v5203, %v5641
        %v6228 = vmax.f32 %v5349, %v5787
        %v6229 = vmax.f32 %v5495, %v5933
        %v6230 = vmax.f32 %v5206, %v5644
        %v6231 = vmax.f32 %v5352, %v5790
        %v6232 = vmax.f32 %v5498, %v5936
        %v6233 = vmax.f32 %v5208, %v5646
        %v6234 = vmax.f32 %v5354, %v5792
        %v6235 = vmax.f32 %v5500, %v5938
        %v6236 = vmax.f32 %v5211, %v5649
        %v6237 = vmax.f32 %v5357, %v5795
        %v6238 = vmax.f32 %v5503, %v5941
        %v6239 = vmax.f32 %v5213, %v5651
        %v6240 = vmax.f32 %v5359, %v5797
        %v6241 = vmax.f32 %v5505, %v5943
        %v6242 = vmax.f32 %v5216, %v5654
        %v6243 = vmax.f32 %v5362, %v5800
        %v6244 = vmax.f32 %v5508, %v5946
        %v6245 = vmax.f32 %v5218, %v5656
        %v6246 = vmax.f32 %v5364, %v5802
        %v6247 = vmax.f32 %v5510, %v5948
        %v6248 = vmax.f32 %v5221, %v5659
        %v6249 = vmax.f32 %v5367, %v5805
        %v6250 = vmax.f32 %v5513, %v5951
        %v6251 = vmax.f32 %v5223, %v5661
        %v6252 = vmax.f32 %v5369, %v5807
        %v6253 = vmax.f32 %v5515, %v5953
        %v6254 = vmax.f32 %v5226, %v5664
        %v6255 = vmax.f32 %v5372, %v5810
        %v6256 = vmax.f32 %v5518, %v5956
        %v6257 = vmax.f32 %v5228, %v5666
        %v6258 = vmax.f32 %v5374, %v5812
        %v6259 = vmax.f32 %v5520, %v5958
        %v6260 = vmax.f32 %v5231, %v5669
        %v6261 = vmax.f32 %v5377, %v5815
        %v6262 = vmax.f32 %v5523, %v5961
        %v6263 = vmax.f32 %v5233, %v5671
        %v6264 = vmax.f32 %v5379, %v5817
        %v6265 = vmax.f32 %v5525, %v5963
        %v6266 = vmax.f32 %v5236, %v5674
        %v6267 = vmax.f32 %v5382, %v5820
        %v6268 = vmax.f32 %v5528, %v5966
        %v6269 = vmax.f32 %v5969, %v6044
        %v6270 = vmax.f32 %v5970, %v6045
        %v6271 = vmax.f32 %v5971, %v6046
        %v6272 = vmax.f32 %v5972, %v6047
        %v6273 = vmax.f32 %v5973, %v6048
        %v6274 = vmax.f32 %v5974, %v6049
        %v6275 = vmax.f32 %v5975, %v6050
        %v6276 = vmax.f32 %v5976, %v6051
        %v6277 = vmax.f32 %v5977, %v6052
        %v6278 = vmax.f32 %v5978, %v6053
        %v6279 = vmax.f32 %v5979, %v6054
        %v6280 = vmax.f32 %v5980, %v6055
        %v6281 = vmax.f32 %v5981, %v6056
        %v6282 = vmax.f32 %v5982, %v6057
        %v6283 = vmax.f32 %v5983, %v6058
        %v6284 = vmax.f32 %v5984, %v6059
        %v6285 = vmax.f32 %v5985, %v6060
        %v6286 = vmax.f32 %v5986, %v6061
        %v6287 = vmax.f32 %v5987, %v6062
        %v6288 = vmax.f32 %v5988, %v6063
        %v6289 = vmax.f32 %v5989, %v6064
        %v6290 = vmax.f32 %v5990, %v6065
        %v6291 = vmax.f32 %v5991, %v6066
        %v6292 = vmax.f32 %v5992, %v6067
        %v6293 = vmax.f32 %v5993, %v6068
        %v6294 = vmax.f32 %v5994, %v6069
        %v6295 = vmax.f32 %v5995, %v6070
        %v6296 = vmax.f32 %v5996, %v6071
        %v6297 = vmax.f32 %v5997, %v6072
        %v6298 = vmax.f32 %v5998, %v6073
        %v6299 = vmax.f32 %v5999, %v6074
        %v6300 = vmax.f32 %v6000, %v6075
        %v6301 = vmax.f32 %v6001, %v6076
        %v6302 = vmax.f32 %v6002, %v6077
        %v6303 = vmax.f32 %v6003, %v6078
        %v6304 = vmax.f32 %v6004, %v6079
        %v6305 = vmax.f32 %v6005, %v6080
        %v6306 = vmax.f32 %v6006, %v6081
        %v6307 = vmax.f32 %v6007, %v6082
        %v6308 = vmax.f32 %v6008, %v6083
        %v6309 = vmax.f32 %v6009, %v6084
        %v6310 = vmax.f32 %v6010, %v6085
        %v6311 = vmax.f32 %v6011, %v6086
        %v6312 = vmax.f32 %v6012, %v6087
        %v6313 = vmax.f32 %v6013, %v6088
        %v6314 = vmax.f32 %v6014, %v6089
        %v6315 = vmax.f32 %v6015, %v6090
        %v6316 = vmax.f32 %v6016, %v6091
        %v6317 = vmax.f32 %v6017, %v6092
        %v6318 = vmax.f32 %v6018, %v6093
        %v6319 = vmax.f32 %v6019, %v6094
        %v6320 = vmax.f32 %v6020, %v6095
        %v6321 = vmax.f32 %v6021, %v6096
        %v6322 = vmax.f32 %v6022, %v6097
        %v6323 = vmax.f32 %v6023, %v6098
        %v6324 = vmax.f32 %v6024, %v6099
        %v6325 = vmax.f32 %v6025, %v6100
        %v6326 = vmax.f32 %v6026, %v6101
        %v6327 = vmax.f32 %v6027, %v6102
        %v6328 = vmax.f32 %v6028, %v6103
        %v6329 = vmax.f32 %v6029, %v6104
        %v6330 = vmax.f32 %v6030, %v6105
        %v6331 = vmax.f32 %v6031, %v6106
        %v6332 = vmax.f32 %v6032, %v6107
        %v6333 = vmax.f32 %v6033, %v6108
        %v6334 = vmax.f32 %v6034, %v6109
        %v6335 = vmax.f32 %v6035, %v6110
        %v6336 = vmax.f32 %v6036, %v6111
        %v6337 = vmax.f32 %v6037, %v6112
        %v6338 = vmax.f32 %v6038, %v6113
        %v6339 = vmax.f32 %v6039, %v6114
        %v6340 = vmax.f32 %v6040, %v6115
        %v6341 = vmax.f32 %v6041, %v6116
        %v6342 = vmax.f32 %v6042, %v6117
        %v6343 = vmax.f32 %v6043, %v6118
        %v6344 = vmax.f32 %v6119, %v6194
        %v6345 = vmax.f32 %v6120, %v6195
        %v6346 = vmax.f32 %v6121, %v6196
        %v6347 = vmax.f32 %v6122, %v6197
        %v6348 = vmax.f32 %v6123, %v6198
        %v6349 = vmax.f32 %v6124, %v6199
        %v6350 = vmax.f32 %v6125, %v6200
        %v6351 = vmax.f32 %v6126, %v6201
        %v6352 = vmax.f32 %v6127, %v6202
        %v6353 = vmax.f32 %v6128, %v6203
        %v6354 = vmax.f32 %v6129, %v6204
        %v6355 = vmax.f32 %v6130, %v6205
        %v6356 = vmax.f32 %v6131, %v6206
        %v6357 = vmax.f32 %v6132, %v6207
        %v6358 = vmax.f32 %v6133, %v6208
        %v6359 = vmax.f32 %v6134, %v6209
        %v6360 = vmax.f32 %v6135, %v6210
        %v6361 = vmax.f32 %v6136, %v6211
        %v6362 = vmax.f32 %v6137, %v6212
        %v6363 = vmax.f32 %v6138, %v6213
        %v6364 = vmax.f32 %v6139, %v6214
        %v6365 = vmax.f32 %v6140, %v6215
        %v6366 = vmax.f32 %v6141, %v6216
        %v6367 = vmax.f32 %v6142, %v6217
        %v6368 = vmax.f32 %v6143, %v6218
        %v6369 = vmax.f32 %v6144, %v6219
        %v6370 = vmax.f32 %v6145, %v6220
        %v6371 = vmax.f32 %v6146, %v6221
        %v6372 = vmax.f32 %v6147, %v6222
        %v6373 = vmax.f32 %v6148, %v6223
        %v6374 = vmax.f32 %v6149, %v6224
        %v6375 = vmax.f32 %v6150, %v6225
        %v6376 = vmax.f32 %v6151, %v6226
        %v6377 = vmax.f32 %v6152, %v6227
        %v6378 = vmax.f32 %v6153, %v6228
        %v6379 = vmax.f32 %v6154, %v6229
        %v6380 = vmax.f32 %v6155, %v6230
        %v6381 = vmax.f32 %v6156, %v6231
        %v6382 = vmax.f32 %v6157, %v6232
        %v6383 = vmax.f32 %v6158, %v6233
        %v6384 = vmax.f32 %v6159, %v6234
        %v6385 = vmax.f32 %v6160, %v6235
        %v6386 = vmax.f32 %v6161, %v6236
        %v6387 = vmax.f32 %v6162, %v6237
        %v6388 = vmax.f32 %v6163, %v6238
        %v6389 = vmax.f32 %v6164, %v6239
        %v6390 = vmax.f32 %v6165, %v6240
        %v6391 = vmax.f32 %v6166, %v6241
        %v6392 = vmax.f32 %v6167, %v6242
        %v6393 = vmax.f32 %v6168, %v6243
        %v6394 = vmax.f32 %v6169, %v6244
        %v6395 = vmax.f32 %v6170, %v6245
        %v6396 = vmax.f32 %v6171, %v6246
        %v6397 = vmax.f32 %v6172, %v6247
        %v6398 = vmax.f32 %v6173, %v6248
        %v6399 = vmax.f32 %v6174, %v6249
        %v6400 = vmax.f32 %v6175, %v6250
        %v6401 = vmax.f32 %v6176, %v6251
        %v6402 = vmax.f32 %v6177, %v6252
        %v6403 = vmax.f32 %v6178, %v6253
        %v6404 = vmax.f32 %v6179, %v6254
        %v6405 = vmax.f32 %v6180, %v6255
        %v6406 = vmax.f32 %v6181, %v6256
        %v6407 = vmax.f32 %v6182, %v6257
        %v6408 = vmax.f32 %v6183, %v6258
        %v6409 = vmax.f32 %v6184, %v6259
        %v6410 = vmax.f32 %v6185, %v6260
        %v6411 = vmax.f32 %v6186, %v6261
        %v6412 = vmax.f32 %v6187, %v6262
        %v6413 = vmax.f32 %v6188, %v6263
        %v6414 = vmax.f32 %v6189, %v6264
        %v6415 = vmax.f32 %v6190, %v6265
        %v6416 = vmax.f32 %v6191, %v6266
        %v6417 = vmax.f32 %v6192, %v6267
        %v6418 = vmax.f32 %v6193, %v6268
        %v6419 = vmax.f32 %v6269, %v6344
        %v6420 = vmax.f32 %v6270, %v6345
        %v6421 = vmax.f32 %v6271, %v6346
        %v6422 = vmax.f32 %v6272, %v6347
        %v6423 = vmax.f32 %v6273, %v6348
        %v6424 = vmax.f32 %v6274, %v6349
        %v6425 = vmax.f32 %v6275, %v6350
        %v6426 = vmax.f32 %v6276, %v6351
        %v6427 = vmax.f32 %v6277, %v6352
        %v6428 = vmax.f32 %v6278, %v6353
        %v6429 = vmax.f32 %v6279, %v6354
        %v6430 = vmax.f32 %v6280, %v6355
        %v6431 = vmax.f32 %v6281, %v6356
        %v6432 = vmax.f32 %v6282, %v6357
        %v6433 = vmax.f32 %v6283, %v6358
        %v6434 = vmax.f32 %v6284, %v6359
        %v6435 = vmax.f32 %v6285, %v6360
        %v6436 = vmax.f32 %v6286, %v6361
        %v6437 = vmax.f32 %v6287, %v6362
        %v6438 = vmax.f32 %v6288, %v6363
        %v6439 = vmax.f32 %v6289, %v6364
        %v6440 = vmax.f32 %v6290, %v6365
        %v6441 = vmax.f32 %v6291, %v6366
        %v6442 = vmax.f32 %v6292, %v6367
        %v6443 = vmax.f32 %v6293, %v6368
        %v6444 = vmax.f32 %v6294, %v6369
        %v6445 = vmax.f32 %v6295, %v6370
        %v6446 = vmax.f32 %v6296, %v6371
        %v6447 = vmax.f32 %v6297, %v6372
        %v6448 = vmax.f32 %v6298, %v6373
        %v6449 = vmax.f32 %v6299, %v6374
        %v6450 = vmax.f32 %v6300, %v6375
        %v6451 = vmax.f32 %v6301, %v6376
        %v6452 = vmax.f32 %v6302, %v6377
        %v6453 = vmax.f32 %v6303, %v6378
        %v6454 = vmax.f32 %v6304, %v6379
        %v6455 = vmax.f32 %v6305, %v6380
        %v6456 = vmax.f32 %v6306, %v6381
        %v6457 = vmax.f32 %v6307, %v6382
        %v6458 = vmax.f32 %v6308, %v6383
        %v6459 = vmax.f32 %v6309, %v6384
        %v6460 = vmax.f32 %v6310, %v6385
        %v6461 = vmax.f32 %v6311, %v6386
        %v6462 = vmax.f32 %v6312, %v6387
        %v6463 = vmax.f32 %v6313, %v6388
        %v6464 = vmax.f32 %v6314, %v6389
        %v6465 = vmax.f32 %v6315, %v6390
        %v6466 = vmax.f32 %v6316, %v6391
        %v6467 = vmax.f32 %v6317, %v6392
        %v6468 = vmax.f32 %v6318, %v6393
        %v6469 = vmax.f32 %v6319, %v6394
        %v6470 = vmax.f32 %v6320, %v6395
        %v6471 = vmax.f32 %v6321, %v6396
        %v6472 = vmax.f32 %v6322, %v6397
        %v6473 = vmax.f32 %v6323, %v6398
        %v6474 = vmax.f32 %v6324, %v6399
        %v6475 = vmax.f32 %v6325, %v6400
        %v6476 = vmax.f32 %v6326, %v6401
        %v6477 = vmax.f32 %v6327, %v6402
        %v6478 = vmax.f32 %v6328, %v6403
        %v6479 = vmax.f32 %v6329, %v6404
        %v6480 = vmax.f32 %v6330, %v6405
        %v6481 = vmax.f32 %v6331, %v6406
        %v6482 = vmax.f32 %v6332, %v6407
        %v6483 = vmax.f32 %v6333, %v6408
        %v6484 = vmax.f32 %v6334, %v6409
        %v6485 = vmax.f32 %v6335, %v6410
        %v6486 = vmax.f32 %v6336, %v6411
        %v6487 = vmax.f32 %v6337, %v6412
        %v6488 = vmax.f32 %v6338, %v6413
        %v6489 = vmax.f32 %v6339, %v6414
        %v6490 = vmax.f32 %v6340, %v6415
        %v6491 = vmax.f32 %v6341, %v6416
        %v6492 = vmax.f32 %v6342, %v6417
        %v6493 = vmax.f32 %v6343, %v6418
        %v6494 = vld [vmem:[%s2] sm:$0x7]
        %v6496 = vperm.slane %v6494, 0
        %v6497 = vperm.slane %v6494, 1
        %v6498 = vperm.slane %v6494, 2
        %v6502 = vadd.f32 %v6419, %v6496
        %v6503 = vadd.f32 %v6420, %v6497
        %v6504 = vadd.f32 %v6421, %v6498
        %v6505 = vadd.f32 %v6422, %v6496
        %v6506 = vadd.f32 %v6423, %v6497
        %v6507 = vadd.f32 %v6424, %v6498
        %v6508 = vadd.f32 %v6425, %v6496
        %v6509 = vadd.f32 %v6426, %v6497
        %v6510 = vadd.f32 %v6427, %v6498
        %v6511 = vadd.f32 %v6428, %v6496
        %v6512 = vadd.f32 %v6429, %v6497
        %v6513 = vadd.f32 %v6430, %v6498
        %v6514 = vadd.f32 %v6431, %v6496
        %v6515 = vadd.f32 %v6432, %v6497
        %v6516 = vadd.f32 %v6433, %v6498
        %v6517 = vadd.f32 %v6434, %v6496
        %v6518 = vadd.f32 %v6435, %v6497
        %v6519 = vadd.f32 %v6436, %v6498
        %v6520 = vadd.f32 %v6437, %v6496
        %v6521 = vadd.f32 %v6438, %v6497
        %v6522 = vadd.f32 %v6439, %v6498
        %v6523 = vadd.f32 %v6440, %v6496
        %v6524 = vadd.f32 %v6441, %v6497
        %v6525 = vadd.f32 %v6442, %v6498
        %v6526 = vadd.f32 %v6443, %v6496
        %v6527 = vadd.f32 %v6444, %v6497
        %v6528 = vadd.f32 %v6445, %v6498
        %v6529 = vadd.f32 %v6446, %v6496
        %v6530 = vadd.f32 %v6447, %v6497
        %v6531 = vadd.f32 %v6448, %v6498
        %v6532 = vadd.f32 %v6449, %v6496
        %v6533 = vadd.f32 %v6450, %v6497
        %v6534 = vadd.f32 %v6451, %v6498
        %v6535 = vadd.f32 %v6452, %v6496
        %v6536 = vadd.f32 %v6453, %v6497
        %v6537 = vadd.f32 %v6454, %v6498
        %v6538 = vadd.f32 %v6455, %v6496
        %v6539 = vadd.f32 %v6456, %v6497
        %v6540 = vadd.f32 %v6457, %v6498
        %v6541 = vadd.f32 %v6458, %v6496
        %v6542 = vadd.f32 %v6459, %v6497
        %v6543 = vadd.f32 %v6460, %v6498
        %v6544 = vadd.f32 %v6461, %v6496
        %v6545 = vadd.f32 %v6462, %v6497
        %v6546 = vadd.f32 %v6463, %v6498
        %v6547 = vadd.f32 %v6464, %v6496
        %v6548 = vadd.f32 %v6465, %v6497
        %v6549 = vadd.f32 %v6466, %v6498
        %v6550 = vadd.f32 %v6467, %v6496
        %v6551 = vadd.f32 %v6468, %v6497
        %v6552 = vadd.f32 %v6469, %v6498
        %v6553 = vadd.f32 %v6470, %v6496
        %v6554 = vadd.f32 %v6471, %v6497
        %v6555 = vadd.f32 %v6472, %v6498
        %v6556 = vadd.f32 %v6473, %v6496
        %v6557 = vadd.f32 %v6474, %v6497
        %v6558 = vadd.f32 %v6475, %v6498
        %v6559 = vadd.f32 %v6476, %v6496
        %v6560 = vadd.f32 %v6477, %v6497
        %v6561 = vadd.f32 %v6478, %v6498
        %v6562 = vadd.f32 %v6479, %v6496
        %v6563 = vadd.f32 %v6480, %v6497
        %v6564 = vadd.f32 %v6481, %v6498
        %v6565 = vadd.f32 %v6482, %v6496
        %v6566 = vadd.f32 %v6483, %v6497
        %v6567 = vadd.f32 %v6484, %v6498
        %v6568 = vadd.f32 %v6485, %v6496
        %v6569 = vadd.f32 %v6486, %v6497
        %v6570 = vadd.f32 %v6487, %v6498
        %v6571 = vadd.f32 %v6488, %v6496
        %v6572 = vadd.f32 %v6489, %v6497
        %v6573 = vadd.f32 %v6490, %v6498
        %v6574 = vadd.f32 %v6491, %v6496
        %v6575 = vadd.f32 %v6492, %v6497
        %v6576 = vadd.f32 %v6493, %v6498
        %v6577 = vmax.f32 %v6502, 0.0
        %v6578 = vmax.f32 %v6503, 0.0
        %v6579 = vmax.f32 %v6504, 0.0
        %v6580 = vmax.f32 %v6505, 0.0
        %v6581 = vmax.f32 %v6506, 0.0
        %v6582 = vmax.f32 %v6507, 0.0
        %v6583 = vmax.f32 %v6508, 0.0
        %v6584 = vmax.f32 %v6509, 0.0
        %v6585 = vmax.f32 %v6510, 0.0
        %v6586 = vmax.f32 %v6511, 0.0
        %v6587 = vmax.f32 %v6512, 0.0
        %v6588 = vmax.f32 %v6513, 0.0
        %v6589 = vmax.f32 %v6514, 0.0
        %v6590 = vmax.f32 %v6515, 0.0
        %v6591 = vmax.f32 %v6516, 0.0
        %v6592 = vmax.f32 %v6517, 0.0
        %v6593 = vmax.f32 %v6518, 0.0
        %v6594 = vmax.f32 %v6519, 0.0
        %v6595 = vmax.f32 %v6520, 0.0
        %v6596 = vmax.f32 %v6521, 0.0
        %v6597 = vmax.f32 %v6522, 0.0
        %v6598 = vmax.f32 %v6523, 0.0
        %v6599 = vmax.f32 %v6524, 0.0
        %v6600 = vmax.f32 %v6525, 0.0
        %v6601 = vmax.f32 %v6526, 0.0
        %v6602 = vmax.f32 %v6527, 0.0
        %v6603 = vmax.f32 %v6528, 0.0
        %v6604 = vmax.f32 %v6529, 0.0
        %v6605 = vmax.f32 %v6530, 0.0
        %v6606 = vmax.f32 %v6531, 0.0
        %v6607 = vmax.f32 %v6532, 0.0
        %v6608 = vmax.f32 %v6533, 0.0
        %v6609 = vmax.f32 %v6534, 0.0
        %v6610 = vmax.f32 %v6535, 0.0
        %v6611 = vmax.f32 %v6536, 0.0
        %v6612 = vmax.f32 %v6537, 0.0
        %v6613 = vmax.f32 %v6538, 0.0
        %v6614 = vmax.f32 %v6539, 0.0
        %v6615 = vmax.f32 %v6540, 0.0
        %v6616 = vmax.f32 %v6541, 0.0
        %v6617 = vmax.f32 %v6542, 0.0
        %v6618 = vmax.f32 %v6543, 0.0
        %v6619 = vmax.f32 %v6544, 0.0
        %v6620 = vmax.f32 %v6545, 0.0
        %v6621 = vmax.f32 %v6546, 0.0
        %v6622 = vmax.f32 %v6547, 0.0
        %v6623 = vmax.f32 %v6548, 0.0
        %v6624 = vmax.f32 %v6549, 0.0
        %v6625 = vmax.f32 %v6550, 0.0
        %v6626 = vmax.f32 %v6551, 0.0
        %v6627 = vmax.f32 %v6552, 0.0
        %v6628 = vmax.f32 %v6553, 0.0
        %v6629 = vmax.f32 %v6554, 0.0
        %v6630 = vmax.f32 %v6555, 0.0
        %v6631 = vmax.f32 %v6556, 0.0
        %v6632 = vmax.f32 %v6557, 0.0
        %v6633 = vmax.f32 %v6558, 0.0
        %v6634 = vmax.f32 %v6559, 0.0
        %v6635 = vmax.f32 %v6560, 0.0
        %v6636 = vmax.f32 %v6561, 0.0
        %v6637 = vmax.f32 %v6562, 0.0
        %v6638 = vmax.f32 %v6563, 0.0
        %v6639 = vmax.f32 %v6564, 0.0
        %v6640 = vmax.f32 %v6565, 0.0
        %v6641 = vmax.f32 %v6566, 0.0
        %v6642 = vmax.f32 %v6567, 0.0
        %v6643 = vmax.f32 %v6568, 0.0
        %v6644 = vmax.f32 %v6569, 0.0
        %v6645 = vmax.f32 %v6570, 0.0
        %v6646 = vmax.f32 %v6571, 0.0
        %v6647 = vmax.f32 %v6572, 0.0
        %v6648 = vmax.f32 %v6573, 0.0
        %v6649 = vmax.f32 %v6574, 0.0
        %v6650 = vmax.f32 %v6575, 0.0
        %v6651 = vmax.f32 %v6576, 0.0
        %6677 = vrot.lane.b32.xlu0 %v6651, 96
        %v6678 = vpop.permute.xlu0 %6677
        %6679 = vrot.lane.b32.xlu0 %v6579, 96
        %v6680 = vpop.permute.xlu0 %6679
        %6681 = vrot.lane.b32.xlu0 %v6582, 96
        %v6682 = vpop.permute.xlu0 %6681
        %6683 = vrot.lane.b32.xlu0 %v6585, 96
        %v6684 = vpop.permute.xlu0 %6683
        %6685 = vrot.lane.b32.xlu0 %v6588, 96
        %v6686 = vpop.permute.xlu0 %6685
        %6687 = vrot.lane.b32.xlu0 %v6591, 96
        %v6688 = vpop.permute.xlu0 %6687
        %6689 = vrot.lane.b32.xlu0 %v6594, 96
        %v6690 = vpop.permute.xlu0 %6689
        %6691 = vrot.lane.b32.xlu0 %v6597, 96
        %v6692 = vpop.permute.xlu0 %6691
        %6693 = vrot.lane.b32.xlu0 %v6600, 96
        %v6694 = vpop.permute.xlu0 %6693
        %6695 = vrot.lane.b32.xlu0 %v6603, 96
        %v6696 = vpop.permute.xlu0 %6695
        %6697 = vrot.lane.b32.xlu0 %v6606, 96
        %v6698 = vpop.permute.xlu0 %6697
        %6699 = vrot.lane.b32.xlu0 %v6609, 96
        %v6700 = vpop.permute.xlu0 %6699
        %6701 = vrot.lane.b32.xlu0 %v6612, 96
        %v6702 = vpop.permute.xlu0 %6701
        %6703 = vrot.lane.b32.xlu0 %v6615, 96
        %v6704 = vpop.permute.xlu0 %6703
        %6705 = vrot.lane.b32.xlu0 %v6618, 96
        %v6706 = vpop.permute.xlu0 %6705
        %6707 = vrot.lane.b32.xlu0 %v6621, 96
        %v6708 = vpop.permute.xlu0 %6707
        %6709 = vrot.lane.b32.xlu0 %v6624, 96
        %v6710 = vpop.permute.xlu0 %6709
        %6711 = vrot.lane.b32.xlu0 %v6627, 96
        %v6712 = vpop.permute.xlu0 %6711
        %6713 = vrot.lane.b32.xlu0 %v6630, 96
        %v6714 = vpop.permute.xlu0 %6713
        %6715 = vrot.lane.b32.xlu0 %v6633, 96
        %v6716 = vpop.permute.xlu0 %6715
        %6717 = vrot.lane.b32.xlu0 %v6636, 96
        %v6718 = vpop.permute.xlu0 %6717
        %6719 = vrot.lane.b32.xlu0 %v6639, 96
        %v6720 = vpop.permute.xlu0 %6719
        %6721 = vrot.lane.b32.xlu0 %v6642, 96
        %v6722 = vpop.permute.xlu0 %6721
        %6723 = vrot.lane.b32.xlu0 %v6645, 96
        %v6724 = vpop.permute.xlu0 %6723
        %6725 = vrot.lane.b32.xlu0 %v6648, 96
        %v6726 = vpop.permute.xlu0 %6725
        %6802 = vrot.lane.b32.xlu0 %v6577, 96
        %v6803 = vpop.permute.xlu0 %6802
        %6804 = vrot.lane.b32.xlu0 %v6578, 96
        %v6805 = vpop.permute.xlu0 %6804
        %6806 = vrot.lane.b32.xlu0 %v6580, 96
        %v6807 = vpop.permute.xlu0 %6806
        %6808 = vrot.lane.b32.xlu0 %v6581, 96
        %v6809 = vpop.permute.xlu0 %6808
        %6810 = vrot.lane.b32.xlu0 %v6583, 96
        %v6811 = vpop.permute.xlu0 %6810
        %6812 = vrot.lane.b32.xlu0 %v6584, 96
        %v6813 = vpop.permute.xlu0 %6812
        %6814 = vrot.lane.b32.xlu0 %v6586, 96
        %v6815 = vpop.permute.xlu0 %6814
        %6816 = vrot.lane.b32.xlu0 %v6587, 96
        %v6817 = vpop.permute.xlu0 %6816
        %6818 = vrot.lane.b32.xlu0 %v6589, 96
        %v6819 = vpop.permute.xlu0 %6818
        %6820 = vrot.lane.b32.xlu0 %v6590, 96
        %v6821 = vpop.permute.xlu0 %6820
        %6822 = vrot.lane.b32.xlu0 %v6592, 96
        %v6823 = vpop.permute.xlu0 %6822
        %6824 = vrot.lane.b32.xlu0 %v6593, 96
        %v6825 = vpop.permute.xlu0 %6824
        %6826 = vrot.lane.b32.xlu0 %v6595, 96
        %v6827 = vpop.permute.xlu0 %6826
        %6828 = vrot.lane.b32.xlu0 %v6596, 96
        %v6829 = vpop.permute.xlu0 %6828
        %6830 = vrot.lane.b32.xlu0 %v6598, 96
        %v6831 = vpop.permute.xlu0 %6830
        %6832 = vrot.lane.b32.xlu0 %v6599, 96
        %v6833 = vpop.permute.xlu0 %6832
        %6834 = vrot.lane.b32.xlu0 %v6601, 96
        %v6835 = vpop.permute.xlu0 %6834
        %6836 = vrot.lane.b32.xlu0 %v6602, 96
        %v6837 = vpop.permute.xlu0 %6836
        %6838 = vrot.lane.b32.xlu0 %v6604, 96
        %v6839 = vpop.permute.xlu0 %6838
        %6840 = vrot.lane.b32.xlu0 %v6605, 96
        %v6841 = vpop.permute.xlu0 %6840
        %6842 = vrot.lane.b32.xlu0 %v6607, 96
        %v6843 = vpop.permute.xlu0 %6842
        %6844 = vrot.lane.b32.xlu0 %v6608, 96
        %v6845 = vpop.permute.xlu0 %6844
        %6846 = vrot.lane.b32.xlu0 %v6610, 96
        %v6847 = vpop.permute.xlu0 %6846
        %6848 = vrot.lane.b32.xlu0 %v6611, 96
        %v6849 = vpop.permute.xlu0 %6848
        %6850 = vrot.lane.b32.xlu0 %v6613, 96
        %v6851 = vpop.permute.xlu0 %6850
        %6852 = vrot.lane.b32.xlu0 %v6614, 96
        %v6853 = vpop.permute.xlu0 %6852
        %6854 = vrot.lane.b32.xlu0 %v6616, 96
        %v6855 = vpop.permute.xlu0 %6854
        %6856 = vrot.lane.b32.xlu0 %v6617, 96
        %v6857 = vpop.permute.xlu0 %6856
        %6858 = vrot.lane.b32.xlu0 %v6619, 96
        %v6859 = vpop.permute.xlu0 %6858
        %6860 = vrot.lane.b32.xlu0 %v6620, 96
        %v6861 = vpop.permute.xlu0 %6860
        %6862 = vrot.lane.b32.xlu0 %v6622, 96
        %v6863 = vpop.permute.xlu0 %6862
        %6864 = vrot.lane.b32.xlu0 %v6623, 96
        %v6865 = vpop.permute.xlu0 %6864
        %6866 = vrot.lane.b32.xlu0 %v6625, 96
        %v6867 = vpop.permute.xlu0 %6866
        %6868 = vrot.lane.b32.xlu0 %v6626, 96
        %v6869 = vpop.permute.xlu0 %6868
        %6870 = vrot.lane.b32.xlu0 %v6628, 96
        %v6871 = vpop.permute.xlu0 %6870
        %6872 = vrot.lane.b32.xlu0 %v6629, 96
        %v6873 = vpop.permute.xlu0 %6872
        %6874 = vrot.lane.b32.xlu0 %v6631, 96
        %v6875 = vpop.permute.xlu0 %6874
        %6876 = vrot.lane.b32.xlu0 %v6632, 96
        %v6877 = vpop.permute.xlu0 %6876
        %6878 = vrot.lane.b32.xlu0 %v6634, 96
        %v6879 = vpop.permute.xlu0 %6878
        %6880 = vrot.lane.b32.xlu0 %v6635, 96
        %v6881 = vpop.permute.xlu0 %6880
        %6882 = vrot.lane.b32.xlu0 %v6637, 96
        %v6883 = vpop.permute.xlu0 %6882
        %6884 = vrot.lane.b32.xlu0 %v6638, 96
        %v6885 = vpop.permute.xlu0 %6884
        %6886 = vrot.lane.b32.xlu0 %v6640, 96
        %v6887 = vpop.permute.xlu0 %6886
        %6888 = vrot.lane.b32.xlu0 %v6641, 96
        %v6889 = vpop.permute.xlu0 %6888
        %6890 = vrot.lane.b32.xlu0 %v6643, 96
        %v6891 = vpop.permute.xlu0 %6890
        %6892 = vrot.lane.b32.xlu0 %v6644, 96
        %v6893 = vpop.permute.xlu0 %6892
        %6894 = vrot.lane.b32.xlu0 %v6646, 96
        %v6895 = vpop.permute.xlu0 %6894
        %6896 = vrot.lane.b32.xlu0 %v6647, 96
        %v6897 = vpop.permute.xlu0 %6896
        %6898 = vrot.lane.b32.xlu0 %v6649, 96
        %v6899 = vpop.permute.xlu0 %6898
        %6900 = vrot.lane.b32.xlu0 %v6650, 96
        %v6901 = vpop.permute.xlu0 %6900
        %vm6902 = vcmask 785408
        %v6903 = vsel %vm6902, %v6803, %v6805
        %v6904 = vsel %vm6902, %v6805, %v6680
        %v6905 = vsel %vm6902, %v6807, %v6809
        %v6906 = vsel %vm6902, %v6809, %v6682
        %v6907 = vsel %vm6902, %v6811, %v6813
        %v6908 = vsel %vm6902, %v6813, %v6684
        %v6909 = vsel %vm6902, %v6815, %v6817
        %v6910 = vsel %vm6902, %v6817, %v6686
        %v6911 = vsel %vm6902, %v6819, %v6821
        %v6912 = vsel %vm6902, %v6821, %v6688
        %v6913 = vsel %vm6902, %v6823, %v6825
        %v6914 = vsel %vm6902, %v6825, %v6690
        %v6915 = vsel %vm6902, %v6827, %v6829
        %v6916 = vsel %vm6902, %v6829, %v6692
        %v6917 = vsel %vm6902, %v6831, %v6833
        %v6918 = vsel %vm6902, %v6833, %v6694
        %v6919 = vsel %vm6902, %v6835, %v6837
        %v6920 = vsel %vm6902, %v6837, %v6696
        %v6921 = vsel %vm6902, %v6839, %v6841
        %v6922 = vsel %vm6902, %v6841, %v6698
        %v6923 = vsel %vm6902, %v6843, %v6845
        %v6924 = vsel %vm6902, %v6845, %v6700
        %v6925 = vsel %vm6902, %v6847, %v6849
        %v6926 = vsel %vm6902, %v6849, %v6702
        %v6927 = vsel %vm6902, %v6851, %v6853
        %v6928 = vsel %vm6902, %v6853, %v6704
        %v6929 = vsel %vm6902, %v6855, %v6857
        %v6930 = vsel %vm6902, %v6857, %v6706
        %v6931 = vsel %vm6902, %v6859, %v6861
        %v6932 = vsel %vm6902, %v6861, %v6708
        %v6933 = vsel %vm6902, %v6863, %v6865
        %v6934 = vsel %vm6902, %v6865, %v6710
        %v6935 = vsel %vm6902, %v6867, %v6869
        %v6936 = vsel %vm6902, %v6869, %v6712
        %v6937 = vsel %vm6902, %v6871, %v6873
        %v6938 = vsel %vm6902, %v6873, %v6714
        %v6939 = vsel %vm6902, %v6875, %v6877
        %v6940 = vsel %vm6902, %v6877, %v6716
        %v6941 = vsel %vm6902, %v6879, %v6881
        %v6942 = vsel %vm6902, %v6881, %v6718
        %v6943 = vsel %vm6902, %v6883, %v6885
        %v6944 = vsel %vm6902, %v6885, %v6720
        %v6945 = vsel %vm6902, %v6887, %v6889
        %v6946 = vsel %vm6902, %v6889, %v6722
        %v6947 = vsel %vm6902, %v6891, %v6893
        %v6948 = vsel %vm6902, %v6893, %v6724
        %v6949 = vsel %vm6902, %v6895, %v6897
        %v6950 = vsel %vm6902, %v6897, %v6726
        %v6951 = vsel %vm6902, %v6899, %v6901
        %v6952 = vsel %vm6902, %v6901, %v6678
        %v7028 = vsel %vm6902, %v6678, %v6803
        %v7029 = vsel %vm6902, %v6680, %v6807
        %v7030 = vsel %vm6902, %v6682, %v6811
        %v7031 = vsel %vm6902, %v6684, %v6815
        %v7032 = vsel %vm6902, %v6686, %v6819
        %v7033 = vsel %vm6902, %v6688, %v6823
        %v7034 = vsel %vm6902, %v6690, %v6827
        %v7035 = vsel %vm6902, %v6692, %v6831
        %v7036 = vsel %vm6902, %v6694, %v6835
        %v7037 = vsel %vm6902, %v6696, %v6839
        %v7038 = vsel %vm6902, %v6698, %v6843
        %v7039 = vsel %vm6902, %v6700, %v6847
        %v7040 = vsel %vm6902, %v6702, %v6851
        %v7041 = vsel %vm6902, %v6704, %v6855
        %v7042 = vsel %vm6902, %v6706, %v6859
        %v7043 = vsel %vm6902, %v6708, %v6863
        %v7044 = vsel %vm6902, %v6710, %v6867
        %v7045 = vsel %vm6902, %v6712, %v6871
        %v7046 = vsel %vm6902, %v6714, %v6875
        %v7047 = vsel %vm6902, %v6716, %v6879
        %v7048 = vsel %vm6902, %v6718, %v6883
        %v7049 = vsel %vm6902, %v6720, %v6887
        %v7050 = vsel %vm6902, %v6722, %v6891
        %v7051 = vsel %vm6902, %v6724, %v6895
        %v7052 = vsel %vm6902, %v6726, %v6899
        %v7053 = vpack.c.bf16 %v7029, %v7028
        %v7054 = vpack.c.bf16 %v6905, %v6903
        %v7055 = vpack.c.bf16 %v6906, %v6904
        %v7056 = vpack.c.bf16 %v7030, %v7029
        %v7057 = vpack.c.bf16 %v6811, %v6807
        %v7058 = vpack.c.bf16 %v7031, %v7030
        %v7059 = vpack.c.bf16 %v6909, %v6907
        %v7060 = vpack.c.bf16 %v6910, %v6908
        %v7061 = vpack.c.bf16 %v7032, %v7031
        %v7062 = vpack.c.bf16 %v6819, %v6815
        %v7063 = vpack.c.bf16 %v7033, %v7032
        %v7064 = vpack.c.bf16 %v6913, %v6911
        %v7065 = vpack.c.bf16 %v6914, %v6912
        %v7066 = vpack.c.bf16 %v7034, %v7033
        %v7067 = vpack.c.bf16 %v6827, %v6823
        %v7068 = vpack.c.bf16 %v7035, %v7034
        %v7069 = vpack.c.bf16 %v6917, %v6915
        %v7070 = vpack.c.bf16 %v6918, %v6916
        %v7071 = vpack.c.bf16 %v7036, %v7035
        %v7072 = vpack.c.bf16 %v6835, %v6831
        %v7073 = vpack.c.bf16 %v7037, %v7036
        %v7074 = vpack.c.bf16 %v6921, %v6919
        %v7075 = vpack.c.bf16 %v6922, %v6920
        %v7076 = vpack.c.bf16 %v7038, %v7037
        %v7077 = vpack.c.bf16 %v6843, %v6839
        %v7078 = vpack.c.bf16 %v7039, %v7038
        %v7079 = vpack.c.bf16 %v6925, %v6923
        %v7080 = vpack.c.bf16 %v6926, %v6924
        %v7081 = vpack.c.bf16 %v7040, %v7039
        %v7082 = vpack.c.bf16 %v6851, %v6847
        %v7083 = vpack.c.bf16 %v7041, %v7040
        %v7084 = vpack.c.bf16 %v6929, %v6927
        %v7085 = vpack.c.bf16 %v6930, %v6928
        %v7086 = vpack.c.bf16 %v7042, %v7041
        %v7087 = vpack.c.bf16 %v6859, %v6855
        %v7088 = vpack.c.bf16 %v7043, %v7042
        %v7089 = vpack.c.bf16 %v6933, %v6931
        %v7090 = vpack.c.bf16 %v6934, %v6932
        %v7091 = vpack.c.bf16 %v7044, %v7043
        %v7092 = vpack.c.bf16 %v6867, %v6863
        %v7093 = vpack.c.bf16 %v7045, %v7044
        %v7094 = vpack.c.bf16 %v6937, %v6935
        %v7095 = vpack.c.bf16 %v6938, %v6936
        %v7096 = vpack.c.bf16 %v7046, %v7045
        %v7097 = vpack.c.bf16 %v6875, %v6871
        %v7098 = vpack.c.bf16 %v7047, %v7046
        %v7099 = vpack.c.bf16 %v6941, %v6939
        %v7100 = vpack.c.bf16 %v6942, %v6940
        %v7101 = vpack.c.bf16 %v7048, %v7047
        %v7102 = vpack.c.bf16 %v6883, %v6879
        %v7103 = vpack.c.bf16 %v7049, %v7048
        %v7104 = vpack.c.bf16 %v6945, %v6943
        %v7105 = vpack.c.bf16 %v6946, %v6944
        %v7106 = vpack.c.bf16 %v7050, %v7049
        %v7107 = vpack.c.bf16 %v6891, %v6887
        %v7108 = vpack.c.bf16 %v7051, %v7050
        %v7109 = vpack.c.bf16 %v6949, %v6947
        %v7110 = vpack.c.bf16 %v6950, %v6948
        %v7111 = vpack.c.bf16 %v7052, %v7051
        %v7112 = vpack.c.bf16 %v6899, %v6895
        %v7113 = vpack.c.bf16 %v7052, %v7052
        %v7114 = vpack.c.bf16 %v6951, %v6951
        %v7115 = vpack.c.bf16 %v6952, %v6952
        %v7116 = vpack.c.bf16 %v7028, %v7028
        %v7117 = vpack.c.bf16 %v6803, %v6803
        %v7118 = vld [vmem:[%s3] sm:$0xff]
        %v7119 = vld [vmem:[%s3 + $0x8] sm:$0xff]
        %v7120 = vld [vmem:[%s3 + $0x10] sm:$0xff]
        %v7121 = vld [vmem:[%s3 + $0x18] sm:$0xff]
        %v7122 = vld [vmem:[%s3 + $0x20] sm:$0xff]
        %v7123 = vld [vmem:[%s3 + $0x28] sm:$0xff]
        %v7124 = vld [vmem:[%s3 + $0x30] sm:$0xff]
        %v7125 = vld [vmem:[%s3 + $0x38] sm:$0xff]
        %v7126 = vld [vmem:[%s3 + $0x40] sm:$0xff]
        %v7127 = vld [vmem:[%s3 + $0x48] sm:$0xff]
        %v7128 = vld [vmem:[%s3 + $0x50] sm:$0xff]
        %v7129 = vld [vmem:[%s3 + $0x58] sm:$0xff]
        %v7130 = vld [vmem:[%s3 + $0x60] sm:$0xff]
        %v7131 = vld [vmem:[%s3 + $0x68] sm:$0xff]
        %v7132 = vld [vmem:[%s3 + $0x70] sm:$0xff]
        %v7133 = vld [vmem:[%s3 + $0x78] sm:$0xff]
        %v7134 = vld [vmem:[%s3 + $0x80] sm:$0xff]
        %v7135 = vld [vmem:[%s3 + $0x88] sm:$0xff]
        %v7136 = vld [vmem:[%s3 + $0x90] sm:$0xff]
        %v7137 = vld [vmem:[%s3 + $0x98] sm:$0xff]
        %v7138 = vld [vmem:[%s3 + $0xa0] sm:$0xff]
        %v7139 = vld [vmem:[%s3 + $0xa8] sm:$0xff]
        %v7140 = vld [vmem:[%s3 + $0xb0] sm:$0xff]
        %v7141 = vld [vmem:[%s3 + $0xb8] sm:$0xff]
        %v7142 = vld [vmem:[%s3 + $0xc0] sm:$0xff]
        %v7143 = vld [vmem:[%s3 + $0xc8] sm:$0xff]
        %v7144 = vld [vmem:[%s3 + $0xd0] sm:$0xff]
        %v7145 = vld [vmem:[%s3 + $0xd8] sm:$0xff]
        %v7146 = vld [vmem:[%s3 + $0xe0] sm:$0xff]
        %v7147 = vld [vmem:[%s3 + $0xe8] sm:$0xff]
        %v7148 = vld [vmem:[%s3 + $0xf0] sm:$0xff]
        %v7149 = vld [vmem:[%s3 + $0xf8] sm:$0xff]
        %v7150 = vld [vmem:[%s3 + $0x100] sm:$0xff]
        %v7151 = vld [vmem:[%s3 + $0x108] sm:$0xff]
        %v7152 = vld [vmem:[%s3 + $0x110] sm:$0xff]
        %v7153 = vld [vmem:[%s3 + $0x118] sm:$0xff]
        %v7154 = vld [vmem:[%s3 + $0x120] sm:$0xff]
        %v7155 = vld [vmem:[%s3 + $0x128] sm:$0xff]
        %v7156 = vld [vmem:[%s3 + $0x130] sm:$0xff]
        %v7157 = vld [vmem:[%s3 + $0x138] sm:$0xff]
        %v7158 = vld [vmem:[%s3 + $0x140] sm:$0xff]
        %v7159 = vld [vmem:[%s3 + $0x148] sm:$0xff]
        %v7160 = vld [vmem:[%s3 + $0x150] sm:$0xff]
        %v7161 = vld [vmem:[%s3 + $0x158] sm:$0xff]
        %v7162 = vld [vmem:[%s3 + $0x160] sm:$0xff]
        %v7163 = vld [vmem:[%s3 + $0x168] sm:$0xff]
        %v7164 = vld [vmem:[%s3 + $0x170] sm:$0xff]
        %v7165 = vld [vmem:[%s3 + $0x178] sm:$0xff]
        %v7166 = vld [vmem:[%s3 + $0x180] sm:$0xff]
        %v7167 = vld [vmem:[%s3 + $0x188] sm:$0xff]
        %v7168 = vld [vmem:[%s3 + $0x190] sm:$0xff]
        %v7169 = vld [vmem:[%s3 + $0x198] sm:$0xff]
        %v7170 = vld [vmem:[%s3 + $0x1a0] sm:$0xff]
        %v7171 = vld [vmem:[%s3 + $0x1a8] sm:$0xff]
        %v7172 = vld [vmem:[%s3 + $0x1b0] sm:$0xff]
        %v7173 = vld [vmem:[%s3 + $0x1b8] sm:$0xff]
        %v7174 = vld [vmem:[%s3 + $0x1c0] sm:$0xff]
        %v7175 = vld [vmem:[%s3 + $0x1c8] sm:$0xff]
        %v7176 = vld [vmem:[%s3 + $0x1d0] sm:$0xff]
        %v7177 = vld [vmem:[%s3 + $0x1d8] sm:$0xff]
        %v7178 = vld [vmem:[%s3 + $0x1e0] sm:$0xff]
        %v7179 = vld [vmem:[%s3 + $0x1e8] sm:$0xff]
        %v7180 = vld [vmem:[%s3 + $0x1f0] sm:$0xff]
        %v7181 = vld [vmem:[%s3 + $0x1f8] sm:$0xff]
        %v7182 = vld [vmem:[%s3 + $0x200] sm:$0xff]
        %v7183 = vld [vmem:[%s3 + $0x208] sm:$0xff]
        %v7184 = vld [vmem:[%s3 + $0x210] sm:$0xff]
        %v7185 = vld [vmem:[%s3 + $0x218] sm:$0xff]
        %v7186 = vld [vmem:[%s3 + $0x220] sm:$0xff]
        %v7187 = vld [vmem:[%s3 + $0x228] sm:$0xff]
        %v7188 = vld [vmem:[%s3 + $0x230] sm:$0xff]
        %v7189 = vld [vmem:[%s3 + $0x238] sm:$0xff]
        %v7262 = vunpack.c.l.b16 %v7118
        %v7263 = vunpack.c.h.b16 %v7118
        %v7264 = vunpack.c.l.b16 %v7119
        %v7265 = vunpack.c.h.b16 %v7119
        %v7266 = vunpack.c.l.b16 %v7120
        %v7267 = vunpack.c.h.b16 %v7120
        %v7268 = vunpack.c.l.b16 %v7121
        %v7269 = vunpack.c.h.b16 %v7121
        %v7270 = vunpack.c.l.b16 %v7122
        %v7271 = vunpack.c.h.b16 %v7122
        %v7272 = vunpack.c.l.b16 %v7123
        %v7273 = vunpack.c.h.b16 %v7123
        %v7274 = vunpack.c.l.b16 %v7124
        %v7275 = vunpack.c.h.b16 %v7124
        %v7276 = vunpack.c.l.b16 %v7125
        %v7277 = vunpack.c.h.b16 %v7125
        %v7278 = vunpack.c.l.b16 %v7126
        %v7279 = vunpack.c.h.b16 %v7126
        %v7280 = vunpack.c.l.b16 %v7127
        %v7281 = vunpack.c.h.b16 %v7127
        %v7282 = vunpack.c.l.b16 %v7128
        %v7283 = vunpack.c.h.b16 %v7128
        %v7284 = vunpack.c.l.b16 %v7129
        %v7285 = vunpack.c.h.b16 %v7129
        %v7286 = vunpack.c.l.b16 %v7130
        %v7287 = vunpack.c.h.b16 %v7130
        %v7288 = vunpack.c.l.b16 %v7131
        %v7289 = vunpack.c.h.b16 %v7131
        %v7290 = vunpack.c.l.b16 %v7132
        %v7291 = vunpack.c.h.b16 %v7132
        %v7292 = vunpack.c.l.b16 %v7133
        %v7293 = vunpack.c.h.b16 %v7133
        %v7294 = vunpack.c.l.b16 %v7134
        %v7295 = vunpack.c.h.b16 %v7134
        %v7296 = vunpack.c.l.b16 %v7135
        %v7297 = vunpack.c.h.b16 %v7135
        %v7298 = vunpack.c.l.b16 %v7136
        %v7299 = vunpack.c.h.b16 %v7136
        %v7300 = vunpack.c.l.b16 %v7137
        %v7301 = vunpack.c.h.b16 %v7137
        %v7302 = vunpack.c.l.b16 %v7138
        %v7303 = vunpack.c.h.b16 %v7138
        %v7304 = vunpack.c.l.b16 %v7139
        %v7305 = vunpack.c.h.b16 %v7139
        %v7306 = vunpack.c.l.b16 %v7140
        %v7307 = vunpack.c.h.b16 %v7140
        %v7308 = vunpack.c.l.b16 %v7141
        %v7309 = vunpack.c.h.b16 %v7141
        %v7310 = vunpack.c.l.b16 %v7142
        %v7311 = vunpack.c.h.b16 %v7142
        %v7312 = vunpack.c.l.b16 %v7143
        %v7313 = vunpack.c.h.b16 %v7143
        %v7314 = vunpack.c.l.b16 %v7144
        %v7315 = vunpack.c.h.b16 %v7144
        %v7316 = vunpack.c.l.b16 %v7145
        %v7317 = vunpack.c.h.b16 %v7145
        %v7318 = vunpack.c.l.b16 %v7146
        %v7319 = vunpack.c.h.b16 %v7146
        %v7320 = vunpack.c.l.b16 %v7147
        %v7321 = vunpack.c.h.b16 %v7147
        %v7322 = vunpack.c.l.b16 %v7148
        %v7323 = vunpack.c.h.b16 %v7148
        %v7324 = vunpack.c.l.b16 %v7149
        %v7325 = vunpack.c.h.b16 %v7149
        %v7326 = vunpack.c.l.b16 %v7150
        %v7327 = vunpack.c.h.b16 %v7150
        %v7328 = vunpack.c.l.b16 %v7151
        %v7329 = vunpack.c.h.b16 %v7151
        %v7330 = vunpack.c.l.b16 %v7152
        %v7331 = vunpack.c.h.b16 %v7152
        %v7332 = vunpack.c.l.b16 %v7153
        %v7333 = vunpack.c.h.b16 %v7153
        %v7334 = vunpack.c.l.b16 %v7154
        %v7335 = vunpack.c.h.b16 %v7154
        %v7336 = vunpack.c.l.b16 %v7155
        %v7337 = vunpack.c.h.b16 %v7155
        %v7338 = vunpack.c.l.b16 %v7156
        %v7339 = vunpack.c.h.b16 %v7156
        %v7340 = vunpack.c.l.b16 %v7157
        %v7341 = vunpack.c.h.b16 %v7157
        %v7342 = vunpack.c.l.b16 %v7158
        %v7343 = vunpack.c.h.b16 %v7158
        %v7344 = vunpack.c.l.b16 %v7159
        %v7345 = vunpack.c.h.b16 %v7159
        %v7346 = vunpack.c.l.b16 %v7160
        %v7347 = vunpack.c.h.b16 %v7160
        %v7348 = vunpack.c.l.b16 %v7161
        %v7349 = vunpack.c.h.b16 %v7161
        %v7350 = vunpack.c.l.b16 %v7162
        %v7351 = vunpack.c.h.b16 %v7162
        %v7352 = vunpack.c.l.b16 %v7163
        %v7353 = vunpack.c.h.b16 %v7163
        %v7354 = vunpack.c.l.b16 %v7164
        %v7355 = vunpack.c.h.b16 %v7164
        %v7356 = vunpack.c.l.b16 %v7165
        %v7357 = vunpack.c.h.b16 %v7165
        %v7358 = vunpack.c.l.b16 %v7166
        %v7359 = vunpack.c.h.b16 %v7166
        %v7360 = vunpack.c.l.b16 %v7167
        %v7361 = vunpack.c.h.b16 %v7167
        %v7362 = vunpack.c.l.b16 %v7168
        %v7363 = vunpack.c.h.b16 %v7168
        %v7364 = vunpack.c.l.b16 %v7169
        %v7365 = vunpack.c.h.b16 %v7169
        %v7366 = vunpack.c.l.b16 %v7170
        %v7367 = vunpack.c.h.b16 %v7170
        %v7368 = vunpack.c.l.b16 %v7171
        %v7369 = vunpack.c.h.b16 %v7171
        %v7370 = vunpack.c.l.b16 %v7172
        %v7371 = vunpack.c.h.b16 %v7172
        %v7372 = vunpack.c.l.b16 %v7173
        %v7373 = vunpack.c.h.b16 %v7173
        %v7374 = vunpack.c.l.b16 %v7174
        %v7375 = vunpack.c.h.b16 %v7174
        %v7376 = vunpack.c.l.b16 %v7175
        %v7377 = vunpack.c.h.b16 %v7175
        %v7378 = vunpack.c.l.b16 %v7176
        %v7379 = vunpack.c.h.b16 %v7176
        %v7380 = vunpack.c.l.b16 %v7177
        %v7381 = vunpack.c.h.b16 %v7177
        %v7382 = vunpack.c.l.b16 %v7178
        %v7383 = vunpack.c.h.b16 %v7178
        %v7384 = vunpack.c.l.b16 %v7179
        %v7385 = vunpack.c.h.b16 %v7179
        %v7386 = vunpack.c.l.b16 %v7180
        %v7387 = vunpack.c.h.b16 %v7180
        %v7388 = vunpack.c.l.b16 %v7181
        %v7389 = vunpack.c.h.b16 %v7181
        %v7390 = vunpack.c.l.b16 %v7182
        %v7391 = vunpack.c.h.b16 %v7182
        %v7392 = vunpack.c.l.b16 %v7183
        %v7393 = vunpack.c.h.b16 %v7183
        %v7394 = vunpack.c.l.b16 %v7184
        %v7395 = vunpack.c.h.b16 %v7184
        %v7396 = vunpack.c.l.b16 %v7185
        %v7397 = vunpack.c.h.b16 %v7185
        %v7398 = vunpack.c.l.b16 %v7186
        %v7399 = vunpack.c.h.b16 %v7186
        %v7400 = vunpack.c.l.b16 %v7187
        %v7401 = vunpack.c.h.b16 %v7187
        %v7402 = vunpack.c.l.b16 %v7188
        %v7403 = vunpack.c.h.b16 %v7188
        %v7404 = vunpack.c.l.b16 %v7189
        %v7405 = vunpack.c.h.b16 %v7189
        %v7406 = vpack.c.b16 %v7264, %v7262
        %v7407 = vpack.c.b16 %v7265, %v7263
        %v7408 = vpack.c.b16 %v7268, %v7266
        %v7409 = vpack.c.b16 %v7269, %v7267
        %v7410 = vpack.c.b16 %v7272, %v7270
        %v7411 = vpack.c.b16 %v7273, %v7271
        %v7412 = vpack.c.b16 %v7276, %v7274
        %v7413 = vpack.c.b16 %v7277, %v7275
        %v7414 = vpack.c.b16 %v7280, %v7278
        %v7415 = vpack.c.b16 %v7281, %v7279
        %v7416 = vpack.c.b16 %v7284, %v7282
        %v7417 = vpack.c.b16 %v7285, %v7283
        %v7418 = vpack.c.b16 %v7288, %v7286
        %v7419 = vpack.c.b16 %v7289, %v7287
        %v7420 = vpack.c.b16 %v7292, %v7290
        %v7421 = vpack.c.b16 %v7293, %v7291
        %v7422 = vpack.c.b16 %v7296, %v7294
        %v7423 = vpack.c.b16 %v7297, %v7295
        %v7424 = vpack.c.b16 %v7300, %v7298
        %v7425 = vpack.c.b16 %v7301, %v7299
        %v7426 = vpack.c.b16 %v7304, %v7302
        %v7427 = vpack.c.b16 %v7305, %v7303
        %v7428 = vpack.c.b16 %v7308, %v7306
        %v7429 = vpack.c.b16 %v7309, %v7307
        %v7430 = vpack.c.b16 %v7312, %v7310
        %v7431 = vpack.c.b16 %v7313, %v7311
        %v7432 = vpack.c.b16 %v7316, %v7314
        %v7433 = vpack.c.b16 %v7317, %v7315
        %v7434 = vpack.c.b16 %v7320, %v7318
        %v7435 = vpack.c.b16 %v7321, %v7319
        %v7436 = vpack.c.b16 %v7324, %v7322
        %v7437 = vpack.c.b16 %v7325, %v7323
        %v7438 = vpack.c.b16 %v7328, %v7326
        %v7439 = vpack.c.b16 %v7329, %v7327
        %v7440 = vpack.c.b16 %v7332, %v7330
        %v7441 = vpack.c.b16 %v7333, %v7331
        %v7442 = vpack.c.b16 %v7336, %v7334
        %v7443 = vpack.c.b16 %v7337, %v7335
        %v7444 = vpack.c.b16 %v7340, %v7338
        %v7445 = vpack.c.b16 %v7341, %v7339
        %v7446 = vpack.c.b16 %v7344, %v7342
        %v7447 = vpack.c.b16 %v7345, %v7343
        %v7448 = vpack.c.b16 %v7348, %v7346
        %v7449 = vpack.c.b16 %v7349, %v7347
        %v7450 = vpack.c.b16 %v7352, %v7350
        %v7451 = vpack.c.b16 %v7353, %v7351
        %v7452 = vpack.c.b16 %v7356, %v7354
        %v7453 = vpack.c.b16 %v7357, %v7355
        %v7454 = vpack.c.b16 %v7360, %v7358
        %v7455 = vpack.c.b16 %v7361, %v7359
        %v7456 = vpack.c.b16 %v7364, %v7362
        %v7457 = vpack.c.b16 %v7365, %v7363
        %v7458 = vpack.c.b16 %v7368, %v7366
        %v7459 = vpack.c.b16 %v7369, %v7367
        %v7460 = vpack.c.b16 %v7372, %v7370
        %v7461 = vpack.c.b16 %v7373, %v7371
        %v7462 = vpack.c.b16 %v7376, %v7374
        %v7463 = vpack.c.b16 %v7377, %v7375
        %v7464 = vpack.c.b16 %v7380, %v7378
        %v7465 = vpack.c.b16 %v7381, %v7379
        %v7466 = vpack.c.b16 %v7384, %v7382
        %v7467 = vpack.c.b16 %v7385, %v7383
        %v7468 = vpack.c.b16 %v7388, %v7386
        %v7469 = vpack.c.b16 %v7389, %v7387
        %v7470 = vpack.c.b16 %v7392, %v7390
        %v7471 = vpack.c.b16 %v7393, %v7391
        %v7472 = vpack.c.b16 %v7396, %v7394
        %v7473 = vpack.c.b16 %v7397, %v7395
        %v7474 = vpack.c.b16 %v7400, %v7398
        %v7475 = vpack.c.b16 %v7401, %v7399
        %v7476 = vpack.c.b16 %v7404, %v7402
        %v7477 = vpack.c.b16 %v7405, %v7403
        %vm7550 = vcmask 523264
        %v7552 = vsel %vm7550, %v7057, 0
        %v7555 = vsel %vm7550, %v7062, 0
        %v7558 = vsel %vm7550, %v7067, 0
        %v7561 = vsel %vm7550, %v7072, 0
        %v7564 = vsel %vm7550, %v7077, 0
        %v7567 = vsel %vm7550, %v7082, 0
        %v7570 = vsel %vm7550, %v7087, 0
        %v7573 = vsel %vm7550, %v7092, 0
        %v7576 = vsel %vm7550, %v7097, 0
        %v7579 = vsel %vm7550, %v7102, 0
        %v7582 = vsel %vm7550, %v7107, 0
        %v7585 = vsel %vm7550, %v7112, 0
        %v7588 = vsel %vm7550, %v7117, 0
        %7590 = vmatpush.bf16.msra.mxu0 %v7420
        %7591 = vmatpush.bf16.msra.mxu0 %v7418
        %7592 = vmatpush.bf16.msra.mxu0 %v7416
        %7593 = vmatpush.bf16.msra.mxu0 %v7414
        %7594 = vmatpush.bf16.msra.mxu0 %v7412
        %7595 = vmatpush.bf16.msra.mxu0 %v7410
        %7596 = vmatpush.bf16.msra.mxu0 %v7408
        %7597 = vmatpush.bf16.msra.mxu0 %v7406
        %7598 = vmatmul.bf16.gmra.mxu0 %v7053
        %v7599 = vpop.f32.mrf.mxu0
        %v7600 = vadd.f32 0.0, %v7599
        %v7601 = vpop.f32.mrf.mxu0
        %v7602 = vadd.f32 0.0, %v7601
        %7603 = vmatmul.bf16.gmra.mxu0 %v7058
        %v7604 = vpop.f32.mrf.mxu0
        %v7605 = vadd.f32 0.0, %v7604
        %v7606 = vpop.f32.mrf.mxu0
        %v7607 = vadd.f32 0.0, %v7606
        %7608 = vmatmul.bf16.gmra.mxu0 %v7063
        %v7609 = vpop.f32.mrf.mxu0
        %v7610 = vadd.f32 0.0, %v7609
        %v7611 = vpop.f32.mrf.mxu0
        %v7612 = vadd.f32 0.0, %v7611
        %7613 = vmatmul.bf16.gmra.mxu0 %v7068
        %v7614 = vpop.f32.mrf.mxu0
        %v7615 = vadd.f32 0.0, %v7614
        %v7616 = vpop.f32.mrf.mxu0
        %v7617 = vadd.f32 0.0, %v7616
        %7618 = vmatmul.bf16.gmra.mxu0 %v7073
        %v7619 = vpop.f32.mrf.mxu0
        %v7620 = vadd.f32 0.0, %v7619
        %v7621 = vpop.f32.mrf.mxu0
        %v7622 = vadd.f32 0.0, %v7621
        %7623 = vmatmul.bf16.gmra.mxu0 %v7078
        %v7624 = vpop.f32.mrf.mxu0
        %v7625 = vadd.f32 0.0, %v7624
        %v7626 = vpop.f32.mrf.mxu0
        %v7627 = vadd.f32 0.0, %v7626
        %7628 = vmatmul.bf16.gmra.mxu0 %v7083
        %v7629 = vpop.f32.mrf.mxu0
        %v7630 = vadd.f32 0.0, %v7629
        %v7631 = vpop.f32.mrf.mxu0
        %v7632 = vadd.f32 0.0, %v7631
        %7633 = vmatmul.bf16.gmra.mxu0 %v7088
        %v7634 = vpop.f32.mrf.mxu0
        %v7635 = vadd.f32 0.0, %v7634
        %v7636 = vpop.f32.mrf.mxu0
        %v7637 = vadd.f32 0.0, %v7636
        %7638 = vmatmul.bf16.gmra.mxu0 %v7093
        %v7639 = vpop.f32.mrf.mxu0
        %v7640 = vadd.f32 0.0, %v7639
        %v7641 = vpop.f32.mrf.mxu0
        %v7642 = vadd.f32 0.0, %v7641
        %7643 = vmatmul.bf16.gmra.mxu0 %v7098
        %v7644 = vpop.f32.mrf.mxu0
        %v7645 = vadd.f32 0.0, %v7644
        %v7646 = vpop.f32.mrf.mxu0
        %v7647 = vadd.f32 0.0, %v7646
        %7648 = vmatmul.bf16.gmra.mxu0 %v7103
        %v7649 = vpop.f32.mrf.mxu0
        %v7650 = vadd.f32 0.0, %v7649
        %v7651 = vpop.f32.mrf.mxu0
        %v7652 = vadd.f32 0.0, %v7651
        %7653 = vmatmul.bf16.gmra.mxu0 %v7108
        %v7654 = vpop.f32.mrf.mxu0
        %v7655 = vadd.f32 0.0, %v7654
        %v7656 = vpop.f32.mrf.mxu0
        %v7657 = vadd.f32 0.0, %v7656
        %7658 = vmatmul.bf16.gmra.mxu0 %v7113
        %v7659 = vpop.f32.mrf.mxu0
        %v7660 = vadd.f32 0.0, %v7659
        %v7661 = vpop.f32.mrf.mxu0
        %7662 = vdwg.mxu0
        %7663 = vmatpush.bf16.msra.mxu0 %v7436
        %7664 = vmatpush.bf16.msra.mxu0 %v7434
        %7665 = vmatpush.bf16.msra.mxu0 %v7432
        %7666 = vmatpush.bf16.msra.mxu0 %v7430
        %7667 = vmatpush.bf16.msra.mxu0 %v7428
        %7668 = vmatpush.bf16.msra.mxu0 %v7426
        %7669 = vmatpush.bf16.msra.mxu0 %v7424
        %7670 = vmatpush.bf16.msra.mxu0 %v7422
        %7671 = vmatmul.bf16.gmra.mxu0 %v7054
        %v7672 = vpop.f32.mrf.mxu0
        %v7673 = vadd.f32 %v7600, %v7672
        %v7674 = vpop.f32.mrf.mxu0
        %v7675 = vadd.f32 %v7602, %v7674
        %7676 = vmatmul.bf16.gmra.mxu0 %v7059
        %v7677 = vpop.f32.mrf.mxu0
        %v7678 = vadd.f32 %v7605, %v7677
        %v7679 = vpop.f32.mrf.mxu0
        %v7680 = vadd.f32 %v7607, %v7679
        %7681 = vmatmul.bf16.gmra.mxu0 %v7064
        %v7682 = vpop.f32.mrf.mxu0
        %v7683 = vadd.f32 %v7610, %v7682
        %v7684 = vpop.f32.mrf.mxu0
        %v7685 = vadd.f32 %v7612, %v7684
        %7686 = vmatmul.bf16.gmra.mxu0 %v7069
        %v7687 = vpop.f32.mrf.mxu0
        %v7688 = vadd.f32 %v7615, %v7687
        %v7689 = vpop.f32.mrf.mxu0
        %v7690 = vadd.f32 %v7617, %v7689
        %7691 = vmatmul.bf16.gmra.mxu0 %v7074
        %v7692 = vpop.f32.mrf.mxu0
        %v7693 = vadd.f32 %v7620, %v7692
        %v7694 = vpop.f32.mrf.mxu0
        %v7695 = vadd.f32 %v7622, %v7694
        %7696 = vmatmul.bf16.gmra.mxu0 %v7079
        %v7697 = vpop.f32.mrf.mxu0
        %v7698 = vadd.f32 %v7625, %v7697
        %v7699 = vpop.f32.mrf.mxu0
        %v7700 = vadd.f32 %v7627, %v7699
        %7701 = vmatmul.bf16.gmra.mxu0 %v7084
        %v7702 = vpop.f32.mrf.mxu0
        %v7703 = vadd.f32 %v7630, %v7702
        %v7704 = vpop.f32.mrf.mxu0
        %v7705 = vadd.f32 %v7632, %v7704
        %7706 = vmatmul.bf16.gmra.mxu0 %v7089
        %v7707 = vpop.f32.mrf.mxu0
        %v7708 = vadd.f32 %v7635, %v7707
        %v7709 = vpop.f32.mrf.mxu0
        %v7710 = vadd.f32 %v7637, %v7709
        %7711 = vmatmul.bf16.gmra.mxu0 %v7094
        %v7712 = vpop.f32.mrf.mxu0
        %v7713 = vadd.f32 %v7640, %v7712
        %v7714 = vpop.f32.mrf.mxu0
        %v7715 = vadd.f32 %v7642, %v7714
        %7716 = vmatmul.bf16.gmra.mxu0 %v7099
        %v7717 = vpop.f32.mrf.mxu0
        %v7718 = vadd.f32 %v7645, %v7717
        %v7719 = vpop.f32.mrf.mxu0
        %v7720 = vadd.f32 %v7647, %v7719
        %7721 = vmatmul.bf16.gmra.mxu0 %v7104
        %v7722 = vpop.f32.mrf.mxu0
        %v7723 = vadd.f32 %v7650, %v7722
        %v7724 = vpop.f32.mrf.mxu0
        %v7725 = vadd.f32 %v7652, %v7724
        %7726 = vmatmul.bf16.gmra.mxu0 %v7109
        %v7727 = vpop.f32.mrf.mxu0
        %v7728 = vadd.f32 %v7655, %v7727
        %v7729 = vpop.f32.mrf.mxu0
        %v7730 = vadd.f32 %v7657, %v7729
        %7731 = vmatmul.bf16.gmra.mxu0 %v7114
        %v7732 = vpop.f32.mrf.mxu0
        %v7733 = vadd.f32 %v7660, %v7732
        %v7734 = vpop.f32.mrf.mxu0
        %7735 = vdwg.mxu0
        %7736 = vmatpush.bf16.msra.mxu0 %v7452
        %7737 = vmatpush.bf16.msra.mxu0 %v7450
        %7738 = vmatpush.bf16.msra.mxu0 %v7448
        %7739 = vmatpush.bf16.msra.mxu0 %v7446
        %7740 = vmatpush.bf16.msra.mxu0 %v7444
        %7741 = vmatpush.bf16.msra.mxu0 %v7442
        %7742 = vmatpush.bf16.msra.mxu0 %v7440
        %7743 = vmatpush.bf16.msra.mxu0 %v7438
        %7744 = vmatmul.bf16.gmra.mxu0 %v7055
        %v7745 = vpop.f32.mrf.mxu0
        %v7746 = vadd.f32 %v7673, %v7745
        %v7747 = vpop.f32.mrf.mxu0
        %v7748 = vadd.f32 %v7675, %v7747
        %7749 = vmatmul.bf16.gmra.mxu0 %v7060
        %v7750 = vpop.f32.mrf.mxu0
        %v7751 = vadd.f32 %v7678, %v7750
        %v7752 = vpop.f32.mrf.mxu0
        %v7753 = vadd.f32 %v7680, %v7752
        %7754 = vmatmul.bf16.gmra.mxu0 %v7065
        %v7755 = vpop.f32.mrf.mxu0
        %v7756 = vadd.f32 %v7683, %v7755
        %v7757 = vpop.f32.mrf.mxu0
        %v7758 = vadd.f32 %v7685, %v7757
        %7759 = vmatmul.bf16.gmra.mxu0 %v7070
        %v7760 = vpop.f32.mrf.mxu0
        %v7761 = vadd.f32 %v7688, %v7760
        %v7762 = vpop.f32.mrf.mxu0
        %v7763 = vadd.f32 %v7690, %v7762
        %7764 = vmatmul.bf16.gmra.mxu0 %v7075
        %v7765 = vpop.f32.mrf.mxu0
        %v7766 = vadd.f32 %v7693, %v7765
        %v7767 = vpop.f32.mrf.mxu0
        %v7768 = vadd.f32 %v7695, %v7767
        %7769 = vmatmul.bf16.gmra.mxu0 %v7080
        %v7770 = vpop.f32.mrf.mxu0
        %v7771 = vadd.f32 %v7698, %v7770
        %v7772 = vpop.f32.mrf.mxu0
        %v7773 = vadd.f32 %v7700, %v7772
        %7774 = vmatmul.bf16.gmra.mxu0 %v7085
        %v7775 = vpop.f32.mrf.mxu0
        %v7776 = vadd.f32 %v7703, %v7775
        %v7777 = vpop.f32.mrf.mxu0
        %v7778 = vadd.f32 %v7705, %v7777
        %7779 = vmatmul.bf16.gmra.mxu0 %v7090
        %v7780 = vpop.f32.mrf.mxu0
        %v7781 = vadd.f32 %v7708, %v7780
        %v7782 = vpop.f32.mrf.mxu0
        %v7783 = vadd.f32 %v7710, %v7782
        %7784 = vmatmul.bf16.gmra.mxu0 %v7095
        %v7785 = vpop.f32.mrf.mxu0
        %v7786 = vadd.f32 %v7713, %v7785
        %v7787 = vpop.f32.mrf.mxu0
        %v7788 = vadd.f32 %v7715, %v7787
        %7789 = vmatmul.bf16.gmra.mxu0 %v7100
        %v7790 = vpop.f32.mrf.mxu0
        %v7791 = vadd.f32 %v7718, %v7790
        %v7792 = vpop.f32.mrf.mxu0
        %v7793 = vadd.f32 %v7720, %v7792
        %7794 = vmatmul.bf16.gmra.mxu0 %v7105
        %v7795 = vpop.f32.mrf.mxu0
        %v7796 = vadd.f32 %v7723, %v7795
        %v7797 = vpop.f32.mrf.mxu0
        %v7798 = vadd.f32 %v7725, %v7797
        %7799 = vmatmul.bf16.gmra.mxu0 %v7110
        %v7800 = vpop.f32.mrf.mxu0
        %v7801 = vadd.f32 %v7728, %v7800
        %v7802 = vpop.f32.mrf.mxu0
        %v7803 = vadd.f32 %v7730, %v7802
        %7804 = vmatmul.bf16.gmra.mxu0 %v7115
        %v7805 = vpop.f32.mrf.mxu0
        %v7806 = vadd.f32 %v7733, %v7805
        %v7807 = vpop.f32.mrf.mxu0
        %7808 = vdwg.mxu0
        %7809 = vmatpush.bf16.msra.mxu0 %v7468
        %7810 = vmatpush.bf16.msra.mxu0 %v7466
        %7811 = vmatpush.bf16.msra.mxu0 %v7464
        %7812 = vmatpush.bf16.msra.mxu0 %v7462
        %7813 = vmatpush.bf16.msra.mxu0 %v7460
        %7814 = vmatpush.bf16.msra.mxu0 %v7458
        %7815 = vmatpush.bf16.msra.mxu0 %v7456
        %7816 = vmatpush.bf16.msra.mxu0 %v7454
        %7817 = vmatmul.bf16.gmra.mxu0 %v7056
        %v7818 = vpop.f32.mrf.mxu0
        %v7819 = vadd.f32 %v7746, %v7818
        %v7820 = vpop.f32.mrf.mxu0
        %v7821 = vadd.f32 %v7748, %v7820
        %7822 = vmatmul.bf16.gmra.mxu0 %v7061
        %v7823 = vpop.f32.mrf.mxu0
        %v7824 = vadd.f32 %v7751, %v7823
        %v7825 = vpop.f32.mrf.mxu0
        %v7826 = vadd.f32 %v7753, %v7825
        %7827 = vmatmul.bf16.gmra.mxu0 %v7066
        %v7828 = vpop.f32.mrf.mxu0
        %v7829 = vadd.f32 %v7756, %v7828
        %v7830 = vpop.f32.mrf.mxu0
        %v7831 = vadd.f32 %v7758, %v7830
        %7832 = vmatmul.bf16.gmra.mxu0 %v7071
        %v7833 = vpop.f32.mrf.mxu0
        %v7834 = vadd.f32 %v7761, %v7833
        %v7835 = vpop.f32.mrf.mxu0
        %v7836 = vadd.f32 %v7763, %v7835
        %7837 = vmatmul.bf16.gmra.mxu0 %v7076
        %v7838 = vpop.f32.mrf.mxu0
        %v7839 = vadd.f32 %v7766, %v7838
        %v7840 = vpop.f32.mrf.mxu0
        %v7841 = vadd.f32 %v7768, %v7840
        %7842 = vmatmul.bf16.gmra.mxu0 %v7081
        %v7843 = vpop.f32.mrf.mxu0
        %v7844 = vadd.f32 %v7771, %v7843
        %v7845 = vpop.f32.mrf.mxu0
        %v7846 = vadd.f32 %v7773, %v7845
        %7847 = vmatmul.bf16.gmra.mxu0 %v7086
        %v7848 = vpop.f32.mrf.mxu0
        %v7849 = vadd.f32 %v7776, %v7848
        %v7850 = vpop.f32.mrf.mxu0
        %v7851 = vadd.f32 %v7778, %v7850
        %7852 = vmatmul.bf16.gmra.mxu0 %v7091
        %v7853 = vpop.f32.mrf.mxu0
        %v7854 = vadd.f32 %v7781, %v7853
        %v7855 = vpop.f32.mrf.mxu0
        %v7856 = vadd.f32 %v7783, %v7855
        %7857 = vmatmul.bf16.gmra.mxu0 %v7096
        %v7858 = vpop.f32.mrf.mxu0
        %v7859 = vadd.f32 %v7786, %v7858
        %v7860 = vpop.f32.mrf.mxu0
        %v7861 = vadd.f32 %v7788, %v7860
        %7862 = vmatmul.bf16.gmra.mxu0 %v7101
        %v7863 = vpop.f32.mrf.mxu0
        %v7864 = vadd.f32 %v7791, %v7863
        %v7865 = vpop.f32.mrf.mxu0
        %v7866 = vadd.f32 %v7793, %v7865
        %7867 = vmatmul.bf16.gmra.mxu0 %v7106
        %v7868 = vpop.f32.mrf.mxu0
        %v7869 = vadd.f32 %v7796, %v7868
        %v7870 = vpop.f32.mrf.mxu0
        %v7871 = vadd.f32 %v7798, %v7870
        %7872 = vmatmul.bf16.gmra.mxu0 %v7111
        %v7873 = vpop.f32.mrf.mxu0
        %v7874 = vadd.f32 %v7801, %v7873
        %v7875 = vpop.f32.mrf.mxu0
        %v7876 = vadd.f32 %v7803, %v7875
        %7877 = vmatmul.bf16.gmra.mxu0 %v7116
        %v7878 = vpop.f32.mrf.mxu0
        %v7879 = vadd.f32 %v7806, %v7878
        %v7880 = vpop.f32.mrf.mxu0
        %7881 = vdwg.mxu0
        %7882 = vmatpush.bf16.msra.mxu0 0
        %7883 = vmatpush.bf16.msra.mxu0 0
        %7884 = vmatpush.bf16.msra.mxu0 0
        %7885 = vmatpush.bf16.msra.mxu0 0
        %7886 = vmatpush.bf16.msra.mxu0 %v7476
        %7887 = vmatpush.bf16.msra.mxu0 %v7474
        %7888 = vmatpush.bf16.msra.mxu0 %v7472
        %7889 = vmatpush.bf16.msra.mxu0 %v7470
        %7890 = vmatmul.bf16.gmra.mxu0 %v7552
        %v7891 = vpop.f32.mrf.mxu0
        %v7892 = vadd.f32 %v7819, %v7891
        %v7893 = vpop.f32.mrf.mxu0
        %v7894 = vadd.f32 %v7821, %v7893
        %7895 = vmatmul.bf16.gmra.mxu0 %v7555
        %v7896 = vpop.f32.mrf.mxu0
        %v7897 = vadd.f32 %v7824, %v7896
        %v7898 = vpop.f32.mrf.mxu0
        %v7899 = vadd.f32 %v7826, %v7898
        %7900 = vmatmul.bf16.gmra.mxu0 %v7558
        %v7901 = vpop.f32.mrf.mxu0
        %v7902 = vadd.f32 %v7829, %v7901
        %v7903 = vpop.f32.mrf.mxu0
        %v7904 = vadd.f32 %v7831, %v7903
        %7905 = vmatmul.bf16.gmra.mxu0 %v7561
        %v7906 = vpop.f32.mrf.mxu0
        %v7907 = vadd.f32 %v7834, %v7906
        %v7908 = vpop.f32.mrf.mxu0
        %v7909 = vadd.f32 %v7836, %v7908
        %7910 = vmatmul.bf16.gmra.mxu0 %v7564
        %v7911 = vpop.f32.mrf.mxu0
        %v7912 = vadd.f32 %v7839, %v7911
        %v7913 = vpop.f32.mrf.mxu0
        %v7914 = vadd.f32 %v7841, %v7913
        %7915 = vmatmul.bf16.gmra.mxu0 %v7567
        %v7916 = vpop.f32.mrf.mxu0
        %v7917 = vadd.f32 %v7844, %v7916
        %v7918 = vpop.f32.mrf.mxu0
        %v7919 = vadd.f32 %v7846, %v7918
        %7920 = vmatmul.bf16.gmra.mxu0 %v7570
        %v7921 = vpop.f32.mrf.mxu0
        %v7922 = vadd.f32 %v7849, %v7921
        %v7923 = vpop.f32.mrf.mxu0
        %v7924 = vadd.f32 %v7851, %v7923
        %7925 = vmatmul.bf16.gmra.mxu0 %v7573
        %v7926 = vpop.f32.mrf.mxu0
        %v7927 = vadd.f32 %v7854, %v7926
        %v7928 = vpop.f32.mrf.mxu0
        %v7929 = vadd.f32 %v7856, %v7928
        %7930 = vmatmul.bf16.gmra.mxu0 %v7576
        %v7931 = vpop.f32.mrf.mxu0
        %v7932 = vadd.f32 %v7859, %v7931
        %v7933 = vpop.f32.mrf.mxu0
        %v7934 = vadd.f32 %v7861, %v7933
        %7935 = vmatmul.bf16.gmra.mxu0 %v7579
        %v7936 = vpop.f32.mrf.mxu0
        %v7937 = vadd.f32 %v7864, %v7936
        %v7938 = vpop.f32.mrf.mxu0
        %v7939 = vadd.f32 %v7866, %v7938
        %7940 = vmatmul.bf16.gmra.mxu0 %v7582
        %v7941 = vpop.f32.mrf.mxu0
        %v7942 = vadd.f32 %v7869, %v7941
        %v7943 = vpop.f32.mrf.mxu0
        %v7944 = vadd.f32 %v7871, %v7943
        %7945 = vmatmul.bf16.gmra.mxu0 %v7585
        %v7946 = vpop.f32.mrf.mxu0
        %v7947 = vadd.f32 %v7874, %v7946
        %v7948 = vpop.f32.mrf.mxu0
        %v7949 = vadd.f32 %v7876, %v7948
        %7950 = vmatmul.bf16.gmra.mxu0 %v7588
        %v7951 = vpop.f32.mrf.mxu0
        %v7952 = vadd.f32 %v7879, %v7951
        %v7953 = vpop.f32.mrf.mxu0
        %7954 = vdwg.mxu0
        %7955 = vmatpush.bf16.msra.mxu0 %v7421
        %7956 = vmatpush.bf16.msra.mxu0 %v7419
        %7957 = vmatpush.bf16.msra.mxu0 %v7417
        %7958 = vmatpush.bf16.msra.mxu0 %v7415
        %7959 = vmatpush.bf16.msra.mxu0 %v7413
        %7960 = vmatpush.bf16.msra.mxu0 %v7411
        %7961 = vmatpush.bf16.msra.mxu0 %v7409
        %7962 = vmatpush.bf16.msra.mxu0 %v7407
        %7963 = vmatmul.bf16.gmra.mxu0 %v7053
        %v7964 = vpop.f32.mrf.mxu0
        %v7965 = vadd.f32 0.0, %v7964
        %v7966 = vpop.f32.mrf.mxu0
        %v7967 = vadd.f32 0.0, %v7966
        %7968 = vmatmul.bf16.gmra.mxu0 %v7058
        %v7969 = vpop.f32.mrf.mxu0
        %v7970 = vadd.f32 0.0, %v7969
        %v7971 = vpop.f32.mrf.mxu0
        %v7972 = vadd.f32 0.0, %v7971
        %7973 = vmatmul.bf16.gmra.mxu0 %v7063
        %v7974 = vpop.f32.mrf.mxu0
        %v7975 = vadd.f32 0.0, %v7974
        %v7976 = vpop.f32.mrf.mxu0
        %v7977 = vadd.f32 0.0, %v7976
        %7978 = vmatmul.bf16.gmra.mxu0 %v7068
        %v7979 = vpop.f32.mrf.mxu0
        %v7980 = vadd.f32 0.0, %v7979
        %v7981 = vpop.f32.mrf.mxu0
        %v7982 = vadd.f32 0.0, %v7981
        %7983 = vmatmul.bf16.gmra.mxu0 %v7073
        %v7984 = vpop.f32.mrf.mxu0
        %v7985 = vadd.f32 0.0, %v7984
        %v7986 = vpop.f32.mrf.mxu0
        %v7987 = vadd.f32 0.0, %v7986
        %7988 = vmatmul.bf16.gmra.mxu0 %v7078
        %v7989 = vpop.f32.mrf.mxu0
        %v7990 = vadd.f32 0.0, %v7989
        %v7991 = vpop.f32.mrf.mxu0
        %v7992 = vadd.f32 0.0, %v7991
        %7993 = vmatmul.bf16.gmra.mxu0 %v7083
        %v7994 = vpop.f32.mrf.mxu0
        %v7995 = vadd.f32 0.0, %v7994
        %v7996 = vpop.f32.mrf.mxu0
        %v7997 = vadd.f32 0.0, %v7996
        %7998 = vmatmul.bf16.gmra.mxu0 %v7088
        %v7999 = vpop.f32.mrf.mxu0
        %v8000 = vadd.f32 0.0, %v7999
        %v8001 = vpop.f32.mrf.mxu0
        %v8002 = vadd.f32 0.0, %v8001
        %8003 = vmatmul.bf16.gmra.mxu0 %v7093
        %v8004 = vpop.f32.mrf.mxu0
        %v8005 = vadd.f32 0.0, %v8004
        %v8006 = vpop.f32.mrf.mxu0
        %v8007 = vadd.f32 0.0, %v8006
        %8008 = vmatmul.bf16.gmra.mxu0 %v7098
        %v8009 = vpop.f32.mrf.mxu0
        %v8010 = vadd.f32 0.0, %v8009
        %v8011 = vpop.f32.mrf.mxu0
        %v8012 = vadd.f32 0.0, %v8011
        %8013 = vmatmul.bf16.gmra.mxu0 %v7103
        %v8014 = vpop.f32.mrf.mxu0
        %v8015 = vadd.f32 0.0, %v8014
        %v8016 = vpop.f32.mrf.mxu0
        %v8017 = vadd.f32 0.0, %v8016
        %8018 = vmatmul.bf16.gmra.mxu0 %v7108
        %v8019 = vpop.f32.mrf.mxu0
        %v8020 = vadd.f32 0.0, %v8019
        %v8021 = vpop.f32.mrf.mxu0
        %v8022 = vadd.f32 0.0, %v8021
        %8023 = vmatmul.bf16.gmra.mxu0 %v7113
        %v8024 = vpop.f32.mrf.mxu0
        %v8025 = vadd.f32 0.0, %v8024
        %v8026 = vpop.f32.mrf.mxu0
        %8027 = vdwg.mxu0
        %8028 = vmatpush.bf16.msra.mxu0 %v7437
        %8029 = vmatpush.bf16.msra.mxu0 %v7435
        %8030 = vmatpush.bf16.msra.mxu0 %v7433
        %8031 = vmatpush.bf16.msra.mxu0 %v7431
        %8032 = vmatpush.bf16.msra.mxu0 %v7429
        %8033 = vmatpush.bf16.msra.mxu0 %v7427
        %8034 = vmatpush.bf16.msra.mxu0 %v7425
        %8035 = vmatpush.bf16.msra.mxu0 %v7423
        %8036 = vmatmul.bf16.gmra.mxu0 %v7054
        %v8037 = vpop.f32.mrf.mxu0
        %v8038 = vadd.f32 %v7965, %v8037
        %v8039 = vpop.f32.mrf.mxu0
        %v8040 = vadd.f32 %v7967, %v8039
        %8041 = vmatmul.bf16.gmra.mxu0 %v7059
        %v8042 = vpop.f32.mrf.mxu0
        %v8043 = vadd.f32 %v7970, %v8042
        %v8044 = vpop.f32.mrf.mxu0
        %v8045 = vadd.f32 %v7972, %v8044
        %8046 = vmatmul.bf16.gmra.mxu0 %v7064
        %v8047 = vpop.f32.mrf.mxu0
        %v8048 = vadd.f32 %v7975, %v8047
        %v8049 = vpop.f32.mrf.mxu0
        %v8050 = vadd.f32 %v7977, %v8049
        %8051 = vmatmul.bf16.gmra.mxu0 %v7069
        %v8052 = vpop.f32.mrf.mxu0
        %v8053 = vadd.f32 %v7980, %v8052
        %v8054 = vpop.f32.mrf.mxu0
        %v8055 = vadd.f32 %v7982, %v8054
        %8056 = vmatmul.bf16.gmra.mxu0 %v7074
        %v8057 = vpop.f32.mrf.mxu0
        %v8058 = vadd.f32 %v7985, %v8057
        %v8059 = vpop.f32.mrf.mxu0
        %v8060 = vadd.f32 %v7987, %v8059
        %8061 = vmatmul.bf16.gmra.mxu0 %v7079
        %v8062 = vpop.f32.mrf.mxu0
        %v8063 = vadd.f32 %v7990, %v8062
        %v8064 = vpop.f32.mrf.mxu0
        %v8065 = vadd.f32 %v7992, %v8064
        %8066 = vmatmul.bf16.gmra.mxu0 %v7084
        %v8067 = vpop.f32.mrf.mxu0
        %v8068 = vadd.f32 %v7995, %v8067
        %v8069 = vpop.f32.mrf.mxu0
        %v8070 = vadd.f32 %v7997, %v8069
        %8071 = vmatmul.bf16.gmra.mxu0 %v7089
        %v8072 = vpop.f32.mrf.mxu0
        %v8073 = vadd.f32 %v8000, %v8072
        %v8074 = vpop.f32.mrf.mxu0
        %v8075 = vadd.f32 %v8002, %v8074
        %8076 = vmatmul.bf16.gmra.mxu0 %v7094
        %v8077 = vpop.f32.mrf.mxu0
        %v8078 = vadd.f32 %v8005, %v8077
        %v8079 = vpop.f32.mrf.mxu0
        %v8080 = vadd.f32 %v8007, %v8079
        %8081 = vmatmul.bf16.gmra.mxu0 %v7099
        %v8082 = vpop.f32.mrf.mxu0
        %v8083 = vadd.f32 %v8010, %v8082
        %v8084 = vpop.f32.mrf.mxu0
        %v8085 = vadd.f32 %v8012, %v8084
        %8086 = vmatmul.bf16.gmra.mxu0 %v7104
        %v8087 = vpop.f32.mrf.mxu0
        %v8088 = vadd.f32 %v8015, %v8087
        %v8089 = vpop.f32.mrf.mxu0
        %v8090 = vadd.f32 %v8017, %v8089
        %8091 = vmatmul.bf16.gmra.mxu0 %v7109
        %v8092 = vpop.f32.mrf.mxu0
        %v8093 = vadd.f32 %v8020, %v8092
        %v8094 = vpop.f32.mrf.mxu0
        %v8095 = vadd.f32 %v8022, %v8094
        %8096 = vmatmul.bf16.gmra.mxu0 %v7114
        %v8097 = vpop.f32.mrf.mxu0
        %v8098 = vadd.f32 %v8025, %v8097
        %v8099 = vpop.f32.mrf.mxu0
        %8100 = vdwg.mxu0
        %8101 = vmatpush.bf16.msra.mxu0 %v7453
        %8102 = vmatpush.bf16.msra.mxu0 %v7451
        %8103 = vmatpush.bf16.msra.mxu0 %v7449
        %8104 = vmatpush.bf16.msra.mxu0 %v7447
        %8105 = vmatpush.bf16.msra.mxu0 %v7445
        %8106 = vmatpush.bf16.msra.mxu0 %v7443
        %8107 = vmatpush.bf16.msra.mxu0 %v7441
        %8108 = vmatpush.bf16.msra.mxu0 %v7439
        %8109 = vmatmul.bf16.gmra.mxu0 %v7055
        %v8110 = vpop.f32.mrf.mxu0
        %v8111 = vadd.f32 %v8038, %v8110
        %v8112 = vpop.f32.mrf.mxu0
        %v8113 = vadd.f32 %v8040, %v8112
        %8114 = vmatmul.bf16.gmra.mxu0 %v7060
        %v8115 = vpop.f32.mrf.mxu0
        %v8116 = vadd.f32 %v8043, %v8115
        %v8117 = vpop.f32.mrf.mxu0
        %v8118 = vadd.f32 %v8045, %v8117
        %8119 = vmatmul.bf16.gmra.mxu0 %v7065
        %v8120 = vpop.f32.mrf.mxu0
        %v8121 = vadd.f32 %v8048, %v8120
        %v8122 = vpop.f32.mrf.mxu0
        %v8123 = vadd.f32 %v8050, %v8122
        %8124 = vmatmul.bf16.gmra.mxu0 %v7070
        %v8125 = vpop.f32.mrf.mxu0
        %v8126 = vadd.f32 %v8053, %v8125
        %v8127 = vpop.f32.mrf.mxu0
        %v8128 = vadd.f32 %v8055, %v8127
        %8129 = vmatmul.bf16.gmra.mxu0 %v7075
        %v8130 = vpop.f32.mrf.mxu0
        %v8131 = vadd.f32 %v8058, %v8130
        %v8132 = vpop.f32.mrf.mxu0
        %v8133 = vadd.f32 %v8060, %v8132
        %8134 = vmatmul.bf16.gmra.mxu0 %v7080
        %v8135 = vpop.f32.mrf.mxu0
        %v8136 = vadd.f32 %v8063, %v8135
        %v8137 = vpop.f32.mrf.mxu0
        %v8138 = vadd.f32 %v8065, %v8137
        %8139 = vmatmul.bf16.gmra.mxu0 %v7085
        %v8140 = vpop.f32.mrf.mxu0
        %v8141 = vadd.f32 %v8068, %v8140
        %v8142 = vpop.f32.mrf.mxu0
        %v8143 = vadd.f32 %v8070, %v8142
        %8144 = vmatmul.bf16.gmra.mxu0 %v7090
        %v8145 = vpop.f32.mrf.mxu0
        %v8146 = vadd.f32 %v8073, %v8145
        %v8147 = vpop.f32.mrf.mxu0
        %v8148 = vadd.f32 %v8075, %v8147
        %8149 = vmatmul.bf16.gmra.mxu0 %v7095
        %v8150 = vpop.f32.mrf.mxu0
        %v8151 = vadd.f32 %v8078, %v8150
        %v8152 = vpop.f32.mrf.mxu0
        %v8153 = vadd.f32 %v8080, %v8152
        %8154 = vmatmul.bf16.gmra.mxu0 %v7100
        %v8155 = vpop.f32.mrf.mxu0
        %v8156 = vadd.f32 %v8083, %v8155
        %v8157 = vpop.f32.mrf.mxu0
        %v8158 = vadd.f32 %v8085, %v8157
        %8159 = vmatmul.bf16.gmra.mxu0 %v7105
        %v8160 = vpop.f32.mrf.mxu0
        %v8161 = vadd.f32 %v8088, %v8160
        %v8162 = vpop.f32.mrf.mxu0
        %v8163 = vadd.f32 %v8090, %v8162
        %8164 = vmatmul.bf16.gmra.mxu0 %v7110
        %v8165 = vpop.f32.mrf.mxu0
        %v8166 = vadd.f32 %v8093, %v8165
        %v8167 = vpop.f32.mrf.mxu0
        %v8168 = vadd.f32 %v8095, %v8167
        %8169 = vmatmul.bf16.gmra.mxu0 %v7115
        %v8170 = vpop.f32.mrf.mxu0
        %v8171 = vadd.f32 %v8098, %v8170
        %v8172 = vpop.f32.mrf.mxu0
        %8173 = vdwg.mxu0
        %8174 = vmatpush.bf16.msra.mxu0 %v7469
        %8175 = vmatpush.bf16.msra.mxu0 %v7467
        %8176 = vmatpush.bf16.msra.mxu0 %v7465
        %8177 = vmatpush.bf16.msra.mxu0 %v7463
        %8178 = vmatpush.bf16.msra.mxu0 %v7461
        %8179 = vmatpush.bf16.msra.mxu0 %v7459
        %8180 = vmatpush.bf16.msra.mxu0 %v7457
        %8181 = vmatpush.bf16.msra.mxu0 %v7455
        %8182 = vmatmul.bf16.gmra.mxu0 %v7056
        %v8183 = vpop.f32.mrf.mxu0
        %v8184 = vadd.f32 %v8111, %v8183
        %v8185 = vpop.f32.mrf.mxu0
        %v8186 = vadd.f32 %v8113, %v8185
        %8187 = vmatmul.bf16.gmra.mxu0 %v7061
        %v8188 = vpop.f32.mrf.mxu0
        %v8189 = vadd.f32 %v8116, %v8188
        %v8190 = vpop.f32.mrf.mxu0
        %v8191 = vadd.f32 %v8118, %v8190
        %8192 = vmatmul.bf16.gmra.mxu0 %v7066
        %v8193 = vpop.f32.mrf.mxu0
        %v8194 = vadd.f32 %v8121, %v8193
        %v8195 = vpop.f32.mrf.mxu0
        %v8196 = vadd.f32 %v8123, %v8195
        %8197 = vmatmul.bf16.gmra.mxu0 %v7071
        %v8198 = vpop.f32.mrf.mxu0
        %v8199 = vadd.f32 %v8126, %v8198
        %v8200 = vpop.f32.mrf.mxu0
        %v8201 = vadd.f32 %v8128, %v8200
        %8202 = vmatmul.bf16.gmra.mxu0 %v7076
        %v8203 = vpop.f32.mrf.mxu0
        %v8204 = vadd.f32 %v8131, %v8203
        %v8205 = vpop.f32.mrf.mxu0
        %v8206 = vadd.f32 %v8133, %v8205
        %8207 = vmatmul.bf16.gmra.mxu0 %v7081
        %v8208 = vpop.f32.mrf.mxu0
        %v8209 = vadd.f32 %v8136, %v8208
        %v8210 = vpop.f32.mrf.mxu0
        %v8211 = vadd.f32 %v8138, %v8210
        %8212 = vmatmul.bf16.gmra.mxu0 %v7086
        %v8213 = vpop.f32.mrf.mxu0
        %v8214 = vadd.f32 %v8141, %v8213
        %v8215 = vpop.f32.mrf.mxu0
        %v8216 = vadd.f32 %v8143, %v8215
        %8217 = vmatmul.bf16.gmra.mxu0 %v7091
        %v8218 = vpop.f32.mrf.mxu0
        %v8219 = vadd.f32 %v8146, %v8218
        %v8220 = vpop.f32.mrf.mxu0
        %v8221 = vadd.f32 %v8148, %v8220
        %8222 = vmatmul.bf16.gmra.mxu0 %v7096
        %v8223 = vpop.f32.mrf.mxu0
        %v8224 = vadd.f32 %v8151, %v8223
        %v8225 = vpop.f32.mrf.mxu0
        %v8226 = vadd.f32 %v8153, %v8225
        %8227 = vmatmul.bf16.gmra.mxu0 %v7101
        %v8228 = vpop.f32.mrf.mxu0
        %v8229 = vadd.f32 %v8156, %v8228
        %v8230 = vpop.f32.mrf.mxu0
        %v8231 = vadd.f32 %v8158, %v8230
        %8232 = vmatmul.bf16.gmra.mxu0 %v7106
        %v8233 = vpop.f32.mrf.mxu0
        %v8234 = vadd.f32 %v8161, %v8233
        %v8235 = vpop.f32.mrf.mxu0
        %v8236 = vadd.f32 %v8163, %v8235
        %8237 = vmatmul.bf16.gmra.mxu0 %v7111
        %v8238 = vpop.f32.mrf.mxu0
        %v8239 = vadd.f32 %v8166, %v8238
        %v8240 = vpop.f32.mrf.mxu0
        %v8241 = vadd.f32 %v8168, %v8240
        %8242 = vmatmul.bf16.gmra.mxu0 %v7116
        %v8243 = vpop.f32.mrf.mxu0
        %v8244 = vadd.f32 %v8171, %v8243
        %v8245 = vpop.f32.mrf.mxu0
        %8246 = vdwg.mxu0
        %8247 = vmatpush.bf16.msra.mxu0 0
        %8248 = vmatpush.bf16.msra.mxu0 0
        %8249 = vmatpush.bf16.msra.mxu0 0
        %8250 = vmatpush.bf16.msra.mxu0 0
        %8251 = vmatpush.bf16.msra.mxu0 %v7477
        %8252 = vmatpush.bf16.msra.mxu0 %v7475
        %8253 = vmatpush.bf16.msra.mxu0 %v7473
        %8254 = vmatpush.bf16.msra.mxu0 %v7471
        %8255 = vmatmul.bf16.gmra.mxu0 %v7552
        %v8256 = vpop.f32.mrf.mxu0
        %v8257 = vadd.f32 %v8184, %v8256
        %v8258 = vpop.f32.mrf.mxu0
        %v8259 = vadd.f32 %v8186, %v8258
        %8260 = vmatmul.bf16.gmra.mxu0 %v7555
        %v8261 = vpop.f32.mrf.mxu0
        %v8262 = vadd.f32 %v8189, %v8261
        %v8263 = vpop.f32.mrf.mxu0
        %v8264 = vadd.f32 %v8191, %v8263
        %8265 = vmatmul.bf16.gmra.mxu0 %v7558
        %v8266 = vpop.f32.mrf.mxu0
        %v8267 = vadd.f32 %v8194, %v8266
        %v8268 = vpop.f32.mrf.mxu0
        %v8269 = vadd.f32 %v8196, %v8268
        %8270 = vmatmul.bf16.gmra.mxu0 %v7561
        %v8271 = vpop.f32.mrf.mxu0
        %v8272 = vadd.f32 %v8199, %v8271
        %v8273 = vpop.f32.mrf.mxu0
        %v8274 = vadd.f32 %v8201, %v8273
        %8275 = vmatmul.bf16.gmra.mxu0 %v7564
        %v8276 = vpop.f32.mrf.mxu0
        %v8277 = vadd.f32 %v8204, %v8276
        %v8278 = vpop.f32.mrf.mxu0
        %v8279 = vadd.f32 %v8206, %v8278
        %8280 = vmatmul.bf16.gmra.mxu0 %v7567
        %v8281 = vpop.f32.mrf.mxu0
        %v8282 = vadd.f32 %v8209, %v8281
        %v8283 = vpop.f32.mrf.mxu0
        %v8284 = vadd.f32 %v8211, %v8283
        %8285 = vmatmul.bf16.gmra.mxu0 %v7570
        %v8286 = vpop.f32.mrf.mxu0
        %v8287 = vadd.f32 %v8214, %v8286
        %v8288 = vpop.f32.mrf.mxu0
        %v8289 = vadd.f32 %v8216, %v8288
        %8290 = vmatmul.bf16.gmra.mxu0 %v7573
        %v8291 = vpop.f32.mrf.mxu0
        %v8292 = vadd.f32 %v8219, %v8291
        %v8293 = vpop.f32.mrf.mxu0
        %v8294 = vadd.f32 %v8221, %v8293
        %8295 = vmatmul.bf16.gmra.mxu0 %v7576
        %v8296 = vpop.f32.mrf.mxu0
        %v8297 = vadd.f32 %v8224, %v8296
        %v8298 = vpop.f32.mrf.mxu0
        %v8299 = vadd.f32 %v8226, %v8298
        %8300 = vmatmul.bf16.gmra.mxu0 %v7579
        %v8301 = vpop.f32.mrf.mxu0
        %v8302 = vadd.f32 %v8229, %v8301
        %v8303 = vpop.f32.mrf.mxu0
        %v8304 = vadd.f32 %v8231, %v8303
        %8305 = vmatmul.bf16.gmra.mxu0 %v7582
        %v8306 = vpop.f32.mrf.mxu0
        %v8307 = vadd.f32 %v8234, %v8306
        %v8308 = vpop.f32.mrf.mxu0
        %v8309 = vadd.f32 %v8236, %v8308
        %8310 = vmatmul.bf16.gmra.mxu0 %v7585
        %v8311 = vpop.f32.mrf.mxu0
        %v8312 = vadd.f32 %v8239, %v8311
        %v8313 = vpop.f32.mrf.mxu0
        %v8314 = vadd.f32 %v8241, %v8313
        %8315 = vmatmul.bf16.gmra.mxu0 %v7588
        %v8316 = vpop.f32.mrf.mxu0
        %v8317 = vadd.f32 %v8244, %v8316
        %v8318 = vpop.f32.mrf.mxu0
        %8319 = vdwg.mxu0
        %8345 = vrot.lane.b32.xlu0 %v7892, 104
        %v8346 = vpop.permute.xlu0 %8345
        %8347 = vrot.lane.b32.xlu0 %v7894, 104
        %v8348 = vpop.permute.xlu0 %8347
        %8349 = vrot.lane.b32.xlu0 %v7897, 104
        %v8350 = vpop.permute.xlu0 %8349
        %8351 = vrot.lane.b32.xlu0 %v7899, 104
        %v8352 = vpop.permute.xlu0 %8351
        %8353 = vrot.lane.b32.xlu0 %v7902, 104
        %v8354 = vpop.permute.xlu0 %8353
        %8355 = vrot.lane.b32.xlu0 %v7904, 104
        %v8356 = vpop.permute.xlu0 %8355
        %8357 = vrot.lane.b32.xlu0 %v7907, 104
        %v8358 = vpop.permute.xlu0 %8357
        %8359 = vrot.lane.b32.xlu0 %v7909, 104
        %v8360 = vpop.permute.xlu0 %8359
        %8361 = vrot.lane.b32.xlu0 %v7912, 104
        %v8362 = vpop.permute.xlu0 %8361
        %8363 = vrot.lane.b32.xlu0 %v7914, 104
        %v8364 = vpop.permute.xlu0 %8363
        %8365 = vrot.lane.b32.xlu0 %v7917, 104
        %v8366 = vpop.permute.xlu0 %8365
        %8367 = vrot.lane.b32.xlu0 %v7919, 104
        %v8368 = vpop.permute.xlu0 %8367
        %8369 = vrot.lane.b32.xlu0 %v7922, 104
        %v8370 = vpop.permute.xlu0 %8369
        %8371 = vrot.lane.b32.xlu0 %v7924, 104
        %v8372 = vpop.permute.xlu0 %8371
        %8373 = vrot.lane.b32.xlu0 %v7927, 104
        %v8374 = vpop.permute.xlu0 %8373
        %8375 = vrot.lane.b32.xlu0 %v7929, 104
        %v8376 = vpop.permute.xlu0 %8375
        %8377 = vrot.lane.b32.xlu0 %v7932, 104
        %v8378 = vpop.permute.xlu0 %8377
        %8379 = vrot.lane.b32.xlu0 %v7934, 104
        %v8380 = vpop.permute.xlu0 %8379
        %8381 = vrot.lane.b32.xlu0 %v7937, 104
        %v8382 = vpop.permute.xlu0 %8381
        %8383 = vrot.lane.b32.xlu0 %v7939, 104
        %v8384 = vpop.permute.xlu0 %8383
        %8385 = vrot.lane.b32.xlu0 %v7942, 104
        %v8386 = vpop.permute.xlu0 %8385
        %8387 = vrot.lane.b32.xlu0 %v7944, 104
        %v8388 = vpop.permute.xlu0 %8387
        %8389 = vrot.lane.b32.xlu0 %v7947, 104
        %v8390 = vpop.permute.xlu0 %8389
        %8391 = vrot.lane.b32.xlu0 %v7949, 104
        %v8392 = vpop.permute.xlu0 %8391
        %8393 = vrot.lane.b32.xlu0 %v7952, 104
        %v8394 = vpop.permute.xlu0 %8393
        %v8420 = vmax.f32 %v7892, %v8346
        %v8421 = vmax.f32 %v7894, %v8348
        %v8422 = vmax.f32 %v7897, %v8350
        %v8423 = vmax.f32 %v7899, %v8352
        %v8424 = vmax.f32 %v7902, %v8354
        %v8425 = vmax.f32 %v7904, %v8356
        %v8426 = vmax.f32 %v7907, %v8358
        %v8427 = vmax.f32 %v7909, %v8360
        %v8428 = vmax.f32 %v7912, %v8362
        %v8429 = vmax.f32 %v7914, %v8364
        %v8430 = vmax.f32 %v7917, %v8366
        %v8431 = vmax.f32 %v7919, %v8368
        %v8432 = vmax.f32 %v7922, %v8370
        %v8433 = vmax.f32 %v7924, %v8372
        %v8434 = vmax.f32 %v7927, %v8374
        %v8435 = vmax.f32 %v7929, %v8376
        %v8436 = vmax.f32 %v7932, %v8378
        %v8437 = vmax.f32 %v7934, %v8380
        %v8438 = vmax.f32 %v7937, %v8382
        %v8439 = vmax.f32 %v7939, %v8384
        %v8440 = vmax.f32 %v7942, %v8386
        %v8441 = vmax.f32 %v7944, %v8388
        %v8442 = vmax.f32 %v7947, %v8390
        %v8443 = vmax.f32 %v7949, %v8392
        %v8444 = vmax.f32 %v7952, %v8394
        %8470 = vrot.lane.b32.xlu0 %v8257, 104
        %v8471 = vpop.permute.xlu0 %8470
        %8472 = vrot.lane.b32.xlu0 %v8259, 104
        %v8473 = vpop.permute.xlu0 %8472
        %8474 = vrot.lane.b32.xlu0 %v8262, 104
        %v8475 = vpop.permute.xlu0 %8474
        %8476 = vrot.lane.b32.xlu0 %v8264, 104
        %v8477 = vpop.permute.xlu0 %8476
        %8478 = vrot.lane.b32.xlu0 %v8267, 104
        %v8479 = vpop.permute.xlu0 %8478
        %8480 = vrot.lane.b32.xlu0 %v8269, 104
        %v8481 = vpop.permute.xlu0 %8480
        %8482 = vrot.lane.b32.xlu0 %v8272, 104
        %v8483 = vpop.permute.xlu0 %8482
        %8484 = vrot.lane.b32.xlu0 %v8274, 104
        %v8485 = vpop.permute.xlu0 %8484
        %8486 = vrot.lane.b32.xlu0 %v8277, 104
        %v8487 = vpop.permute.xlu0 %8486
        %8488 = vrot.lane.b32.xlu0 %v8279, 104
        %v8489 = vpop.permute.xlu0 %8488
        %8490 = vrot.lane.b32.xlu0 %v8282, 104
        %v8491 = vpop.permute.xlu0 %8490
        %8492 = vrot.lane.b32.xlu0 %v8284, 104
        %v8493 = vpop.permute.xlu0 %8492
        %8494 = vrot.lane.b32.xlu0 %v8287, 104
        %v8495 = vpop.permute.xlu0 %8494
        %8496 = vrot.lane.b32.xlu0 %v8289, 104
        %v8497 = vpop.permute.xlu0 %8496
        %8498 = vrot.lane.b32.xlu0 %v8292, 104
        %v8499 = vpop.permute.xlu0 %8498
        %8500 = vrot.lane.b32.xlu0 %v8294, 104
        %v8501 = vpop.permute.xlu0 %8500
        %8502 = vrot.lane.b32.xlu0 %v8297, 104
        %v8503 = vpop.permute.xlu0 %8502
        %8504 = vrot.lane.b32.xlu0 %v8299, 104
        %v8505 = vpop.permute.xlu0 %8504
        %8506 = vrot.lane.b32.xlu0 %v8302, 104
        %v8507 = vpop.permute.xlu0 %8506
        %8508 = vrot.lane.b32.xlu0 %v8304, 104
        %v8509 = vpop.permute.xlu0 %8508
        %8510 = vrot.lane.b32.xlu0 %v8307, 104
        %v8511 = vpop.permute.xlu0 %8510
        %8512 = vrot.lane.b32.xlu0 %v8309, 104
        %v8513 = vpop.permute.xlu0 %8512
        %8514 = vrot.lane.b32.xlu0 %v8312, 104
        %v8515 = vpop.permute.xlu0 %8514
        %8516 = vrot.lane.b32.xlu0 %v8314, 104
        %v8517 = vpop.permute.xlu0 %8516
        %8518 = vrot.lane.b32.xlu0 %v8317, 104
        %v8519 = vpop.permute.xlu0 %8518
        %vm8520 = vcmask 850944
        %v8521 = vsel %vm8520, %v8346, %v8471
        %v8522 = vsel %vm8520, %v8348, %v8473
        %v8523 = vsel %vm8520, %v8350, %v8475
        %v8524 = vsel %vm8520, %v8352, %v8477
        %v8525 = vsel %vm8520, %v8354, %v8479
        %v8526 = vsel %vm8520, %v8356, %v8481
        %v8527 = vsel %vm8520, %v8358, %v8483
        %v8528 = vsel %vm8520, %v8360, %v8485
        %v8529 = vsel %vm8520, %v8362, %v8487
        %v8530 = vsel %vm8520, %v8364, %v8489
        %v8531 = vsel %vm8520, %v8366, %v8491
        %v8532 = vsel %vm8520, %v8368, %v8493
        %v8533 = vsel %vm8520, %v8370, %v8495
        %v8534 = vsel %vm8520, %v8372, %v8497
        %v8535 = vsel %vm8520, %v8374, %v8499
        %v8536 = vsel %vm8520, %v8376, %v8501
        %v8537 = vsel %vm8520, %v8378, %v8503
        %v8538 = vsel %vm8520, %v8380, %v8505
        %v8539 = vsel %vm8520, %v8382, %v8507
        %v8540 = vsel %vm8520, %v8384, %v8509
        %v8541 = vsel %vm8520, %v8386, %v8511
        %v8542 = vsel %vm8520, %v8388, %v8513
        %v8543 = vsel %vm8520, %v8390, %v8515
        %v8544 = vsel %vm8520, %v8392, %v8517
        %v8545 = vsel %vm8520, %v8394, %v8519
        %v8571 = vmax.f32 %v7892, %v8521
        %v8572 = vmax.f32 %v7894, %v8522
        %v8573 = vmax.f32 %v7897, %v8523
        %v8574 = vmax.f32 %v7899, %v8524
        %v8575 = vmax.f32 %v7902, %v8525
        %v8576 = vmax.f32 %v7904, %v8526
        %v8577 = vmax.f32 %v7907, %v8527
        %v8578 = vmax.f32 %v7909, %v8528
        %v8579 = vmax.f32 %v7912, %v8529
        %v8580 = vmax.f32 %v7914, %v8530
        %v8581 = vmax.f32 %v7917, %v8531
        %v8582 = vmax.f32 %v7919, %v8532
        %v8583 = vmax.f32 %v7922, %v8533
        %v8584 = vmax.f32 %v7924, %v8534
        %v8585 = vmax.f32 %v7927, %v8535
        %v8586 = vmax.f32 %v7929, %v8536
        %v8587 = vmax.f32 %v7932, %v8537
        %v8588 = vmax.f32 %v7934, %v8538
        %v8589 = vmax.f32 %v7937, %v8539
        %v8590 = vmax.f32 %v7939, %v8540
        %v8591 = vmax.f32 %v7942, %v8541
        %v8592 = vmax.f32 %v7944, %v8542
        %v8593 = vmax.f32 %v7947, %v8543
        %v8594 = vmax.f32 %v7949, %v8544
        %v8595 = vmax.f32 %v7952, %v8545
        %v8621 = vmax.f32 %v8257, %v8471
        %v8622 = vmax.f32 %v8259, %v8473
        %v8623 = vmax.f32 %v8262, %v8475
        %v8624 = vmax.f32 %v8264, %v8477
        %v8625 = vmax.f32 %v8267, %v8479
        %v8626 = vmax.f32 %v8269, %v8481
        %v8627 = vmax.f32 %v8272, %v8483
        %v8628 = vmax.f32 %v8274, %v8485
        %v8629 = vmax.f32 %v8277, %v8487
        %v8630 = vmax.f32 %v8279, %v8489
        %v8631 = vmax.f32 %v8282, %v8491
        %v8632 = vmax.f32 %v8284, %v8493
        %v8633 = vmax.f32 %v8287, %v8495
        %v8634 = vmax.f32 %v8289, %v8497
        %v8635 = vmax.f32 %v8292, %v8499
        %v8636 = vmax.f32 %v8294, %v8501
        %v8637 = vmax.f32 %v8297, %v8503
        %v8638 = vmax.f32 %v8299, %v8505
        %v8639 = vmax.f32 %v8302, %v8507
        %v8640 = vmax.f32 %v8304, %v8509
        %v8641 = vmax.f32 %v8307, %v8511
        %v8642 = vmax.f32 %v8309, %v8513
        %v8643 = vmax.f32 %v8312, %v8515
        %v8644 = vmax.f32 %v8314, %v8517
        %v8645 = vmax.f32 %v8317, %v8519
        %8671 = vrot.lane.b32.xlu0 %v8420, 80
        %v8672 = vpop.permute.xlu0 %8671
        %8673 = vrot.lane.b32.xlu0 %v8421, 80
        %v8674 = vpop.permute.xlu0 %8673
        %8675 = vrot.lane.b32.xlu0 %v8422, 80
        %v8676 = vpop.permute.xlu0 %8675
        %8677 = vrot.lane.b32.xlu0 %v8423, 80
        %v8678 = vpop.permute.xlu0 %8677
        %8679 = vrot.lane.b32.xlu0 %v8424, 80
        %v8680 = vpop.permute.xlu0 %8679
        %8681 = vrot.lane.b32.xlu0 %v8425, 80
        %v8682 = vpop.permute.xlu0 %8681
        %8683 = vrot.lane.b32.xlu0 %v8426, 80
        %v8684 = vpop.permute.xlu0 %8683
        %8685 = vrot.lane.b32.xlu0 %v8427, 80
        %v8686 = vpop.permute.xlu0 %8685
        %8687 = vrot.lane.b32.xlu0 %v8428, 80
        %v8688 = vpop.permute.xlu0 %8687
        %8689 = vrot.lane.b32.xlu0 %v8429, 80
        %v8690 = vpop.permute.xlu0 %8689
        %8691 = vrot.lane.b32.xlu0 %v8430, 80
        %v8692 = vpop.permute.xlu0 %8691
        %8693 = vrot.lane.b32.xlu0 %v8431, 80
        %v8694 = vpop.permute.xlu0 %8693
        %8695 = vrot.lane.b32.xlu0 %v8432, 80
        %v8696 = vpop.permute.xlu0 %8695
        %8697 = vrot.lane.b32.xlu0 %v8433, 80
        %v8698 = vpop.permute.xlu0 %8697
        %8699 = vrot.lane.b32.xlu0 %v8434, 80
        %v8700 = vpop.permute.xlu0 %8699
        %8701 = vrot.lane.b32.xlu0 %v8435, 80
        %v8702 = vpop.permute.xlu0 %8701
        %8703 = vrot.lane.b32.xlu0 %v8436, 80
        %v8704 = vpop.permute.xlu0 %8703
        %8705 = vrot.lane.b32.xlu0 %v8437, 80
        %v8706 = vpop.permute.xlu0 %8705
        %8707 = vrot.lane.b32.xlu0 %v8438, 80
        %v8708 = vpop.permute.xlu0 %8707
        %8709 = vrot.lane.b32.xlu0 %v8439, 80
        %v8710 = vpop.permute.xlu0 %8709
        %8711 = vrot.lane.b32.xlu0 %v8440, 80
        %v8712 = vpop.permute.xlu0 %8711
        %8713 = vrot.lane.b32.xlu0 %v8441, 80
        %v8714 = vpop.permute.xlu0 %8713
        %8715 = vrot.lane.b32.xlu0 %v8442, 80
        %v8716 = vpop.permute.xlu0 %8715
        %8717 = vrot.lane.b32.xlu0 %v8443, 80
        %v8718 = vpop.permute.xlu0 %8717
        %8719 = vrot.lane.b32.xlu0 %v8444, 80
        %v8720 = vpop.permute.xlu0 %8719
        %v8746 = vmax.f32 %v8420, %v8672
        %v8747 = vmax.f32 %v8421, %v8674
        %v8748 = vmax.f32 %v8422, %v8676
        %v8749 = vmax.f32 %v8423, %v8678
        %v8750 = vmax.f32 %v8424, %v8680
        %v8751 = vmax.f32 %v8425, %v8682
        %v8752 = vmax.f32 %v8426, %v8684
        %v8753 = vmax.f32 %v8427, %v8686
        %v8754 = vmax.f32 %v8428, %v8688
        %v8755 = vmax.f32 %v8429, %v8690
        %v8756 = vmax.f32 %v8430, %v8692
        %v8757 = vmax.f32 %v8431, %v8694
        %v8758 = vmax.f32 %v8432, %v8696
        %v8759 = vmax.f32 %v8433, %v8698
        %v8760 = vmax.f32 %v8434, %v8700
        %v8761 = vmax.f32 %v8435, %v8702
        %v8762 = vmax.f32 %v8436, %v8704
        %v8763 = vmax.f32 %v8437, %v8706
        %v8764 = vmax.f32 %v8438, %v8708
        %v8765 = vmax.f32 %v8439, %v8710
        %v8766 = vmax.f32 %v8440, %v8712
        %v8767 = vmax.f32 %v8441, %v8714
        %v8768 = vmax.f32 %v8442, %v8716
        %v8769 = vmax.f32 %v8443, %v8718
        %v8770 = vmax.f32 %v8444, %v8720
        %8796 = vrot.lane.b32.xlu0 %v8621, 80
        %v8797 = vpop.permute.xlu0 %8796
        %8798 = vrot.lane.b32.xlu0 %v8622, 80
        %v8799 = vpop.permute.xlu0 %8798
        %8800 = vrot.lane.b32.xlu0 %v8623, 80
        %v8801 = vpop.permute.xlu0 %8800
        %8802 = vrot.lane.b32.xlu0 %v8624, 80
        %v8803 = vpop.permute.xlu0 %8802
        %8804 = vrot.lane.b32.xlu0 %v8625, 80
        %v8805 = vpop.permute.xlu0 %8804
        %8806 = vrot.lane.b32.xlu0 %v8626, 80
        %v8807 = vpop.permute.xlu0 %8806
        %8808 = vrot.lane.b32.xlu0 %v8627, 80
        %v8809 = vpop.permute.xlu0 %8808
        %8810 = vrot.lane.b32.xlu0 %v8628, 80
        %v8811 = vpop.permute.xlu0 %8810
        %8812 = vrot.lane.b32.xlu0 %v8629, 80
        %v8813 = vpop.permute.xlu0 %8812
        %8814 = vrot.lane.b32.xlu0 %v8630, 80
        %v8815 = vpop.permute.xlu0 %8814
        %8816 = vrot.lane.b32.xlu0 %v8631, 80
        %v8817 = vpop.permute.xlu0 %8816
        %8818 = vrot.lane.b32.xlu0 %v8632, 80
        %v8819 = vpop.permute.xlu0 %8818
        %8820 = vrot.lane.b32.xlu0 %v8633, 80
        %v8821 = vpop.permute.xlu0 %8820
        %8822 = vrot.lane.b32.xlu0 %v8634, 80
        %v8823 = vpop.permute.xlu0 %8822
        %8824 = vrot.lane.b32.xlu0 %v8635, 80
        %v8825 = vpop.permute.xlu0 %8824
        %8826 = vrot.lane.b32.xlu0 %v8636, 80
        %v8827 = vpop.permute.xlu0 %8826
        %8828 = vrot.lane.b32.xlu0 %v8637, 80
        %v8829 = vpop.permute.xlu0 %8828
        %8830 = vrot.lane.b32.xlu0 %v8638, 80
        %v8831 = vpop.permute.xlu0 %8830
        %8832 = vrot.lane.b32.xlu0 %v8639, 80
        %v8833 = vpop.permute.xlu0 %8832
        %8834 = vrot.lane.b32.xlu0 %v8640, 80
        %v8835 = vpop.permute.xlu0 %8834
        %8836 = vrot.lane.b32.xlu0 %v8641, 80
        %v8837 = vpop.permute.xlu0 %8836
        %8838 = vrot.lane.b32.xlu0 %v8642, 80
        %v8839 = vpop.permute.xlu0 %8838
        %8840 = vrot.lane.b32.xlu0 %v8643, 80
        %v8841 = vpop.permute.xlu0 %8840
        %8842 = vrot.lane.b32.xlu0 %v8644, 80
        %v8843 = vpop.permute.xlu0 %8842
        %8844 = vrot.lane.b32.xlu0 %v8645, 80
        %v8845 = vpop.permute.xlu0 %8844
        %v8871 = vmax.f32 %v8571, %v8797
        %v8872 = vmax.f32 %v8572, %v8799
        %v8873 = vmax.f32 %v8573, %v8801
        %v8874 = vmax.f32 %v8574, %v8803
        %v8875 = vmax.f32 %v8575, %v8805
        %v8876 = vmax.f32 %v8576, %v8807
        %v8877 = vmax.f32 %v8577, %v8809
        %v8878 = vmax.f32 %v8578, %v8811
        %v8879 = vmax.f32 %v8579, %v8813
        %v8880 = vmax.f32 %v8580, %v8815
        %v8881 = vmax.f32 %v8581, %v8817
        %v8882 = vmax.f32 %v8582, %v8819
        %v8883 = vmax.f32 %v8583, %v8821
        %v8884 = vmax.f32 %v8584, %v8823
        %v8885 = vmax.f32 %v8585, %v8825
        %v8886 = vmax.f32 %v8586, %v8827
        %v8887 = vmax.f32 %v8587, %v8829
        %v8888 = vmax.f32 %v8588, %v8831
        %v8889 = vmax.f32 %v8589, %v8833
        %v8890 = vmax.f32 %v8590, %v8835
        %v8891 = vmax.f32 %v8591, %v8837
        %v8892 = vmax.f32 %v8592, %v8839
        %v8893 = vmax.f32 %v8593, %v8841
        %v8894 = vmax.f32 %v8594, %v8843
        %v8895 = vmax.f32 %v8595, %v8845
        %8921 = vrot.lane.b32.xlu0 %v8871, 32
        %v8922 = vpop.permute.xlu0 %8921
        %8923 = vrot.lane.b32.xlu0 %v8872, 32
        %v8924 = vpop.permute.xlu0 %8923
        %8925 = vrot.lane.b32.xlu0 %v8873, 32
        %v8926 = vpop.permute.xlu0 %8925
        %8927 = vrot.lane.b32.xlu0 %v8874, 32
        %v8928 = vpop.permute.xlu0 %8927
        %8929 = vrot.lane.b32.xlu0 %v8875, 32
        %v8930 = vpop.permute.xlu0 %8929
        %8931 = vrot.lane.b32.xlu0 %v8876, 32
        %v8932 = vpop.permute.xlu0 %8931
        %8933 = vrot.lane.b32.xlu0 %v8877, 32
        %v8934 = vpop.permute.xlu0 %8933
        %8935 = vrot.lane.b32.xlu0 %v8878, 32
        %v8936 = vpop.permute.xlu0 %8935
        %8937 = vrot.lane.b32.xlu0 %v8879, 32
        %v8938 = vpop.permute.xlu0 %8937
        %8939 = vrot.lane.b32.xlu0 %v8880, 32
        %v8940 = vpop.permute.xlu0 %8939
        %8941 = vrot.lane.b32.xlu0 %v8881, 32
        %v8942 = vpop.permute.xlu0 %8941
        %8943 = vrot.lane.b32.xlu0 %v8882, 32
        %v8944 = vpop.permute.xlu0 %8943
        %8945 = vrot.lane.b32.xlu0 %v8883, 32
        %v8946 = vpop.permute.xlu0 %8945
        %8947 = vrot.lane.b32.xlu0 %v8884, 32
        %v8948 = vpop.permute.xlu0 %8947
        %8949 = vrot.lane.b32.xlu0 %v8885, 32
        %v8950 = vpop.permute.xlu0 %8949
        %8951 = vrot.lane.b32.xlu0 %v8886, 32
        %v8952 = vpop.permute.xlu0 %8951
        %8953 = vrot.lane.b32.xlu0 %v8887, 32
        %v8954 = vpop.permute.xlu0 %8953
        %8955 = vrot.lane.b32.xlu0 %v8888, 32
        %v8956 = vpop.permute.xlu0 %8955
        %8957 = vrot.lane.b32.xlu0 %v8889, 32
        %v8958 = vpop.permute.xlu0 %8957
        %8959 = vrot.lane.b32.xlu0 %v8890, 32
        %v8960 = vpop.permute.xlu0 %8959
        %8961 = vrot.lane.b32.xlu0 %v8891, 32
        %v8962 = vpop.permute.xlu0 %8961
        %8963 = vrot.lane.b32.xlu0 %v8892, 32
        %v8964 = vpop.permute.xlu0 %8963
        %8965 = vrot.lane.b32.xlu0 %v8893, 32
        %v8966 = vpop.permute.xlu0 %8965
        %8967 = vrot.lane.b32.xlu0 %v8894, 32
        %v8968 = vpop.permute.xlu0 %8967
        %8969 = vrot.lane.b32.xlu0 %v8895, 32
        %v8970 = vpop.permute.xlu0 %8969
        %v8996 = vmax.f32 %v8746, %v8922
        %v8997 = vmax.f32 %v8747, %v8924
        %v8998 = vmax.f32 %v8748, %v8926
        %v8999 = vmax.f32 %v8749, %v8928
        %v9000 = vmax.f32 %v8750, %v8930
        %v9001 = vmax.f32 %v8751, %v8932
        %v9002 = vmax.f32 %v8752, %v8934
        %v9003 = vmax.f32 %v8753, %v8936
        %v9004 = vmax.f32 %v8754, %v8938
        %v9005 = vmax.f32 %v8755, %v8940
        %v9006 = vmax.f32 %v8756, %v8942
        %v9007 = vmax.f32 %v8757, %v8944
        %v9008 = vmax.f32 %v8758, %v8946
        %v9009 = vmax.f32 %v8759, %v8948
        %v9010 = vmax.f32 %v8760, %v8950
        %v9011 = vmax.f32 %v8761, %v8952
        %v9012 = vmax.f32 %v8762, %v8954
        %v9013 = vmax.f32 %v8763, %v8956
        %v9014 = vmax.f32 %v8764, %v8958
        %v9015 = vmax.f32 %v8765, %v8960
        %v9016 = vmax.f32 %v8766, %v8962
        %v9017 = vmax.f32 %v8767, %v8964
        %v9018 = vmax.f32 %v8768, %v8966
        %v9019 = vmax.f32 %v8769, %v8968
        %v9020 = vmax.f32 %v8770, %v8970
        %v9021 = vld [vmem:[%s4] sm:$0x1]
        %v9023 = vperm.slane %v9021, 0
        %v9025 = vadd.f32 %v8996, %v9023
        %v9026 = vadd.f32 %v8997, %v9023
        %v9027 = vadd.f32 %v8998, %v9023
        %v9028 = vadd.f32 %v8999, %v9023
        %v9029 = vadd.f32 %v9000, %v9023
        %v9030 = vadd.f32 %v9001, %v9023
        %v9031 = vadd.f32 %v9002, %v9023
        %v9032 = vadd.f32 %v9003, %v9023
        %v9033 = vadd.f32 %v9004, %v9023
        %v9034 = vadd.f32 %v9005, %v9023
        %v9035 = vadd.f32 %v9006, %v9023
        %v9036 = vadd.f32 %v9007, %v9023
        %v9037 = vadd.f32 %v9008, %v9023
        %v9038 = vadd.f32 %v9009, %v9023
        %v9039 = vadd.f32 %v9010, %v9023
        %v9040 = vadd.f32 %v9011, %v9023
        %v9041 = vadd.f32 %v9012, %v9023
        %v9042 = vadd.f32 %v9013, %v9023
        %v9043 = vadd.f32 %v9014, %v9023
        %v9044 = vadd.f32 %v9015, %v9023
        %v9045 = vadd.f32 %v9016, %v9023
        %v9046 = vadd.f32 %v9017, %v9023
        %v9047 = vadd.f32 %v9018, %v9023
        %v9048 = vadd.f32 %v9019, %v9023
        %v9049 = vadd.f32 %v9020, %v9023
        %v9050 = vmax.f32 %v9025, 0.0
        %v9051 = vmax.f32 %v9026, 0.0
        %v9052 = vmax.f32 %v9027, 0.0
        %v9053 = vmax.f32 %v9028, 0.0
        %v9054 = vmax.f32 %v9029, 0.0
        %v9055 = vmax.f32 %v9030, 0.0
        %v9056 = vmax.f32 %v9031, 0.0
        %v9057 = vmax.f32 %v9032, 0.0
        %v9058 = vmax.f32 %v9033, 0.0
        %v9059 = vmax.f32 %v9034, 0.0
        %v9060 = vmax.f32 %v9035, 0.0
        %v9061 = vmax.f32 %v9036, 0.0
        %v9062 = vmax.f32 %v9037, 0.0
        %v9063 = vmax.f32 %v9038, 0.0
        %v9064 = vmax.f32 %v9039, 0.0
        %v9065 = vmax.f32 %v9040, 0.0
        %v9066 = vmax.f32 %v9041, 0.0
        %v9067 = vmax.f32 %v9042, 0.0
        %v9068 = vmax.f32 %v9043, 0.0
        %v9069 = vmax.f32 %v9044, 0.0
        %v9070 = vmax.f32 %v9045, 0.0
        %v9071 = vmax.f32 %v9046, 0.0
        %v9072 = vmax.f32 %v9047, 0.0
        %v9073 = vmax.f32 %v9048, 0.0
        %v9074 = vmax.f32 %v9049, 0.0
        %v9075 = vld [vmem:[%s5] sm:$0xff]
        %v9076 = vld [vmem:[%s5 + $0x8] sm:$0xff]
        %v9077 = vld [vmem:[%s5 + $0x10] sm:$0xff]
        %s9078 = scalar_lea.vmem %s5, 24
        %v9079 = vld [vmem:[%s9078] sm:$0xff]
        %v9080 = vld [vmem:[%s9078 + $0x8] sm:$0xff]
        %v9081 = vld [vmem:[%s9078 + $0x10] sm:$0xff]
        %vm9082 = vcmask 195584
        %v9084 = vsel %vm9082, %v9051, 0
        %9086 = vmatpush.msra.mxu0 0.0
        %9087 = vmatpush.msra.mxu0 0.0
        %9088 = vmatpush.msra.mxu0 0.0
        %9089 = vmatpush.msra.mxu0 0.0
        %9090 = vmatpush.msra.mxu0 0.0
        %9091 = vmatpush.msra.mxu0 0.0
        %9092 = vmatpush.msra.mxu0 0.0
        %9093 = vmatpush.msra.mxu0 0.0
        %9094 = vmatpush.msra.mxu0 0.0
        %9095 = vmatpush.msra.mxu0 0.0
        %9096 = vmatpush.msra.mxu0 0.0
        %9097 = vmatpush.msra.mxu0 0.0
        %9098 = vmatpush.msra.mxu0 0.0
        %9099 = vmatpush.msra.mxu0 %v9081
        %9100 = vmatpush.msra.mxu0 %v9080
        %9101 = vmatpush.msra.mxu0 %v9079
        %9102 = vmatmul.f32.gmra.mxu0 %v9084
        %v9103 = vpop.f32.mrf.mxu0
        %v9104 = vadd.f32 0.0, %v9103
        %9105 = vdwg.mxu0
        %s9106 = scalar_lea.vmem %s5, 48
        %v9107 = vld [vmem:[%s9106] sm:$0xff]
        %v9108 = vld [vmem:[%s9106 + $0x8] sm:$0xff]
        %v9109 = vld [vmem:[%s9106 + $0x10] sm:$0xff]
        %s9110 = scalar_lea.vmem %s5, 72
        %v9111 = vld [vmem:[%s9110] sm:$0xff]
        %v9112 = vld [vmem:[%s9110 + $0x8] sm:$0xff]
        %v9113 = vld [vmem:[%s9110 + $0x10] sm:$0xff]
        %v9115 = vsel %vm9082, %v9053, 0
        %9117 = vmatpush.msra.mxu0 0.0
        %9118 = vmatpush.msra.mxu0 0.0
        %9119 = vmatpush.msra.mxu0 0.0
        %9120 = vmatpush.msra.mxu0 0.0
        %9121 = vmatpush.msra.mxu0 0.0
        %9122 = vmatpush.msra.mxu0 0.0
        %9123 = vmatpush.msra.mxu0 0.0
        %9124 = vmatpush.msra.mxu0 0.0
        %9125 = vmatpush.msra.mxu0 0.0
        %9126 = vmatpush.msra.mxu0 0.0
        %9127 = vmatpush.msra.mxu0 0.0
        %9128 = vmatpush.msra.mxu0 0.0
        %9129 = vmatpush.msra.mxu0 0.0
        %9130 = vmatpush.msra.mxu0 %v9113
        %9131 = vmatpush.msra.mxu0 %v9112
        %9132 = vmatpush.msra.mxu0 %v9111
        %9133 = vmatmul.f32.gmra.mxu0 %v9115
        %v9134 = vpop.f32.mrf.mxu0
        %v9135 = vadd.f32 0.0, %v9134
        %9136 = vdwg.mxu0
        %s9137 = scalar_lea.vmem %s5, 96
        %v9138 = vld [vmem:[%s9137] sm:$0xff]
        %v9139 = vld [vmem:[%s9137 + $0x8] sm:$0xff]
        %v9140 = vld [vmem:[%s9137 + $0x10] sm:$0xff]
        %s9141 = scalar_lea.vmem %s5, 120
        %v9142 = vld [vmem:[%s9141] sm:$0xff]
        %v9143 = vld [vmem:[%s9141 + $0x8] sm:$0xff]
        %v9144 = vld [vmem:[%s9141 + $0x10] sm:$0xff]
        %v9146 = vsel %vm9082, %v9055, 0
        %9148 = vmatpush.msra.mxu0 0.0
        %9149 = vmatpush.msra.mxu0 0.0
        %9150 = vmatpush.msra.mxu0 0.0
        %9151 = vmatpush.msra.mxu0 0.0
        %9152 = vmatpush.msra.mxu0 0.0
        %9153 = vmatpush.msra.mxu0 0.0
        %9154 = vmatpush.msra.mxu0 0.0
        %9155 = vmatpush.msra.mxu0 0.0
        %9156 = vmatpush.msra.mxu0 0.0
        %9157 = vmatpush.msra.mxu0 0.0
        %9158 = vmatpush.msra.mxu0 0.0
        %9159 = vmatpush.msra.mxu0 0.0
        %9160 = vmatpush.msra.mxu0 0.0
        %9161 = vmatpush.msra.mxu0 %v9144
        %9162 = vmatpush.msra.mxu0 %v9143
        %9163 = vmatpush.msra.mxu0 %v9142
        %9164 = vmatmul.f32.gmra.mxu0 %v9146
        %v9165 = vpop.f32.mrf.mxu0
        %v9166 = vadd.f32 0.0, %v9165
        %9167 = vdwg.mxu0
        %s9168 = scalar_lea.vmem %s5, 144
        %v9169 = vld [vmem:[%s9168] sm:$0xff]
        %v9170 = vld [vmem:[%s9168 + $0x8] sm:$0xff]
        %v9171 = vld [vmem:[%s9168 + $0x10] sm:$0xff]
        %s9172 = scalar_lea.vmem %s5, 168
        %v9173 = vld [vmem:[%s9172] sm:$0xff]
        %v9174 = vld [vmem:[%s9172 + $0x8] sm:$0xff]
        %v9175 = vld [vmem:[%s9172 + $0x10] sm:$0xff]
        %v9177 = vsel %vm9082, %v9057, 0
        %9179 = vmatpush.msra.mxu0 0.0
        %9180 = vmatpush.msra.mxu0 0.0
        %9181 = vmatpush.msra.mxu0 0.0
        %9182 = vmatpush.msra.mxu0 0.0
        %9183 = vmatpush.msra.mxu0 0.0
        %9184 = vmatpush.msra.mxu0 0.0
        %9185 = vmatpush.msra.mxu0 0.0
        %9186 = vmatpush.msra.mxu0 0.0
        %9187 = vmatpush.msra.mxu0 0.0
        %9188 = vmatpush.msra.mxu0 0.0
        %9189 = vmatpush.msra.mxu0 0.0
        %9190 = vmatpush.msra.mxu0 0.0
        %9191 = vmatpush.msra.mxu0 0.0
        %9192 = vmatpush.msra.mxu0 %v9175
        %9193 = vmatpush.msra.mxu0 %v9174
        %9194 = vmatpush.msra.mxu0 %v9173
        %9195 = vmatmul.f32.gmra.mxu0 %v9177
        %v9196 = vpop.f32.mrf.mxu0
        %v9197 = vadd.f32 0.0, %v9196
        %9198 = vdwg.mxu0
        %s9199 = scalar_lea.vmem %s5, 192
        %v9200 = vld [vmem:[%s9199] sm:$0xff]
        %v9201 = vld [vmem:[%s9199 + $0x8] sm:$0xff]
        %v9202 = vld [vmem:[%s9199 + $0x10] sm:$0xff]
        %s9203 = scalar_lea.vmem %s5, 216
        %v9204 = vld [vmem:[%s9203] sm:$0xff]
        %v9205 = vld [vmem:[%s9203 + $0x8] sm:$0xff]
        %v9206 = vld [vmem:[%s9203 + $0x10] sm:$0xff]
        %v9208 = vsel %vm9082, %v9059, 0
        %9210 = vmatpush.msra.mxu0 0.0
        %9211 = vmatpush.msra.mxu0 0.0
        %9212 = vmatpush.msra.mxu0 0.0
        %9213 = vmatpush.msra.mxu0 0.0
        %9214 = vmatpush.msra.mxu0 0.0
        %9215 = vmatpush.msra.mxu0 0.0
        %9216 = vmatpush.msra.mxu0 0.0
        %9217 = vmatpush.msra.mxu0 0.0
        %9218 = vmatpush.msra.mxu0 0.0
        %9219 = vmatpush.msra.mxu0 0.0
        %9220 = vmatpush.msra.mxu0 0.0
        %9221 = vmatpush.msra.mxu0 0.0
        %9222 = vmatpush.msra.mxu0 0.0
        %9223 = vmatpush.msra.mxu0 %v9206
        %9224 = vmatpush.msra.mxu0 %v9205
        %9225 = vmatpush.msra.mxu0 %v9204
        %9226 = vmatmul.f32.gmra.mxu0 %v9208
        %v9227 = vpop.f32.mrf.mxu0
        %v9228 = vadd.f32 0.0, %v9227
        %9229 = vdwg.mxu0
        %s9230 = scalar_lea.vmem %s5, 240
        %v9231 = vld [vmem:[%s9230] sm:$0xff]
        %v9232 = vld [vmem:[%s9230 + $0x8] sm:$0xff]
        %v9233 = vld [vmem:[%s9230 + $0x10] sm:$0xff]
        %s9234 = scalar_lea.vmem %s5, 264
        %v9235 = vld [vmem:[%s9234] sm:$0xff]
        %v9236 = vld [vmem:[%s9234 + $0x8] sm:$0xff]
        %v9237 = vld [vmem:[%s9234 + $0x10] sm:$0xff]
        %v9239 = vsel %vm9082, %v9061, 0
        %9241 = vmatpush.msra.mxu0 0.0
        %9242 = vmatpush.msra.mxu0 0.0
        %9243 = vmatpush.msra.mxu0 0.0
        %9244 = vmatpush.msra.mxu0 0.0
        %9245 = vmatpush.msra.mxu0 0.0
        %9246 = vmatpush.msra.mxu0 0.0
        %9247 = vmatpush.msra.mxu0 0.0
        %9248 = vmatpush.msra.mxu0 0.0
        %9249 = vmatpush.msra.mxu0 0.0
        %9250 = vmatpush.msra.mxu0 0.0
        %9251 = vmatpush.msra.mxu0 0.0
        %9252 = vmatpush.msra.mxu0 0.0
        %9253 = vmatpush.msra.mxu0 0.0
        %9254 = vmatpush.msra.mxu0 %v9237
        %9255 = vmatpush.msra.mxu0 %v9236
        %9256 = vmatpush.msra.mxu0 %v9235
        %9257 = vmatmul.f32.gmra.mxu0 %v9239
        %v9258 = vpop.f32.mrf.mxu0
        %v9259 = vadd.f32 0.0, %v9258
        %9260 = vdwg.mxu0
        %s9261 = scalar_lea.vmem %s5, 288
        %v9262 = vld [vmem:[%s9261] sm:$0xff]
        %v9263 = vld [vmem:[%s9261 + $0x8] sm:$0xff]
        %v9264 = vld [vmem:[%s9261 + $0x10] sm:$0xff]
        %s9265 = scalar_lea.vmem %s5, 312
        %v9266 = vld [vmem:[%s9265] sm:$0xff]
        %v9267 = vld [vmem:[%s9265 + $0x8] sm:$0xff]
        %v9268 = vld [vmem:[%s9265 + $0x10] sm:$0xff]
        %v9270 = vsel %vm9082, %v9063, 0
        %9272 = vmatpush.msra.mxu0 0.0
        %9273 = vmatpush.msra.mxu0 0.0
        %9274 = vmatpush.msra.mxu0 0.0
        %9275 = vmatpush.msra.mxu0 0.0
        %9276 = vmatpush.msra.mxu0 0.0
        %9277 = vmatpush.msra.mxu0 0.0
        %9278 = vmatpush.msra.mxu0 0.0
        %9279 = vmatpush.msra.mxu0 0.0
        %9280 = vmatpush.msra.mxu0 0.0
        %9281 = vmatpush.msra.mxu0 0.0
        %9282 = vmatpush.msra.mxu0 0.0
        %9283 = vmatpush.msra.mxu0 0.0
        %9284 = vmatpush.msra.mxu0 0.0
        %9285 = vmatpush.msra.mxu0 %v9268
        %9286 = vmatpush.msra.mxu0 %v9267
        %9287 = vmatpush.msra.mxu0 %v9266
        %9288 = vmatmul.f32.gmra.mxu0 %v9270
        %v9289 = vpop.f32.mrf.mxu0
        %v9290 = vadd.f32 0.0, %v9289
        %9291 = vdwg.mxu0
        %s9292 = scalar_lea.vmem %s5, 336
        %v9293 = vld [vmem:[%s9292] sm:$0xff]
        %v9294 = vld [vmem:[%s9292 + $0x8] sm:$0xff]
        %v9295 = vld [vmem:[%s9292 + $0x10] sm:$0xff]
        %s9296 = scalar_lea.vmem %s5, 360
        %v9297 = vld [vmem:[%s9296] sm:$0xff]
        %v9298 = vld [vmem:[%s9296 + $0x8] sm:$0xff]
        %v9299 = vld [vmem:[%s9296 + $0x10] sm:$0xff]
        %v9301 = vsel %vm9082, %v9065, 0
        %9303 = vmatpush.msra.mxu0 0.0
        %9304 = vmatpush.msra.mxu0 0.0
        %9305 = vmatpush.msra.mxu0 0.0
        %9306 = vmatpush.msra.mxu0 0.0
        %9307 = vmatpush.msra.mxu0 0.0
        %9308 = vmatpush.msra.mxu0 0.0
        %9309 = vmatpush.msra.mxu0 0.0
        %9310 = vmatpush.msra.mxu0 0.0
        %9311 = vmatpush.msra.mxu0 0.0
        %9312 = vmatpush.msra.mxu0 0.0
        %9313 = vmatpush.msra.mxu0 0.0
        %9314 = vmatpush.msra.mxu0 0.0
        %9315 = vmatpush.msra.mxu0 0.0
        %9316 = vmatpush.msra.mxu0 %v9299
        %9317 = vmatpush.msra.mxu0 %v9298
        %9318 = vmatpush.msra.mxu0 %v9297
        %9319 = vmatmul.f32.gmra.mxu0 %v9301
        %v9320 = vpop.f32.mrf.mxu0
        %v9321 = vadd.f32 0.0, %v9320
        %9322 = vdwg.mxu0
        %s9323 = scalar_lea.vmem %s5, 384
        %v9324 = vld [vmem:[%s9323] sm:$0xff]
        %v9325 = vld [vmem:[%s9323 + $0x8] sm:$0xff]
        %v9326 = vld [vmem:[%s9323 + $0x10] sm:$0xff]
        %s9327 = scalar_lea.vmem %s5, 408
        %v9328 = vld [vmem:[%s9327] sm:$0xff]
        %v9329 = vld [vmem:[%s9327 + $0x8] sm:$0xff]
        %v9330 = vld [vmem:[%s9327 + $0x10] sm:$0xff]
        %v9332 = vsel %vm9082, %v9067, 0
        %9334 = vmatpush.msra.mxu0 0.0
        %9335 = vmatpush.msra.mxu0 0.0
        %9336 = vmatpush.msra.mxu0 0.0
        %9337 = vmatpush.msra.mxu0 0.0
        %9338 = vmatpush.msra.mxu0 0.0
        %9339 = vmatpush.msra.mxu0 0.0
        %9340 = vmatpush.msra.mxu0 0.0
        %9341 = vmatpush.msra.mxu0 0.0
        %9342 = vmatpush.msra.mxu0 0.0
        %9343 = vmatpush.msra.mxu0 0.0
        %9344 = vmatpush.msra.mxu0 0.0
        %9345 = vmatpush.msra.mxu0 0.0
        %9346 = vmatpush.msra.mxu0 0.0
        %9347 = vmatpush.msra.mxu0 %v9330
        %9348 = vmatpush.msra.mxu0 %v9329
        %9349 = vmatpush.msra.mxu0 %v9328
        %9350 = vmatmul.f32.gmra.mxu0 %v9332
        %v9351 = vpop.f32.mrf.mxu0
        %v9352 = vadd.f32 0.0, %v9351
        %9353 = vdwg.mxu0
        %s9354 = scalar_lea.vmem %s5, 432
        %v9355 = vld [vmem:[%s9354] sm:$0xff]
        %v9356 = vld [vmem:[%s9354 + $0x8] sm:$0xff]
        %v9357 = vld [vmem:[%s9354 + $0x10] sm:$0xff]
        %s9358 = scalar_lea.vmem %s5, 456
        %v9359 = vld [vmem:[%s9358] sm:$0xff]
        %v9360 = vld [vmem:[%s9358 + $0x8] sm:$0xff]
        %v9361 = vld [vmem:[%s9358 + $0x10] sm:$0xff]
        %v9363 = vsel %vm9082, %v9069, 0
        %9365 = vmatpush.msra.mxu0 0.0
        %9366 = vmatpush.msra.mxu0 0.0
        %9367 = vmatpush.msra.mxu0 0.0
        %9368 = vmatpush.msra.mxu0 0.0
        %9369 = vmatpush.msra.mxu0 0.0
        %9370 = vmatpush.msra.mxu0 0.0
        %9371 = vmatpush.msra.mxu0 0.0
        %9372 = vmatpush.msra.mxu0 0.0
        %9373 = vmatpush.msra.mxu0 0.0
        %9374 = vmatpush.msra.mxu0 0.0
        %9375 = vmatpush.msra.mxu0 0.0
        %9376 = vmatpush.msra.mxu0 0.0
        %9377 = vmatpush.msra.mxu0 0.0
        %9378 = vmatpush.msra.mxu0 %v9361
        %9379 = vmatpush.msra.mxu0 %v9360
        %9380 = vmatpush.msra.mxu0 %v9359
        %9381 = vmatmul.f32.gmra.mxu0 %v9363
        %v9382 = vpop.f32.mrf.mxu0
        %v9383 = vadd.f32 0.0, %v9382
        %9384 = vdwg.mxu0
        %s9385 = scalar_lea.vmem %s5, 480
        %v9386 = vld [vmem:[%s9385] sm:$0xff]
        %v9387 = vld [vmem:[%s9385 + $0x8] sm:$0xff]
        %v9388 = vld [vmem:[%s9385 + $0x10] sm:$0xff]
        %s9389 = scalar_lea.vmem %s5, 504
        %v9390 = vld [vmem:[%s9389] sm:$0xff]
        %v9391 = vld [vmem:[%s9389 + $0x8] sm:$0xff]
        %v9392 = vld [vmem:[%s9389 + $0x10] sm:$0xff]
        %v9394 = vsel %vm9082, %v9071, 0
        %9396 = vmatpush.msra.mxu0 0.0
        %9397 = vmatpush.msra.mxu0 0.0
        %9398 = vmatpush.msra.mxu0 0.0
        %9399 = vmatpush.msra.mxu0 0.0
        %9400 = vmatpush.msra.mxu0 0.0
        %9401 = vmatpush.msra.mxu0 0.0
        %9402 = vmatpush.msra.mxu0 0.0
        %9403 = vmatpush.msra.mxu0 0.0
        %9404 = vmatpush.msra.mxu0 0.0
        %9405 = vmatpush.msra.mxu0 0.0
        %9406 = vmatpush.msra.mxu0 0.0
        %9407 = vmatpush.msra.mxu0 0.0
        %9408 = vmatpush.msra.mxu0 0.0
        %9409 = vmatpush.msra.mxu0 %v9392
        %9410 = vmatpush.msra.mxu0 %v9391
        %9411 = vmatpush.msra.mxu0 %v9390
        %9412 = vmatmul.f32.gmra.mxu0 %v9394
        %v9413 = vpop.f32.mrf.mxu0
        %v9414 = vadd.f32 0.0, %v9413
        %9415 = vdwg.mxu0
        %s9416 = scalar_lea.vmem %s5, 528
        %v9417 = vld [vmem:[%s9416] sm:$0xff]
        %v9418 = vld [vmem:[%s9416 + $0x8] sm:$0xff]
        %v9419 = vld [vmem:[%s9416 + $0x10] sm:$0xff]
        %s9420 = scalar_lea.vmem %s5, 552
        %v9421 = vld [vmem:[%s9420] sm:$0xff]
        %v9422 = vld [vmem:[%s9420 + $0x8] sm:$0xff]
        %v9423 = vld [vmem:[%s9420 + $0x10] sm:$0xff]
        %v9425 = vsel %vm9082, %v9073, 0
        %9427 = vmatpush.msra.mxu0 0.0
        %9428 = vmatpush.msra.mxu0 0.0
        %9429 = vmatpush.msra.mxu0 0.0
        %9430 = vmatpush.msra.mxu0 0.0
        %9431 = vmatpush.msra.mxu0 0.0
        %9432 = vmatpush.msra.mxu0 0.0
        %9433 = vmatpush.msra.mxu0 0.0
        %9434 = vmatpush.msra.mxu0 0.0
        %9435 = vmatpush.msra.mxu0 0.0
        %9436 = vmatpush.msra.mxu0 0.0
        %9437 = vmatpush.msra.mxu0 0.0
        %9438 = vmatpush.msra.mxu0 0.0
        %9439 = vmatpush.msra.mxu0 0.0
        %9440 = vmatpush.msra.mxu0 %v9423
        %9441 = vmatpush.msra.mxu0 %v9422
        %9442 = vmatpush.msra.mxu0 %v9421
        %9443 = vmatmul.f32.gmra.mxu0 %v9425
        %v9444 = vpop.f32.mrf.mxu0
        %v9445 = vadd.f32 0.0, %v9444
        %9446 = vdwg.mxu0
        %s9447 = scalar_lea.vmem %s5, 576
        %v9448 = vld [vmem:[%s9447] sm:$0xff]
        %v9449 = vld [vmem:[%s9447 + $0x8] sm:$0xff]
        %v9450 = vld [vmem:[%s9447 + $0x10] sm:$0xff]
        %v9452 = vsel %vm9082, %v9074, 0
        %9454 = vmatpush.msra.mxu0 0.0
        %9455 = vmatpush.msra.mxu0 0.0
        %9456 = vmatpush.msra.mxu0 0.0
        %9457 = vmatpush.msra.mxu0 0.0
        %9458 = vmatpush.msra.mxu0 0.0
        %9459 = vmatpush.msra.mxu0 0.0
        %9460 = vmatpush.msra.mxu0 0.0
        %9461 = vmatpush.msra.mxu0 0.0
        %9462 = vmatpush.msra.mxu0 0.0
        %9463 = vmatpush.msra.mxu0 0.0
        %9464 = vmatpush.msra.mxu0 0.0
        %9465 = vmatpush.msra.mxu0 0.0
        %9466 = vmatpush.msra.mxu0 0.0
        %9467 = vmatpush.msra.mxu0 %v9450
        %9468 = vmatpush.msra.mxu0 %v9449
        %9469 = vmatpush.msra.mxu0 %v9448
        %9470 = vmatmul.f32.gmra.mxu0 %v9452
        %v9471 = vpop.f32.mrf.mxu0
        %v9472 = vadd.f32 0.0, %v9471
        %9473 = vdwg.mxu0
        %v9475 = vsel %vm9082, %v9050, 0
        %9477 = vmatpush.msra.mxu0 0.0
        %9478 = vmatpush.msra.mxu0 0.0
        %9479 = vmatpush.msra.mxu0 0.0
        %9480 = vmatpush.msra.mxu0 0.0
        %9481 = vmatpush.msra.mxu0 0.0
        %9482 = vmatpush.msra.mxu0 0.0
        %9483 = vmatpush.msra.mxu0 0.0
        %9484 = vmatpush.msra.mxu0 0.0
        %9485 = vmatpush.msra.mxu0 0.0
        %9486 = vmatpush.msra.mxu0 0.0
        %9487 = vmatpush.msra.mxu0 0.0
        %9488 = vmatpush.msra.mxu0 0.0
        %9489 = vmatpush.msra.mxu0 0.0
        %9490 = vmatpush.msra.mxu0 %v9077
        %9491 = vmatpush.msra.mxu0 %v9076
        %9492 = vmatpush.msra.mxu0 %v9075
        %9493 = vmatmul.f32.gmra.mxu0 %v9475
        %v9494 = vpop.f32.mrf.mxu0
        %v9495 = vadd.f32 %v9104, %v9494
        %9496 = vdwg.mxu0
        %v9498 = vsel %vm9082, %v9052, 0
        %9500 = vmatpush.msra.mxu0 0.0
        %9501 = vmatpush.msra.mxu0 0.0
        %9502 = vmatpush.msra.mxu0 0.0
        %9503 = vmatpush.msra.mxu0 0.0
        %9504 = vmatpush.msra.mxu0 0.0
        %9505 = vmatpush.msra.mxu0 0.0
        %9506 = vmatpush.msra.mxu0 0.0
        %9507 = vmatpush.msra.mxu0 0.0
        %9508 = vmatpush.msra.mxu0 0.0
        %9509 = vmatpush.msra.mxu0 0.0
        %9510 = vmatpush.msra.mxu0 0.0
        %9511 = vmatpush.msra.mxu0 0.0
        %9512 = vmatpush.msra.mxu0 0.0
        %9513 = vmatpush.msra.mxu0 %v9109
        %9514 = vmatpush.msra.mxu0 %v9108
        %9515 = vmatpush.msra.mxu0 %v9107
        %9516 = vmatmul.f32.gmra.mxu0 %v9498
        %v9517 = vpop.f32.mrf.mxu0
        %v9518 = vadd.f32 %v9135, %v9517
        %9519 = vdwg.mxu0
        %v9521 = vsel %vm9082, %v9054, 0
        %9523 = vmatpush.msra.mxu0 0.0
        %9524 = vmatpush.msra.mxu0 0.0
        %9525 = vmatpush.msra.mxu0 0.0
        %9526 = vmatpush.msra.mxu0 0.0
        %9527 = vmatpush.msra.mxu0 0.0
        %9528 = vmatpush.msra.mxu0 0.0
        %9529 = vmatpush.msra.mxu0 0.0
        %9530 = vmatpush.msra.mxu0 0.0
        %9531 = vmatpush.msra.mxu0 0.0
        %9532 = vmatpush.msra.mxu0 0.0
        %9533 = vmatpush.msra.mxu0 0.0
        %9534 = vmatpush.msra.mxu0 0.0
        %9535 = vmatpush.msra.mxu0 0.0
        %9536 = vmatpush.msra.mxu0 %v9140
        %9537 = vmatpush.msra.mxu0 %v9139
        %9538 = vmatpush.msra.mxu0 %v9138
        %9539 = vmatmul.f32.gmra.mxu0 %v9521
        %v9540 = vpop.f32.mrf.mxu0
        %v9541 = vadd.f32 %v9166, %v9540
        %9542 = vdwg.mxu0
        %v9544 = vsel %vm9082, %v9056, 0
        %9546 = vmatpush.msra.mxu0 0.0
        %9547 = vmatpush.msra.mxu0 0.0
        %9548 = vmatpush.msra.mxu0 0.0
        %9549 = vmatpush.msra.mxu0 0.0
        %9550 = vmatpush.msra.mxu0 0.0
        %9551 = vmatpush.msra.mxu0 0.0
        %9552 = vmatpush.msra.mxu0 0.0
        %9553 = vmatpush.msra.mxu0 0.0
        %9554 = vmatpush.msra.mxu0 0.0
        %9555 = vmatpush.msra.mxu0 0.0
        %9556 = vmatpush.msra.mxu0 0.0
        %9557 = vmatpush.msra.mxu0 0.0
        %9558 = vmatpush.msra.mxu0 0.0
        %9559 = vmatpush.msra.mxu0 %v9171
        %9560 = vmatpush.msra.mxu0 %v9170
        %9561 = vmatpush.msra.mxu0 %v9169
        %9562 = vmatmul.f32.gmra.mxu0 %v9544
        %v9563 = vpop.f32.mrf.mxu0
        %v9564 = vadd.f32 %v9197, %v9563
        %9565 = vdwg.mxu0
        %v9567 = vsel %vm9082, %v9058, 0
        %9569 = vmatpush.msra.mxu0 0.0
        %9570 = vmatpush.msra.mxu0 0.0
        %9571 = vmatpush.msra.mxu0 0.0
        %9572 = vmatpush.msra.mxu0 0.0
        %9573 = vmatpush.msra.mxu0 0.0
        %9574 = vmatpush.msra.mxu0 0.0
        %9575 = vmatpush.msra.mxu0 0.0
        %9576 = vmatpush.msra.mxu0 0.0
        %9577 = vmatpush.msra.mxu0 0.0
        %9578 = vmatpush.msra.mxu0 0.0
        %9579 = vmatpush.msra.mxu0 0.0
        %9580 = vmatpush.msra.mxu0 0.0
        %9581 = vmatpush.msra.mxu0 0.0
        %9582 = vmatpush.msra.mxu0 %v9202
        %9583 = vmatpush.msra.mxu0 %v9201
        %9584 = vmatpush.msra.mxu0 %v9200
        %9585 = vmatmul.f32.gmra.mxu0 %v9567
        %v9586 = vpop.f32.mrf.mxu0
        %v9587 = vadd.f32 %v9228, %v9586
        %9588 = vdwg.mxu0
        %v9590 = vsel %vm9082, %v9060, 0
        %9592 = vmatpush.msra.mxu0 0.0
        %9593 = vmatpush.msra.mxu0 0.0
        %9594 = vmatpush.msra.mxu0 0.0
        %9595 = vmatpush.msra.mxu0 0.0
        %9596 = vmatpush.msra.mxu0 0.0
        %9597 = vmatpush.msra.mxu0 0.0
        %9598 = vmatpush.msra.mxu0 0.0
        %9599 = vmatpush.msra.mxu0 0.0
        %9600 = vmatpush.msra.mxu0 0.0
        %9601 = vmatpush.msra.mxu0 0.0
        %9602 = vmatpush.msra.mxu0 0.0
        %9603 = vmatpush.msra.mxu0 0.0
        %9604 = vmatpush.msra.mxu0 0.0
        %9605 = vmatpush.msra.mxu0 %v9233
        %9606 = vmatpush.msra.mxu0 %v9232
        %9607 = vmatpush.msra.mxu0 %v9231
        %9608 = vmatmul.f32.gmra.mxu0 %v9590
        %v9609 = vpop.f32.mrf.mxu0
        %v9610 = vadd.f32 %v9259, %v9609
        %9611 = vdwg.mxu0
        %v9613 = vsel %vm9082, %v9062, 0
        %9615 = vmatpush.msra.mxu0 0.0
        %9616 = vmatpush.msra.mxu0 0.0
        %9617 = vmatpush.msra.mxu0 0.0
        %9618 = vmatpush.msra.mxu0 0.0
        %9619 = vmatpush.msra.mxu0 0.0
        %9620 = vmatpush.msra.mxu0 0.0
        %9621 = vmatpush.msra.mxu0 0.0
        %9622 = vmatpush.msra.mxu0 0.0
        %9623 = vmatpush.msra.mxu0 0.0
        %9624 = vmatpush.msra.mxu0 0.0
        %9625 = vmatpush.msra.mxu0 0.0
        %9626 = vmatpush.msra.mxu0 0.0
        %9627 = vmatpush.msra.mxu0 0.0
        %9628 = vmatpush.msra.mxu0 %v9264
        %9629 = vmatpush.msra.mxu0 %v9263
        %9630 = vmatpush.msra.mxu0 %v9262
        %9631 = vmatmul.f32.gmra.mxu0 %v9613
        %v9632 = vpop.f32.mrf.mxu0
        %v9633 = vadd.f32 %v9290, %v9632
        %9634 = vdwg.mxu0
        %v9636 = vsel %vm9082, %v9064, 0
        %9638 = vmatpush.msra.mxu0 0.0
        %9639 = vmatpush.msra.mxu0 0.0
        %9640 = vmatpush.msra.mxu0 0.0
        %9641 = vmatpush.msra.mxu0 0.0
        %9642 = vmatpush.msra.mxu0 0.0
        %9643 = vmatpush.msra.mxu0 0.0
        %9644 = vmatpush.msra.mxu0 0.0
        %9645 = vmatpush.msra.mxu0 0.0
        %9646 = vmatpush.msra.mxu0 0.0
        %9647 = vmatpush.msra.mxu0 0.0
        %9648 = vmatpush.msra.mxu0 0.0
        %9649 = vmatpush.msra.mxu0 0.0
        %9650 = vmatpush.msra.mxu0 0.0
        %9651 = vmatpush.msra.mxu0 %v9295
        %9652 = vmatpush.msra.mxu0 %v9294
        %9653 = vmatpush.msra.mxu0 %v9293
        %9654 = vmatmul.f32.gmra.mxu0 %v9636
        %v9655 = vpop.f32.mrf.mxu0
        %v9656 = vadd.f32 %v9321, %v9655
        %9657 = vdwg.mxu0
        %v9659 = vsel %vm9082, %v9066, 0
        %9661 = vmatpush.msra.mxu0 0.0
        %9662 = vmatpush.msra.mxu0 0.0
        %9663 = vmatpush.msra.mxu0 0.0
        %9664 = vmatpush.msra.mxu0 0.0
        %9665 = vmatpush.msra.mxu0 0.0
        %9666 = vmatpush.msra.mxu0 0.0
        %9667 = vmatpush.msra.mxu0 0.0
        %9668 = vmatpush.msra.mxu0 0.0
        %9669 = vmatpush.msra.mxu0 0.0
        %9670 = vmatpush.msra.mxu0 0.0
        %9671 = vmatpush.msra.mxu0 0.0
        %9672 = vmatpush.msra.mxu0 0.0
        %9673 = vmatpush.msra.mxu0 0.0
        %9674 = vmatpush.msra.mxu0 %v9326
        %9675 = vmatpush.msra.mxu0 %v9325
        %9676 = vmatpush.msra.mxu0 %v9324
        %9677 = vmatmul.f32.gmra.mxu0 %v9659
        %v9678 = vpop.f32.mrf.mxu0
        %v9679 = vadd.f32 %v9352, %v9678
        %9680 = vdwg.mxu0
        %v9682 = vsel %vm9082, %v9068, 0
        %9684 = vmatpush.msra.mxu0 0.0
        %9685 = vmatpush.msra.mxu0 0.0
        %9686 = vmatpush.msra.mxu0 0.0
        %9687 = vmatpush.msra.mxu0 0.0
        %9688 = vmatpush.msra.mxu0 0.0
        %9689 = vmatpush.msra.mxu0 0.0
        %9690 = vmatpush.msra.mxu0 0.0
        %9691 = vmatpush.msra.mxu0 0.0
        %9692 = vmatpush.msra.mxu0 0.0
        %9693 = vmatpush.msra.mxu0 0.0
        %9694 = vmatpush.msra.mxu0 0.0
        %9695 = vmatpush.msra.mxu0 0.0
        %9696 = vmatpush.msra.mxu0 0.0
        %9697 = vmatpush.msra.mxu0 %v9357
        %9698 = vmatpush.msra.mxu0 %v9356
        %9699 = vmatpush.msra.mxu0 %v9355
        %9700 = vmatmul.f32.gmra.mxu0 %v9682
        %v9701 = vpop.f32.mrf.mxu0
        %v9702 = vadd.f32 %v9383, %v9701
        %9703 = vdwg.mxu0
        %v9705 = vsel %vm9082, %v9070, 0
        %9707 = vmatpush.msra.mxu0 0.0
        %9708 = vmatpush.msra.mxu0 0.0
        %9709 = vmatpush.msra.mxu0 0.0
        %9710 = vmatpush.msra.mxu0 0.0
        %9711 = vmatpush.msra.mxu0 0.0
        %9712 = vmatpush.msra.mxu0 0.0
        %9713 = vmatpush.msra.mxu0 0.0
        %9714 = vmatpush.msra.mxu0 0.0
        %9715 = vmatpush.msra.mxu0 0.0
        %9716 = vmatpush.msra.mxu0 0.0
        %9717 = vmatpush.msra.mxu0 0.0
        %9718 = vmatpush.msra.mxu0 0.0
        %9719 = vmatpush.msra.mxu0 0.0
        %9720 = vmatpush.msra.mxu0 %v9388
        %9721 = vmatpush.msra.mxu0 %v9387
        %9722 = vmatpush.msra.mxu0 %v9386
        %9723 = vmatmul.f32.gmra.mxu0 %v9705
        %v9724 = vpop.f32.mrf.mxu0
        %v9725 = vadd.f32 %v9414, %v9724
        %9726 = vdwg.mxu0
        %v9728 = vsel %vm9082, %v9072, 0
        %9730 = vmatpush.msra.mxu0 0.0
        %9731 = vmatpush.msra.mxu0 0.0
        %9732 = vmatpush.msra.mxu0 0.0
        %9733 = vmatpush.msra.mxu0 0.0
        %9734 = vmatpush.msra.mxu0 0.0
        %9735 = vmatpush.msra.mxu0 0.0
        %9736 = vmatpush.msra.mxu0 0.0
        %9737 = vmatpush.msra.mxu0 0.0
        %9738 = vmatpush.msra.mxu0 0.0
        %9739 = vmatpush.msra.mxu0 0.0
        %9740 = vmatpush.msra.mxu0 0.0
        %9741 = vmatpush.msra.mxu0 0.0
        %9742 = vmatpush.msra.mxu0 0.0
        %9743 = vmatpush.msra.mxu0 %v9419
        %9744 = vmatpush.msra.mxu0 %v9418
        %9745 = vmatpush.msra.mxu0 %v9417
        %9746 = vmatmul.f32.gmra.mxu0 %v9728
        %v9747 = vpop.f32.mrf.mxu0
        %v9748 = vadd.f32 %v9445, %v9747
        %9749 = vdwg.mxu0
        %v9750 = vadd.f32 %v9495, %v9518
        %v9751 = vadd.f32 %v9541, %v9564
        %v9752 = vadd.f32 %v9587, %v9610
        %v9753 = vadd.f32 %v9633, %v9656
        %v9754 = vadd.f32 %v9679, %v9702
        %v9755 = vadd.f32 %v9725, %v9748
        %v9756 = vadd.f32 %v9750, %v9751
        %v9757 = vadd.f32 %v9752, %v9753
        %v9758 = vadd.f32 %v9754, %v9755
        %v9759 = vadd.f32 %v9756, %v9757
        %v9760 = vadd.f32 %v9758, %v9472
        %v9761 = vadd.f32 %v9759, %v9760
        %v9762 = vld [vmem:[%s6] sm:$0x1]
        %v9764 = vperm.slane %v9762, 0
        %v9766 = vadd.f32 %v9761, %v9764
        %v9767 = vmax.f32 %v9766, 0.0
        %v9768 = vld [vmem:[%s7] sm:$0xff]
        %v9769 = vld [vmem:[%s7 + $0x8] sm:$0xff]
        %v9770 = vld [vmem:[%s7 + $0x10] sm:$0xff]
        %v9771 = vld [vmem:[%s7 + $0x18] sm:$0xff]
        %v9772 = vld [vmem:[%s7 + $0x20] sm:$0xff]
        %v9773 = vld [vmem:[%s7 + $0x28] sm:$0xff]
        %v9774 = vld [vmem:[%s7 + $0x30] sm:$0xff]
        %v9775 = vld [vmem:[%s7 + $0x38] sm:$0xff]
        %v9776 = vld [vmem:[%s7 + $0x40] sm:$0xff]
        %v9777 = vld [vmem:[%s7 + $0x48] sm:$0xff]
        %v9778 = vld [vmem:[%s7 + $0x50] sm:$0xff]
        %v9779 = vld [vmem:[%s7 + $0x58] sm:$0xff]
        %v9780 = vld [vmem:[%s7 + $0x60] sm:$0xff]
        %v9781 = vld [vmem:[%s7 + $0x68] sm:$0xff]
        %v9782 = vld [vmem:[%s7 + $0x70] sm:$0xff]
        %v9783 = vld [vmem:[%s7 + $0x78] sm:$0xff]
        %v9784 = vld [vmem:[%s8] sm:$0x1]
        %v9786 = vperm.slane %v9784, 0
        %9788 = vmatpush.msra.mxu0 %v9783
        %9789 = vmatpush.msra.mxu0 %v9782
        %9790 = vmatpush.msra.mxu0 %v9781
        %9791 = vmatpush.msra.mxu0 %v9780
        %9792 = vmatpush.msra.mxu0 %v9779
        %9793 = vmatpush.msra.mxu0 %v9778
        %9794 = vmatpush.msra.mxu0 %v9777
        %9795 = vmatpush.msra.mxu0 %v9776
        %9796 = vmatpush.msra.mxu0 %v9775
        %9797 = vmatpush.msra.mxu0 %v9774
        %9798 = vmatpush.msra.mxu0 %v9773
        %9799 = vmatpush.msra.mxu0 %v9772
        %9800 = vmatpush.msra.mxu0 %v9771
        %9801 = vmatpush.msra.mxu0 %v9770
        %9802 = vmatpush.msra.mxu0 %v9769
        %9803 = vmatpush.msra.mxu0 %v9768
        %9804 = vmatmul.f32.gmra.mxu0 %v9767
        %v9805 = vpop.f32.mrf.mxu0
        %v9806 = vadd.f32 %v9786, %v9805
        %9807 = vdwg.mxu0
        %9808 = vst [vmem:[%s325] sm:$0xff] %v9806
        %s9809 = sand.u32 %s225, 1
        %s9810 = scalar_lea.sflag [#allocation3], %s9809
        %s9811 = sand.u32 %s225, 1
        %s9812 = smul.addr %s9811, 8
        %s9813 = scalar_lea.vmem [#allocation2], %s9812
        // Predicated region
        $region57: #{cnn_early_forward.1} parent=55 // pred_check
          %p9814 = pneg %p235
        $region58: #{cnn_early_forward.1} parent=55 // pred_check_branch
          %9816 = sbr.rel (%p9814) target = $region60
        $region59: #{cnn_early_forward.1} parent=55 // pred_region
          %9818 = vsyncadd %s9810, 0
          %s9819 = smul.addr %s23, 8
          %s9820 = scalar_lea.hbm %s9, %s9819
          %s9822 = sshll.u32 %s9813, 4
          %s9823 = int_to_ptr.vmem [resolvable:$true] %s9822
          %s9824 = sshll.u32 %s9820, 4
          %s9825 = int_to_ptr.hbm [resolvable:$true] %s9824
          %9827 = dma.vmem_to_hbm [thread:$0]  %s9823, 128, %s9825, %s9810
        $region60: #{cnn_early_forward.1} parent=55 // pred_fallthru
          _
      $region56: #{cnn_early_forward.1} parent=5 // pred_fallthru
        _
      %p9828 = scmp.le.s32.totalorder 2, %s18
      // Predicated region
      $region61: #{cnn_early_forward.1} parent=5 // pred_check
        %p9829 = pneg %p9828
      $region62: #{cnn_early_forward.1} parent=5 // pred_check_branch
        %9831 = sbr.rel (%p9829) target = $region64
      $region63: #{cnn_early_forward.1} parent=5 // pred_region
        %s9832 = ssub.s32 %s18, 2
        // Predicated region
        $region65: #{cnn_early_forward.1} parent=63 // pred_check
          %p9833 = pneg %p241
        $region66: #{cnn_early_forward.1} parent=63 // pred_check_branch
          %9835 = sbr.rel (%p9833) target = $region68
        $region67: #{cnn_early_forward.1} parent=63 // pred_region
          %s9836 = sand.u32 %s226, 1
          %s9837 = scalar_lea.sflag [#allocation3], %s9836
          %s9838 = sand.u32 %s226, 1
          %s9839 = smul.addr %s9838, 8
          %s9840 = scalar_lea.vmem [#allocation2], %s9839
          %9842 = dma.done %s9837, 128
        $region68: #{cnn_early_forward.1} parent=63 // pred_fallthru
          _
      $region64: #{cnn_early_forward.1} parent=5 // pred_fallthru
        _
    $region6: #{cnn_early_forward.1} parent=1 // loop_footer
      %s22 = sadd.s32 1, %s18
    $region7: #{cnn_early_forward.1} parent=1 // loop_footer_branch
      %17 = sbr.rel target = $region3
    $region8: #{cnn_early_forward.1} parent=1 // loop_exit
      _
    %9843 = vsyncpa [#allocation3], 1
    %s9844 = scalar_lea.sflag [#allocation3], 1
    %9845 = vsyncpa %s9844, 1

</llo_original>
